<compile_context>
chip_gen: v7x
topology: tpu7x:2x2x1
jax: 0.10.0
libtpu: 0.0.40
codegen_flags: <defaults>
</compile_context>

<pallas_src>
import numpy as np

import jax
import jax.numpy as jnp
from jax.experimental import pallas as pl
from jax.experimental.pallas import tpu as pltpu


# --------------------------------------------------------------------------- #
# One-time parameter packing (hoisted out of the kernel / forward pass)
# --------------------------------------------------------------------------- #
def conv_banded(w, w_in, pad, out_cols):
    """Banded matrices for a stride-1 Conv2d evaluated at the given output columns.

    w: torch layout (Co, Ci, kh, kw).  Returns A of shape (kh, w_in*Ci, len(out_cols)*Co)
    so that conv_out[y, oi*Co+co] = sum_di dot(in_rows[y+di], A[di]) where in_rows is
    the H-padded activation slab with lanes ordered x*Ci + ci.
    """
    w = np.asarray(w, np.float32)
    co, ci, kh, kw = w.shape
    out_cols = list(out_cols)
    a = np.zeros((kh, w_in * ci, len(out_cols) * co), np.float32)
    for di in range(kh):
        for oi, x_out in enumerate(out_cols):
            for dj in range(kw):
                xin = x_out + dj - pad
                if 0 <= xin < w_in:
                    a[di, xin * ci:(xin + 1) * ci, oi * co:(oi + 1) * co] = w[:, :, di, dj].T
    return jnp.asarray(a)


def convt_banded(w, w_in, stride, pad, out_pad):
    """Banded matrices for ConvTranspose2d (torch weight layout (Ci, Co, kh, kw)).

    Input slab is H-dilated only (input row y sits at scratch row (kh-1-pad)+stride*y,
    lanes ordered x*Ci + ci, NOT W-dilated).  Returns A of shape
    (kh, w_in*Ci, W_out*Co) with out[Y, X*Co+co] = sum_di dot(slab_rows[Y+di], A[di]).
    """
    w = np.asarray(w, np.float32)
    ci, co, kh, kw = w.shape
    w_out = (w_in - 1) * stride - 2 * pad + kw + out_pad
    off = kw - 1 - pad
    a = np.zeros((kh, w_in * ci, w_out * co), np.float32)
    for di in range(kh):
        for x_out in range(w_out):
            for x in range(w_in):
                dj = off + stride * x - x_out
                if 0 <= dj < kw:
                    a[di, x * ci:(x + 1) * ci, x_out * co:(x_out + 1) * co] = \
                        w[:, :, kh - 1 - di, kw - 1 - dj]
    return jnp.asarray(a)


def pack_params(params):
    p = {k: np.asarray(v, np.float32) for k, v in params.items()}
    packed = {}
    # conv1 (1->16, 3x3, pad 1): even/odd output columns (fused 2x2 maxpool along W)
    packed["a1e"] = conv_banded(p["conv1_w"], 16, 1, range(0, 16, 2))   # (3,16,128)
    packed["a1o"] = conv_banded(p["conv1_w"], 16, 1, range(1, 16, 2))
    packed["b1"] = jnp.asarray(np.tile(p["conv1_b"], 8)[None, :])       # (1,128) lanes xo*16+co
    # conv2 (16->9, 3x3, pad 1)
    packed["a2e"] = conv_banded(p["conv2_w"], 8, 1, range(0, 8, 2))     # (3,128,36)
    packed["a2o"] = conv_banded(p["conv2_w"], 8, 1, range(1, 8, 2))
    packed["b2"] = jnp.asarray(np.tile(p["conv2_b"], 4)[None, :])       # (1,36) lanes xo*9+co
    # encoder Linear(144->10): torch flatten order (c,y,x) -> our (y, x*9+c), split by y
    ew = p["enc_fc_w"].reshape(10, 9, 4, 4).transpose(2, 3, 1, 0).reshape(4, 36, 10)
    packed["ew"] = jnp.asarray(ew)                                      # (4,36,10)
    packed["eb"] = jnp.asarray(p["enc_fc_b"][None, :])                  # (1,10)
    # decoder Linear(10->144): emit directly in (y, x*9+c) order, split by y
    dw = p["dec_fc_w"].reshape(9, 4, 4, 10).transpose(1, 3, 2, 0).reshape(4, 10, 36)
    packed["dw"] = jnp.asarray(dw)                                      # (4,10,36)
    db = p["dec_fc_b"].reshape(9, 4, 4).transpose(1, 2, 0).reshape(4, 1, 36)
    packed["db"] = jnp.asarray(db)                                      # (4,1,36)
    # convT1 (9->16, 3x3, stride 2, pad 1, out_pad 1)
    packed["a3"] = convt_banded(p["convt1_w"], 4, 2, 1, 1)              # (3,36,128)
    packed["b3"] = jnp.asarray(np.tile(p["convt1_b"], 8)[None, :])      # (1,128) lanes X*16+co
    # convT2 (16->1, 5x5, stride 2, pad 1)
    packed["a4"] = convt_banded(p["convt2_w"], 8, 2, 1, 0)              # (5,128,17)
    packed["b4"] = jnp.asarray(p["convt2_b"].reshape(1, 1))             # (1,1)
    return packed


# --------------------------------------------------------------------------- #
# Single fused Pallas kernel: the whole forward pass
# --------------------------------------------------------------------------- #
def _autoencoder_kernel(x_ref, a1e_ref, a1o_ref, b1_ref, a2e_ref, a2o_ref, b2_ref,
                        ew_ref, eb_ref, dw_ref, db_ref, a3_ref, b3_ref, a4_ref, b4_ref,
                        dec_ref, lat_ref, s1, s2, s3, s4):
    f32 = jnp.float32
    batch = x_ref.shape[0]

    def mm(a, w):
        return jnp.dot(a, w, preferred_element_type=f32)

    # Zero the padded / dilated staging slabs once (pad rows & dilation gaps stay 0).
    s1[...] = jnp.zeros(s1.shape, f32)
    s2[...] = jnp.zeros(s2.shape, f32)
    s3[...] = jnp.zeros(s3.shape, f32)
    s4[...] = jnp.zeros(s4.shape, f32)

    # Input (B,16,16) -> H-padded slab (B,18,16); lanes = x (Ci = 1).
    s1[:, 1:17, :] = x_ref[...]

    # Hoisted (loop-invariant) small operands.
    b1v = b1_ref[...]     # (1,128)
    b2v = b2_ref[...]     # (1,36)
    b3v = b3_ref[...]     # (1,128)
    b4v = b4_ref[...]     # (1,1)
    ebv = eb_ref[...]     # (1,10)

    for b in range(batch):
        # ---------------- conv1 + ReLU + 2x2 maxpool (fused) ----------------
        ev = jnp.zeros((16, 128), f32)            # even output columns, lanes xo*16+co
        od = jnp.zeros((16, 128), f32)            # odd output columns
        for di in range(3):
            rows = s1[b, di:di + 16, :]           # (16,16)
            ev = ev + mm(rows, a1e_ref[di])
            od = od + mm(rows, a1o_ref[di])
        wmax = jnp.maximum(ev, od)                # W-pool
        hrows = [jnp.maximum(wmax[2 * yo:2 * yo + 1, :], wmax[2 * yo + 1:2 * yo + 2, :])
                 for yo in range(8)]              # H-pool rows
        pooled1 = jnp.concatenate(hrows, axis=0)  # (8,128)
        # bias + ReLU commute with the max-pool (monotone); single store.
        s2[b, 1:9, :] = jnp.maximum(pooled1 + b1v, 0.0)

        # ---------------- conv2 + ReLU + 2x2 maxpool (fused) ----------------
        ev = jnp.zeros((8, 36), f32)
        od = jnp.zeros((8, 36), f32)
        for di in range(3):
            rows = s2[b, di:di + 8, :]            # (8,128)
            ev = ev + mm(rows, a2e_ref[di])
            od = od + mm(rows, a2o_ref[di])
        wmax = jnp.maximum(ev, od)
        pooled2 = []
        for yo in range(4):
            r = jnp.maximum(wmax[2 * yo:2 * yo + 1, :], wmax[2 * yo + 1:2 * yo + 2, :])
            pooled2.append(jnp.maximum(r + b2v, 0.0))   # (1,36), lanes x*9+c

        # ---------------- encoder Linear(144 -> 10) ----------------
        lat = ebv
        for y in range(4):
            lat = lat + mm(pooled2[y], ew_ref[y])       # (1,10)
        lat_ref[b:b + 1, :] = lat

        # -------- decoder Linear(10 -> 144) + Unflatten + H-dilation --------
        for y in range(4):
            s3[b, 1 + 2 * y:2 + 2 * y, :] = mm(lat, dw_ref[y]) + db_ref[y]  # (1,36)

        # ---------------- convT1 (3x3, s2, p1, op1) + ReLU ----------------
        acc = jnp.zeros((8, 128), f32)
        for di in range(3):
            acc = acc + mm(s3[b, di:di + 8, :], a3_ref[di])   # (8,128), lanes X*16+co
        h = jnp.maximum(acc + b3v, 0.0)
        for y in range(8):                                    # H-dilate into convT2 slab
            s4[b, 3 + 2 * y:4 + 2 * y, :] = h[y:y + 1, :]

        # ---------------- convT2 (5x5, s2, p1) ----------------
        out = jnp.zeros((17, 17), f32)
        for di in range(5):
            out = out + mm(s4[b, di:di + 17, :], a4_ref[di])  # (17,17)
        dec_ref[b, :, :] = out + b4v


def autoencoder_forward(packed, x):
    """Full forward pass in one pallas_call. Returns (decoded (B,1,17,17), latent (B,10))."""
    batch = x.shape[0]
    x2 = x.reshape(batch, x.shape[-2], x.shape[-1])   # squeeze channel dim wrapper-side
    n_in = 15
    dec, lat = pl.pallas_call(
        _autoencoder_kernel,
        out_shape=(jax.ShapeDtypeStruct((batch, 17, 17), jnp.float32),
                   jax.ShapeDtypeStruct((batch, 10), jnp.float32)),
        in_specs=[pl.BlockSpec(memory_space=pltpu.MemorySpace.VMEM)] * n_in,
        out_specs=(pl.BlockSpec(memory_space=pltpu.MemorySpace.VMEM),
                   pl.BlockSpec(memory_space=pltpu.MemorySpace.VMEM)),
        scratch_shapes=[
            pltpu.VMEM((batch, 18, 16), jnp.float32),    # H-padded input slab
            pltpu.VMEM((batch, 10, 128), jnp.float32),   # pooled conv1 out, H-padded for conv2
            pltpu.VMEM((batch, 10, 36), jnp.float32),    # H-dilated/padded convT1 input
            pltpu.VMEM((batch, 21, 128), jnp.float32),   # H-dilated/padded convT2 input
        ],
    )(x2, packed["a1e"], packed["a1o"], packed["b1"],
      packed["a2e"], packed["a2o"], packed["b2"],
      packed["ew"], packed["eb"], packed["dw"], packed["db"],
      packed["a3"], packed["b3"], packed["a4"], packed["b4"])
    return dec.reshape(batch, 1, 17, 17), lat


# --------------------------------------------------------------------------- #
# Parameters and an independent pure-JAX (XLA) reference for validation
# --------------------------------------------------------------------------- #
def init_params(key):
    ks = jax.random.split(key, 12)

    def init(k, shape, scale=0.1):
        return (scale * jax.random.normal(k, shape)).astype(jnp.float32)

    return dict(
        conv1_w=init(ks[0], (16, 1, 3, 3)), conv1_b=init(ks[1], (16,)),
        conv2_w=init(ks[2], (9, 16, 3, 3)), conv2_b=init(ks[3], (9,)),
        enc_fc_w=init(ks[4], (10, 144)), enc_fc_b=init(ks[5], (10,)),
        dec_fc_w=init(ks[6], (144, 10)), dec_fc_b=init(ks[7], (144,)),
        convt1_w=init(ks[8], (9, 16, 3, 3)), convt1_b=init(ks[9], (16,)),
        convt2_w=init(ks[10], (16, 1, 5, 5)), convt2_b=init(ks[11], (1,)),
    )


def reference_forward(params, x):
    def conv(h, w, b, pad):
        out = jax.lax.conv_general_dilated(
            h, w, window_strides=(1, 1), padding=((pad, pad), (pad, pad)),
            dimension_numbers=("NCHW", "OIHW", "NCHW"))
        return out + b[None, :, None, None]

    def convt(h, w, b, stride, pad, out_pad):
        k = w.shape[2]
        wf = jnp.flip(w, (2, 3)).transpose(1, 0, 2, 3)
        lo, hi = k - 1 - pad, k - 1 - pad + out_pad
        out = jax.lax.conv_general_dilated(
            h, wf, window_strides=(1, 1), padding=((lo, hi), (lo, hi)),
            lhs_dilation=(stride, stride), dimension_numbers=("NCHW", "OIHW", "NCHW"))
        return out + b[None, :, None, None]

    def pool(h):
        a = h[:, :, 0::2, 0::2]; b_ = h[:, :, 0::2, 1::2]
        c = h[:, :, 1::2, 0::2]; d = h[:, :, 1::2, 1::2]
        return jnp.maximum(jnp.maximum(a, b_), jnp.maximum(c, d))

    h = pool(jax.nn.relu(conv(x, params["conv1_w"], params["conv1_b"], 1)))
    h = pool(jax.nn.relu(conv(h, params["conv2_w"], params["conv2_b"], 1)))
    flat = h.reshape(x.shape[0], -1)
    latent = flat @ params["enc_fc_w"].T + params["enc_fc_b"]
    d = latent @ params["dec_fc_w"].T + params["dec_fc_b"]
    d = d.reshape(x.shape[0], 9, 4, 4)
    d = jax.nn.relu(convt(d, params["convt1_w"], params["convt1_b"], 2, 1, 1))
    d = convt(d, params["convt2_w"], params["convt2_b"], 2, 1, 0)
    return d, latent


if __name__ == "__main__":
    key = jax.random.PRNGKey(0)
    kx, kp = jax.random.split(key)
    params = init_params(kp)
    x = jax.random.normal(kx, (2, 1, 16, 16), dtype=jnp.float32)

    packed = pack_params(params)                 # one-time weight packing (hoisted)
    fwd = jax.jit(autoencoder_forward)

    decoded, latent = fwd(packed, x)
    decoded = jax.block_until_ready(decoded)
    latent = jax.block_until_ready(latent)

    assert decoded.shape == (2, 1, 17, 17), decoded.shape
    assert latent.shape == (2, 10), latent.shape

    ref_dec, ref_lat = reference_forward(params, x)
    lat_err = float(jnp.max(jnp.abs(latent - ref_lat)))
    dec_err = float(jnp.max(jnp.abs(decoded - ref_dec)))
    assert jnp.allclose(latent, ref_lat, atol=2e-3, rtol=2e-3), lat_err
    assert jnp.allclose(decoded, ref_dec, atol=2e-3, rtol=2e-3), dec_err

    print("KERNEL_OK")
</pallas_src>

<mosaic_0001>
module attributes {stable_mosaic.version = 11 : i64} {
  func.func @_autoencoder_kernel(%arg0: memref<2x16x16xf32, #tpu.memory_space<vmem>>, %arg1: memref<3x16x128xf32, #tpu.memory_space<vmem>>, %arg2: memref<3x16x128xf32, #tpu.memory_space<vmem>>, %arg3: memref<1x128xf32, #tpu.memory_space<vmem>>, %arg4: memref<3x128x36xf32, #tpu.memory_space<vmem>>, %arg5: memref<3x128x36xf32, #tpu.memory_space<vmem>>, %arg6: memref<1x36xf32, #tpu.memory_space<vmem>>, %arg7: memref<4x36x10xf32, #tpu.memory_space<vmem>>, %arg8: memref<1x10xf32, #tpu.memory_space<vmem>>, %arg9: memref<4x10x36xf32, #tpu.memory_space<vmem>>, %arg10: memref<4x1x36xf32, #tpu.memory_space<vmem>>, %arg11: memref<3x36x128xf32, #tpu.memory_space<vmem>>, %arg12: memref<1x128xf32, #tpu.memory_space<vmem>>, %arg13: memref<5x128x17xf32, #tpu.memory_space<vmem>>, %arg14: memref<1x1xf32, #tpu.memory_space<vmem>>, %arg15: memref<2x17x17xf32, #tpu.memory_space<vmem>>, %arg16: memref<2x10xf32, #tpu.memory_space<vmem>>, %arg17: memref<2x18x16xf32, #tpu.memory_space<vmem>>, %arg18: memref<2x10x128xf32, #tpu.memory_space<vmem>>, %arg19: memref<2x10x36xf32, #tpu.memory_space<vmem>>, %arg20: memref<2x21x128xf32, #tpu.memory_space<vmem>>) attributes {dimension_semantics = [], scalar_prefetch = 0 : i64, scratch_operands = 4 : i64, tpu.core_type = #tpu.core_type<tc>} {
    %cst = arith.constant 0.000000e+00 : f32
    %0 = vector.broadcast %cst : f32 to vector<2x18x16xf32>
    %c0 = arith.constant 0 : index
    %c0_0 = arith.constant 0 : index
    %c0_1 = arith.constant 0 : index
    %1 = vector.load %arg17[%c0, %c0_0, %c0_1] : memref<2x18x16xf32, #tpu.memory_space<vmem>>, vector<2x18x16xf32>
    tpu.vector_store %arg17[%c0, %c0_0, %c0_1], %0 {strides = array<i32>} : memref<2x18x16xf32, #tpu.memory_space<vmem>>, vector<2x18x16xf32>,
    %cst_2 = arith.constant 0.000000e+00 : f32
    %2 = vector.broadcast %cst_2 : f32 to vector<2x10x128xf32>
    %c0_3 = arith.constant 0 : index
    %c0_4 = arith.constant 0 : index
    %c0_5 = arith.constant 0 : index
    %3 = vector.load %arg18[%c0_3, %c0_4, %c0_5] : memref<2x10x128xf32, #tpu.memory_space<vmem>>, vector<2x10x128xf32>
    tpu.vector_store %arg18[%c0_3, %c0_4, %c0_5], %2 {strides = array<i32>} : memref<2x10x128xf32, #tpu.memory_space<vmem>>, vector<2x10x128xf32>,
    %cst_6 = arith.constant 0.000000e+00 : f32
    %4 = vector.broadcast %cst_6 : f32 to vector<2x10x36xf32>
    %c0_7 = arith.constant 0 : index
    %c0_8 = arith.constant 0 : index
    %c0_9 = arith.constant 0 : index
    %5 = vector.load %arg19[%c0_7, %c0_8, %c0_9] : memref<2x10x36xf32, #tpu.memory_space<vmem>>, vector<2x10x36xf32>
    tpu.vector_store %arg19[%c0_7, %c0_8, %c0_9], %4 {strides = array<i32>} : memref<2x10x36xf32, #tpu.memory_space<vmem>>, vector<2x10x36xf32>,
    %cst_10 = arith.constant 0.000000e+00 : f32
    %6 = vector.broadcast %cst_10 : f32 to vector<2x21x128xf32>
    %c0_11 = arith.constant 0 : index
    %c0_12 = arith.constant 0 : index
    %c0_13 = arith.constant 0 : index
    %7 = vector.load %arg20[%c0_11, %c0_12, %c0_13] : memref<2x21x128xf32, #tpu.memory_space<vmem>>, vector<2x21x128xf32>
    tpu.vector_store %arg20[%c0_11, %c0_12, %c0_13], %6 {strides = array<i32>} : memref<2x21x128xf32, #tpu.memory_space<vmem>>, vector<2x21x128xf32>,
    %c0_14 = arith.constant 0 : index
    %c0_15 = arith.constant 0 : index
    %c0_16 = arith.constant 0 : index
    %8 = vector.load %arg0[%c0_14, %c0_15, %c0_16] : memref<2x16x16xf32, #tpu.memory_space<vmem>>, vector<2x16x16xf32>
    %c0_17 = arith.constant 0 : index
    %c1 = arith.constant 1 : index
    %c0_18 = arith.constant 0 : index
    %9 = vector.load %arg17[%c0_17, %c1, %c0_18] : memref<2x18x16xf32, #tpu.memory_space<vmem>>, vector<2x16x16xf32>
    tpu.vector_store %arg17[%c0_17, %c1, %c0_18], %8 {strides = array<i32>} : memref<2x18x16xf32, #tpu.memory_space<vmem>>, vector<2x16x16xf32>,
    %c0_19 = arith.constant 0 : index
    %c0_20 = arith.constant 0 : index
    %10 = vector.load %arg3[%c0_19, %c0_20] : memref<1x128xf32, #tpu.memory_space<vmem>>, vector<1x128xf32>
    %c0_21 = arith.constant 0 : index
    %c0_22 = arith.constant 0 : index
    %11 = vector.load %arg6[%c0_21, %c0_22] : memref<1x36xf32, #tpu.memory_space<vmem>>, vector<1x36xf32>
    %c0_23 = arith.constant 0 : index
    %c0_24 = arith.constant 0 : index
    %12 = vector.load %arg12[%c0_23, %c0_24] : memref<1x128xf32, #tpu.memory_space<vmem>>, vector<1x128xf32>
    %c0_25 = arith.constant 0 : index
    %c0_26 = arith.constant 0 : index
    %13 = vector.load %arg14[%c0_25, %c0_26] : memref<1x1xf32, #tpu.memory_space<vmem>>, vector<1x1xf32>
    %c0_27 = arith.constant 0 : index
    %c0_28 = arith.constant 0 : index
    %14 = vector.load %arg8[%c0_27, %c0_28] : memref<1x10xf32, #tpu.memory_space<vmem>>, vector<1x10xf32>
    %cst_29 = arith.constant 0.000000e+00 : f32
    %15 = vector.broadcast %cst_29 : f32 to vector<16x128xf32>
    %cst_30 = arith.constant 0.000000e+00 : f32
    %16 = vector.broadcast %cst_30 : f32 to vector<16x128xf32>
    %c0_31 = arith.constant 0 : index
    %c0_32 = arith.constant 0 : index
    %c0_33 = arith.constant 0 : index
    %17 = vector.load %arg17[%c0_31, %c0_32, %c0_33] : memref<2x18x16xf32, #tpu.memory_space<vmem>>, vector<1x16x16xf32>
    %18 = vector.shape_cast %17 : vector<1x16x16xf32> to vector<16x16xf32>
    %c0_34 = arith.constant 0 : index
    %c0_35 = arith.constant 0 : index
    %c0_36 = arith.constant 0 : index
    %19 = vector.load %arg1[%c0_34, %c0_35, %c0_36] : memref<3x16x128xf32, #tpu.memory_space<vmem>>, vector<1x16x128xf32>
    %20 = vector.shape_cast %19 : vector<1x16x128xf32> to vector<16x128xf32>
    %cst_37 = arith.constant dense<0.000000e+00> : vector<16x128xf32>
    %21 = tpu.matmul %18, %20, %cst_37 {dimension_numbers = #tpu.dot_dimension_numbers<[1], [0], [0], [1], [0, 0, 1, 1], [], []>} : vector<16x16xf32>, vector<16x128xf32>, vector<16x128xf32> -> vector<16x128xf32>
    %22 = arith.addf %15, %21 : vector<16x128xf32>
    %c0_38 = arith.constant 0 : index
    %c0_39 = arith.constant 0 : index
    %c0_40 = arith.constant 0 : index
    %23 = vector.load %arg2[%c0_38, %c0_39, %c0_40] : memref<3x16x128xf32, #tpu.memory_space<vmem>>, vector<1x16x128xf32>
    %24 = vector.shape_cast %23 : vector<1x16x128xf32> to vector<16x128xf32>
    %cst_41 = arith.constant dense<0.000000e+00> : vector<16x128xf32>
    %25 = tpu.matmul %18, %24, %cst_41 {dimension_numbers = #tpu.dot_dimension_numbers<[1], [0], [0], [1], [0, 0, 1, 1], [], []>} : vector<16x16xf32>, vector<16x128xf32>, vector<16x128xf32> -> vector<16x128xf32>
    %26 = arith.addf %16, %25 : vector<16x128xf32>
    %c0_42 = arith.constant 0 : index
    %c1_43 = arith.constant 1 : index
    %c0_44 = arith.constant 0 : index
    %27 = vector.load %arg17[%c0_42, %c1_43, %c0_44] : memref<2x18x16xf32, #tpu.memory_space<vmem>>, vector<1x16x16xf32>
    %28 = vector.shape_cast %27 : vector<1x16x16xf32> to vector<16x16xf32>
    %c1_45 = arith.constant 1 : index
    %c0_46 = arith.constant 0 : index
    %c0_47 = arith.constant 0 : index
    %29 = vector.load %arg1[%c1_45, %c0_46, %c0_47] : memref<3x16x128xf32, #tpu.memory_space<vmem>>, vector<1x16x128xf32>
    %30 = vector.shape_cast %29 : vector<1x16x128xf32> to vector<16x128xf32>
    %cst_48 = arith.constant dense<0.000000e+00> : vector<16x128xf32>
    %31 = tpu.matmul %28, %30, %cst_48 {dimension_numbers = #tpu.dot_dimension_numbers<[1], [0], [0], [1], [0, 0, 1, 1], [], []>} : vector<16x16xf32>, vector<16x128xf32>, vector<16x128xf32> -> vector<16x128xf32>
    %32 = arith.addf %22, %31 : vector<16x128xf32>
    %c1_49 = arith.constant 1 : index
    %c0_50 = arith.constant 0 : index
    %c0_51 = arith.constant 0 : index
    %33 = vector.load %arg2[%c1_49, %c0_50, %c0_51] : memref<3x16x128xf32, #tpu.memory_space<vmem>>, vector<1x16x128xf32>
    %34 = vector.shape_cast %33 : vector<1x16x128xf32> to vector<16x128xf32>
    %cst_52 = arith.constant dense<0.000000e+00> : vector<16x128xf32>
    %35 = tpu.matmul %28, %34, %cst_52 {dimension_numbers = #tpu.dot_dimension_numbers<[1], [0], [0], [1], [0, 0, 1, 1], [], []>} : vector<16x16xf32>, vector<16x128xf32>, vector<16x128xf32> -> vector<16x128xf32>
    %36 = arith.addf %26, %35 : vector<16x128xf32>
    %c0_53 = arith.constant 0 : index
    %c2 = arith.constant 2 : index
    %c0_54 = arith.constant 0 : index
    %37 = vector.load %arg17[%c0_53, %c2, %c0_54] : memref<2x18x16xf32, #tpu.memory_space<vmem>>, vector<1x16x16xf32>
    %38 = vector.shape_cast %37 : vector<1x16x16xf32> to vector<16x16xf32>
    %c2_55 = arith.constant 2 : index
    %c0_56 = arith.constant 0 : index
    %c0_57 = arith.constant 0 : index
    %39 = vector.load %arg1[%c2_55, %c0_56, %c0_57] : memref<3x16x128xf32, #tpu.memory_space<vmem>>, vector<1x16x128xf32>
    %40 = vector.shape_cast %39 : vector<1x16x128xf32> to vector<16x128xf32>
    %cst_58 = arith.constant dense<0.000000e+00> : vector<16x128xf32>
    %41 = tpu.matmul %38, %40, %cst_58 {dimension_numbers = #tpu.dot_dimension_numbers<[1], [0], [0], [1], [0, 0, 1, 1], [], []>} : vector<16x16xf32>, vector<16x128xf32>, vector<16x128xf32> -> vector<16x128xf32>
    %42 = arith.addf %32, %41 : vector<16x128xf32>
    %c2_59 = arith.constant 2 : index
    %c0_60 = arith.constant 0 : index
    %c0_61 = arith.constant 0 : index
    %43 = vector.load %arg2[%c2_59, %c0_60, %c0_61] : memref<3x16x128xf32, #tpu.memory_space<vmem>>, vector<1x16x128xf32>
    %44 = vector.shape_cast %43 : vector<1x16x128xf32> to vector<16x128xf32>
    %cst_62 = arith.constant dense<0.000000e+00> : vector<16x128xf32>
    %45 = tpu.matmul %38, %44, %cst_62 {dimension_numbers = #tpu.dot_dimension_numbers<[1], [0], [0], [1], [0, 0, 1, 1], [], []>} : vector<16x16xf32>, vector<16x128xf32>, vector<16x128xf32> -> vector<16x128xf32>
    %46 = arith.addf %36, %45 : vector<16x128xf32>
    %47 = arith.maximumf %42, %46 : vector<16x128xf32>
    %48 = vector.extract_strided_slice %47 {offsets = [0, 0], sizes = [1, 128], strides = [1, 1]} : vector<16x128xf32> to vector<1x128xf32>
    %49 = vector.extract_strided_slice %47 {offsets = [1, 0], sizes = [1, 128], strides = [1, 1]} : vector<16x128xf32> to vector<1x128xf32>
    %50 = arith.maximumf %48, %49 : vector<1x128xf32>
    %51 = vector.extract_strided_slice %47 {offsets = [2, 0], sizes = [1, 128], strides = [1, 1]} : vector<16x128xf32> to vector<1x128xf32>
    %52 = vector.extract_strided_slice %47 {offsets = [3, 0], sizes = [1, 128], strides = [1, 1]} : vector<16x128xf32> to vector<1x128xf32>
    %53 = arith.maximumf %51, %52 : vector<1x128xf32>
    %54 = vector.extract_strided_slice %47 {offsets = [4, 0], sizes = [1, 128], strides = [1, 1]} : vector<16x128xf32> to vector<1x128xf32>
    %55 = vector.extract_strided_slice %47 {offsets = [5, 0], sizes = [1, 128], strides = [1, 1]} : vector<16x128xf32> to vector<1x128xf32>
    %56 = arith.maximumf %54, %55 : vector<1x128xf32>
    %57 = vector.extract_strided_slice %47 {offsets = [6, 0], sizes = [1, 128], strides = [1, 1]} : vector<16x128xf32> to vector<1x128xf32>
    %58 = vector.extract_strided_slice %47 {offsets = [7, 0], sizes = [1, 128], strides = [1, 1]} : vector<16x128xf32> to vector<1x128xf32>
    %59 = arith.maximumf %57, %58 : vector<1x128xf32>
    %60 = vector.extract_strided_slice %47 {offsets = [8, 0], sizes = [1, 128], strides = [1, 1]} : vector<16x128xf32> to vector<1x128xf32>
    %61 = vector.extract_strided_slice %47 {offsets = [9, 0], sizes = [1, 128], strides = [1, 1]} : vector<16x128xf32> to vector<1x128xf32>
    %62 = arith.maximumf %60, %61 : vector<1x128xf32>
    %63 = vector.extract_strided_slice %47 {offsets = [10, 0], sizes = [1, 128], strides = [1, 1]} : vector<16x128xf32> to vector<1x128xf32>
    %64 = vector.extract_strided_slice %47 {offsets = [11, 0], sizes = [1, 128], strides = [1, 1]} : vector<16x128xf32> to vector<1x128xf32>
    %65 = arith.maximumf %63, %64 : vector<1x128xf32>
    %66 = vector.extract_strided_slice %47 {offsets = [12, 0], sizes = [1, 128], strides = [1, 1]} : vector<16x128xf32> to vector<1x128xf32>
    %67 = vector.extract_strided_slice %47 {offsets = [13, 0], sizes = [1, 128], strides = [1, 1]} : vector<16x128xf32> to vector<1x128xf32>
    %68 = arith.maximumf %66, %67 : vector<1x128xf32>
    %69 = vector.extract_strided_slice %47 {offsets = [14, 0], sizes = [1, 128], strides = [1, 1]} : vector<16x128xf32> to vector<1x128xf32>
    %70 = vector.extract_strided_slice %47 {offsets = [15, 0], sizes = [1, 128], strides = [1, 1]} : vector<16x128xf32> to vector<1x128xf32>
    %71 = arith.maximumf %69, %70 : vector<1x128xf32>
    %72 = tpu.concatenate %50, %53, %56, %59, %62, %65, %68, %71 in 0 : vector<1x128xf32>, vector<1x128xf32>, vector<1x128xf32>, vector<1x128xf32>, vector<1x128xf32>, vector<1x128xf32>, vector<1x128xf32>, vector<1x128xf32> -> vector<8x128xf32>
    %73 = vector.broadcast %10 : vector<1x128xf32> to vector<8x128xf32>
    %74 = arith.addf %72, %73 : vector<8x128xf32>
    %cst_63 = arith.constant 0.000000e+00 : f32
    %75 = vector.broadcast %cst_63 : f32 to vector<8x128xf32>
    %76 = arith.maximumf %74, %75 : vector<8x128xf32>
    %c0_64 = arith.constant 0 : index
    %c1_65 = arith.constant 1 : index
    %c0_66 = arith.constant 0 : index
    %77 = vector.load %arg18[%c0_64, %c1_65, %c0_66] : memref<2x10x128xf32, #tpu.memory_space<vmem>>, vector<1x8x128xf32>
    %78 = vector.shape_cast %77 : vector<1x8x128xf32> to vector<8x128xf32>
    %79 = vector.shape_cast %76 : vector<8x128xf32> to vector<1x8x128xf32>
    tpu.vector_store %arg18[%c0_64, %c1_65, %c0_66], %79 {strides = array<i32>} : memref<2x10x128xf32, #tpu.memory_space<vmem>>, vector<1x8x128xf32>,
    %cst_67 = arith.constant 0.000000e+00 : f32
    %80 = vector.broadcast %cst_67 : f32 to vector<8x36xf32>
    %cst_68 = arith.constant 0.000000e+00 : f32
    %81 = vector.broadcast %cst_68 : f32 to vector<8x36xf32>
    %c0_69 = arith.constant 0 : index
    %c0_70 = arith.constant 0 : index
    %c0_71 = arith.constant 0 : index
    %82 = vector.load %arg18[%c0_69, %c0_70, %c0_71] : memref<2x10x128xf32, #tpu.memory_space<vmem>>, vector<1x8x128xf32>
    %83 = vector.shape_cast %82 : vector<1x8x128xf32> to vector<8x128xf32>
    %c0_72 = arith.constant 0 : index
    %c0_73 = arith.constant 0 : index
    %c0_74 = arith.constant 0 : index
    %84 = vector.load %arg4[%c0_72, %c0_73, %c0_74] : memref<3x128x36xf32, #tpu.memory_space<vmem>>, vector<1x128x36xf32>
    %85 = vector.shape_cast %84 : vector<1x128x36xf32> to vector<128x36xf32>
    %cst_75 = arith.constant dense<0.000000e+00> : vector<8x36xf32>
    %86 = tpu.matmul %83, %85, %cst_75 {dimension_numbers = #tpu.dot_dimension_numbers<[1], [0], [0], [1], [0, 0, 1, 1], [], []>} : vector<8x128xf32>, vector<128x36xf32>, vector<8x36xf32> -> vector<8x36xf32>
    %87 = arith.addf %80, %86 : vector<8x36xf32>
    %c0_76 = arith.constant 0 : index
    %c0_77 = arith.constant 0 : index
    %c0_78 = arith.constant 0 : index
    %88 = vector.load %arg5[%c0_76, %c0_77, %c0_78] : memref<3x128x36xf32, #tpu.memory_space<vmem>>, vector<1x128x36xf32>
    %89 = vector.shape_cast %88 : vector<1x128x36xf32> to vector<128x36xf32>
    %cst_79 = arith.constant dense<0.000000e+00> : vector<8x36xf32>
    %90 = tpu.matmul %83, %89, %cst_79 {dimension_numbers = #tpu.dot_dimension_numbers<[1], [0], [0], [1], [0, 0, 1, 1], [], []>} : vector<8x128xf32>, vector<128x36xf32>, vector<8x36xf32> -> vector<8x36xf32>
    %91 = arith.addf %81, %90 : vector<8x36xf32>
    %c0_80 = arith.constant 0 : index
    %c1_81 = arith.constant 1 : index
    %c0_82 = arith.constant 0 : index
    %92 = vector.load %arg18[%c0_80, %c1_81, %c0_82] : memref<2x10x128xf32, #tpu.memory_space<vmem>>, vector<1x8x128xf32>
    %93 = vector.shape_cast %92 : vector<1x8x128xf32> to vector<8x128xf32>
    %c1_83 = arith.constant 1 : index
    %c0_84 = arith.constant 0 : index
    %c0_85 = arith.constant 0 : index
    %94 = vector.load %arg4[%c1_83, %c0_84, %c0_85] : memref<3x128x36xf32, #tpu.memory_space<vmem>>, vector<1x128x36xf32>
    %95 = vector.shape_cast %94 : vector<1x128x36xf32> to vector<128x36xf32>
    %cst_86 = arith.constant dense<0.000000e+00> : vector<8x36xf32>
    %96 = tpu.matmul %93, %95, %cst_86 {dimension_numbers = #tpu.dot_dimension_numbers<[1], [0], [0], [1], [0, 0, 1, 1], [], []>} : vector<8x128xf32>, vector<128x36xf32>, vector<8x36xf32> -> vector<8x36xf32>
    %97 = arith.addf %87, %96 : vector<8x36xf32>
    %c1_87 = arith.constant 1 : index
    %c0_88 = arith.constant 0 : index
    %c0_89 = arith.constant 0 : index
    %98 = vector.load %arg5[%c1_87, %c0_88, %c0_89] : memref<3x128x36xf32, #tpu.memory_space<vmem>>, vector<1x128x36xf32>
    %99 = vector.shape_cast %98 : vector<1x128x36xf32> to vector<128x36xf32>
    %cst_90 = arith.constant dense<0.000000e+00> : vector<8x36xf32>
    %100 = tpu.matmul %93, %99, %cst_90 {dimension_numbers = #tpu.dot_dimension_numbers<[1], [0], [0], [1], [0, 0, 1, 1], [], []>} : vector<8x128xf32>, vector<128x36xf32>, vector<8x36xf32> -> vector<8x36xf32>
    %101 = arith.addf %91, %100 : vector<8x36xf32>
    %c0_91 = arith.constant 0 : index
    %c2_92 = arith.constant 2 : index
    %c0_93 = arith.constant 0 : index
    %102 = vector.load %arg18[%c0_91, %c2_92, %c0_93] : memref<2x10x128xf32, #tpu.memory_space<vmem>>, vector<1x8x128xf32>
    %103 = vector.shape_cast %102 : vector<1x8x128xf32> to vector<8x128xf32>
    %c2_94 = arith.constant 2 : index
    %c0_95 = arith.constant 0 : index
    %c0_96 = arith.constant 0 : index
    %104 = vector.load %arg4[%c2_94, %c0_95, %c0_96] : memref<3x128x36xf32, #tpu.memory_space<vmem>>, vector<1x128x36xf32>
    %105 = vector.shape_cast %104 : vector<1x128x36xf32> to vector<128x36xf32>
    %cst_97 = arith.constant dense<0.000000e+00> : vector<8x36xf32>
    %106 = tpu.matmul %103, %105, %cst_97 {dimension_numbers = #tpu.dot_dimension_numbers<[1], [0], [0], [1], [0, 0, 1, 1], [], []>} : vector<8x128xf32>, vector<128x36xf32>, vector<8x36xf32> -> vector<8x36xf32>
    %107 = arith.addf %97, %106 : vector<8x36xf32>
    %c2_98 = arith.constant 2 : index
    %c0_99 = arith.constant 0 : index
    %c0_100 = arith.constant 0 : index
    %108 = vector.load %arg5[%c2_98, %c0_99, %c0_100] : memref<3x128x36xf32, #tpu.memory_space<vmem>>, vector<1x128x36xf32>
    %109 = vector.shape_cast %108 : vector<1x128x36xf32> to vector<128x36xf32>
    %cst_101 = arith.constant dense<0.000000e+00> : vector<8x36xf32>
    %110 = tpu.matmul %103, %109, %cst_101 {dimension_numbers = #tpu.dot_dimension_numbers<[1], [0], [0], [1], [0, 0, 1, 1], [], []>} : vector<8x128xf32>, vector<128x36xf32>, vector<8x36xf32> -> vector<8x36xf32>
    %111 = arith.addf %101, %110 : vector<8x36xf32>
    %112 = arith.maximumf %107, %111 : vector<8x36xf32>
    %113 = vector.extract_strided_slice %112 {offsets = [0, 0], sizes = [1, 36], strides = [1, 1]} : vector<8x36xf32> to vector<1x36xf32>
    %114 = vector.extract_strided_slice %112 {offsets = [1, 0], sizes = [1, 36], strides = [1, 1]} : vector<8x36xf32> to vector<1x36xf32>
    %115 = arith.maximumf %113, %114 : vector<1x36xf32>
    %116 = arith.addf %115, %11 : vector<1x36xf32>
    %cst_102 = arith.constant 0.000000e+00 : f32
    %117 = vector.broadcast %cst_102 : f32 to vector<1x36xf32>
    %118 = arith.maximumf %116, %117 : vector<1x36xf32>
    %119 = vector.extract_strided_slice %112 {offsets = [2, 0], sizes = [1, 36], strides = [1, 1]} : vector<8x36xf32> to vector<1x36xf32>
    %120 = vector.extract_strided_slice %112 {offsets = [3, 0], sizes = [1, 36], strides = [1, 1]} : vector<8x36xf32> to vector<1x36xf32>
    %121 = arith.maximumf %119, %120 : vector<1x36xf32>
    %122 = arith.addf %121, %11 : vector<1x36xf32>
    %cst_103 = arith.constant 0.000000e+00 : f32
    %123 = vector.broadcast %cst_103 : f32 to vector<1x36xf32>
    %124 = arith.maximumf %122, %123 : vector<1x36xf32>
    %125 = vector.extract_strided_slice %112 {offsets = [4, 0], sizes = [1, 36], strides = [1, 1]} : vector<8x36xf32> to vector<1x36xf32>
    %126 = vector.extract_strided_slice %112 {offsets = [5, 0], sizes = [1, 36], strides = [1, 1]} : vector<8x36xf32> to vector<1x36xf32>
    %127 = arith.maximumf %125, %126 : vector<1x36xf32>
    %128 = arith.addf %127, %11 : vector<1x36xf32>
    %cst_104 = arith.constant 0.000000e+00 : f32
    %129 = vector.broadcast %cst_104 : f32 to vector<1x36xf32>
    %130 = arith.maximumf %128, %129 : vector<1x36xf32>
    %131 = vector.extract_strided_slice %112 {offsets = [6, 0], sizes = [1, 36], strides = [1, 1]} : vector<8x36xf32> to vector<1x36xf32>
    %132 = vector.extract_strided_slice %112 {offsets = [7, 0], sizes = [1, 36], strides = [1, 1]} : vector<8x36xf32> to vector<1x36xf32>
    %133 = arith.maximumf %131, %132 : vector<1x36xf32>
    %134 = arith.addf %133, %11 : vector<1x36xf32>
    %cst_105 = arith.constant 0.000000e+00 : f32
    %135 = vector.broadcast %cst_105 : f32 to vector<1x36xf32>
    %136 = arith.maximumf %134, %135 : vector<1x36xf32>
    %c0_106 = arith.constant 0 : index
    %c0_107 = arith.constant 0 : index
    %c0_108 = arith.constant 0 : index
    %137 = vector.load %arg7[%c0_106, %c0_107, %c0_108] : memref<4x36x10xf32, #tpu.memory_space<vmem>>, vector<1x36x10xf32>
    %138 = vector.shape_cast %137 : vector<1x36x10xf32> to vector<36x10xf32>
    %cst_109 = arith.constant dense<0.000000e+00> : vector<1x10xf32>
    %139 = tpu.matmul %118, %138, %cst_109 {dimension_numbers = #tpu.dot_dimension_numbers<[1], [0], [0], [1], [0, 0, 1, 1], [], []>} : vector<1x36xf32>, vector<36x10xf32>, vector<1x10xf32> -> vector<1x10xf32>
    %140 = arith.addf %14, %139 : vector<1x10xf32>
    %c1_110 = arith.constant 1 : index
    %c0_111 = arith.constant 0 : index
    %c0_112 = arith.constant 0 : index
    %141 = vector.load %arg7[%c1_110, %c0_111, %c0_112] : memref<4x36x10xf32, #tpu.memory_space<vmem>>, vector<1x36x10xf32>
    %142 = vector.shape_cast %141 : vector<1x36x10xf32> to vector<36x10xf32>
    %cst_113 = arith.constant dense<0.000000e+00> : vector<1x10xf32>
    %143 = tpu.matmul %124, %142, %cst_113 {dimension_numbers = #tpu.dot_dimension_numbers<[1], [0], [0], [1], [0, 0, 1, 1], [], []>} : vector<1x36xf32>, vector<36x10xf32>, vector<1x10xf32> -> vector<1x10xf32>
    %144 = arith.addf %140, %143 : vector<1x10xf32>
    %c2_114 = arith.constant 2 : index
    %c0_115 = arith.constant 0 : index
    %c0_116 = arith.constant 0 : index
    %145 = vector.load %arg7[%c2_114, %c0_115, %c0_116] : memref<4x36x10xf32, #tpu.memory_space<vmem>>, vector<1x36x10xf32>
    %146 = vector.shape_cast %145 : vector<1x36x10xf32> to vector<36x10xf32>
    %cst_117 = arith.constant dense<0.000000e+00> : vector<1x10xf32>
    %147 = tpu.matmul %130, %146, %cst_117 {dimension_numbers = #tpu.dot_dimension_numbers<[1], [0], [0], [1], [0, 0, 1, 1], [], []>} : vector<1x36xf32>, vector<36x10xf32>, vector<1x10xf32> -> vector<1x10xf32>
    %148 = arith.addf %144, %147 : vector<1x10xf32>
    %c3 = arith.constant 3 : index
    %c0_118 = arith.constant 0 : index
    %c0_119 = arith.constant 0 : index
    %149 = vector.load %arg7[%c3, %c0_118, %c0_119] : memref<4x36x10xf32, #tpu.memory_space<vmem>>, vector<1x36x10xf32>
    %150 = vector.shape_cast %149 : vector<1x36x10xf32> to vector<36x10xf32>
    %cst_120 = arith.constant dense<0.000000e+00> : vector<1x10xf32>
    %151 = tpu.matmul %136, %150, %cst_120 {dimension_numbers = #tpu.dot_dimension_numbers<[1], [0], [0], [1], [0, 0, 1, 1], [], []>} : vector<1x36xf32>, vector<36x10xf32>, vector<1x10xf32> -> vector<1x10xf32>
    %152 = arith.addf %148, %151 : vector<1x10xf32>
    %c0_121 = arith.constant 0 : index
    %c0_122 = arith.constant 0 : index
    %153 = vector.load %arg16[%c0_121, %c0_122] : memref<2x10xf32, #tpu.memory_space<vmem>>, vector<1x10xf32>
    tpu.vector_store %arg16[%c0_121, %c0_122], %152 {strides = array<i32>} : memref<2x10xf32, #tpu.memory_space<vmem>>, vector<1x10xf32>,
    %c0_123 = arith.constant 0 : index
    %c0_124 = arith.constant 0 : index
    %c0_125 = arith.constant 0 : index
    %154 = vector.load %arg9[%c0_123, %c0_124, %c0_125] : memref<4x10x36xf32, #tpu.memory_space<vmem>>, vector<1x10x36xf32>
    %155 = vector.shape_cast %154 : vector<1x10x36xf32> to vector<10x36xf32>
    %cst_126 = arith.constant dense<0.000000e+00> : vector<1x36xf32>
    %156 = tpu.matmul %152, %155, %cst_126 {dimension_numbers = #tpu.dot_dimension_numbers<[1], [0], [0], [1], [0, 0, 1, 1], [], []>} : vector<1x10xf32>, vector<10x36xf32>, vector<1x36xf32> -> vector<1x36xf32>
    %c0_127 = arith.constant 0 : index
    %c0_128 = arith.constant 0 : index
    %c0_129 = arith.constant 0 : index
    %157 = vector.load %arg10[%c0_127, %c0_128, %c0_129] : memref<4x1x36xf32, #tpu.memory_space<vmem>>, vector<1x1x36xf32>
    %158 = vector.shape_cast %157 : vector<1x1x36xf32> to vector<1x36xf32>
    %159 = arith.addf %156, %158 : vector<1x36xf32>
    %c0_130 = arith.constant 0 : index
    %c1_131 = arith.constant 1 : index
    %c0_132 = arith.constant 0 : index
    %160 = vector.load %arg19[%c0_130, %c1_131, %c0_132] : memref<2x10x36xf32, #tpu.memory_space<vmem>>, vector<1x1x36xf32>
    %161 = vector.shape_cast %160 : vector<1x1x36xf32> to vector<1x36xf32>
    %162 = vector.shape_cast %159 : vector<1x36xf32> to vector<1x1x36xf32>
    tpu.vector_store %arg19[%c0_130, %c1_131, %c0_132], %162 {strides = array<i32>} : memref<2x10x36xf32, #tpu.memory_space<vmem>>, vector<1x1x36xf32>,
    %c1_133 = arith.constant 1 : index
    %c0_134 = arith.constant 0 : index
    %c0_135 = arith.constant 0 : index
    %163 = vector.load %arg9[%c1_133, %c0_134, %c0_135] : memref<4x10x36xf32, #tpu.memory_space<vmem>>, vector<1x10x36xf32>
    %164 = vector.shape_cast %163 : vector<1x10x36xf32> to vector<10x36xf32>
    %cst_136 = arith.constant dense<0.000000e+00> : vector<1x36xf32>
    %165 = tpu.matmul %152, %164, %cst_136 {dimension_numbers = #tpu.dot_dimension_numbers<[1], [0], [0], [1], [0, 0, 1, 1], [], []>} : vector<1x10xf32>, vector<10x36xf32>, vector<1x36xf32> -> vector<1x36xf32>
    %c1_137 = arith.constant 1 : index
    %c0_138 = arith.constant 0 : index
    %c0_139 = arith.constant 0 : index
    %166 = vector.load %arg10[%c1_137, %c0_138, %c0_139] : memref<4x1x36xf32, #tpu.memory_space<vmem>>, vector<1x1x36xf32>
    %167 = vector.shape_cast %166 : vector<1x1x36xf32> to vector<1x36xf32>
    %168 = arith.addf %165, %167 : vector<1x36xf32>
    %c0_140 = arith.constant 0 : index
    %c3_141 = arith.constant 3 : index
    %c0_142 = arith.constant 0 : index
    %169 = vector.load %arg19[%c0_140, %c3_141, %c0_142] : memref<2x10x36xf32, #tpu.memory_space<vmem>>, vector<1x1x36xf32>
    %170 = vector.shape_cast %169 : vector<1x1x36xf32> to vector<1x36xf32>
    %171 = vector.shape_cast %168 : vector<1x36xf32> to vector<1x1x36xf32>
    tpu.vector_store %arg19[%c0_140, %c3_141, %c0_142], %171 {strides = array<i32>} : memref<2x10x36xf32, #tpu.memory_space<vmem>>, vector<1x1x36xf32>,
    %c2_143 = arith.constant 2 : index
    %c0_144 = arith.constant 0 : index
    %c0_145 = arith.constant 0 : index
    %172 = vector.load %arg9[%c2_143, %c0_144, %c0_145] : memref<4x10x36xf32, #tpu.memory_space<vmem>>, vector<1x10x36xf32>
    %173 = vector.shape_cast %172 : vector<1x10x36xf32> to vector<10x36xf32>
    %cst_146 = arith.constant dense<0.000000e+00> : vector<1x36xf32>
    %174 = tpu.matmul %152, %173, %cst_146 {dimension_numbers = #tpu.dot_dimension_numbers<[1], [0], [0], [1], [0, 0, 1, 1], [], []>} : vector<1x10xf32>, vector<10x36xf32>, vector<1x36xf32> -> vector<1x36xf32>
    %c2_147 = arith.constant 2 : index
    %c0_148 = arith.constant 0 : index
    %c0_149 = arith.constant 0 : index
    %175 = vector.load %arg10[%c2_147, %c0_148, %c0_149] : memref<4x1x36xf32, #tpu.memory_space<vmem>>, vector<1x1x36xf32>
    %176 = vector.shape_cast %175 : vector<1x1x36xf32> to vector<1x36xf32>
    %177 = arith.addf %174, %176 : vector<1x36xf32>
    %c0_150 = arith.constant 0 : index
    %c5 = arith.constant 5 : index
    %c0_151 = arith.constant 0 : index
    %178 = vector.load %arg19[%c0_150, %c5, %c0_151] : memref<2x10x36xf32, #tpu.memory_space<vmem>>, vector<1x1x36xf32>
    %179 = vector.shape_cast %178 : vector<1x1x36xf32> to vector<1x36xf32>
    %180 = vector.shape_cast %177 : vector<1x36xf32> to vector<1x1x36xf32>
    tpu.vector_store %arg19[%c0_150, %c5, %c0_151], %180 {strides = array<i32>} : memref<2x10x36xf32, #tpu.memory_space<vmem>>, vector<1x1x36xf32>,
    %c3_152 = arith.constant 3 : index
    %c0_153 = arith.constant 0 : index
    %c0_154 = arith.constant 0 : index
    %181 = vector.load %arg9[%c3_152, %c0_153, %c0_154] : memref<4x10x36xf32, #tpu.memory_space<vmem>>, vector<1x10x36xf32>
    %182 = vector.shape_cast %181 : vector<1x10x36xf32> to vector<10x36xf32>
    %cst_155 = arith.constant dense<0.000000e+00> : vector<1x36xf32>
    %183 = tpu.matmul %152, %182, %cst_155 {dimension_numbers = #tpu.dot_dimension_numbers<[1], [0], [0], [1], [0, 0, 1, 1], [], []>} : vector<1x10xf32>, vector<10x36xf32>, vector<1x36xf32> -> vector<1x36xf32>
    %c3_156 = arith.constant 3 : index
    %c0_157 = arith.constant 0 : index
    %c0_158 = arith.constant 0 : index
    %184 = vector.load %arg10[%c3_156, %c0_157, %c0_158] : memref<4x1x36xf32, #tpu.memory_space<vmem>>, vector<1x1x36xf32>
    %185 = vector.shape_cast %184 : vector<1x1x36xf32> to vector<1x36xf32>
    %186 = arith.addf %183, %185 : vector<1x36xf32>
    %c0_159 = arith.constant 0 : index
    %c7 = arith.constant 7 : index
    %c0_160 = arith.constant 0 : index
    %187 = vector.load %arg19[%c0_159, %c7, %c0_160] : memref<2x10x36xf32, #tpu.memory_space<vmem>>, vector<1x1x36xf32>
    %188 = vector.shape_cast %187 : vector<1x1x36xf32> to vector<1x36xf32>
    %189 = vector.shape_cast %186 : vector<1x36xf32> to vector<1x1x36xf32>
    tpu.vector_store %arg19[%c0_159, %c7, %c0_160], %189 {strides = array<i32>} : memref<2x10x36xf32, #tpu.memory_space<vmem>>, vector<1x1x36xf32>,
    %cst_161 = arith.constant 0.000000e+00 : f32
    %190 = vector.broadcast %cst_161 : f32 to vector<8x128xf32>
    %c0_162 = arith.constant 0 : index
    %c0_163 = arith.constant 0 : index
    %c0_164 = arith.constant 0 : index
    %191 = vector.load %arg19[%c0_162, %c0_163, %c0_164] : memref<2x10x36xf32, #tpu.memory_space<vmem>>, vector<1x8x36xf32>
    %192 = vector.shape_cast %191 : vector<1x8x36xf32> to vector<8x36xf32>
    %c0_165 = arith.constant 0 : index
    %c0_166 = arith.constant 0 : index
    %c0_167 = arith.constant 0 : index
    %193 = vector.load %arg11[%c0_165, %c0_166, %c0_167] : memref<3x36x128xf32, #tpu.memory_space<vmem>>, vector<1x36x128xf32>
    %194 = vector.shape_cast %193 : vector<1x36x128xf32> to vector<36x128xf32>
    %cst_168 = arith.constant dense<0.000000e+00> : vector<8x128xf32>
    %195 = tpu.matmul %192, %194, %cst_168 {dimension_numbers = #tpu.dot_dimension_numbers<[1], [0], [0], [1], [0, 0, 1, 1], [], []>} : vector<8x36xf32>, vector<36x128xf32>, vector<8x128xf32> -> vector<8x128xf32>
    %196 = arith.addf %190, %195 : vector<8x128xf32>
    %c0_169 = arith.constant 0 : index
    %c1_170 = arith.constant 1 : index
    %c0_171 = arith.constant 0 : index
    %197 = vector.load %arg19[%c0_169, %c1_170, %c0_171] : memref<2x10x36xf32, #tpu.memory_space<vmem>>, vector<1x8x36xf32>
    %198 = vector.shape_cast %197 : vector<1x8x36xf32> to vector<8x36xf32>
    %c1_172 = arith.constant 1 : index
    %c0_173 = arith.constant 0 : index
    %c0_174 = arith.constant 0 : index
    %199 = vector.load %arg11[%c1_172, %c0_173, %c0_174] : memref<3x36x128xf32, #tpu.memory_space<vmem>>, vector<1x36x128xf32>
    %200 = vector.shape_cast %199 : vector<1x36x128xf32> to vector<36x128xf32>
    %cst_175 = arith.constant dense<0.000000e+00> : vector<8x128xf32>
    %201 = tpu.matmul %198, %200, %cst_175 {dimension_numbers = #tpu.dot_dimension_numbers<[1], [0], [0], [1], [0, 0, 1, 1], [], []>} : vector<8x36xf32>, vector<36x128xf32>, vector<8x128xf32> -> vector<8x128xf32>
    %202 = arith.addf %196, %201 : vector<8x128xf32>
    %c0_176 = arith.constant 0 : index
    %c2_177 = arith.constant 2 : index
    %c0_178 = arith.constant 0 : index
    %203 = vector.load %arg19[%c0_176, %c2_177, %c0_178] : memref<2x10x36xf32, #tpu.memory_space<vmem>>, vector<1x8x36xf32>
    %204 = vector.shape_cast %203 : vector<1x8x36xf32> to vector<8x36xf32>
    %c2_179 = arith.constant 2 : index
    %c0_180 = arith.constant 0 : index
    %c0_181 = arith.constant 0 : index
    %205 = vector.load %arg11[%c2_179, %c0_180, %c0_181] : memref<3x36x128xf32, #tpu.memory_space<vmem>>, vector<1x36x128xf32>
    %206 = vector.shape_cast %205 : vector<1x36x128xf32> to vector<36x128xf32>
    %cst_182 = arith.constant dense<0.000000e+00> : vector<8x128xf32>
    %207 = tpu.matmul %204, %206, %cst_182 {dimension_numbers = #tpu.dot_dimension_numbers<[1], [0], [0], [1], [0, 0, 1, 1], [], []>} : vector<8x36xf32>, vector<36x128xf32>, vector<8x128xf32> -> vector<8x128xf32>
    %208 = arith.addf %202, %207 : vector<8x128xf32>
    %209 = vector.broadcast %12 : vector<1x128xf32> to vector<8x128xf32>
    %210 = arith.addf %208, %209 : vector<8x128xf32>
    %cst_183 = arith.constant 0.000000e+00 : f32
    %211 = vector.broadcast %cst_183 : f32 to vector<8x128xf32>
    %212 = arith.maximumf %210, %211 : vector<8x128xf32>
    %213 = vector.extract_strided_slice %212 {offsets = [0, 0], sizes = [1, 128], strides = [1, 1]} : vector<8x128xf32> to vector<1x128xf32>
    %c0_184 = arith.constant 0 : index
    %c3_185 = arith.constant 3 : index
    %c0_186 = arith.constant 0 : index
    %214 = vector.load %arg20[%c0_184, %c3_185, %c0_186] : memref<2x21x128xf32, #tpu.memory_space<vmem>>, vector<1x1x128xf32>
    %215 = vector.shape_cast %214 : vector<1x1x128xf32> to vector<1x128xf32>
    %216 = vector.shape_cast %213 : vector<1x128xf32> to vector<1x1x128xf32>
    tpu.vector_store %arg20[%c0_184, %c3_185, %c0_186], %216 {strides = array<i32>} : memref<2x21x128xf32, #tpu.memory_space<vmem>>, vector<1x1x128xf32>,
    %217 = vector.extract_strided_slice %212 {offsets = [1, 0], sizes = [1, 128], strides = [1, 1]} : vector<8x128xf32> to vector<1x128xf32>
    %c0_187 = arith.constant 0 : index
    %c5_188 = arith.constant 5 : index
    %c0_189 = arith.constant 0 : index
    %218 = vector.load %arg20[%c0_187, %c5_188, %c0_189] : memref<2x21x128xf32, #tpu.memory_space<vmem>>, vector<1x1x128xf32>
    %219 = vector.shape_cast %218 : vector<1x1x128xf32> to vector<1x128xf32>
    %220 = vector.shape_cast %217 : vector<1x128xf32> to vector<1x1x128xf32>
    tpu.vector_store %arg20[%c0_187, %c5_188, %c0_189], %220 {strides = array<i32>} : memref<2x21x128xf32, #tpu.memory_space<vmem>>, vector<1x1x128xf32>,
    %221 = vector.extract_strided_slice %212 {offsets = [2, 0], sizes = [1, 128], strides = [1, 1]} : vector<8x128xf32> to vector<1x128xf32>
    %c0_190 = arith.constant 0 : index
    %c7_191 = arith.constant 7 : index
    %c0_192 = arith.constant 0 : index
    %222 = vector.load %arg20[%c0_190, %c7_191, %c0_192] : memref<2x21x128xf32, #tpu.memory_space<vmem>>, vector<1x1x128xf32>
    %223 = vector.shape_cast %222 : vector<1x1x128xf32> to vector<1x128xf32>
    %224 = vector.shape_cast %221 : vector<1x128xf32> to vector<1x1x128xf32>
    tpu.vector_store %arg20[%c0_190, %c7_191, %c0_192], %224 {strides = array<i32>} : memref<2x21x128xf32, #tpu.memory_space<vmem>>, vector<1x1x128xf32>,
    %225 = vector.extract_strided_slice %212 {offsets = [3, 0], sizes = [1, 128], strides = [1, 1]} : vector<8x128xf32> to vector<1x128xf32>
    %c0_193 = arith.constant 0 : index
    %c9 = arith.constant 9 : index
    %c0_194 = arith.constant 0 : index
    %226 = vector.load %arg20[%c0_193, %c9, %c0_194] : memref<2x21x128xf32, #tpu.memory_space<vmem>>, vector<1x1x128xf32>
    %227 = vector.shape_cast %226 : vector<1x1x128xf32> to vector<1x128xf32>
    %228 = vector.shape_cast %225 : vector<1x128xf32> to vector<1x1x128xf32>
    tpu.vector_store %arg20[%c0_193, %c9, %c0_194], %228 {strides = array<i32>} : memref<2x21x128xf32, #tpu.memory_space<vmem>>, vector<1x1x128xf32>,
    %229 = vector.extract_strided_slice %212 {offsets = [4, 0], sizes = [1, 128], strides = [1, 1]} : vector<8x128xf32> to vector<1x128xf32>
    %c0_195 = arith.constant 0 : index
    %c11 = arith.constant 11 : index
    %c0_196 = arith.constant 0 : index
    %230 = vector.load %arg20[%c0_195, %c11, %c0_196] : memref<2x21x128xf32, #tpu.memory_space<vmem>>, vector<1x1x128xf32>
    %231 = vector.shape_cast %230 : vector<1x1x128xf32> to vector<1x128xf32>
    %232 = vector.shape_cast %229 : vector<1x128xf32> to vector<1x1x128xf32>
    tpu.vector_store %arg20[%c0_195, %c11, %c0_196], %232 {strides = array<i32>} : memref<2x21x128xf32, #tpu.memory_space<vmem>>, vector<1x1x128xf32>,
    %233 = vector.extract_strided_slice %212 {offsets = [5, 0], sizes = [1, 128], strides = [1, 1]} : vector<8x128xf32> to vector<1x128xf32>
    %c0_197 = arith.constant 0 : index
    %c13 = arith.constant 13 : index
    %c0_198 = arith.constant 0 : index
    %234 = vector.load %arg20[%c0_197, %c13, %c0_198] : memref<2x21x128xf32, #tpu.memory_space<vmem>>, vector<1x1x128xf32>
    %235 = vector.shape_cast %234 : vector<1x1x128xf32> to vector<1x128xf32>
    %236 = vector.shape_cast %233 : vector<1x128xf32> to vector<1x1x128xf32>
    tpu.vector_store %arg20[%c0_197, %c13, %c0_198], %236 {strides = array<i32>} : memref<2x21x128xf32, #tpu.memory_space<vmem>>, vector<1x1x128xf32>,
    %237 = vector.extract_strided_slice %212 {offsets = [6, 0], sizes = [1, 128], strides = [1, 1]} : vector<8x128xf32> to vector<1x128xf32>
    %c0_199 = arith.constant 0 : index
    %c15 = arith.constant 15 : index
    %c0_200 = arith.constant 0 : index
    %238 = vector.load %arg20[%c0_199, %c15, %c0_200] : memref<2x21x128xf32, #tpu.memory_space<vmem>>, vector<1x1x128xf32>
    %239 = vector.shape_cast %238 : vector<1x1x128xf32> to vector<1x128xf32>
    %240 = vector.shape_cast %237 : vector<1x128xf32> to vector<1x1x128xf32>
    tpu.vector_store %arg20[%c0_199, %c15, %c0_200], %240 {strides = array<i32>} : memref<2x21x128xf32, #tpu.memory_space<vmem>>, vector<1x1x128xf32>,
    %241 = vector.extract_strided_slice %212 {offsets = [7, 0], sizes = [1, 128], strides = [1, 1]} : vector<8x128xf32> to vector<1x128xf32>
    %c0_201 = arith.constant 0 : index
    %c17 = arith.constant 17 : index
    %c0_202 = arith.constant 0 : index
    %242 = vector.load %arg20[%c0_201, %c17, %c0_202] : memref<2x21x128xf32, #tpu.memory_space<vmem>>, vector<1x1x128xf32>
    %243 = vector.shape_cast %242 : vector<1x1x128xf32> to vector<1x128xf32>
    %244 = vector.shape_cast %241 : vector<1x128xf32> to vector<1x1x128xf32>
    tpu.vector_store %arg20[%c0_201, %c17, %c0_202], %244 {strides = array<i32>} : memref<2x21x128xf32, #tpu.memory_space<vmem>>, vector<1x1x128xf32>,
    %cst_203 = arith.constant 0.000000e+00 : f32
    %245 = vector.broadcast %cst_203 : f32 to vector<17x17xf32>
    %c0_204 = arith.constant 0 : index
    %c0_205 = arith.constant 0 : index
    %c0_206 = arith.constant 0 : index
    %246 = vector.load %arg20[%c0_204, %c0_205, %c0_206] : memref<2x21x128xf32, #tpu.memory_space<vmem>>, vector<1x17x128xf32>
    %247 = vector.shape_cast %246 : vector<1x17x128xf32> to vector<17x128xf32>
    %c0_207 = arith.constant 0 : index
    %c0_208 = arith.constant 0 : index
    %c0_209 = arith.constant 0 : index
    %248 = vector.load %arg13[%c0_207, %c0_208, %c0_209] : memref<5x128x17xf32, #tpu.memory_space<vmem>>, vector<1x128x17xf32>
    %249 = vector.shape_cast %248 : vector<1x128x17xf32> to vector<128x17xf32>
    %cst_210 = arith.constant dense<0.000000e+00> : vector<17x17xf32>
    %250 = tpu.matmul %247, %249, %cst_210 {dimension_numbers = #tpu.dot_dimension_numbers<[1], [0], [0], [1], [0, 0, 1, 1], [], []>} : vector<17x128xf32>, vector<128x17xf32>, vector<17x17xf32> -> vector<17x17xf32>
    %251 = arith.addf %245, %250 : vector<17x17xf32>
    %c0_211 = arith.constant 0 : index
    %c1_212 = arith.constant 1 : index
    %c0_213 = arith.constant 0 : index
    %252 = vector.load %arg20[%c0_211, %c1_212, %c0_213] : memref<2x21x128xf32, #tpu.memory_space<vmem>>, vector<1x17x128xf32>
    %253 = vector.shape_cast %252 : vector<1x17x128xf32> to vector<17x128xf32>
    %c1_214 = arith.constant 1 : index
    %c0_215 = arith.constant 0 : index
    %c0_216 = arith.constant 0 : index
    %254 = vector.load %arg13[%c1_214, %c0_215, %c0_216] : memref<5x128x17xf32, #tpu.memory_space<vmem>>, vector<1x128x17xf32>
    %255 = vector.shape_cast %254 : vector<1x128x17xf32> to vector<128x17xf32>
    %cst_217 = arith.constant dense<0.000000e+00> : vector<17x17xf32>
    %256 = tpu.matmul %253, %255, %cst_217 {dimension_numbers = #tpu.dot_dimension_numbers<[1], [0], [0], [1], [0, 0, 1, 1], [], []>} : vector<17x128xf32>, vector<128x17xf32>, vector<17x17xf32> -> vector<17x17xf32>
    %257 = arith.addf %251, %256 : vector<17x17xf32>
    %c0_218 = arith.constant 0 : index
    %c2_219 = arith.constant 2 : index
    %c0_220 = arith.constant 0 : index
    %258 = vector.load %arg20[%c0_218, %c2_219, %c0_220] : memref<2x21x128xf32, #tpu.memory_space<vmem>>, vector<1x17x128xf32>
    %259 = vector.shape_cast %258 : vector<1x17x128xf32> to vector<17x128xf32>
    %c2_221 = arith.constant 2 : index
    %c0_222 = arith.constant 0 : index
    %c0_223 = arith.constant 0 : index
    %260 = vector.load %arg13[%c2_221, %c0_222, %c0_223] : memref<5x128x17xf32, #tpu.memory_space<vmem>>, vector<1x128x17xf32>
    %261 = vector.shape_cast %260 : vector<1x128x17xf32> to vector<128x17xf32>
    %cst_224 = arith.constant dense<0.000000e+00> : vector<17x17xf32>
    %262 = tpu.matmul %259, %261, %cst_224 {dimension_numbers = #tpu.dot_dimension_numbers<[1], [0], [0], [1], [0, 0, 1, 1], [], []>} : vector<17x128xf32>, vector<128x17xf32>, vector<17x17xf32> -> vector<17x17xf32>
    %263 = arith.addf %257, %262 : vector<17x17xf32>
    %c0_225 = arith.constant 0 : index
    %c3_226 = arith.constant 3 : index
    %c0_227 = arith.constant 0 : index
    %264 = vector.load %arg20[%c0_225, %c3_226, %c0_227] : memref<2x21x128xf32, #tpu.memory_space<vmem>>, vector<1x17x128xf32>
    %265 = vector.shape_cast %264 : vector<1x17x128xf32> to vector<17x128xf32>
    %c3_228 = arith.constant 3 : index
    %c0_229 = arith.constant 0 : index
    %c0_230 = arith.constant 0 : index
    %266 = vector.load %arg13[%c3_228, %c0_229, %c0_230] : memref<5x128x17xf32, #tpu.memory_space<vmem>>, vector<1x128x17xf32>
    %267 = vector.shape_cast %266 : vector<1x128x17xf32> to vector<128x17xf32>
    %cst_231 = arith.constant dense<0.000000e+00> : vector<17x17xf32>
    %268 = tpu.matmul %265, %267, %cst_231 {dimension_numbers = #tpu.dot_dimension_numbers<[1], [0], [0], [1], [0, 0, 1, 1], [], []>} : vector<17x128xf32>, vector<128x17xf32>, vector<17x17xf32> -> vector<17x17xf32>
    %269 = arith.addf %263, %268 : vector<17x17xf32>
    %c0_232 = arith.constant 0 : index
    %c4 = arith.constant 4 : index
    %c0_233 = arith.constant 0 : index
    %270 = vector.load %arg20[%c0_232, %c4, %c0_233] : memref<2x21x128xf32, #tpu.memory_space<vmem>>, vector<1x17x128xf32>
    %271 = vector.shape_cast %270 : vector<1x17x128xf32> to vector<17x128xf32>
    %c4_234 = arith.constant 4 : index
    %c0_235 = arith.constant 0 : index
    %c0_236 = arith.constant 0 : index
    %272 = vector.load %arg13[%c4_234, %c0_235, %c0_236] : memref<5x128x17xf32, #tpu.memory_space<vmem>>, vector<1x128x17xf32>
    %273 = vector.shape_cast %272 : vector<1x128x17xf32> to vector<128x17xf32>
    %cst_237 = arith.constant dense<0.000000e+00> : vector<17x17xf32>
    %274 = tpu.matmul %271, %273, %cst_237 {dimension_numbers = #tpu.dot_dimension_numbers<[1], [0], [0], [1], [0, 0, 1, 1], [], []>} : vector<17x128xf32>, vector<128x17xf32>, vector<17x17xf32> -> vector<17x17xf32>
    %275 = arith.addf %269, %274 : vector<17x17xf32>
    %276 = vector.broadcast %13 : vector<1x1xf32> to vector<17x17xf32>
    %277 = arith.addf %275, %276 : vector<17x17xf32>
    %c0_238 = arith.constant 0 : index
    %c0_239 = arith.constant 0 : index
    %c0_240 = arith.constant 0 : index
    %278 = vector.load %arg15[%c0_238, %c0_239, %c0_240] : memref<2x17x17xf32, #tpu.memory_space<vmem>>, vector<1x17x17xf32>
    %279 = vector.shape_cast %278 : vector<1x17x17xf32> to vector<17x17xf32>
    %280 = vector.shape_cast %277 : vector<17x17xf32> to vector<1x17x17xf32>
    tpu.vector_store %arg15[%c0_238, %c0_239, %c0_240], %280 {strides = array<i32>} : memref<2x17x17xf32, #tpu.memory_space<vmem>>, vector<1x17x17xf32>,
    %cst_241 = arith.constant 0.000000e+00 : f32
    %281 = vector.broadcast %cst_241 : f32 to vector<16x128xf32>
    %cst_242 = arith.constant 0.000000e+00 : f32
    %282 = vector.broadcast %cst_242 : f32 to vector<16x128xf32>
    %c1_243 = arith.constant 1 : index
    %c0_244 = arith.constant 0 : index
    %c0_245 = arith.constant 0 : index
    %283 = vector.load %arg17[%c1_243, %c0_244, %c0_245] : memref<2x18x16xf32, #tpu.memory_space<vmem>>, vector<1x16x16xf32>
    %284 = vector.shape_cast %283 : vector<1x16x16xf32> to vector<16x16xf32>
    %c0_246 = arith.constant 0 : index
    %c0_247 = arith.constant 0 : index
    %c0_248 = arith.constant 0 : index
    %285 = vector.load %arg1[%c0_246, %c0_247, %c0_248] : memref<3x16x128xf32, #tpu.memory_space<vmem>>, vector<1x16x128xf32>
    %286 = vector.shape_cast %285 : vector<1x16x128xf32> to vector<16x128xf32>
    %cst_249 = arith.constant dense<0.000000e+00> : vector<16x128xf32>
    %287 = tpu.matmul %284, %286, %cst_249 {dimension_numbers = #tpu.dot_dimension_numbers<[1], [0], [0], [1], [0, 0, 1, 1], [], []>} : vector<16x16xf32>, vector<16x128xf32>, vector<16x128xf32> -> vector<16x128xf32>
    %288 = arith.addf %281, %287 : vector<16x128xf32>
    %c0_250 = arith.constant 0 : index
    %c0_251 = arith.constant 0 : index
    %c0_252 = arith.constant 0 : index
    %289 = vector.load %arg2[%c0_250, %c0_251, %c0_252] : memref<3x16x128xf32, #tpu.memory_space<vmem>>, vector<1x16x128xf32>
    %290 = vector.shape_cast %289 : vector<1x16x128xf32> to vector<16x128xf32>
    %cst_253 = arith.constant dense<0.000000e+00> : vector<16x128xf32>
    %291 = tpu.matmul %284, %290, %cst_253 {dimension_numbers = #tpu.dot_dimension_numbers<[1], [0], [0], [1], [0, 0, 1, 1], [], []>} : vector<16x16xf32>, vector<16x128xf32>, vector<16x128xf32> -> vector<16x128xf32>
    %292 = arith.addf %282, %291 : vector<16x128xf32>
    %c1_254 = arith.constant 1 : index
    %c1_255 = arith.constant 1 : index
    %c0_256 = arith.constant 0 : index
    %293 = vector.load %arg17[%c1_254, %c1_255, %c0_256] : memref<2x18x16xf32, #tpu.memory_space<vmem>>, vector<1x16x16xf32>
    %294 = vector.shape_cast %293 : vector<1x16x16xf32> to vector<16x16xf32>
    %c1_257 = arith.constant 1 : index
    %c0_258 = arith.constant 0 : index
    %c0_259 = arith.constant 0 : index
    %295 = vector.load %arg1[%c1_257, %c0_258, %c0_259] : memref<3x16x128xf32, #tpu.memory_space<vmem>>, vector<1x16x128xf32>
    %296 = vector.shape_cast %295 : vector<1x16x128xf32> to vector<16x128xf32>
    %cst_260 = arith.constant dense<0.000000e+00> : vector<16x128xf32>
    %297 = tpu.matmul %294, %296, %cst_260 {dimension_numbers = #tpu.dot_dimension_numbers<[1], [0], [0], [1], [0, 0, 1, 1], [], []>} : vector<16x16xf32>, vector<16x128xf32>, vector<16x128xf32> -> vector<16x128xf32>
    %298 = arith.addf %288, %297 : vector<16x128xf32>
    %c1_261 = arith.constant 1 : index
    %c0_262 = arith.constant 0 : index
    %c0_263 = arith.constant 0 : index
    %299 = vector.load %arg2[%c1_261, %c0_262, %c0_263] : memref<3x16x128xf32, #tpu.memory_space<vmem>>, vector<1x16x128xf32>
    %300 = vector.shape_cast %299 : vector<1x16x128xf32> to vector<16x128xf32>
    %cst_264 = arith.constant dense<0.000000e+00> : vector<16x128xf32>
    %301 = tpu.matmul %294, %300, %cst_264 {dimension_numbers = #tpu.dot_dimension_numbers<[1], [0], [0], [1], [0, 0, 1, 1], [], []>} : vector<16x16xf32>, vector<16x128xf32>, vector<16x128xf32> -> vector<16x128xf32>
    %302 = arith.addf %292, %301 : vector<16x128xf32>
    %c1_265 = arith.constant 1 : index
    %c2_266 = arith.constant 2 : index
    %c0_267 = arith.constant 0 : index
    %303 = vector.load %arg17[%c1_265, %c2_266, %c0_267] : memref<2x18x16xf32, #tpu.memory_space<vmem>>, vector<1x16x16xf32>
    %304 = vector.shape_cast %303 : vector<1x16x16xf32> to vector<16x16xf32>
    %c2_268 = arith.constant 2 : index
    %c0_269 = arith.constant 0 : index
    %c0_270 = arith.constant 0 : index
    %305 = vector.load %arg1[%c2_268, %c0_269, %c0_270] : memref<3x16x128xf32, #tpu.memory_space<vmem>>, vector<1x16x128xf32>
    %306 = vector.shape_cast %305 : vector<1x16x128xf32> to vector<16x128xf32>
    %cst_271 = arith.constant dense<0.000000e+00> : vector<16x128xf32>
    %307 = tpu.matmul %304, %306, %cst_271 {dimension_numbers = #tpu.dot_dimension_numbers<[1], [0], [0], [1], [0, 0, 1, 1], [], []>} : vector<16x16xf32>, vector<16x128xf32>, vector<16x128xf32> -> vector<16x128xf32>
    %308 = arith.addf %298, %307 : vector<16x128xf32>
    %c2_272 = arith.constant 2 : index
    %c0_273 = arith.constant 0 : index
    %c0_274 = arith.constant 0 : index
    %309 = vector.load %arg2[%c2_272, %c0_273, %c0_274] : memref<3x16x128xf32, #tpu.memory_space<vmem>>, vector<1x16x128xf32>
    %310 = vector.shape_cast %309 : vector<1x16x128xf32> to vector<16x128xf32>
    %cst_275 = arith.constant dense<0.000000e+00> : vector<16x128xf32>
    %311 = tpu.matmul %304, %310, %cst_275 {dimension_numbers = #tpu.dot_dimension_numbers<[1], [0], [0], [1], [0, 0, 1, 1], [], []>} : vector<16x16xf32>, vector<16x128xf32>, vector<16x128xf32> -> vector<16x128xf32>
    %312 = arith.addf %302, %311 : vector<16x128xf32>
    %313 = arith.maximumf %308, %312 : vector<16x128xf32>
    %314 = vector.extract_strided_slice %313 {offsets = [0, 0], sizes = [1, 128], strides = [1, 1]} : vector<16x128xf32> to vector<1x128xf32>
    %315 = vector.extract_strided_slice %313 {offsets = [1, 0], sizes = [1, 128], strides = [1, 1]} : vector<16x128xf32> to vector<1x128xf32>
    %316 = arith.maximumf %314, %315 : vector<1x128xf32>
    %317 = vector.extract_strided_slice %313 {offsets = [2, 0], sizes = [1, 128], strides = [1, 1]} : vector<16x128xf32> to vector<1x128xf32>
    %318 = vector.extract_strided_slice %313 {offsets = [3, 0], sizes = [1, 128], strides = [1, 1]} : vector<16x128xf32> to vector<1x128xf32>
    %319 = arith.maximumf %317, %318 : vector<1x128xf32>
    %320 = vector.extract_strided_slice %313 {offsets = [4, 0], sizes = [1, 128], strides = [1, 1]} : vector<16x128xf32> to vector<1x128xf32>
    %321 = vector.extract_strided_slice %313 {offsets = [5, 0], sizes = [1, 128], strides = [1, 1]} : vector<16x128xf32> to vector<1x128xf32>
    %322 = arith.maximumf %320, %321 : vector<1x128xf32>
    %323 = vector.extract_strided_slice %313 {offsets = [6, 0], sizes = [1, 128], strides = [1, 1]} : vector<16x128xf32> to vector<1x128xf32>
    %324 = vector.extract_strided_slice %313 {offsets = [7, 0], sizes = [1, 128], strides = [1, 1]} : vector<16x128xf32> to vector<1x128xf32>
    %325 = arith.maximumf %323, %324 : vector<1x128xf32>
    %326 = vector.extract_strided_slice %313 {offsets = [8, 0], sizes = [1, 128], strides = [1, 1]} : vector<16x128xf32> to vector<1x128xf32>
    %327 = vector.extract_strided_slice %313 {offsets = [9, 0], sizes = [1, 128], strides = [1, 1]} : vector<16x128xf32> to vector<1x128xf32>
    %328 = arith.maximumf %326, %327 : vector<1x128xf32>
    %329 = vector.extract_strided_slice %313 {offsets = [10, 0], sizes = [1, 128], strides = [1, 1]} : vector<16x128xf32> to vector<1x128xf32>
    %330 = vector.extract_strided_slice %313 {offsets = [11, 0], sizes = [1, 128], strides = [1, 1]} : vector<16x128xf32> to vector<1x128xf32>
    %331 = arith.maximumf %329, %330 : vector<1x128xf32>
    %332 = vector.extract_strided_slice %313 {offsets = [12, 0], sizes = [1, 128], strides = [1, 1]} : vector<16x128xf32> to vector<1x128xf32>
    %333 = vector.extract_strided_slice %313 {offsets = [13, 0], sizes = [1, 128], strides = [1, 1]} : vector<16x128xf32> to vector<1x128xf32>
    %334 = arith.maximumf %332, %333 : vector<1x128xf32>
    %335 = vector.extract_strided_slice %313 {offsets = [14, 0], sizes = [1, 128], strides = [1, 1]} : vector<16x128xf32> to vector<1x128xf32>
    %336 = vector.extract_strided_slice %313 {offsets = [15, 0], sizes = [1, 128], strides = [1, 1]} : vector<16x128xf32> to vector<1x128xf32>
    %337 = arith.maximumf %335, %336 : vector<1x128xf32>
    %338 = tpu.concatenate %316, %319, %322, %325, %328, %331, %334, %337 in 0 : vector<1x128xf32>, vector<1x128xf32>, vector<1x128xf32>, vector<1x128xf32>, vector<1x128xf32>, vector<1x128xf32>, vector<1x128xf32>, vector<1x128xf32> -> vector<8x128xf32>
    %339 = vector.broadcast %10 : vector<1x128xf32> to vector<8x128xf32>
    %340 = arith.addf %338, %339 : vector<8x128xf32>
    %cst_276 = arith.constant 0.000000e+00 : f32
    %341 = vector.broadcast %cst_276 : f32 to vector<8x128xf32>
    %342 = arith.maximumf %340, %341 : vector<8x128xf32>
    %c1_277 = arith.constant 1 : index
    %c1_278 = arith.constant 1 : index
    %c0_279 = arith.constant 0 : index
    %343 = vector.load %arg18[%c1_277, %c1_278, %c0_279] : memref<2x10x128xf32, #tpu.memory_space<vmem>>, vector<1x8x128xf32>
    %344 = vector.shape_cast %343 : vector<1x8x128xf32> to vector<8x128xf32>
    %345 = vector.shape_cast %342 : vector<8x128xf32> to vector<1x8x128xf32>
    tpu.vector_store %arg18[%c1_277, %c1_278, %c0_279], %345 {strides = array<i32>} : memref<2x10x128xf32, #tpu.memory_space<vmem>>, vector<1x8x128xf32>,
    %cst_280 = arith.constant 0.000000e+00 : f32
    %346 = vector.broadcast %cst_280 : f32 to vector<8x36xf32>
    %cst_281 = arith.constant 0.000000e+00 : f32
    %347 = vector.broadcast %cst_281 : f32 to vector<8x36xf32>
    %c1_282 = arith.constant 1 : index
    %c0_283 = arith.constant 0 : index
    %c0_284 = arith.constant 0 : index
    %348 = vector.load %arg18[%c1_282, %c0_283, %c0_284] : memref<2x10x128xf32, #tpu.memory_space<vmem>>, vector<1x8x128xf32>
    %349 = vector.shape_cast %348 : vector<1x8x128xf32> to vector<8x128xf32>
    %c0_285 = arith.constant 0 : index
    %c0_286 = arith.constant 0 : index
    %c0_287 = arith.constant 0 : index
    %350 = vector.load %arg4[%c0_285, %c0_286, %c0_287] : memref<3x128x36xf32, #tpu.memory_space<vmem>>, vector<1x128x36xf32>
    %351 = vector.shape_cast %350 : vector<1x128x36xf32> to vector<128x36xf32>
    %cst_288 = arith.constant dense<0.000000e+00> : vector<8x36xf32>
    %352 = tpu.matmul %349, %351, %cst_288 {dimension_numbers = #tpu.dot_dimension_numbers<[1], [0], [0], [1], [0, 0, 1, 1], [], []>} : vector<8x128xf32>, vector<128x36xf32>, vector<8x36xf32> -> vector<8x36xf32>
    %353 = arith.addf %346, %352 : vector<8x36xf32>
    %c0_289 = arith.constant 0 : index
    %c0_290 = arith.constant 0 : index
    %c0_291 = arith.constant 0 : index
    %354 = vector.load %arg5[%c0_289, %c0_290, %c0_291] : memref<3x128x36xf32, #tpu.memory_space<vmem>>, vector<1x128x36xf32>
    %355 = vector.shape_cast %354 : vector<1x128x36xf32> to vector<128x36xf32>
    %cst_292 = arith.constant dense<0.000000e+00> : vector<8x36xf32>
    %356 = tpu.matmul %349, %355, %cst_292 {dimension_numbers = #tpu.dot_dimension_numbers<[1], [0], [0], [1], [0, 0, 1, 1], [], []>} : vector<8x128xf32>, vector<128x36xf32>, vector<8x36xf32> -> vector<8x36xf32>
    %357 = arith.addf %347, %356 : vector<8x36xf32>
    %c1_293 = arith.constant 1 : index
    %c1_294 = arith.constant 1 : index
    %c0_295 = arith.constant 0 : index
    %358 = vector.load %arg18[%c1_293, %c1_294, %c0_295] : memref<2x10x128xf32, #tpu.memory_space<vmem>>, vector<1x8x128xf32>
    %359 = vector.shape_cast %358 : vector<1x8x128xf32> to vector<8x128xf32>
    %c1_296 = arith.constant 1 : index
    %c0_297 = arith.constant 0 : index
    %c0_298 = arith.constant 0 : index
    %360 = vector.load %arg4[%c1_296, %c0_297, %c0_298] : memref<3x128x36xf32, #tpu.memory_space<vmem>>, vector<1x128x36xf32>
    %361 = vector.shape_cast %360 : vector<1x128x36xf32> to vector<128x36xf32>
    %cst_299 = arith.constant dense<0.000000e+00> : vector<8x36xf32>
    %362 = tpu.matmul %359, %361, %cst_299 {dimension_numbers = #tpu.dot_dimension_numbers<[1], [0], [0], [1], [0, 0, 1, 1], [], []>} : vector<8x128xf32>, vector<128x36xf32>, vector<8x36xf32> -> vector<8x36xf32>
    %363 = arith.addf %353, %362 : vector<8x36xf32>
    %c1_300 = arith.constant 1 : index
    %c0_301 = arith.constant 0 : index
    %c0_302 = arith.constant 0 : index
    %364 = vector.load %arg5[%c1_300, %c0_301, %c0_302] : memref<3x128x36xf32, #tpu.memory_space<vmem>>, vector<1x128x36xf32>
    %365 = vector.shape_cast %364 : vector<1x128x36xf32> to vector<128x36xf32>
    %cst_303 = arith.constant dense<0.000000e+00> : vector<8x36xf32>
    %366 = tpu.matmul %359, %365, %cst_303 {dimension_numbers = #tpu.dot_dimension_numbers<[1], [0], [0], [1], [0, 0, 1, 1], [], []>} : vector<8x128xf32>, vector<128x36xf32>, vector<8x36xf32> -> vector<8x36xf32>
    %367 = arith.addf %357, %366 : vector<8x36xf32>
    %c1_304 = arith.constant 1 : index
    %c2_305 = arith.constant 2 : index
    %c0_306 = arith.constant 0 : index
    %368 = vector.load %arg18[%c1_304, %c2_305, %c0_306] : memref<2x10x128xf32, #tpu.memory_space<vmem>>, vector<1x8x128xf32>
    %369 = vector.shape_cast %368 : vector<1x8x128xf32> to vector<8x128xf32>
    %c2_307 = arith.constant 2 : index
    %c0_308 = arith.constant 0 : index
    %c0_309 = arith.constant 0 : index
    %370 = vector.load %arg4[%c2_307, %c0_308, %c0_309] : memref<3x128x36xf32, #tpu.memory_space<vmem>>, vector<1x128x36xf32>
    %371 = vector.shape_cast %370 : vector<1x128x36xf32> to vector<128x36xf32>
    %cst_310 = arith.constant dense<0.000000e+00> : vector<8x36xf32>
    %372 = tpu.matmul %369, %371, %cst_310 {dimension_numbers = #tpu.dot_dimension_numbers<[1], [0], [0], [1], [0, 0, 1, 1], [], []>} : vector<8x128xf32>, vector<128x36xf32>, vector<8x36xf32> -> vector<8x36xf32>
    %373 = arith.addf %363, %372 : vector<8x36xf32>
    %c2_311 = arith.constant 2 : index
    %c0_312 = arith.constant 0 : index
    %c0_313 = arith.constant 0 : index
    %374 = vector.load %arg5[%c2_311, %c0_312, %c0_313] : memref<3x128x36xf32, #tpu.memory_space<vmem>>, vector<1x128x36xf32>
    %375 = vector.shape_cast %374 : vector<1x128x36xf32> to vector<128x36xf32>
    %cst_314 = arith.constant dense<0.000000e+00> : vector<8x36xf32>
    %376 = tpu.matmul %369, %375, %cst_314 {dimension_numbers = #tpu.dot_dimension_numbers<[1], [0], [0], [1], [0, 0, 1, 1], [], []>} : vector<8x128xf32>, vector<128x36xf32>, vector<8x36xf32> -> vector<8x36xf32>
    %377 = arith.addf %367, %376 : vector<8x36xf32>
    %378 = arith.maximumf %373, %377 : vector<8x36xf32>
    %379 = vector.extract_strided_slice %378 {offsets = [0, 0], sizes = [1, 36], strides = [1, 1]} : vector<8x36xf32> to vector<1x36xf32>
    %380 = vector.extract_strided_slice %378 {offsets = [1, 0], sizes = [1, 36], strides = [1, 1]} : vector<8x36xf32> to vector<1x36xf32>
    %381 = arith.maximumf %379, %380 : vector<1x36xf32>
    %382 = arith.addf %381, %11 : vector<1x36xf32>
    %cst_315 = arith.constant 0.000000e+00 : f32
    %383 = vector.broadcast %cst_315 : f32 to vector<1x36xf32>
    %384 = arith.maximumf %382, %383 : vector<1x36xf32>
    %385 = vector.extract_strided_slice %378 {offsets = [2, 0], sizes = [1, 36], strides = [1, 1]} : vector<8x36xf32> to vector<1x36xf32>
    %386 = vector.extract_strided_slice %378 {offsets = [3, 0], sizes = [1, 36], strides = [1, 1]} : vector<8x36xf32> to vector<1x36xf32>
    %387 = arith.maximumf %385, %386 : vector<1x36xf32>
    %388 = arith.addf %387, %11 : vector<1x36xf32>
    %cst_316 = arith.constant 0.000000e+00 : f32
    %389 = vector.broadcast %cst_316 : f32 to vector<1x36xf32>
    %390 = arith.maximumf %388, %389 : vector<1x36xf32>
    %391 = vector.extract_strided_slice %378 {offsets = [4, 0], sizes = [1, 36], strides = [1, 1]} : vector<8x36xf32> to vector<1x36xf32>
    %392 = vector.extract_strided_slice %378 {offsets = [5, 0], sizes = [1, 36], strides = [1, 1]} : vector<8x36xf32> to vector<1x36xf32>
    %393 = arith.maximumf %391, %392 : vector<1x36xf32>
    %394 = arith.addf %393, %11 : vector<1x36xf32>
    %cst_317 = arith.constant 0.000000e+00 : f32
    %395 = vector.broadcast %cst_317 : f32 to vector<1x36xf32>
    %396 = arith.maximumf %394, %395 : vector<1x36xf32>
    %397 = vector.extract_strided_slice %378 {offsets = [6, 0], sizes = [1, 36], strides = [1, 1]} : vector<8x36xf32> to vector<1x36xf32>
    %398 = vector.extract_strided_slice %378 {offsets = [7, 0], sizes = [1, 36], strides = [1, 1]} : vector<8x36xf32> to vector<1x36xf32>
    %399 = arith.maximumf %397, %398 : vector<1x36xf32>
    %400 = arith.addf %399, %11 : vector<1x36xf32>
    %cst_318 = arith.constant 0.000000e+00 : f32
    %401 = vector.broadcast %cst_318 : f32 to vector<1x36xf32>
    %402 = arith.maximumf %400, %401 : vector<1x36xf32>
    %c0_319 = arith.constant 0 : index
    %c0_320 = arith.constant 0 : index
    %c0_321 = arith.constant 0 : index
    %403 = vector.load %arg7[%c0_319, %c0_320, %c0_321] : memref<4x36x10xf32, #tpu.memory_space<vmem>>, vector<1x36x10xf32>
    %404 = vector.shape_cast %403 : vector<1x36x10xf32> to vector<36x10xf32>
    %cst_322 = arith.constant dense<0.000000e+00> : vector<1x10xf32>
    %405 = tpu.matmul %384, %404, %cst_322 {dimension_numbers = #tpu.dot_dimension_numbers<[1], [0], [0], [1], [0, 0, 1, 1], [], []>} : vector<1x36xf32>, vector<36x10xf32>, vector<1x10xf32> -> vector<1x10xf32>
    %406 = arith.addf %14, %405 : vector<1x10xf32>
    %c1_323 = arith.constant 1 : index
    %c0_324 = arith.constant 0 : index
    %c0_325 = arith.constant 0 : index
    %407 = vector.load %arg7[%c1_323, %c0_324, %c0_325] : memref<4x36x10xf32, #tpu.memory_space<vmem>>, vector<1x36x10xf32>
    %408 = vector.shape_cast %407 : vector<1x36x10xf32> to vector<36x10xf32>
    %cst_326 = arith.constant dense<0.000000e+00> : vector<1x10xf32>
    %409 = tpu.matmul %390, %408, %cst_326 {dimension_numbers = #tpu.dot_dimension_numbers<[1], [0], [0], [1], [0, 0, 1, 1], [], []>} : vector<1x36xf32>, vector<36x10xf32>, vector<1x10xf32> -> vector<1x10xf32>
    %410 = arith.addf %406, %409 : vector<1x10xf32>
    %c2_327 = arith.constant 2 : index
    %c0_328 = arith.constant 0 : index
    %c0_329 = arith.constant 0 : index
    %411 = vector.load %arg7[%c2_327, %c0_328, %c0_329] : memref<4x36x10xf32, #tpu.memory_space<vmem>>, vector<1x36x10xf32>
    %412 = vector.shape_cast %411 : vector<1x36x10xf32> to vector<36x10xf32>
    %cst_330 = arith.constant dense<0.000000e+00> : vector<1x10xf32>
    %413 = tpu.matmul %396, %412, %cst_330 {dimension_numbers = #tpu.dot_dimension_numbers<[1], [0], [0], [1], [0, 0, 1, 1], [], []>} : vector<1x36xf32>, vector<36x10xf32>, vector<1x10xf32> -> vector<1x10xf32>
    %414 = arith.addf %410, %413 : vector<1x10xf32>
    %c3_331 = arith.constant 3 : index
    %c0_332 = arith.constant 0 : index
    %c0_333 = arith.constant 0 : index
    %415 = vector.load %arg7[%c3_331, %c0_332, %c0_333] : memref<4x36x10xf32, #tpu.memory_space<vmem>>, vector<1x36x10xf32>
    %416 = vector.shape_cast %415 : vector<1x36x10xf32> to vector<36x10xf32>
    %cst_334 = arith.constant dense<0.000000e+00> : vector<1x10xf32>
    %417 = tpu.matmul %402, %416, %cst_334 {dimension_numbers = #tpu.dot_dimension_numbers<[1], [0], [0], [1], [0, 0, 1, 1], [], []>} : vector<1x36xf32>, vector<36x10xf32>, vector<1x10xf32> -> vector<1x10xf32>
    %418 = arith.addf %414, %417 : vector<1x10xf32>
    %c1_335 = arith.constant 1 : index
    %c0_336 = arith.constant 0 : index
    %419 = vector.load %arg16[%c1_335, %c0_336] : memref<2x10xf32, #tpu.memory_space<vmem>>, vector<1x10xf32>
    tpu.vector_store %arg16[%c1_335, %c0_336], %418 {strides = array<i32>} : memref<2x10xf32, #tpu.memory_space<vmem>>, vector<1x10xf32>,
    %c0_337 = arith.constant 0 : index
    %c0_338 = arith.constant 0 : index
    %c0_339 = arith.constant 0 : index
    %420 = vector.load %arg9[%c0_337, %c0_338, %c0_339] : memref<4x10x36xf32, #tpu.memory_space<vmem>>, vector<1x10x36xf32>
    %421 = vector.shape_cast %420 : vector<1x10x36xf32> to vector<10x36xf32>
    %cst_340 = arith.constant dense<0.000000e+00> : vector<1x36xf32>
    %422 = tpu.matmul %418, %421, %cst_340 {dimension_numbers = #tpu.dot_dimension_numbers<[1], [0], [0], [1], [0, 0, 1, 1], [], []>} : vector<1x10xf32>, vector<10x36xf32>, vector<1x36xf32> -> vector<1x36xf32>
    %c0_341 = arith.constant 0 : index
    %c0_342 = arith.constant 0 : index
    %c0_343 = arith.constant 0 : index
    %423 = vector.load %arg10[%c0_341, %c0_342, %c0_343] : memref<4x1x36xf32, #tpu.memory_space<vmem>>, vector<1x1x36xf32>
    %424 = vector.shape_cast %423 : vector<1x1x36xf32> to vector<1x36xf32>
    %425 = arith.addf %422, %424 : vector<1x36xf32>
    %c1_344 = arith.constant 1 : index
    %c1_345 = arith.constant 1 : index
    %c0_346 = arith.constant 0 : index
    %426 = vector.load %arg19[%c1_344, %c1_345, %c0_346] : memref<2x10x36xf32, #tpu.memory_space<vmem>>, vector<1x1x36xf32>
    %427 = vector.shape_cast %426 : vector<1x1x36xf32> to vector<1x36xf32>
    %428 = vector.shape_cast %425 : vector<1x36xf32> to vector<1x1x36xf32>
    tpu.vector_store %arg19[%c1_344, %c1_345, %c0_346], %428 {strides = array<i32>} : memref<2x10x36xf32, #tpu.memory_space<vmem>>, vector<1x1x36xf32>,
    %c1_347 = arith.constant 1 : index
    %c0_348 = arith.constant 0 : index
    %c0_349 = arith.constant 0 : index
    %429 = vector.load %arg9[%c1_347, %c0_348, %c0_349] : memref<4x10x36xf32, #tpu.memory_space<vmem>>, vector<1x10x36xf32>
    %430 = vector.shape_cast %429 : vector<1x10x36xf32> to vector<10x36xf32>
    %cst_350 = arith.constant dense<0.000000e+00> : vector<1x36xf32>
    %431 = tpu.matmul %418, %430, %cst_350 {dimension_numbers = #tpu.dot_dimension_numbers<[1], [0], [0], [1], [0, 0, 1, 1], [], []>} : vector<1x10xf32>, vector<10x36xf32>, vector<1x36xf32> -> vector<1x36xf32>
    %c1_351 = arith.constant 1 : index
    %c0_352 = arith.constant 0 : index
    %c0_353 = arith.constant 0 : index
    %432 = vector.load %arg10[%c1_351, %c0_352, %c0_353] : memref<4x1x36xf32, #tpu.memory_space<vmem>>, vector<1x1x36xf32>
    %433 = vector.shape_cast %432 : vector<1x1x36xf32> to vector<1x36xf32>
    %434 = arith.addf %431, %433 : vector<1x36xf32>
    %c1_354 = arith.constant 1 : index
    %c3_355 = arith.constant 3 : index
    %c0_356 = arith.constant 0 : index
    %435 = vector.load %arg19[%c1_354, %c3_355, %c0_356] : memref<2x10x36xf32, #tpu.memory_space<vmem>>, vector<1x1x36xf32>
    %436 = vector.shape_cast %435 : vector<1x1x36xf32> to vector<1x36xf32>
    %437 = vector.shape_cast %434 : vector<1x36xf32> to vector<1x1x36xf32>
    tpu.vector_store %arg19[%c1_354, %c3_355, %c0_356], %437 {strides = array<i32>} : memref<2x10x36xf32, #tpu.memory_space<vmem>>, vector<1x1x36xf32>,
    %c2_357 = arith.constant 2 : index
    %c0_358 = arith.constant 0 : index
    %c0_359 = arith.constant 0 : index
    %438 = vector.load %arg9[%c2_357, %c0_358, %c0_359] : memref<4x10x36xf32, #tpu.memory_space<vmem>>, vector<1x10x36xf32>
    %439 = vector.shape_cast %438 : vector<1x10x36xf32> to vector<10x36xf32>
    %cst_360 = arith.constant dense<0.000000e+00> : vector<1x36xf32>
    %440 = tpu.matmul %418, %439, %cst_360 {dimension_numbers = #tpu.dot_dimension_numbers<[1], [0], [0], [1], [0, 0, 1, 1], [], []>} : vector<1x10xf32>, vector<10x36xf32>, vector<1x36xf32> -> vector<1x36xf32>
    %c2_361 = arith.constant 2 : index
    %c0_362 = arith.constant 0 : index
    %c0_363 = arith.constant 0 : index
    %441 = vector.load %arg10[%c2_361, %c0_362, %c0_363] : memref<4x1x36xf32, #tpu.memory_space<vmem>>, vector<1x1x36xf32>
    %442 = vector.shape_cast %441 : vector<1x1x36xf32> to vector<1x36xf32>
    %443 = arith.addf %440, %442 : vector<1x36xf32>
    %c1_364 = arith.constant 1 : index
    %c5_365 = arith.constant 5 : index
    %c0_366 = arith.constant 0 : index
    %444 = vector.load %arg19[%c1_364, %c5_365, %c0_366] : memref<2x10x36xf32, #tpu.memory_space<vmem>>, vector<1x1x36xf32>
    %445 = vector.shape_cast %444 : vector<1x1x36xf32> to vector<1x36xf32>
    %446 = vector.shape_cast %443 : vector<1x36xf32> to vector<1x1x36xf32>
    tpu.vector_store %arg19[%c1_364, %c5_365, %c0_366], %446 {strides = array<i32>} : memref<2x10x36xf32, #tpu.memory_space<vmem>>, vector<1x1x36xf32>,
    %c3_367 = arith.constant 3 : index
    %c0_368 = arith.constant 0 : index
    %c0_369 = arith.constant 0 : index
    %447 = vector.load %arg9[%c3_367, %c0_368, %c0_369] : memref<4x10x36xf32, #tpu.memory_space<vmem>>, vector<1x10x36xf32>
    %448 = vector.shape_cast %447 : vector<1x10x36xf32> to vector<10x36xf32>
    %cst_370 = arith.constant dense<0.000000e+00> : vector<1x36xf32>
    %449 = tpu.matmul %418, %448, %cst_370 {dimension_numbers = #tpu.dot_dimension_numbers<[1], [0], [0], [1], [0, 0, 1, 1], [], []>} : vector<1x10xf32>, vector<10x36xf32>, vector<1x36xf32> -> vector<1x36xf32>
    %c3_371 = arith.constant 3 : index
    %c0_372 = arith.constant 0 : index
    %c0_373 = arith.constant 0 : index
    %450 = vector.load %arg10[%c3_371, %c0_372, %c0_373] : memref<4x1x36xf32, #tpu.memory_space<vmem>>, vector<1x1x36xf32>
    %451 = vector.shape_cast %450 : vector<1x1x36xf32> to vector<1x36xf32>
    %452 = arith.addf %449, %451 : vector<1x36xf32>
    %c1_374 = arith.constant 1 : index
    %c7_375 = arith.constant 7 : index
    %c0_376 = arith.constant 0 : index
    %453 = vector.load %arg19[%c1_374, %c7_375, %c0_376] : memref<2x10x36xf32, #tpu.memory_space<vmem>>, vector<1x1x36xf32>
    %454 = vector.shape_cast %453 : vector<1x1x36xf32> to vector<1x36xf32>
    %455 = vector.shape_cast %452 : vector<1x36xf32> to vector<1x1x36xf32>
    tpu.vector_store %arg19[%c1_374, %c7_375, %c0_376], %455 {strides = array<i32>} : memref<2x10x36xf32, #tpu.memory_space<vmem>>, vector<1x1x36xf32>,
    %cst_377 = arith.constant 0.000000e+00 : f32
    %456 = vector.broadcast %cst_377 : f32 to vector<8x128xf32>
    %c1_378 = arith.constant 1 : index
    %c0_379 = arith.constant 0 : index
    %c0_380 = arith.constant 0 : index
    %457 = vector.load %arg19[%c1_378, %c0_379, %c0_380] : memref<2x10x36xf32, #tpu.memory_space<vmem>>, vector<1x8x36xf32>
    %458 = vector.shape_cast %457 : vector<1x8x36xf32> to vector<8x36xf32>
    %c0_381 = arith.constant 0 : index
    %c0_382 = arith.constant 0 : index
    %c0_383 = arith.constant 0 : index
    %459 = vector.load %arg11[%c0_381, %c0_382, %c0_383] : memref<3x36x128xf32, #tpu.memory_space<vmem>>, vector<1x36x128xf32>
    %460 = vector.shape_cast %459 : vector<1x36x128xf32> to vector<36x128xf32>
    %cst_384 = arith.constant dense<0.000000e+00> : vector<8x128xf32>
    %461 = tpu.matmul %458, %460, %cst_384 {dimension_numbers = #tpu.dot_dimension_numbers<[1], [0], [0], [1], [0, 0, 1, 1], [], []>} : vector<8x36xf32>, vector<36x128xf32>, vector<8x128xf32> -> vector<8x128xf32>
    %462 = arith.addf %456, %461 : vector<8x128xf32>
    %c1_385 = arith.constant 1 : index
    %c1_386 = arith.constant 1 : index
    %c0_387 = arith.constant 0 : index
    %463 = vector.load %arg19[%c1_385, %c1_386, %c0_387] : memref<2x10x36xf32, #tpu.memory_space<vmem>>, vector<1x8x36xf32>
    %464 = vector.shape_cast %463 : vector<1x8x36xf32> to vector<8x36xf32>
    %c1_388 = arith.constant 1 : index
    %c0_389 = arith.constant 0 : index
    %c0_390 = arith.constant 0 : index
    %465 = vector.load %arg11[%c1_388, %c0_389, %c0_390] : memref<3x36x128xf32, #tpu.memory_space<vmem>>, vector<1x36x128xf32>
    %466 = vector.shape_cast %465 : vector<1x36x128xf32> to vector<36x128xf32>
    %cst_391 = arith.constant dense<0.000000e+00> : vector<8x128xf32>
    %467 = tpu.matmul %464, %466, %cst_391 {dimension_numbers = #tpu.dot_dimension_numbers<[1], [0], [0], [1], [0, 0, 1, 1], [], []>} : vector<8x36xf32>, vector<36x128xf32>, vector<8x128xf32> -> vector<8x128xf32>
    %468 = arith.addf %462, %467 : vector<8x128xf32>
    %c1_392 = arith.constant 1 : index
    %c2_393 = arith.constant 2 : index
    %c0_394 = arith.constant 0 : index
    %469 = vector.load %arg19[%c1_392, %c2_393, %c0_394] : memref<2x10x36xf32, #tpu.memory_space<vmem>>, vector<1x8x36xf32>
    %470 = vector.shape_cast %469 : vector<1x8x36xf32> to vector<8x36xf32>
    %c2_395 = arith.constant 2 : index
    %c0_396 = arith.constant 0 : index
    %c0_397 = arith.constant 0 : index
    %471 = vector.load %arg11[%c2_395, %c0_396, %c0_397] : memref<3x36x128xf32, #tpu.memory_space<vmem>>, vector<1x36x128xf32>
    %472 = vector.shape_cast %471 : vector<1x36x128xf32> to vector<36x128xf32>
    %cst_398 = arith.constant dense<0.000000e+00> : vector<8x128xf32>
    %473 = tpu.matmul %470, %472, %cst_398 {dimension_numbers = #tpu.dot_dimension_numbers<[1], [0], [0], [1], [0, 0, 1, 1], [], []>} : vector<8x36xf32>, vector<36x128xf32>, vector<8x128xf32> -> vector<8x128xf32>
    %474 = arith.addf %468, %473 : vector<8x128xf32>
    %475 = vector.broadcast %12 : vector<1x128xf32> to vector<8x128xf32>
    %476 = arith.addf %474, %475 : vector<8x128xf32>
    %cst_399 = arith.constant 0.000000e+00 : f32
    %477 = vector.broadcast %cst_399 : f32 to vector<8x128xf32>
    %478 = arith.maximumf %476, %477 : vector<8x128xf32>
    %479 = vector.extract_strided_slice %478 {offsets = [0, 0], sizes = [1, 128], strides = [1, 1]} : vector<8x128xf32> to vector<1x128xf32>
    %c1_400 = arith.constant 1 : index
    %c3_401 = arith.constant 3 : index
    %c0_402 = arith.constant 0 : index
    %480 = vector.load %arg20[%c1_400, %c3_401, %c0_402] : memref<2x21x128xf32, #tpu.memory_space<vmem>>, vector<1x1x128xf32>
    %481 = vector.shape_cast %480 : vector<1x1x128xf32> to vector<1x128xf32>
    %482 = vector.shape_cast %479 : vector<1x128xf32> to vector<1x1x128xf32>
    tpu.vector_store %arg20[%c1_400, %c3_401, %c0_402], %482 {strides = array<i32>} : memref<2x21x128xf32, #tpu.memory_space<vmem>>, vector<1x1x128xf32>,
    %483 = vector.extract_strided_slice %478 {offsets = [1, 0], sizes = [1, 128], strides = [1, 1]} : vector<8x128xf32> to vector<1x128xf32>
    %c1_403 = arith.constant 1 : index
    %c5_404 = arith.constant 5 : index
    %c0_405 = arith.constant 0 : index
    %484 = vector.load %arg20[%c1_403, %c5_404, %c0_405] : memref<2x21x128xf32, #tpu.memory_space<vmem>>, vector<1x1x128xf32>
    %485 = vector.shape_cast %484 : vector<1x1x128xf32> to vector<1x128xf32>
    %486 = vector.shape_cast %483 : vector<1x128xf32> to vector<1x1x128xf32>
    tpu.vector_store %arg20[%c1_403, %c5_404, %c0_405], %486 {strides = array<i32>} : memref<2x21x128xf32, #tpu.memory_space<vmem>>, vector<1x1x128xf32>,
    %487 = vector.extract_strided_slice %478 {offsets = [2, 0], sizes = [1, 128], strides = [1, 1]} : vector<8x128xf32> to vector<1x128xf32>
    %c1_406 = arith.constant 1 : index
    %c7_407 = arith.constant 7 : index
    %c0_408 = arith.constant 0 : index
    %488 = vector.load %arg20[%c1_406, %c7_407, %c0_408] : memref<2x21x128xf32, #tpu.memory_space<vmem>>, vector<1x1x128xf32>
    %489 = vector.shape_cast %488 : vector<1x1x128xf32> to vector<1x128xf32>
    %490 = vector.shape_cast %487 : vector<1x128xf32> to vector<1x1x128xf32>
    tpu.vector_store %arg20[%c1_406, %c7_407, %c0_408], %490 {strides = array<i32>} : memref<2x21x128xf32, #tpu.memory_space<vmem>>, vector<1x1x128xf32>,
    %491 = vector.extract_strided_slice %478 {offsets = [3, 0], sizes = [1, 128], strides = [1, 1]} : vector<8x128xf32> to vector<1x128xf32>
    %c1_409 = arith.constant 1 : index
    %c9_410 = arith.constant 9 : index
    %c0_411 = arith.constant 0 : index
    %492 = vector.load %arg20[%c1_409, %c9_410, %c0_411] : memref<2x21x128xf32, #tpu.memory_space<vmem>>, vector<1x1x128xf32>
    %493 = vector.shape_cast %492 : vector<1x1x128xf32> to vector<1x128xf32>
    %494 = vector.shape_cast %491 : vector<1x128xf32> to vector<1x1x128xf32>
    tpu.vector_store %arg20[%c1_409, %c9_410, %c0_411], %494 {strides = array<i32>} : memref<2x21x128xf32, #tpu.memory_space<vmem>>, vector<1x1x128xf32>,
    %495 = vector.extract_strided_slice %478 {offsets = [4, 0], sizes = [1, 128], strides = [1, 1]} : vector<8x128xf32> to vector<1x128xf32>
    %c1_412 = arith.constant 1 : index
    %c11_413 = arith.constant 11 : index
    %c0_414 = arith.constant 0 : index
    %496 = vector.load %arg20[%c1_412, %c11_413, %c0_414] : memref<2x21x128xf32, #tpu.memory_space<vmem>>, vector<1x1x128xf32>
    %497 = vector.shape_cast %496 : vector<1x1x128xf32> to vector<1x128xf32>
    %498 = vector.shape_cast %495 : vector<1x128xf32> to vector<1x1x128xf32>
    tpu.vector_store %arg20[%c1_412, %c11_413, %c0_414], %498 {strides = array<i32>} : memref<2x21x128xf32, #tpu.memory_space<vmem>>, vector<1x1x128xf32>,
    %499 = vector.extract_strided_slice %478 {offsets = [5, 0], sizes = [1, 128], strides = [1, 1]} : vector<8x128xf32> to vector<1x128xf32>
    %c1_415 = arith.constant 1 : index
    %c13_416 = arith.constant 13 : index
    %c0_417 = arith.constant 0 : index
    %500 = vector.load %arg20[%c1_415, %c13_416, %c0_417] : memref<2x21x128xf32, #tpu.memory_space<vmem>>, vector<1x1x128xf32>
    %501 = vector.shape_cast %500 : vector<1x1x128xf32> to vector<1x128xf32>
    %502 = vector.shape_cast %499 : vector<1x128xf32> to vector<1x1x128xf32>
    tpu.vector_store %arg20[%c1_415, %c13_416, %c0_417], %502 {strides = array<i32>} : memref<2x21x128xf32, #tpu.memory_space<vmem>>, vector<1x1x128xf32>,
    %503 = vector.extract_strided_slice %478 {offsets = [6, 0], sizes = [1, 128], strides = [1, 1]} : vector<8x128xf32> to vector<1x128xf32>
    %c1_418 = arith.constant 1 : index
    %c15_419 = arith.constant 15 : index
    %c0_420 = arith.constant 0 : index
    %504 = vector.load %arg20[%c1_418, %c15_419, %c0_420] : memref<2x21x128xf32, #tpu.memory_space<vmem>>, vector<1x1x128xf32>
    %505 = vector.shape_cast %504 : vector<1x1x128xf32> to vector<1x128xf32>
    %506 = vector.shape_cast %503 : vector<1x128xf32> to vector<1x1x128xf32>
    tpu.vector_store %arg20[%c1_418, %c15_419, %c0_420], %506 {strides = array<i32>} : memref<2x21x128xf32, #tpu.memory_space<vmem>>, vector<1x1x128xf32>,
    %507 = vector.extract_strided_slice %478 {offsets = [7, 0], sizes = [1, 128], strides = [1, 1]} : vector<8x128xf32> to vector<1x128xf32>
    %c1_421 = arith.constant 1 : index
    %c17_422 = arith.constant 17 : index
    %c0_423 = arith.constant 0 : index
    %508 = vector.load %arg20[%c1_421, %c17_422, %c0_423] : memref<2x21x128xf32, #tpu.memory_space<vmem>>, vector<1x1x128xf32>
    %509 = vector.shape_cast %508 : vector<1x1x128xf32> to vector<1x128xf32>
    %510 = vector.shape_cast %507 : vector<1x128xf32> to vector<1x1x128xf32>
    tpu.vector_store %arg20[%c1_421, %c17_422, %c0_423], %510 {strides = array<i32>} : memref<2x21x128xf32, #tpu.memory_space<vmem>>, vector<1x1x128xf32>,
    %cst_424 = arith.constant 0.000000e+00 : f32
    %511 = vector.broadcast %cst_424 : f32 to vector<17x17xf32>
    %c1_425 = arith.constant 1 : index
    %c0_426 = arith.constant 0 : index
    %c0_427 = arith.constant 0 : index
    %512 = vector.load %arg20[%c1_425, %c0_426, %c0_427] : memref<2x21x128xf32, #tpu.memory_space<vmem>>, vector<1x17x128xf32>
    %513 = vector.shape_cast %512 : vector<1x17x128xf32> to vector<17x128xf32>
    %c0_428 = arith.constant 0 : index
    %c0_429 = arith.constant 0 : index
    %c0_430 = arith.constant 0 : index
    %514 = vector.load %arg13[%c0_428, %c0_429, %c0_430] : memref<5x128x17xf32, #tpu.memory_space<vmem>>, vector<1x128x17xf32>
    %515 = vector.shape_cast %514 : vector<1x128x17xf32> to vector<128x17xf32>
    %cst_431 = arith.constant dense<0.000000e+00> : vector<17x17xf32>
    %516 = tpu.matmul %513, %515, %cst_431 {dimension_numbers = #tpu.dot_dimension_numbers<[1], [0], [0], [1], [0, 0, 1, 1], [], []>} : vector<17x128xf32>, vector<128x17xf32>, vector<17x17xf32> -> vector<17x17xf32>
    %517 = arith.addf %511, %516 : vector<17x17xf32>
    %c1_432 = arith.constant 1 : index
    %c1_433 = arith.constant 1 : index
    %c0_434 = arith.constant 0 : index
    %518 = vector.load %arg20[%c1_432, %c1_433, %c0_434] : memref<2x21x128xf32, #tpu.memory_space<vmem>>, vector<1x17x128xf32>
    %519 = vector.shape_cast %518 : vector<1x17x128xf32> to vector<17x128xf32>
    %c1_435 = arith.constant 1 : index
    %c0_436 = arith.constant 0 : index
    %c0_437 = arith.constant 0 : index
    %520 = vector.load %arg13[%c1_435, %c0_436, %c0_437] : memref<5x128x17xf32, #tpu.memory_space<vmem>>, vector<1x128x17xf32>
    %521 = vector.shape_cast %520 : vector<1x128x17xf32> to vector<128x17xf32>
    %cst_438 = arith.constant dense<0.000000e+00> : vector<17x17xf32>
    %522 = tpu.matmul %519, %521, %cst_438 {dimension_numbers = #tpu.dot_dimension_numbers<[1], [0], [0], [1], [0, 0, 1, 1], [], []>} : vector<17x128xf32>, vector<128x17xf32>, vector<17x17xf32> -> vector<17x17xf32>
    %523 = arith.addf %517, %522 : vector<17x17xf32>
    %c1_439 = arith.constant 1 : index
    %c2_440 = arith.constant 2 : index
    %c0_441 = arith.constant 0 : index
    %524 = vector.load %arg20[%c1_439, %c2_440, %c0_441] : memref<2x21x128xf32, #tpu.memory_space<vmem>>, vector<1x17x128xf32>
    %525 = vector.shape_cast %524 : vector<1x17x128xf32> to vector<17x128xf32>
    %c2_442 = arith.constant 2 : index
    %c0_443 = arith.constant 0 : index
    %c0_444 = arith.constant 0 : index
    %526 = vector.load %arg13[%c2_442, %c0_443, %c0_444] : memref<5x128x17xf32, #tpu.memory_space<vmem>>, vector<1x128x17xf32>
    %527 = vector.shape_cast %526 : vector<1x128x17xf32> to vector<128x17xf32>
    %cst_445 = arith.constant dense<0.000000e+00> : vector<17x17xf32>
    %528 = tpu.matmul %525, %527, %cst_445 {dimension_numbers = #tpu.dot_dimension_numbers<[1], [0], [0], [1], [0, 0, 1, 1], [], []>} : vector<17x128xf32>, vector<128x17xf32>, vector<17x17xf32> -> vector<17x17xf32>
    %529 = arith.addf %523, %528 : vector<17x17xf32>
    %c1_446 = arith.constant 1 : index
    %c3_447 = arith.constant 3 : index
    %c0_448 = arith.constant 0 : index
    %530 = vector.load %arg20[%c1_446, %c3_447, %c0_448] : memref<2x21x128xf32, #tpu.memory_space<vmem>>, vector<1x17x128xf32>
    %531 = vector.shape_cast %530 : vector<1x17x128xf32> to vector<17x128xf32>
    %c3_449 = arith.constant 3 : index
    %c0_450 = arith.constant 0 : index
    %c0_451 = arith.constant 0 : index
    %532 = vector.load %arg13[%c3_449, %c0_450, %c0_451] : memref<5x128x17xf32, #tpu.memory_space<vmem>>, vector<1x128x17xf32>
    %533 = vector.shape_cast %532 : vector<1x128x17xf32> to vector<128x17xf32>
    %cst_452 = arith.constant dense<0.000000e+00> : vector<17x17xf32>
    %534 = tpu.matmul %531, %533, %cst_452 {dimension_numbers = #tpu.dot_dimension_numbers<[1], [0], [0], [1], [0, 0, 1, 1], [], []>} : vector<17x128xf32>, vector<128x17xf32>, vector<17x17xf32> -> vector<17x17xf32>
    %535 = arith.addf %529, %534 : vector<17x17xf32>
    %c1_453 = arith.constant 1 : index
    %c4_454 = arith.constant 4 : index
    %c0_455 = arith.constant 0 : index
    %536 = vector.load %arg20[%c1_453, %c4_454, %c0_455] : memref<2x21x128xf32, #tpu.memory_space<vmem>>, vector<1x17x128xf32>
    %537 = vector.shape_cast %536 : vector<1x17x128xf32> to vector<17x128xf32>
    %c4_456 = arith.constant 4 : index
    %c0_457 = arith.constant 0 : index
    %c0_458 = arith.constant 0 : index
    %538 = vector.load %arg13[%c4_456, %c0_457, %c0_458] : memref<5x128x17xf32, #tpu.memory_space<vmem>>, vector<1x128x17xf32>
    %539 = vector.shape_cast %538 : vector<1x128x17xf32> to vector<128x17xf32>
    %cst_459 = arith.constant dense<0.000000e+00> : vector<17x17xf32>
    %540 = tpu.matmul %537, %539, %cst_459 {dimension_numbers = #tpu.dot_dimension_numbers<[1], [0], [0], [1], [0, 0, 1, 1], [], []>} : vector<17x128xf32>, vector<128x17xf32>, vector<17x17xf32> -> vector<17x17xf32>
    %541 = arith.addf %535, %540 : vector<17x17xf32>
    %542 = vector.broadcast %13 : vector<1x1xf32> to vector<17x17xf32>
    %543 = arith.addf %541, %542 : vector<17x17xf32>
    %c1_460 = arith.constant 1 : index
    %c0_461 = arith.constant 0 : index
    %c0_462 = arith.constant 0 : index
    %544 = vector.load %arg15[%c1_460, %c0_461, %c0_462] : memref<2x17x17xf32, #tpu.memory_space<vmem>>, vector<1x17x17xf32>
    %545 = vector.shape_cast %544 : vector<1x17x17xf32> to vector<17x17xf32>
    %546 = vector.shape_cast %543 : vector<17x17xf32> to vector<1x17x17xf32>
    tpu.vector_store %arg15[%c1_460, %c0_461, %c0_462], %546 {strides = array<i32>} : memref<2x17x17xf32, #tpu.memory_space<vmem>>, vector<1x17x17xf32>,
    return
  }
}

</mosaic_0001>

<llo_original>
// kernel: autoencoder_forward.1
$region0: #{autoencoder_forward.1}
  #allocation0 [shape = 'u32[]', space=smem, size = 0x4, offset = 0x4, fixed_abs, tag = 'smem constant byte address 0x4 - core index']
  #allocation1 [shape = 'u32[144,128]{1,0:T(1,128)}', space=vmem, size = 0x12000, scoped, tag = 'internal scratch']
  #allocation2 [shape = 'f32[2,18,16]{2,1,0:T(8,128)}', space=vmem, size = 0x6000, scoped, tag = 'scratch operand']
  #allocation3 [shape = 'f32[2,10,128]{2,1,0:T(8,128)}', space=vmem, size = 0x4000, scoped, tag = 'scratch operand']
  #allocation4 [shape = 'f32[2,10,36]{2,1,0:T(8,128)}', space=vmem, size = 0x4000, scoped, tag = 'scratch operand']
  #allocation5 [shape = 'f32[2,21,128]{2,1,0:T(8,128)}', space=vmem, size = 0x6000, scoped, tag = 'scratch operand']
  #allocation6 [shape = 'f32[1,1]{1,0:T(1,128)S(1)}', space=vmem, size = 0x200, scoped, tag = 'scoped memory for autoencoder_forward.1']
  %s0 = inlined_call_operand.vmem [shape: f32[2,16,16], index: 0, kind: input, shape index: {}]
  %s1 = inlined_call_operand.vmem [shape: f32[3,16,128], index: 1, kind: input, shape index: {}]
  %s2 = inlined_call_operand.vmem [shape: f32[3,16,128], index: 2, kind: input, shape index: {}]
  %s3 = inlined_call_operand.vmem [shape: f32[1,128], index: 3, kind: input, shape index: {}]
  %s4 = inlined_call_operand.vmem [shape: f32[3,128,36], index: 4, kind: input, shape index: {}]
  %s5 = inlined_call_operand.vmem [shape: f32[3,128,36], index: 5, kind: input, shape index: {}]
  %s6 = inlined_call_operand.vmem [shape: f32[1,36], index: 6, kind: input, shape index: {}]
  %s7 = inlined_call_operand.vmem [shape: f32[4,36,10], index: 7, kind: input, shape index: {}]
  %s8 = inlined_call_operand.vmem [shape: f32[1,10], index: 8, kind: input, shape index: {}]
  %s9 = inlined_call_operand.vmem [shape: f32[4,10,36], index: 9, kind: input, shape index: {}]
  %s10 = inlined_call_operand.vmem [shape: f32[4,1,36], index: 10, kind: input, shape index: {}]
  %s11 = inlined_call_operand.vmem [shape: f32[3,36,128], index: 11, kind: input, shape index: {}]
  %s12 = inlined_call_operand.vmem [shape: f32[1,128], index: 12, kind: input, shape index: {}]
  %s13 = inlined_call_operand.vmem [shape: f32[5,128,17], index: 13, kind: input, shape index: {}]
  %s14 = inlined_call_operand.<no memory space> [shape: f32[1,1], index: 14, kind: input, shape index: {}]
  %s15 = inlined_call_operand.vmem [shape: f32[2,17,17], index: 15, kind: output, shape index: {0}]
  %s16 = inlined_call_operand.hbm [shape: f32[2,10], index: 16, kind: output, shape index: {1}]
  %17 = xla_tuple %s15, %s16
  %s18 = sld [smem:[#allocation0]]
  $region78: #{autoencoder_forward.1} parent=0
    _
  %s20 = ssub.s32 1, %s18
  %s21 = scalar_select 0, %s20, %s18
  %v22 = vstv %s14
  %23 = vst [vmem:[#allocation6] sm:$0x1] %v22
  $region1: #{autoencoder_forward.1} parent=0
    #allocation7 [shape = 'u8[1024]{0}', space=vmem, size = 0x400, scoped, tag = 'output window, operand 1, single buffered']
    #allocation8 [shape = 's32[1]{0}', space=sflag, size = 0x4, scoped, tag = 'scoped memory for autoencoder_forward.1']
    %24 = vsyncpa [#allocation8], 0
    // Predicated region
    $region2: #{autoencoder_forward.1} parent=1 // pred_check
      _
    $region3: #{autoencoder_forward.1} parent=1 // pred_check_branch
      %26 = sbr.rel (0) target = $region5
    $region4: #{autoencoder_forward.1} parent=1 // pred_region
      _
    $region5: #{autoencoder_forward.1} parent=1 // pred_fallthru
      _
    // Predicated region
    $region6: #{autoencoder_forward.1} parent=1 // pred_check
      _
    $region7: #{autoencoder_forward.1} parent=1 // pred_check_branch
      %28 = sbr.rel (0) target = $region9
    $region8: #{autoencoder_forward.1} parent=1 // pred_region
      _
    $region9: #{autoencoder_forward.1} parent=1 // pred_fallthru
      _
    // Predicated region
    $region10: #{autoencoder_forward.1} parent=1 // pred_check
      _
    $region11: #{autoencoder_forward.1} parent=1 // pred_check_branch
      %30 = sbr.rel (0) target = $region13
    $region12: #{autoencoder_forward.1} parent=1 // pred_region
      _
    $region13: #{autoencoder_forward.1} parent=1 // pred_fallthru
      _
    // Predicated region
    $region14: #{autoencoder_forward.1} parent=1 // pred_check
      _
    $region15: #{autoencoder_forward.1} parent=1 // pred_check_branch
      %32 = sbr.rel (0) target = $region17
    $region16: #{autoencoder_forward.1} parent=1 // pred_region
      _
    $region17: #{autoencoder_forward.1} parent=1 // pred_fallthru
      _
    // Predicated region
    $region18: #{autoencoder_forward.1} parent=1 // pred_check
      _
    $region19: #{autoencoder_forward.1} parent=1 // pred_check_branch
      %34 = sbr.rel (0) target = $region21
    $region20: #{autoencoder_forward.1} parent=1 // pred_region
      _
    $region21: #{autoencoder_forward.1} parent=1 // pred_fallthru
      _
    // Predicated region
    $region22: #{autoencoder_forward.1} parent=1 // pred_check
      _
    $region23: #{autoencoder_forward.1} parent=1 // pred_check_branch
      %36 = sbr.rel (0) target = $region25
    $region24: #{autoencoder_forward.1} parent=1 // pred_region
      _
    $region25: #{autoencoder_forward.1} parent=1 // pred_fallthru
      _
    // Predicated region
    $region26: #{autoencoder_forward.1} parent=1 // pred_check
      _
    $region27: #{autoencoder_forward.1} parent=1 // pred_check_branch
      %38 = sbr.rel (0) target = $region29
    $region28: #{autoencoder_forward.1} parent=1 // pred_region
      _
    $region29: #{autoencoder_forward.1} parent=1 // pred_fallthru
      _
    // Predicated region
    $region30: #{autoencoder_forward.1} parent=1 // pred_check
      _
    $region31: #{autoencoder_forward.1} parent=1 // pred_check_branch
      %40 = sbr.rel (0) target = $region33
    $region32: #{autoencoder_forward.1} parent=1 // pred_region
      _
    $region33: #{autoencoder_forward.1} parent=1 // pred_fallthru
      _
    // Predicated region
    $region34: #{autoencoder_forward.1} parent=1 // pred_check
      _
    $region35: #{autoencoder_forward.1} parent=1 // pred_check_branch
      %42 = sbr.rel (0) target = $region37
    $region36: #{autoencoder_forward.1} parent=1 // pred_region
      _
    $region37: #{autoencoder_forward.1} parent=1 // pred_fallthru
      _
    // Predicated region
    $region38: #{autoencoder_forward.1} parent=1 // pred_check
      _
    $region39: #{autoencoder_forward.1} parent=1 // pred_check_branch
      %44 = sbr.rel (0) target = $region41
    $region40: #{autoencoder_forward.1} parent=1 // pred_region
      _
    $region41: #{autoencoder_forward.1} parent=1 // pred_fallthru
      _
    // Predicated region
    $region42: #{autoencoder_forward.1} parent=1 // pred_check
      _
    $region43: #{autoencoder_forward.1} parent=1 // pred_check_branch
      %46 = sbr.rel (0) target = $region45
    $region44: #{autoencoder_forward.1} parent=1 // pred_region
      _
    $region45: #{autoencoder_forward.1} parent=1 // pred_fallthru
      _
    // Predicated region
    $region46: #{autoencoder_forward.1} parent=1 // pred_check
      _
    $region47: #{autoencoder_forward.1} parent=1 // pred_check_branch
      %48 = sbr.rel (0) target = $region49
    $region48: #{autoencoder_forward.1} parent=1 // pred_region
      _
    $region49: #{autoencoder_forward.1} parent=1 // pred_fallthru
      _
    // Predicated region
    $region50: #{autoencoder_forward.1} parent=1 // pred_check
      _
    $region51: #{autoencoder_forward.1} parent=1 // pred_check_branch
      %50 = sbr.rel (0) target = $region53
    $region52: #{autoencoder_forward.1} parent=1 // pred_region
      _
    $region53: #{autoencoder_forward.1} parent=1 // pred_fallthru
      _
    // Predicated region
    $region54: #{autoencoder_forward.1} parent=1 // pred_check
      _
    $region55: #{autoencoder_forward.1} parent=1 // pred_check_branch
      %52 = sbr.rel (0) target = $region57
    $region56: #{autoencoder_forward.1} parent=1 // pred_region
      _
    $region57: #{autoencoder_forward.1} parent=1 // pred_fallthru
      _
    // Predicated region
    $region58: #{autoencoder_forward.1} parent=1 // pred_check
      _
    $region59: #{autoencoder_forward.1} parent=1 // pred_check_branch
      %54 = sbr.rel (0) target = $region61
    $region60: #{autoencoder_forward.1} parent=1 // pred_region
      _
    $region61: #{autoencoder_forward.1} parent=1 // pred_fallthru
      _
    %vm55 = vcmask 130048
    %56 = vst.msk [vmem:[#allocation2] sm:$0xff] %vm55, 0.0
    %57 = vst.msk [vmem:[#allocation2 + $0x8] sm:$0xff] %vm55, 0.0
    %vm58 = vcmask 123904
    %59 = vst.msk [vmem:[#allocation2 + $0x10] sm:$0x3] %vm58, 0.0
    %60 = vst.msk [vmem:[#allocation2 + $0x18] sm:$0xff] %vm55, 0.0
    %61 = vst.msk [vmem:[#allocation2 + $0x20] sm:$0xff] %vm55, 0.0
    %62 = vst.msk [vmem:[#allocation2 + $0x28] sm:$0x3] %vm58, 0.0
    %63 = vst [vmem:[#allocation3] sm:$0xff] 0.0
    %64 = vst [vmem:[#allocation3 + $0x8] sm:$0x3] 0.0
    %65 = vst [vmem:[#allocation3 + $0x10] sm:$0xff] 0.0
    %66 = vst [vmem:[#allocation3 + $0x18] sm:$0x3] 0.0
    %vm67 = vcmask 293888
    %68 = vst.msk [vmem:[#allocation4] sm:$0xff] %vm67, 0.0
    %vm69 = vcmask 287744
    %70 = vst.msk [vmem:[#allocation4 + $0x8] sm:$0x3] %vm69, 0.0
    %71 = vst.msk [vmem:[#allocation4 + $0x10] sm:$0xff] %vm67, 0.0
    %72 = vst.msk [vmem:[#allocation4 + $0x18] sm:$0x3] %vm69, 0.0
    %73 = vst [vmem:[#allocation5] sm:$0xff] 0.0
    %74 = vst [vmem:[#allocation5 + $0x8] sm:$0xff] 0.0
    %75 = vst [vmem:[#allocation5 + $0x10] sm:$0x1f] 0.0
    %76 = vst [vmem:[#allocation5 + $0x18] sm:$0xff] 0.0
    %77 = vst [vmem:[#allocation5 + $0x20] sm:$0xff] 0.0
    %78 = vst [vmem:[#allocation5 + $0x28] sm:$0x1f] 0.0
    %v79 = vld [vmem:[%s0] sm:$0xff]
    %v80 = vld [vmem:[%s0 + $0x8] sm:$0xff]
    %v81 = vld [vmem:[%s0 + $0x10] sm:$0xff]
    %v82 = vld [vmem:[%s0 + $0x18] sm:$0xff]
    %83 = vst.msk [vmem:[#allocation2 + $0x1] sm:$0xff] %vm55, %v79
    %84 = vst.msk [vmem:[#allocation2 + $0x9] sm:$0xff] %vm55, %v80
    %85 = vst.msk [vmem:[#allocation2 + $0x19] sm:$0xff] %vm55, %v81
    %86 = vst.msk [vmem:[#allocation2 + $0x21] sm:$0xff] %vm55, %v82
    %v87 = vld [vmem:[%s3] sm:$0x1]
    %v88 = vld [vmem:[%s6] sm:$0x1]
    %v89 = vld [vmem:[%s12] sm:$0x1]
    %v90 = vld [vmem:[#allocation6] sm:$0x1]
    %v91 = vld [vmem:[%s8] sm:$0x1]
    %v92 = vld [vmem:[#allocation2] sm:$0xff]
    %v93 = vld [vmem:[#allocation2 + $0x8] sm:$0xff]
    %v94 = vld [vmem:[%s1] sm:$0xff]
    %v95 = vld [vmem:[%s1 + $0x8] sm:$0xff]
    %v96 = vld [vmem:[%s2] sm:$0xff]
    %v97 = vld [vmem:[%s2 + $0x8] sm:$0xff]
    %v98 = vld [vmem:[#allocation2 + $0x1] sm:$0xff]
    %v99 = vld [vmem:[#allocation2 + $0x9] sm:$0xff]
    %s100 = scalar_lea.vmem %s1, 16
    %v101 = vld [vmem:[%s100] sm:$0xff]
    %v102 = vld [vmem:[%s100 + $0x8] sm:$0xff]
    %v104 = vsel %vm55, %v98, 0
    %v107 = vsel %vm55, %v99, 0
    %109 = vmatprep.subr.mxu0 0.0
    %110 = vmatpush1.msra.mxu0 %v101
    %111 = vmatprep.subr.mxu0 0.0
    %112 = vmatpush1.msra.mxu0 %v102
    %113 = vmatprep.subr.mxu0 0.0
    %114 = vmatpush1.msra.mxu0 0.0
    %115 = vmatprep.subr.mxu0 0.0
    %116 = vmatpush1.msra.mxu0 0.0
    %117 = vmatprep.subr.mxu0 0.0
    %118 = vmatpush1.msra.mxu0 0.0
    %119 = vmatprep.subr.mxu0 0.0
    %120 = vmatpush1.msra.mxu0 0.0
    %121 = vmatprep.subr.mxu0 0.0
    %122 = vmatpush1.msra.mxu0 0.0
    %123 = vmatprep.subr.mxu0 0.0
    %124 = vmatpush1.msra.mxu0 0.0
    %125 = vmatprep.subr.mxu0 0.0
    %126 = vmatpush1.msra.mxu0 0.0
    %127 = vmatprep.subr.mxu0 0.0
    %128 = vmatpush1.msra.mxu0 0.0
    %129 = vmatprep.subr.mxu0 0.0
    %130 = vmatpush1.msra.mxu0 0.0
    %131 = vmatprep.subr.mxu0 0.0
    %132 = vmatpush1.msra.mxu0 0.0
    %133 = vmatprep.subr.mxu0 0.0
    %134 = vmatpush1.msra.mxu0 0.0
    %135 = vmatprep.subr.mxu0 0.0
    %136 = vmatpush1.msra.mxu0 0.0
    %137 = vmatprep.subr.mxu0 0.0
    %138 = vmatpush1.msra.mxu0 0.0
    %139 = vmatprep.subr.mxu0 0.0
    %140 = vmatpush1.msra.mxu0 0.0
    %141 = vmatprep.subr.mxu0 0.0
    %142 = vmatpush1.msra.mxu0 0.0
    %143 = vmatprep.subr.mxu0 0.0
    %144 = vmatpush1.msra.mxu0 0.0
    %145 = vmatprep.subr.mxu0 0.0
    %146 = vmatpush1.msra.mxu0 0.0
    %147 = vmatprep.subr.mxu0 0.0
    %148 = vmatpush1.msra.mxu0 0.0
    %149 = vmatprep.subr.mxu0 0.0
    %150 = vmatpush1.msra.mxu0 0.0
    %151 = vmatprep.subr.mxu0 0.0
    %152 = vmatpush1.msra.mxu0 0.0
    %153 = vmatprep.subr.mxu0 0.0
    %154 = vmatpush1.msra.mxu0 0.0
    %155 = vmatprep.subr.mxu0 0.0
    %156 = vmatpush1.msra.mxu0 0.0
    %157 = vmatprep.subr.mxu0 0.0
    %158 = vmatpush1.msra.mxu0 0.0
    %159 = vmatprep.subr.mxu0 0.0
    %160 = vmatpush1.msra.mxu0 0.0
    %161 = vmatprep.subr.mxu0 0.0
    %162 = vmatpush1.msra.mxu0 0.0
    %163 = vmatprep.subr.mxu0 0.0
    %164 = vmatpush1.msra.mxu0 0.0
    %165 = vmatprep.subr.mxu0 0.0
    %166 = vmatpush1.msra.mxu0 0.0
    %167 = vmatprep.subr.mxu0 0.0
    %168 = vmatpush1.msra.mxu0 0.0
    %169 = vmatprep.subr.mxu0 0.0
    %170 = vmatpush1.msra.mxu0 0.0
    %171 = vmatprep.subr.mxu0 0.0
    %172 = vmatpush1.msra.mxu0 0.0
    %173 = vmatprep.mubr.f32.mxu0 0.0
    %174 = vmatmul.mubr.f32.gmra.mrb[0].mxu0 %v104
    %v175 = vpop.f32.mrb[0].mxu0
    %v176 = vadd.f32 0.0, %v175
    %v177 = vpop.f32.mrb[0].mxu0
    %178 = vmatprep.mubr.f32.mxu0 0.0
    %179 = vmatmul.mubr.f32.gmra.mrb[0].mxu0 %v107
    %v180 = vpop.f32.mrb[0].mxu0
    %v181 = vadd.f32 0.0, %v180
    %v182 = vpop.f32.mrb[0].mxu0
    %183 = vdwg.mxu0
    %v185 = vsel %vm55, %v92, 0
    %v188 = vsel %vm55, %v93, 0
    %190 = vmatprep.subr.mxu0 0.0
    %191 = vmatpush1.msra.mxu0 %v94
    %192 = vmatprep.subr.mxu0 0.0
    %193 = vmatpush1.msra.mxu0 %v95
    %194 = vmatprep.subr.mxu0 0.0
    %195 = vmatpush1.msra.mxu0 0.0
    %196 = vmatprep.subr.mxu0 0.0
    %197 = vmatpush1.msra.mxu0 0.0
    %198 = vmatprep.subr.mxu0 0.0
    %199 = vmatpush1.msra.mxu0 0.0
    %200 = vmatprep.subr.mxu0 0.0
    %201 = vmatpush1.msra.mxu0 0.0
    %202 = vmatprep.subr.mxu0 0.0
    %203 = vmatpush1.msra.mxu0 0.0
    %204 = vmatprep.subr.mxu0 0.0
    %205 = vmatpush1.msra.mxu0 0.0
    %206 = vmatprep.subr.mxu0 0.0
    %207 = vmatpush1.msra.mxu0 0.0
    %208 = vmatprep.subr.mxu0 0.0
    %209 = vmatpush1.msra.mxu0 0.0
    %210 = vmatprep.subr.mxu0 0.0
    %211 = vmatpush1.msra.mxu0 0.0
    %212 = vmatprep.subr.mxu0 0.0
    %213 = vmatpush1.msra.mxu0 0.0
    %214 = vmatprep.subr.mxu0 0.0
    %215 = vmatpush1.msra.mxu0 0.0
    %216 = vmatprep.subr.mxu0 0.0
    %217 = vmatpush1.msra.mxu0 0.0
    %218 = vmatprep.subr.mxu0 0.0
    %219 = vmatpush1.msra.mxu0 0.0
    %220 = vmatprep.subr.mxu0 0.0
    %221 = vmatpush1.msra.mxu0 0.0
    %222 = vmatprep.subr.mxu0 0.0
    %223 = vmatpush1.msra.mxu0 0.0
    %224 = vmatprep.subr.mxu0 0.0
    %225 = vmatpush1.msra.mxu0 0.0
    %226 = vmatprep.subr.mxu0 0.0
    %227 = vmatpush1.msra.mxu0 0.0
    %228 = vmatprep.subr.mxu0 0.0
    %229 = vmatpush1.msra.mxu0 0.0
    %230 = vmatprep.subr.mxu0 0.0
    %231 = vmatpush1.msra.mxu0 0.0
    %232 = vmatprep.subr.mxu0 0.0
    %233 = vmatpush1.msra.mxu0 0.0
    %234 = vmatprep.subr.mxu0 0.0
    %235 = vmatpush1.msra.mxu0 0.0
    %236 = vmatprep.subr.mxu0 0.0
    %237 = vmatpush1.msra.mxu0 0.0
    %238 = vmatprep.subr.mxu0 0.0
    %239 = vmatpush1.msra.mxu0 0.0
    %240 = vmatprep.subr.mxu0 0.0
    %241 = vmatpush1.msra.mxu0 0.0
    %242 = vmatprep.subr.mxu0 0.0
    %243 = vmatpush1.msra.mxu0 0.0
    %244 = vmatprep.subr.mxu0 0.0
    %245 = vmatpush1.msra.mxu0 0.0
    %246 = vmatprep.subr.mxu0 0.0
    %247 = vmatpush1.msra.mxu0 0.0
    %248 = vmatprep.subr.mxu0 0.0
    %249 = vmatpush1.msra.mxu0 0.0
    %250 = vmatprep.subr.mxu0 0.0
    %251 = vmatpush1.msra.mxu0 0.0
    %252 = vmatprep.subr.mxu0 0.0
    %253 = vmatpush1.msra.mxu0 0.0
    %254 = vmatprep.mubr.f32.mxu0 0.0
    %255 = vmatmul.mubr.f32.gmra.mrb[0].mxu0 %v185
    %v256 = vpop.f32.mrb[0].mxu0
    %v257 = vadd.f32 %v176, %v256
    %v258 = vpop.f32.mrb[0].mxu0
    %259 = vmatprep.mubr.f32.mxu0 0.0
    %260 = vmatmul.mubr.f32.gmra.mrb[0].mxu0 %v188
    %v261 = vpop.f32.mrb[0].mxu0
    %v262 = vadd.f32 %v181, %v261
    %v263 = vpop.f32.mrb[0].mxu0
    %264 = vdwg.mxu0
    %s265 = scalar_lea.vmem %s2, 16
    %v266 = vld [vmem:[%s265] sm:$0xff]
    %v267 = vld [vmem:[%s265 + $0x8] sm:$0xff]
    %268 = vmatprep.subr.mxu0 0.0
    %269 = vmatpush1.msra.mxu0 %v266
    %270 = vmatprep.subr.mxu0 0.0
    %271 = vmatpush1.msra.mxu0 %v267
    %272 = vmatprep.subr.mxu0 0.0
    %273 = vmatpush1.msra.mxu0 0.0
    %274 = vmatprep.subr.mxu0 0.0
    %275 = vmatpush1.msra.mxu0 0.0
    %276 = vmatprep.subr.mxu0 0.0
    %277 = vmatpush1.msra.mxu0 0.0
    %278 = vmatprep.subr.mxu0 0.0
    %279 = vmatpush1.msra.mxu0 0.0
    %280 = vmatprep.subr.mxu0 0.0
    %281 = vmatpush1.msra.mxu0 0.0
    %282 = vmatprep.subr.mxu0 0.0
    %283 = vmatpush1.msra.mxu0 0.0
    %284 = vmatprep.subr.mxu0 0.0
    %285 = vmatpush1.msra.mxu0 0.0
    %286 = vmatprep.subr.mxu0 0.0
    %287 = vmatpush1.msra.mxu0 0.0
    %288 = vmatprep.subr.mxu0 0.0
    %289 = vmatpush1.msra.mxu0 0.0
    %290 = vmatprep.subr.mxu0 0.0
    %291 = vmatpush1.msra.mxu0 0.0
    %292 = vmatprep.subr.mxu0 0.0
    %293 = vmatpush1.msra.mxu0 0.0
    %294 = vmatprep.subr.mxu0 0.0
    %295 = vmatpush1.msra.mxu0 0.0
    %296 = vmatprep.subr.mxu0 0.0
    %297 = vmatpush1.msra.mxu0 0.0
    %298 = vmatprep.subr.mxu0 0.0
    %299 = vmatpush1.msra.mxu0 0.0
    %300 = vmatprep.subr.mxu0 0.0
    %301 = vmatpush1.msra.mxu0 0.0
    %302 = vmatprep.subr.mxu0 0.0
    %303 = vmatpush1.msra.mxu0 0.0
    %304 = vmatprep.subr.mxu0 0.0
    %305 = vmatpush1.msra.mxu0 0.0
    %306 = vmatprep.subr.mxu0 0.0
    %307 = vmatpush1.msra.mxu0 0.0
    %308 = vmatprep.subr.mxu0 0.0
    %309 = vmatpush1.msra.mxu0 0.0
    %310 = vmatprep.subr.mxu0 0.0
    %311 = vmatpush1.msra.mxu0 0.0
    %312 = vmatprep.subr.mxu0 0.0
    %313 = vmatpush1.msra.mxu0 0.0
    %314 = vmatprep.subr.mxu0 0.0
    %315 = vmatpush1.msra.mxu0 0.0
    %316 = vmatprep.subr.mxu0 0.0
    %317 = vmatpush1.msra.mxu0 0.0
    %318 = vmatprep.subr.mxu0 0.0
    %319 = vmatpush1.msra.mxu0 0.0
    %320 = vmatprep.subr.mxu0 0.0
    %321 = vmatpush1.msra.mxu0 0.0
    %322 = vmatprep.subr.mxu0 0.0
    %323 = vmatpush1.msra.mxu0 0.0
    %324 = vmatprep.subr.mxu0 0.0
    %325 = vmatpush1.msra.mxu0 0.0
    %326 = vmatprep.subr.mxu0 0.0
    %327 = vmatpush1.msra.mxu0 0.0
    %328 = vmatprep.subr.mxu0 0.0
    %329 = vmatpush1.msra.mxu0 0.0
    %330 = vmatprep.subr.mxu0 0.0
    %331 = vmatpush1.msra.mxu0 0.0
    %332 = vmatprep.mubr.f32.mxu0 0.0
    %333 = vmatmul.mubr.f32.gmra.mrb[0].mxu0 %v104
    %v334 = vpop.f32.mrb[0].mxu0
    %v335 = vadd.f32 0.0, %v334
    %v336 = vpop.f32.mrb[0].mxu0
    %337 = vmatprep.mubr.f32.mxu0 0.0
    %338 = vmatmul.mubr.f32.gmra.mrb[0].mxu0 %v107
    %v339 = vpop.f32.mrb[0].mxu0
    %v340 = vadd.f32 0.0, %v339
    %v341 = vpop.f32.mrb[0].mxu0
    %342 = vdwg.mxu0
    %343 = vmatprep.subr.mxu0 0.0
    %344 = vmatpush1.msra.mxu0 %v96
    %345 = vmatprep.subr.mxu0 0.0
    %346 = vmatpush1.msra.mxu0 %v97
    %347 = vmatprep.subr.mxu0 0.0
    %348 = vmatpush1.msra.mxu0 0.0
    %349 = vmatprep.subr.mxu0 0.0
    %350 = vmatpush1.msra.mxu0 0.0
    %351 = vmatprep.subr.mxu0 0.0
    %352 = vmatpush1.msra.mxu0 0.0
    %353 = vmatprep.subr.mxu0 0.0
    %354 = vmatpush1.msra.mxu0 0.0
    %355 = vmatprep.subr.mxu0 0.0
    %356 = vmatpush1.msra.mxu0 0.0
    %357 = vmatprep.subr.mxu0 0.0
    %358 = vmatpush1.msra.mxu0 0.0
    %359 = vmatprep.subr.mxu0 0.0
    %360 = vmatpush1.msra.mxu0 0.0
    %361 = vmatprep.subr.mxu0 0.0
    %362 = vmatpush1.msra.mxu0 0.0
    %363 = vmatprep.subr.mxu0 0.0
    %364 = vmatpush1.msra.mxu0 0.0
    %365 = vmatprep.subr.mxu0 0.0
    %366 = vmatpush1.msra.mxu0 0.0
    %367 = vmatprep.subr.mxu0 0.0
    %368 = vmatpush1.msra.mxu0 0.0
    %369 = vmatprep.subr.mxu0 0.0
    %370 = vmatpush1.msra.mxu0 0.0
    %371 = vmatprep.subr.mxu0 0.0
    %372 = vmatpush1.msra.mxu0 0.0
    %373 = vmatprep.subr.mxu0 0.0
    %374 = vmatpush1.msra.mxu0 0.0
    %375 = vmatprep.subr.mxu0 0.0
    %376 = vmatpush1.msra.mxu0 0.0
    %377 = vmatprep.subr.mxu0 0.0
    %378 = vmatpush1.msra.mxu0 0.0
    %379 = vmatprep.subr.mxu0 0.0
    %380 = vmatpush1.msra.mxu0 0.0
    %381 = vmatprep.subr.mxu0 0.0
    %382 = vmatpush1.msra.mxu0 0.0
    %383 = vmatprep.subr.mxu0 0.0
    %384 = vmatpush1.msra.mxu0 0.0
    %385 = vmatprep.subr.mxu0 0.0
    %386 = vmatpush1.msra.mxu0 0.0
    %387 = vmatprep.subr.mxu0 0.0
    %388 = vmatpush1.msra.mxu0 0.0
    %389 = vmatprep.subr.mxu0 0.0
    %390 = vmatpush1.msra.mxu0 0.0
    %391 = vmatprep.subr.mxu0 0.0
    %392 = vmatpush1.msra.mxu0 0.0
    %393 = vmatprep.subr.mxu0 0.0
    %394 = vmatpush1.msra.mxu0 0.0
    %395 = vmatprep.subr.mxu0 0.0
    %396 = vmatpush1.msra.mxu0 0.0
    %397 = vmatprep.subr.mxu0 0.0
    %398 = vmatpush1.msra.mxu0 0.0
    %399 = vmatprep.subr.mxu0 0.0
    %400 = vmatpush1.msra.mxu0 0.0
    %401 = vmatprep.subr.mxu0 0.0
    %402 = vmatpush1.msra.mxu0 0.0
    %403 = vmatprep.subr.mxu0 0.0
    %404 = vmatpush1.msra.mxu0 0.0
    %405 = vmatprep.subr.mxu0 0.0
    %406 = vmatpush1.msra.mxu0 0.0
    %407 = vmatprep.mubr.f32.mxu0 0.0
    %408 = vmatmul.mubr.f32.gmra.mrb[0].mxu0 %v185
    %v409 = vpop.f32.mrb[0].mxu0
    %v410 = vadd.f32 %v335, %v409
    %v411 = vpop.f32.mrb[0].mxu0
    %412 = vmatprep.mubr.f32.mxu0 0.0
    %413 = vmatmul.mubr.f32.gmra.mrb[0].mxu0 %v188
    %v414 = vpop.f32.mrb[0].mxu0
    %v415 = vadd.f32 %v340, %v414
    %v416 = vpop.f32.mrb[0].mxu0
    %417 = vdwg.mxu0
    %v418 = vld [vmem:[#allocation2 + $0x2] sm:$0xff]
    %v419 = vld [vmem:[#allocation2 + $0xa] sm:$0xff]
    %s420 = scalar_lea.vmem %s1, 32
    %v421 = vld [vmem:[%s420] sm:$0xff]
    %v422 = vld [vmem:[%s420 + $0x8] sm:$0xff]
    %v424 = vsel %vm55, %v418, 0
    %v427 = vsel %vm55, %v419, 0
    %429 = vmatprep.subr.mxu0 0.0
    %430 = vmatpush1.msra.mxu0 %v421
    %431 = vmatprep.subr.mxu0 0.0
    %432 = vmatpush1.msra.mxu0 %v422
    %433 = vmatprep.subr.mxu0 0.0
    %434 = vmatpush1.msra.mxu0 0.0
    %435 = vmatprep.subr.mxu0 0.0
    %436 = vmatpush1.msra.mxu0 0.0
    %437 = vmatprep.subr.mxu0 0.0
    %438 = vmatpush1.msra.mxu0 0.0
    %439 = vmatprep.subr.mxu0 0.0
    %440 = vmatpush1.msra.mxu0 0.0
    %441 = vmatprep.subr.mxu0 0.0
    %442 = vmatpush1.msra.mxu0 0.0
    %443 = vmatprep.subr.mxu0 0.0
    %444 = vmatpush1.msra.mxu0 0.0
    %445 = vmatprep.subr.mxu0 0.0
    %446 = vmatpush1.msra.mxu0 0.0
    %447 = vmatprep.subr.mxu0 0.0
    %448 = vmatpush1.msra.mxu0 0.0
    %449 = vmatprep.subr.mxu0 0.0
    %450 = vmatpush1.msra.mxu0 0.0
    %451 = vmatprep.subr.mxu0 0.0
    %452 = vmatpush1.msra.mxu0 0.0
    %453 = vmatprep.subr.mxu0 0.0
    %454 = vmatpush1.msra.mxu0 0.0
    %455 = vmatprep.subr.mxu0 0.0
    %456 = vmatpush1.msra.mxu0 0.0
    %457 = vmatprep.subr.mxu0 0.0
    %458 = vmatpush1.msra.mxu0 0.0
    %459 = vmatprep.subr.mxu0 0.0
    %460 = vmatpush1.msra.mxu0 0.0
    %461 = vmatprep.subr.mxu0 0.0
    %462 = vmatpush1.msra.mxu0 0.0
    %463 = vmatprep.subr.mxu0 0.0
    %464 = vmatpush1.msra.mxu0 0.0
    %465 = vmatprep.subr.mxu0 0.0
    %466 = vmatpush1.msra.mxu0 0.0
    %467 = vmatprep.subr.mxu0 0.0
    %468 = vmatpush1.msra.mxu0 0.0
    %469 = vmatprep.subr.mxu0 0.0
    %470 = vmatpush1.msra.mxu0 0.0
    %471 = vmatprep.subr.mxu0 0.0
    %472 = vmatpush1.msra.mxu0 0.0
    %473 = vmatprep.subr.mxu0 0.0
    %474 = vmatpush1.msra.mxu0 0.0
    %475 = vmatprep.subr.mxu0 0.0
    %476 = vmatpush1.msra.mxu0 0.0
    %477 = vmatprep.subr.mxu0 0.0
    %478 = vmatpush1.msra.mxu0 0.0
    %479 = vmatprep.subr.mxu0 0.0
    %480 = vmatpush1.msra.mxu0 0.0
    %481 = vmatprep.subr.mxu0 0.0
    %482 = vmatpush1.msra.mxu0 0.0
    %483 = vmatprep.subr.mxu0 0.0
    %484 = vmatpush1.msra.mxu0 0.0
    %485 = vmatprep.subr.mxu0 0.0
    %486 = vmatpush1.msra.mxu0 0.0
    %487 = vmatprep.subr.mxu0 0.0
    %488 = vmatpush1.msra.mxu0 0.0
    %489 = vmatprep.subr.mxu0 0.0
    %490 = vmatpush1.msra.mxu0 0.0
    %491 = vmatprep.subr.mxu0 0.0
    %492 = vmatpush1.msra.mxu0 0.0
    %493 = vmatprep.mubr.f32.mxu0 0.0
    %494 = vmatmul.mubr.f32.gmra.mrb[0].mxu0 %v424
    %v495 = vpop.f32.mrb[0].mxu0
    %v496 = vadd.f32 0.0, %v495
    %v497 = vpop.f32.mrb[0].mxu0
    %498 = vmatprep.mubr.f32.mxu0 0.0
    %499 = vmatmul.mubr.f32.gmra.mrb[0].mxu0 %v427
    %v500 = vpop.f32.mrb[0].mxu0
    %v501 = vadd.f32 0.0, %v500
    %v502 = vpop.f32.mrb[0].mxu0
    %503 = vdwg.mxu0
    %v504 = vadd.f32 %v257, %v496
    %v505 = vadd.f32 %v262, %v501
    %s506 = scalar_lea.vmem %s2, 32
    %v507 = vld [vmem:[%s506] sm:$0xff]
    %v508 = vld [vmem:[%s506 + $0x8] sm:$0xff]
    %509 = vmatprep.subr.mxu0 0.0
    %510 = vmatpush1.msra.mxu0 %v507
    %511 = vmatprep.subr.mxu0 0.0
    %512 = vmatpush1.msra.mxu0 %v508
    %513 = vmatprep.subr.mxu0 0.0
    %514 = vmatpush1.msra.mxu0 0.0
    %515 = vmatprep.subr.mxu0 0.0
    %516 = vmatpush1.msra.mxu0 0.0
    %517 = vmatprep.subr.mxu0 0.0
    %518 = vmatpush1.msra.mxu0 0.0
    %519 = vmatprep.subr.mxu0 0.0
    %520 = vmatpush1.msra.mxu0 0.0
    %521 = vmatprep.subr.mxu0 0.0
    %522 = vmatpush1.msra.mxu0 0.0
    %523 = vmatprep.subr.mxu0 0.0
    %524 = vmatpush1.msra.mxu0 0.0
    %525 = vmatprep.subr.mxu0 0.0
    %526 = vmatpush1.msra.mxu0 0.0
    %527 = vmatprep.subr.mxu0 0.0
    %528 = vmatpush1.msra.mxu0 0.0
    %529 = vmatprep.subr.mxu0 0.0
    %530 = vmatpush1.msra.mxu0 0.0
    %531 = vmatprep.subr.mxu0 0.0
    %532 = vmatpush1.msra.mxu0 0.0
    %533 = vmatprep.subr.mxu0 0.0
    %534 = vmatpush1.msra.mxu0 0.0
    %535 = vmatprep.subr.mxu0 0.0
    %536 = vmatpush1.msra.mxu0 0.0
    %537 = vmatprep.subr.mxu0 0.0
    %538 = vmatpush1.msra.mxu0 0.0
    %539 = vmatprep.subr.mxu0 0.0
    %540 = vmatpush1.msra.mxu0 0.0
    %541 = vmatprep.subr.mxu0 0.0
    %542 = vmatpush1.msra.mxu0 0.0
    %543 = vmatprep.subr.mxu0 0.0
    %544 = vmatpush1.msra.mxu0 0.0
    %545 = vmatprep.subr.mxu0 0.0
    %546 = vmatpush1.msra.mxu0 0.0
    %547 = vmatprep.subr.mxu0 0.0
    %548 = vmatpush1.msra.mxu0 0.0
    %549 = vmatprep.subr.mxu0 0.0
    %550 = vmatpush1.msra.mxu0 0.0
    %551 = vmatprep.subr.mxu0 0.0
    %552 = vmatpush1.msra.mxu0 0.0
    %553 = vmatprep.subr.mxu0 0.0
    %554 = vmatpush1.msra.mxu0 0.0
    %555 = vmatprep.subr.mxu0 0.0
    %556 = vmatpush1.msra.mxu0 0.0
    %557 = vmatprep.subr.mxu0 0.0
    %558 = vmatpush1.msra.mxu0 0.0
    %559 = vmatprep.subr.mxu0 0.0
    %560 = vmatpush1.msra.mxu0 0.0
    %561 = vmatprep.subr.mxu0 0.0
    %562 = vmatpush1.msra.mxu0 0.0
    %563 = vmatprep.subr.mxu0 0.0
    %564 = vmatpush1.msra.mxu0 0.0
    %565 = vmatprep.subr.mxu0 0.0
    %566 = vmatpush1.msra.mxu0 0.0
    %567 = vmatprep.subr.mxu0 0.0
    %568 = vmatpush1.msra.mxu0 0.0
    %569 = vmatprep.subr.mxu0 0.0
    %570 = vmatpush1.msra.mxu0 0.0
    %571 = vmatprep.subr.mxu0 0.0
    %572 = vmatpush1.msra.mxu0 0.0
    %573 = vmatprep.mubr.f32.mxu0 0.0
    %574 = vmatmul.mubr.f32.gmra.mrb[0].mxu0 %v424
    %v575 = vpop.f32.mrb[0].mxu0
    %v576 = vadd.f32 0.0, %v575
    %v577 = vpop.f32.mrb[0].mxu0
    %578 = vmatprep.mubr.f32.mxu0 0.0
    %579 = vmatmul.mubr.f32.gmra.mrb[0].mxu0 %v427
    %v580 = vpop.f32.mrb[0].mxu0
    %v581 = vadd.f32 0.0, %v580
    %v582 = vpop.f32.mrb[0].mxu0
    %583 = vdwg.mxu0
    %v584 = vadd.f32 %v410, %v576
    %v585 = vadd.f32 %v415, %v581
    %v586 = vmax.f32 %v504, %v584
    %v587 = vmax.f32 %v505, %v585
    %v589 = vrot.slane %v586, 1
    %v591 = vmax.f32 %v586, %v589
    %v593 = vrot.slane %v587, 1
    %v595 = vmax.f32 %v587, %v593
    %v597 = vrot.slane %v591, 1
    %v599 = vrot.slane %v591, 2
    %v601 = vrot.slane %v591, 3
    %v604 = vrot.slane %v595, 4
    %v606 = vrot.slane %v595, 5
    %v608 = vrot.slane %v595, 6
    %v610 = vrot.slane %v595, 7
    %vm612 = vcmask 1040384
    %v613 = vsel %vm612, %v591, %v597
    %vm614 = vcmask 1041408
    %v615 = vsel %vm614, %v613, %v599
    %vm616 = vcmask 1042432
    %v617 = vsel %vm616, %v615, %v601
    %vm618 = vcmask 1043456
    %v619 = vsel %vm618, %v617, %v604
    %vm620 = vcmask 1044480
    %v621 = vsel %vm620, %v619, %v606
    %vm622 = vcmask 1045504
    %v623 = vsel %vm622, %v621, %v608
    %vm624 = vcmask 1046528
    %v625 = vsel %vm624, %v623, %v610
    %v627 = vlaneseq
    %v628 = vshrl.u32 %v627, 7
    %v629 = vsub.s32 0, %v628
    %v630 = vrot.slane %v87, %v629
    %v632 = vadd.f32 %v625, %v630
    %v633 = vmax.f32 %v632, 0.0
    %634 = vst [vmem:[#allocation3 + $0x1] sm:$0xff] %v633
    %v635 = vld [vmem:[#allocation3] sm:$0xff]
    %v636 = vld [vmem:[%s4] sm:$0xff]
    %v637 = vld [vmem:[%s4 + $0x8] sm:$0xff]
    %v638 = vld [vmem:[%s4 + $0x10] sm:$0xff]
    %v639 = vld [vmem:[%s4 + $0x18] sm:$0xff]
    %v640 = vld [vmem:[%s4 + $0x20] sm:$0xff]
    %v641 = vld [vmem:[%s4 + $0x28] sm:$0xff]
    %v642 = vld [vmem:[%s4 + $0x30] sm:$0xff]
    %v643 = vld [vmem:[%s4 + $0x38] sm:$0xff]
    %v644 = vld [vmem:[%s4 + $0x40] sm:$0xff]
    %v645 = vld [vmem:[%s4 + $0x48] sm:$0xff]
    %v646 = vld [vmem:[%s4 + $0x50] sm:$0xff]
    %v647 = vld [vmem:[%s4 + $0x58] sm:$0xff]
    %v648 = vld [vmem:[%s4 + $0x60] sm:$0xff]
    %v649 = vld [vmem:[%s4 + $0x68] sm:$0xff]
    %v650 = vld [vmem:[%s4 + $0x70] sm:$0xff]
    %v651 = vld [vmem:[%s4 + $0x78] sm:$0xff]
    %v652 = vld [vmem:[%s5] sm:$0xff]
    %v653 = vld [vmem:[%s5 + $0x8] sm:$0xff]
    %v654 = vld [vmem:[%s5 + $0x10] sm:$0xff]
    %v655 = vld [vmem:[%s5 + $0x18] sm:$0xff]
    %v656 = vld [vmem:[%s5 + $0x20] sm:$0xff]
    %v657 = vld [vmem:[%s5 + $0x28] sm:$0xff]
    %v658 = vld [vmem:[%s5 + $0x30] sm:$0xff]
    %v659 = vld [vmem:[%s5 + $0x38] sm:$0xff]
    %v660 = vld [vmem:[%s5 + $0x40] sm:$0xff]
    %v661 = vld [vmem:[%s5 + $0x48] sm:$0xff]
    %v662 = vld [vmem:[%s5 + $0x50] sm:$0xff]
    %v663 = vld [vmem:[%s5 + $0x58] sm:$0xff]
    %v664 = vld [vmem:[%s5 + $0x60] sm:$0xff]
    %v665 = vld [vmem:[%s5 + $0x68] sm:$0xff]
    %v666 = vld [vmem:[%s5 + $0x70] sm:$0xff]
    %v667 = vld [vmem:[%s5 + $0x78] sm:$0xff]
    %v668 = vld [vmem:[#allocation3 + $0x1] sm:$0xff]
    %s669 = scalar_lea.vmem %s4, 128
    %v670 = vld [vmem:[%s669] sm:$0xff]
    %v671 = vld [vmem:[%s669 + $0x8] sm:$0xff]
    %v672 = vld [vmem:[%s669 + $0x10] sm:$0xff]
    %v673 = vld [vmem:[%s669 + $0x18] sm:$0xff]
    %v674 = vld [vmem:[%s669 + $0x20] sm:$0xff]
    %v675 = vld [vmem:[%s669 + $0x28] sm:$0xff]
    %v676 = vld [vmem:[%s669 + $0x30] sm:$0xff]
    %v677 = vld [vmem:[%s669 + $0x38] sm:$0xff]
    %v678 = vld [vmem:[%s669 + $0x40] sm:$0xff]
    %v679 = vld [vmem:[%s669 + $0x48] sm:$0xff]
    %v680 = vld [vmem:[%s669 + $0x50] sm:$0xff]
    %v681 = vld [vmem:[%s669 + $0x58] sm:$0xff]
    %v682 = vld [vmem:[%s669 + $0x60] sm:$0xff]
    %v683 = vld [vmem:[%s669 + $0x68] sm:$0xff]
    %v684 = vld [vmem:[%s669 + $0x70] sm:$0xff]
    %v685 = vld [vmem:[%s669 + $0x78] sm:$0xff]
    %686 = vmatprep.subr.mxu0 0.0
    %687 = vmatpush1.msra.mxu0 %v670
    %688 = vmatprep.subr.mxu0 0.0
    %689 = vmatpush1.msra.mxu0 %v671
    %690 = vmatprep.subr.mxu0 0.0
    %691 = vmatpush1.msra.mxu0 %v672
    %692 = vmatprep.subr.mxu0 0.0
    %693 = vmatpush1.msra.mxu0 %v673
    %694 = vmatprep.subr.mxu0 0.0
    %695 = vmatpush1.msra.mxu0 %v674
    %696 = vmatprep.subr.mxu0 0.0
    %697 = vmatpush1.msra.mxu0 %v675
    %698 = vmatprep.subr.mxu0 0.0
    %699 = vmatpush1.msra.mxu0 %v676
    %700 = vmatprep.subr.mxu0 0.0
    %701 = vmatpush1.msra.mxu0 %v677
    %702 = vmatprep.subr.mxu0 0.0
    %703 = vmatpush1.msra.mxu0 %v678
    %704 = vmatprep.subr.mxu0 0.0
    %705 = vmatpush1.msra.mxu0 %v679
    %706 = vmatprep.subr.mxu0 0.0
    %707 = vmatpush1.msra.mxu0 %v680
    %708 = vmatprep.subr.mxu0 0.0
    %709 = vmatpush1.msra.mxu0 %v681
    %710 = vmatprep.subr.mxu0 0.0
    %711 = vmatpush1.msra.mxu0 %v682
    %712 = vmatprep.subr.mxu0 0.0
    %713 = vmatpush1.msra.mxu0 %v683
    %714 = vmatprep.subr.mxu0 0.0
    %715 = vmatpush1.msra.mxu0 %v684
    %716 = vmatprep.subr.mxu0 0.0
    %717 = vmatpush1.msra.mxu0 %v685
    %718 = vmatprep.subr.mxu0 0.0
    %719 = vmatpush1.msra.mxu0 0.0
    %720 = vmatprep.subr.mxu0 0.0
    %721 = vmatpush1.msra.mxu0 0.0
    %722 = vmatprep.subr.mxu0 0.0
    %723 = vmatpush1.msra.mxu0 0.0
    %724 = vmatprep.subr.mxu0 0.0
    %725 = vmatpush1.msra.mxu0 0.0
    %726 = vmatprep.subr.mxu0 0.0
    %727 = vmatpush1.msra.mxu0 0.0
    %728 = vmatprep.subr.mxu0 0.0
    %729 = vmatpush1.msra.mxu0 0.0
    %730 = vmatprep.subr.mxu0 0.0
    %731 = vmatpush1.msra.mxu0 0.0
    %732 = vmatprep.subr.mxu0 0.0
    %733 = vmatpush1.msra.mxu0 0.0
    %734 = vmatprep.subr.mxu0 0.0
    %735 = vmatpush1.msra.mxu0 0.0
    %736 = vmatprep.subr.mxu0 0.0
    %737 = vmatpush1.msra.mxu0 0.0
    %738 = vmatprep.subr.mxu0 0.0
    %739 = vmatpush1.msra.mxu0 0.0
    %740 = vmatprep.subr.mxu0 0.0
    %741 = vmatpush1.msra.mxu0 0.0
    %742 = vmatprep.subr.mxu0 0.0
    %743 = vmatpush1.msra.mxu0 0.0
    %744 = vmatprep.subr.mxu0 0.0
    %745 = vmatpush1.msra.mxu0 0.0
    %746 = vmatprep.subr.mxu0 0.0
    %747 = vmatpush1.msra.mxu0 0.0
    %748 = vmatprep.subr.mxu0 0.0
    %749 = vmatpush1.msra.mxu0 0.0
    %750 = vmatprep.mubr.f32.mxu0 0.0
    %751 = vmatmul.mubr.f32.gmra.mrb[0].mxu0 %v668
    %v752 = vpop.f32.mrb[0].mxu0
    %v753 = vadd.f32 0.0, %v752
    %v754 = vpop.f32.mrb[0].mxu0
    %755 = vdwg.mxu0
    %756 = vmatprep.subr.mxu0 0.0
    %757 = vmatpush1.msra.mxu0 %v636
    %758 = vmatprep.subr.mxu0 0.0
    %759 = vmatpush1.msra.mxu0 %v637
    %760 = vmatprep.subr.mxu0 0.0
    %761 = vmatpush1.msra.mxu0 %v638
    %762 = vmatprep.subr.mxu0 0.0
    %763 = vmatpush1.msra.mxu0 %v639
    %764 = vmatprep.subr.mxu0 0.0
    %765 = vmatpush1.msra.mxu0 %v640
    %766 = vmatprep.subr.mxu0 0.0
    %767 = vmatpush1.msra.mxu0 %v641
    %768 = vmatprep.subr.mxu0 0.0
    %769 = vmatpush1.msra.mxu0 %v642
    %770 = vmatprep.subr.mxu0 0.0
    %771 = vmatpush1.msra.mxu0 %v643
    %772 = vmatprep.subr.mxu0 0.0
    %773 = vmatpush1.msra.mxu0 %v644
    %774 = vmatprep.subr.mxu0 0.0
    %775 = vmatpush1.msra.mxu0 %v645
    %776 = vmatprep.subr.mxu0 0.0
    %777 = vmatpush1.msra.mxu0 %v646
    %778 = vmatprep.subr.mxu0 0.0
    %779 = vmatpush1.msra.mxu0 %v647
    %780 = vmatprep.subr.mxu0 0.0
    %781 = vmatpush1.msra.mxu0 %v648
    %782 = vmatprep.subr.mxu0 0.0
    %783 = vmatpush1.msra.mxu0 %v649
    %784 = vmatprep.subr.mxu0 0.0
    %785 = vmatpush1.msra.mxu0 %v650
    %786 = vmatprep.subr.mxu0 0.0
    %787 = vmatpush1.msra.mxu0 %v651
    %788 = vmatprep.subr.mxu0 0.0
    %789 = vmatpush1.msra.mxu0 0.0
    %790 = vmatprep.subr.mxu0 0.0
    %791 = vmatpush1.msra.mxu0 0.0
    %792 = vmatprep.subr.mxu0 0.0
    %793 = vmatpush1.msra.mxu0 0.0
    %794 = vmatprep.subr.mxu0 0.0
    %795 = vmatpush1.msra.mxu0 0.0
    %796 = vmatprep.subr.mxu0 0.0
    %797 = vmatpush1.msra.mxu0 0.0
    %798 = vmatprep.subr.mxu0 0.0
    %799 = vmatpush1.msra.mxu0 0.0
    %800 = vmatprep.subr.mxu0 0.0
    %801 = vmatpush1.msra.mxu0 0.0
    %802 = vmatprep.subr.mxu0 0.0
    %803 = vmatpush1.msra.mxu0 0.0
    %804 = vmatprep.subr.mxu0 0.0
    %805 = vmatpush1.msra.mxu0 0.0
    %806 = vmatprep.subr.mxu0 0.0
    %807 = vmatpush1.msra.mxu0 0.0
    %808 = vmatprep.subr.mxu0 0.0
    %809 = vmatpush1.msra.mxu0 0.0
    %810 = vmatprep.subr.mxu0 0.0
    %811 = vmatpush1.msra.mxu0 0.0
    %812 = vmatprep.subr.mxu0 0.0
    %813 = vmatpush1.msra.mxu0 0.0
    %814 = vmatprep.subr.mxu0 0.0
    %815 = vmatpush1.msra.mxu0 0.0
    %816 = vmatprep.subr.mxu0 0.0
    %817 = vmatpush1.msra.mxu0 0.0
    %818 = vmatprep.subr.mxu0 0.0
    %819 = vmatpush1.msra.mxu0 0.0
    %820 = vmatprep.mubr.f32.mxu0 0.0
    %821 = vmatmul.mubr.f32.gmra.mrb[0].mxu0 %v635
    %v822 = vpop.f32.mrb[0].mxu0
    %v823 = vadd.f32 %v753, %v822
    %v824 = vpop.f32.mrb[0].mxu0
    %825 = vdwg.mxu0
    %s826 = scalar_lea.vmem %s5, 128
    %v827 = vld [vmem:[%s826] sm:$0xff]
    %v828 = vld [vmem:[%s826 + $0x8] sm:$0xff]
    %v829 = vld [vmem:[%s826 + $0x10] sm:$0xff]
    %v830 = vld [vmem:[%s826 + $0x18] sm:$0xff]
    %v831 = vld [vmem:[%s826 + $0x20] sm:$0xff]
    %v832 = vld [vmem:[%s826 + $0x28] sm:$0xff]
    %v833 = vld [vmem:[%s826 + $0x30] sm:$0xff]
    %v834 = vld [vmem:[%s826 + $0x38] sm:$0xff]
    %v835 = vld [vmem:[%s826 + $0x40] sm:$0xff]
    %v836 = vld [vmem:[%s826 + $0x48] sm:$0xff]
    %v837 = vld [vmem:[%s826 + $0x50] sm:$0xff]
    %v838 = vld [vmem:[%s826 + $0x58] sm:$0xff]
    %v839 = vld [vmem:[%s826 + $0x60] sm:$0xff]
    %v840 = vld [vmem:[%s826 + $0x68] sm:$0xff]
    %v841 = vld [vmem:[%s826 + $0x70] sm:$0xff]
    %v842 = vld [vmem:[%s826 + $0x78] sm:$0xff]
    %843 = vmatprep.subr.mxu0 0.0
    %844 = vmatpush1.msra.mxu0 %v827
    %845 = vmatprep.subr.mxu0 0.0
    %846 = vmatpush1.msra.mxu0 %v828
    %847 = vmatprep.subr.mxu0 0.0
    %848 = vmatpush1.msra.mxu0 %v829
    %849 = vmatprep.subr.mxu0 0.0
    %850 = vmatpush1.msra.mxu0 %v830
    %851 = vmatprep.subr.mxu0 0.0
    %852 = vmatpush1.msra.mxu0 %v831
    %853 = vmatprep.subr.mxu0 0.0
    %854 = vmatpush1.msra.mxu0 %v832
    %855 = vmatprep.subr.mxu0 0.0
    %856 = vmatpush1.msra.mxu0 %v833
    %857 = vmatprep.subr.mxu0 0.0
    %858 = vmatpush1.msra.mxu0 %v834
    %859 = vmatprep.subr.mxu0 0.0
    %860 = vmatpush1.msra.mxu0 %v835
    %861 = vmatprep.subr.mxu0 0.0
    %862 = vmatpush1.msra.mxu0 %v836
    %863 = vmatprep.subr.mxu0 0.0
    %864 = vmatpush1.msra.mxu0 %v837
    %865 = vmatprep.subr.mxu0 0.0
    %866 = vmatpush1.msra.mxu0 %v838
    %867 = vmatprep.subr.mxu0 0.0
    %868 = vmatpush1.msra.mxu0 %v839
    %869 = vmatprep.subr.mxu0 0.0
    %870 = vmatpush1.msra.mxu0 %v840
    %871 = vmatprep.subr.mxu0 0.0
    %872 = vmatpush1.msra.mxu0 %v841
    %873 = vmatprep.subr.mxu0 0.0
    %874 = vmatpush1.msra.mxu0 %v842
    %875 = vmatprep.subr.mxu0 0.0
    %876 = vmatpush1.msra.mxu0 0.0
    %877 = vmatprep.subr.mxu0 0.0
    %878 = vmatpush1.msra.mxu0 0.0
    %879 = vmatprep.subr.mxu0 0.0
    %880 = vmatpush1.msra.mxu0 0.0
    %881 = vmatprep.subr.mxu0 0.0
    %882 = vmatpush1.msra.mxu0 0.0
    %883 = vmatprep.subr.mxu0 0.0
    %884 = vmatpush1.msra.mxu0 0.0
    %885 = vmatprep.subr.mxu0 0.0
    %886 = vmatpush1.msra.mxu0 0.0
    %887 = vmatprep.subr.mxu0 0.0
    %888 = vmatpush1.msra.mxu0 0.0
    %889 = vmatprep.subr.mxu0 0.0
    %890 = vmatpush1.msra.mxu0 0.0
    %891 = vmatprep.subr.mxu0 0.0
    %892 = vmatpush1.msra.mxu0 0.0
    %893 = vmatprep.subr.mxu0 0.0
    %894 = vmatpush1.msra.mxu0 0.0
    %895 = vmatprep.subr.mxu0 0.0
    %896 = vmatpush1.msra.mxu0 0.0
    %897 = vmatprep.subr.mxu0 0.0
    %898 = vmatpush1.msra.mxu0 0.0
    %899 = vmatprep.subr.mxu0 0.0
    %900 = vmatpush1.msra.mxu0 0.0
    %901 = vmatprep.subr.mxu0 0.0
    %902 = vmatpush1.msra.mxu0 0.0
    %903 = vmatprep.subr.mxu0 0.0
    %904 = vmatpush1.msra.mxu0 0.0
    %905 = vmatprep.subr.mxu0 0.0
    %906 = vmatpush1.msra.mxu0 0.0
    %907 = vmatprep.mubr.f32.mxu0 0.0
    %908 = vmatmul.mubr.f32.gmra.mrb[0].mxu0 %v668
    %v909 = vpop.f32.mrb[0].mxu0
    %v910 = vadd.f32 0.0, %v909
    %v911 = vpop.f32.mrb[0].mxu0
    %912 = vdwg.mxu0
    %913 = vmatprep.subr.mxu0 0.0
    %914 = vmatpush1.msra.mxu0 %v652
    %915 = vmatprep.subr.mxu0 0.0
    %916 = vmatpush1.msra.mxu0 %v653
    %917 = vmatprep.subr.mxu0 0.0
    %918 = vmatpush1.msra.mxu0 %v654
    %919 = vmatprep.subr.mxu0 0.0
    %920 = vmatpush1.msra.mxu0 %v655
    %921 = vmatprep.subr.mxu0 0.0
    %922 = vmatpush1.msra.mxu0 %v656
    %923 = vmatprep.subr.mxu0 0.0
    %924 = vmatpush1.msra.mxu0 %v657
    %925 = vmatprep.subr.mxu0 0.0
    %926 = vmatpush1.msra.mxu0 %v658
    %927 = vmatprep.subr.mxu0 0.0
    %928 = vmatpush1.msra.mxu0 %v659
    %929 = vmatprep.subr.mxu0 0.0
    %930 = vmatpush1.msra.mxu0 %v660
    %931 = vmatprep.subr.mxu0 0.0
    %932 = vmatpush1.msra.mxu0 %v661
    %933 = vmatprep.subr.mxu0 0.0
    %934 = vmatpush1.msra.mxu0 %v662
    %935 = vmatprep.subr.mxu0 0.0
    %936 = vmatpush1.msra.mxu0 %v663
    %937 = vmatprep.subr.mxu0 0.0
    %938 = vmatpush1.msra.mxu0 %v664
    %939 = vmatprep.subr.mxu0 0.0
    %940 = vmatpush1.msra.mxu0 %v665
    %941 = vmatprep.subr.mxu0 0.0
    %942 = vmatpush1.msra.mxu0 %v666
    %943 = vmatprep.subr.mxu0 0.0
    %944 = vmatpush1.msra.mxu0 %v667
    %945 = vmatprep.subr.mxu0 0.0
    %946 = vmatpush1.msra.mxu0 0.0
    %947 = vmatprep.subr.mxu0 0.0
    %948 = vmatpush1.msra.mxu0 0.0
    %949 = vmatprep.subr.mxu0 0.0
    %950 = vmatpush1.msra.mxu0 0.0
    %951 = vmatprep.subr.mxu0 0.0
    %952 = vmatpush1.msra.mxu0 0.0
    %953 = vmatprep.subr.mxu0 0.0
    %954 = vmatpush1.msra.mxu0 0.0
    %955 = vmatprep.subr.mxu0 0.0
    %956 = vmatpush1.msra.mxu0 0.0
    %957 = vmatprep.subr.mxu0 0.0
    %958 = vmatpush1.msra.mxu0 0.0
    %959 = vmatprep.subr.mxu0 0.0
    %960 = vmatpush1.msra.mxu0 0.0
    %961 = vmatprep.subr.mxu0 0.0
    %962 = vmatpush1.msra.mxu0 0.0
    %963 = vmatprep.subr.mxu0 0.0
    %964 = vmatpush1.msra.mxu0 0.0
    %965 = vmatprep.subr.mxu0 0.0
    %966 = vmatpush1.msra.mxu0 0.0
    %967 = vmatprep.subr.mxu0 0.0
    %968 = vmatpush1.msra.mxu0 0.0
    %969 = vmatprep.subr.mxu0 0.0
    %970 = vmatpush1.msra.mxu0 0.0
    %971 = vmatprep.subr.mxu0 0.0
    %972 = vmatpush1.msra.mxu0 0.0
    %973 = vmatprep.subr.mxu0 0.0
    %974 = vmatpush1.msra.mxu0 0.0
    %975 = vmatprep.subr.mxu0 0.0
    %976 = vmatpush1.msra.mxu0 0.0
    %977 = vmatprep.mubr.f32.mxu0 0.0
    %978 = vmatmul.mubr.f32.gmra.mrb[0].mxu0 %v635
    %v979 = vpop.f32.mrb[0].mxu0
    %v980 = vadd.f32 %v910, %v979
    %v981 = vpop.f32.mrb[0].mxu0
    %982 = vdwg.mxu0
    %v983 = vld [vmem:[#allocation3 + $0x2] sm:$0xff]
    %s984 = scalar_lea.vmem %s4, 256
    %v985 = vld [vmem:[%s984] sm:$0xff]
    %v986 = vld [vmem:[%s984 + $0x8] sm:$0xff]
    %v987 = vld [vmem:[%s984 + $0x10] sm:$0xff]
    %v988 = vld [vmem:[%s984 + $0x18] sm:$0xff]
    %v989 = vld [vmem:[%s984 + $0x20] sm:$0xff]
    %v990 = vld [vmem:[%s984 + $0x28] sm:$0xff]
    %v991 = vld [vmem:[%s984 + $0x30] sm:$0xff]
    %v992 = vld [vmem:[%s984 + $0x38] sm:$0xff]
    %v993 = vld [vmem:[%s984 + $0x40] sm:$0xff]
    %v994 = vld [vmem:[%s984 + $0x48] sm:$0xff]
    %v995 = vld [vmem:[%s984 + $0x50] sm:$0xff]
    %v996 = vld [vmem:[%s984 + $0x58] sm:$0xff]
    %v997 = vld [vmem:[%s984 + $0x60] sm:$0xff]
    %v998 = vld [vmem:[%s984 + $0x68] sm:$0xff]
    %v999 = vld [vmem:[%s984 + $0x70] sm:$0xff]
    %v1000 = vld [vmem:[%s984 + $0x78] sm:$0xff]
    %1001 = vmatprep.subr.mxu0 0.0
    %1002 = vmatpush1.msra.mxu0 %v985
    %1003 = vmatprep.subr.mxu0 0.0
    %1004 = vmatpush1.msra.mxu0 %v986
    %1005 = vmatprep.subr.mxu0 0.0
    %1006 = vmatpush1.msra.mxu0 %v987
    %1007 = vmatprep.subr.mxu0 0.0
    %1008 = vmatpush1.msra.mxu0 %v988
    %1009 = vmatprep.subr.mxu0 0.0
    %1010 = vmatpush1.msra.mxu0 %v989
    %1011 = vmatprep.subr.mxu0 0.0
    %1012 = vmatpush1.msra.mxu0 %v990
    %1013 = vmatprep.subr.mxu0 0.0
    %1014 = vmatpush1.msra.mxu0 %v991
    %1015 = vmatprep.subr.mxu0 0.0
    %1016 = vmatpush1.msra.mxu0 %v992
    %1017 = vmatprep.subr.mxu0 0.0
    %1018 = vmatpush1.msra.mxu0 %v993
    %1019 = vmatprep.subr.mxu0 0.0
    %1020 = vmatpush1.msra.mxu0 %v994
    %1021 = vmatprep.subr.mxu0 0.0
    %1022 = vmatpush1.msra.mxu0 %v995
    %1023 = vmatprep.subr.mxu0 0.0
    %1024 = vmatpush1.msra.mxu0 %v996
    %1025 = vmatprep.subr.mxu0 0.0
    %1026 = vmatpush1.msra.mxu0 %v997
    %1027 = vmatprep.subr.mxu0 0.0
    %1028 = vmatpush1.msra.mxu0 %v998
    %1029 = vmatprep.subr.mxu0 0.0
    %1030 = vmatpush1.msra.mxu0 %v999
    %1031 = vmatprep.subr.mxu0 0.0
    %1032 = vmatpush1.msra.mxu0 %v1000
    %1033 = vmatprep.subr.mxu0 0.0
    %1034 = vmatpush1.msra.mxu0 0.0
    %1035 = vmatprep.subr.mxu0 0.0
    %1036 = vmatpush1.msra.mxu0 0.0
    %1037 = vmatprep.subr.mxu0 0.0
    %1038 = vmatpush1.msra.mxu0 0.0
    %1039 = vmatprep.subr.mxu0 0.0
    %1040 = vmatpush1.msra.mxu0 0.0
    %1041 = vmatprep.subr.mxu0 0.0
    %1042 = vmatpush1.msra.mxu0 0.0
    %1043 = vmatprep.subr.mxu0 0.0
    %1044 = vmatpush1.msra.mxu0 0.0
    %1045 = vmatprep.subr.mxu0 0.0
    %1046 = vmatpush1.msra.mxu0 0.0
    %1047 = vmatprep.subr.mxu0 0.0
    %1048 = vmatpush1.msra.mxu0 0.0
    %1049 = vmatprep.subr.mxu0 0.0
    %1050 = vmatpush1.msra.mxu0 0.0
    %1051 = vmatprep.subr.mxu0 0.0
    %1052 = vmatpush1.msra.mxu0 0.0
    %1053 = vmatprep.subr.mxu0 0.0
    %1054 = vmatpush1.msra.mxu0 0.0
    %1055 = vmatprep.subr.mxu0 0.0
    %1056 = vmatpush1.msra.mxu0 0.0
    %1057 = vmatprep.subr.mxu0 0.0
    %1058 = vmatpush1.msra.mxu0 0.0
    %1059 = vmatprep.subr.mxu0 0.0
    %1060 = vmatpush1.msra.mxu0 0.0
    %1061 = vmatprep.subr.mxu0 0.0
    %1062 = vmatpush1.msra.mxu0 0.0
    %1063 = vmatprep.subr.mxu0 0.0
    %1064 = vmatpush1.msra.mxu0 0.0
    %1065 = vmatprep.mubr.f32.mxu0 0.0
    %1066 = vmatmul.mubr.f32.gmra.mrb[0].mxu0 %v983
    %v1067 = vpop.f32.mrb[0].mxu0
    %v1068 = vadd.f32 0.0, %v1067
    %v1069 = vpop.f32.mrb[0].mxu0
    %1070 = vdwg.mxu0
    %v1071 = vadd.f32 %v823, %v1068
    %s1072 = scalar_lea.vmem %s5, 256
    %v1073 = vld [vmem:[%s1072] sm:$0xff]
    %v1074 = vld [vmem:[%s1072 + $0x8] sm:$0xff]
    %v1075 = vld [vmem:[%s1072 + $0x10] sm:$0xff]
    %v1076 = vld [vmem:[%s1072 + $0x18] sm:$0xff]
    %v1077 = vld [vmem:[%s1072 + $0x20] sm:$0xff]
    %v1078 = vld [vmem:[%s1072 + $0x28] sm:$0xff]
    %v1079 = vld [vmem:[%s1072 + $0x30] sm:$0xff]
    %v1080 = vld [vmem:[%s1072 + $0x38] sm:$0xff]
    %v1081 = vld [vmem:[%s1072 + $0x40] sm:$0xff]
    %v1082 = vld [vmem:[%s1072 + $0x48] sm:$0xff]
    %v1083 = vld [vmem:[%s1072 + $0x50] sm:$0xff]
    %v1084 = vld [vmem:[%s1072 + $0x58] sm:$0xff]
    %v1085 = vld [vmem:[%s1072 + $0x60] sm:$0xff]
    %v1086 = vld [vmem:[%s1072 + $0x68] sm:$0xff]
    %v1087 = vld [vmem:[%s1072 + $0x70] sm:$0xff]
    %v1088 = vld [vmem:[%s1072 + $0x78] sm:$0xff]
    %1089 = vmatprep.subr.mxu0 0.0
    %1090 = vmatpush1.msra.mxu0 %v1073
    %1091 = vmatprep.subr.mxu0 0.0
    %1092 = vmatpush1.msra.mxu0 %v1074
    %1093 = vmatprep.subr.mxu0 0.0
    %1094 = vmatpush1.msra.mxu0 %v1075
    %1095 = vmatprep.subr.mxu0 0.0
    %1096 = vmatpush1.msra.mxu0 %v1076
    %1097 = vmatprep.subr.mxu0 0.0
    %1098 = vmatpush1.msra.mxu0 %v1077
    %1099 = vmatprep.subr.mxu0 0.0
    %1100 = vmatpush1.msra.mxu0 %v1078
    %1101 = vmatprep.subr.mxu0 0.0
    %1102 = vmatpush1.msra.mxu0 %v1079
    %1103 = vmatprep.subr.mxu0 0.0
    %1104 = vmatpush1.msra.mxu0 %v1080
    %1105 = vmatprep.subr.mxu0 0.0
    %1106 = vmatpush1.msra.mxu0 %v1081
    %1107 = vmatprep.subr.mxu0 0.0
    %1108 = vmatpush1.msra.mxu0 %v1082
    %1109 = vmatprep.subr.mxu0 0.0
    %1110 = vmatpush1.msra.mxu0 %v1083
    %1111 = vmatprep.subr.mxu0 0.0
    %1112 = vmatpush1.msra.mxu0 %v1084
    %1113 = vmatprep.subr.mxu0 0.0
    %1114 = vmatpush1.msra.mxu0 %v1085
    %1115 = vmatprep.subr.mxu0 0.0
    %1116 = vmatpush1.msra.mxu0 %v1086
    %1117 = vmatprep.subr.mxu0 0.0
    %1118 = vmatpush1.msra.mxu0 %v1087
    %1119 = vmatprep.subr.mxu0 0.0
    %1120 = vmatpush1.msra.mxu0 %v1088
    %1121 = vmatprep.subr.mxu0 0.0
    %1122 = vmatpush1.msra.mxu0 0.0
    %1123 = vmatprep.subr.mxu0 0.0
    %1124 = vmatpush1.msra.mxu0 0.0
    %1125 = vmatprep.subr.mxu0 0.0
    %1126 = vmatpush1.msra.mxu0 0.0
    %1127 = vmatprep.subr.mxu0 0.0
    %1128 = vmatpush1.msra.mxu0 0.0
    %1129 = vmatprep.subr.mxu0 0.0
    %1130 = vmatpush1.msra.mxu0 0.0
    %1131 = vmatprep.subr.mxu0 0.0
    %1132 = vmatpush1.msra.mxu0 0.0
    %1133 = vmatprep.subr.mxu0 0.0
    %1134 = vmatpush1.msra.mxu0 0.0
    %1135 = vmatprep.subr.mxu0 0.0
    %1136 = vmatpush1.msra.mxu0 0.0
    %1137 = vmatprep.subr.mxu0 0.0
    %1138 = vmatpush1.msra.mxu0 0.0
    %1139 = vmatprep.subr.mxu0 0.0
    %1140 = vmatpush1.msra.mxu0 0.0
    %1141 = vmatprep.subr.mxu0 0.0
    %1142 = vmatpush1.msra.mxu0 0.0
    %1143 = vmatprep.subr.mxu0 0.0
    %1144 = vmatpush1.msra.mxu0 0.0
    %1145 = vmatprep.subr.mxu0 0.0
    %1146 = vmatpush1.msra.mxu0 0.0
    %1147 = vmatprep.subr.mxu0 0.0
    %1148 = vmatpush1.msra.mxu0 0.0
    %1149 = vmatprep.subr.mxu0 0.0
    %1150 = vmatpush1.msra.mxu0 0.0
    %1151 = vmatprep.subr.mxu0 0.0
    %1152 = vmatpush1.msra.mxu0 0.0
    %1153 = vmatprep.mubr.f32.mxu0 0.0
    %1154 = vmatmul.mubr.f32.gmra.mrb[0].mxu0 %v983
    %v1155 = vpop.f32.mrb[0].mxu0
    %v1156 = vadd.f32 0.0, %v1155
    %v1157 = vpop.f32.mrb[0].mxu0
    %1158 = vdwg.mxu0
    %v1159 = vadd.f32 %v980, %v1156
    %v1160 = vmax.f32 %v1071, %v1159
    %v1162 = vrot.slane %v1160, 1
    %v1164 = vmax.f32 %v1160, %v1162
    %v1165 = vadd.f32 %v1164, %v88
    %v1166 = vmax.f32 %v1165, 0.0
    %v1168 = vlaneseq
    %v1169 = vshrl.u32 %v1168, 7
    %v1170 = vsub.s32 0, %v1169
    %v1171 = vrot.slane %v88, %v1170
    %v1173 = vadd.f32 %v1164, %v1171
    %v1174 = vmax.f32 %v1173, 0.0
    %v1175 = vld [vmem:[%s7] sm:$0xff]
    %v1176 = vld [vmem:[%s7 + $0x8] sm:$0xff]
    %v1177 = vld [vmem:[%s7 + $0x10] sm:$0xff]
    %v1178 = vld [vmem:[%s7 + $0x18] sm:$0xff]
    %v1179 = vld [vmem:[%s7 + $0x20] sm:$0xf]
    %v1181 = vsel %vm67, %v1166, 0
    %v1184 = vsel %vm618, %v1179, 0
    %1186 = vmatprep.subr.mxu0 0.0
    %1187 = vmatpush1.msra.mxu0 %v1175
    %1188 = vmatprep.subr.mxu0 0.0
    %1189 = vmatpush1.msra.mxu0 %v1176
    %1190 = vmatprep.subr.mxu0 0.0
    %1191 = vmatpush1.msra.mxu0 %v1177
    %1192 = vmatprep.subr.mxu0 0.0
    %1193 = vmatpush1.msra.mxu0 %v1178
    %1194 = vmatprep.subr.mxu0 0.0
    %1195 = vmatpush1.msra.mxu0 %v1184
    %1196 = vmatprep.subr.mxu0 0.0
    %1197 = vmatpush1.msra.mxu0 0.0
    %1198 = vmatprep.subr.mxu0 0.0
    %1199 = vmatpush1.msra.mxu0 0.0
    %1200 = vmatprep.subr.mxu0 0.0
    %1201 = vmatpush1.msra.mxu0 0.0
    %1202 = vmatprep.subr.mxu0 0.0
    %1203 = vmatpush1.msra.mxu0 0.0
    %1204 = vmatprep.subr.mxu0 0.0
    %1205 = vmatpush1.msra.mxu0 0.0
    %1206 = vmatprep.subr.mxu0 0.0
    %1207 = vmatpush1.msra.mxu0 0.0
    %1208 = vmatprep.subr.mxu0 0.0
    %1209 = vmatpush1.msra.mxu0 0.0
    %1210 = vmatprep.subr.mxu0 0.0
    %1211 = vmatpush1.msra.mxu0 0.0
    %1212 = vmatprep.subr.mxu0 0.0
    %1213 = vmatpush1.msra.mxu0 0.0
    %1214 = vmatprep.subr.mxu0 0.0
    %1215 = vmatpush1.msra.mxu0 0.0
    %1216 = vmatprep.subr.mxu0 0.0
    %1217 = vmatpush1.msra.mxu0 0.0
    %1218 = vmatprep.subr.mxu0 0.0
    %1219 = vmatpush1.msra.mxu0 0.0
    %1220 = vmatprep.subr.mxu0 0.0
    %1221 = vmatpush1.msra.mxu0 0.0
    %1222 = vmatprep.subr.mxu0 0.0
    %1223 = vmatpush1.msra.mxu0 0.0
    %1224 = vmatprep.subr.mxu0 0.0
    %1225 = vmatpush1.msra.mxu0 0.0
    %1226 = vmatprep.subr.mxu0 0.0
    %1227 = vmatpush1.msra.mxu0 0.0
    %1228 = vmatprep.subr.mxu0 0.0
    %1229 = vmatpush1.msra.mxu0 0.0
    %1230 = vmatprep.subr.mxu0 0.0
    %1231 = vmatpush1.msra.mxu0 0.0
    %1232 = vmatprep.subr.mxu0 0.0
    %1233 = vmatpush1.msra.mxu0 0.0
    %1234 = vmatprep.subr.mxu0 0.0
    %1235 = vmatpush1.msra.mxu0 0.0
    %1236 = vmatprep.subr.mxu0 0.0
    %1237 = vmatpush1.msra.mxu0 0.0
    %1238 = vmatprep.subr.mxu0 0.0
    %1239 = vmatpush1.msra.mxu0 0.0
    %1240 = vmatprep.subr.mxu0 0.0
    %1241 = vmatpush1.msra.mxu0 0.0
    %1242 = vmatprep.subr.mxu0 0.0
    %1243 = vmatpush1.msra.mxu0 0.0
    %1244 = vmatprep.subr.mxu0 0.0
    %1245 = vmatpush1.msra.mxu0 0.0
    %1246 = vmatprep.subr.mxu0 0.0
    %1247 = vmatpush1.msra.mxu0 0.0
    %1248 = vmatprep.subr.mxu0 0.0
    %1249 = vmatpush1.msra.mxu0 0.0
    %1250 = vmatprep.mubr.f32.mxu0 0.0
    %1251 = vmatmul.mubr.f32.gmra.mrb[0].mxu0 %v1181
    %v1252 = vpop.f32.mrb[0].mxu0
    %v1253 = vadd.f32 0.0, %v1252
    %v1254 = vpop.f32.mrb[0].mxu0
    %1255 = vdwg.mxu0
    %v1256 = vadd.f32 %v91, %v1253
    %s1257 = scalar_lea.vmem %s7, 40
    %v1258 = vld [vmem:[%s1257] sm:$0xff]
    %v1259 = vld [vmem:[%s1257 + $0x8] sm:$0xff]
    %v1260 = vld [vmem:[%s1257 + $0x10] sm:$0xff]
    %v1261 = vld [vmem:[%s1257 + $0x18] sm:$0xff]
    %v1262 = vld [vmem:[%s1257 + $0x20] sm:$0xf]
    %v1264 = vrot.slane %v1174, 2
    %v1265 = vsel %vm67, %v1264, 0
    %v1268 = vsel %vm618, %v1262, 0
    %1270 = vmatprep.subr.mxu0 0.0
    %1271 = vmatpush1.msra.mxu0 %v1258
    %1272 = vmatprep.subr.mxu0 0.0
    %1273 = vmatpush1.msra.mxu0 %v1259
    %1274 = vmatprep.subr.mxu0 0.0
    %1275 = vmatpush1.msra.mxu0 %v1260
    %1276 = vmatprep.subr.mxu0 0.0
    %1277 = vmatpush1.msra.mxu0 %v1261
    %1278 = vmatprep.subr.mxu0 0.0
    %1279 = vmatpush1.msra.mxu0 %v1268
    %1280 = vmatprep.subr.mxu0 0.0
    %1281 = vmatpush1.msra.mxu0 0.0
    %1282 = vmatprep.subr.mxu0 0.0
    %1283 = vmatpush1.msra.mxu0 0.0
    %1284 = vmatprep.subr.mxu0 0.0
    %1285 = vmatpush1.msra.mxu0 0.0
    %1286 = vmatprep.subr.mxu0 0.0
    %1287 = vmatpush1.msra.mxu0 0.0
    %1288 = vmatprep.subr.mxu0 0.0
    %1289 = vmatpush1.msra.mxu0 0.0
    %1290 = vmatprep.subr.mxu0 0.0
    %1291 = vmatpush1.msra.mxu0 0.0
    %1292 = vmatprep.subr.mxu0 0.0
    %1293 = vmatpush1.msra.mxu0 0.0
    %1294 = vmatprep.subr.mxu0 0.0
    %1295 = vmatpush1.msra.mxu0 0.0
    %1296 = vmatprep.subr.mxu0 0.0
    %1297 = vmatpush1.msra.mxu0 0.0
    %1298 = vmatprep.subr.mxu0 0.0
    %1299 = vmatpush1.msra.mxu0 0.0
    %1300 = vmatprep.subr.mxu0 0.0
    %1301 = vmatpush1.msra.mxu0 0.0
    %1302 = vmatprep.subr.mxu0 0.0
    %1303 = vmatpush1.msra.mxu0 0.0
    %1304 = vmatprep.subr.mxu0 0.0
    %1305 = vmatpush1.msra.mxu0 0.0
    %1306 = vmatprep.subr.mxu0 0.0
    %1307 = vmatpush1.msra.mxu0 0.0
    %1308 = vmatprep.subr.mxu0 0.0
    %1309 = vmatpush1.msra.mxu0 0.0
    %1310 = vmatprep.subr.mxu0 0.0
    %1311 = vmatpush1.msra.mxu0 0.0
    %1312 = vmatprep.subr.mxu0 0.0
    %1313 = vmatpush1.msra.mxu0 0.0
    %1314 = vmatprep.subr.mxu0 0.0
    %1315 = vmatpush1.msra.mxu0 0.0
    %1316 = vmatprep.subr.mxu0 0.0
    %1317 = vmatpush1.msra.mxu0 0.0
    %1318 = vmatprep.subr.mxu0 0.0
    %1319 = vmatpush1.msra.mxu0 0.0
    %1320 = vmatprep.subr.mxu0 0.0
    %1321 = vmatpush1.msra.mxu0 0.0
    %1322 = vmatprep.subr.mxu0 0.0
    %1323 = vmatpush1.msra.mxu0 0.0
    %1324 = vmatprep.subr.mxu0 0.0
    %1325 = vmatpush1.msra.mxu0 0.0
    %1326 = vmatprep.subr.mxu0 0.0
    %1327 = vmatpush1.msra.mxu0 0.0
    %1328 = vmatprep.subr.mxu0 0.0
    %1329 = vmatpush1.msra.mxu0 0.0
    %1330 = vmatprep.subr.mxu0 0.0
    %1331 = vmatpush1.msra.mxu0 0.0
    %1332 = vmatprep.subr.mxu0 0.0
    %1333 = vmatpush1.msra.mxu0 0.0
    %1334 = vmatprep.mubr.f32.mxu0 0.0
    %1335 = vmatmul.mubr.f32.gmra.mrb[0].mxu0 %v1265
    %v1336 = vpop.f32.mrb[0].mxu0
    %v1337 = vadd.f32 0.0, %v1336
    %v1338 = vpop.f32.mrb[0].mxu0
    %1339 = vdwg.mxu0
    %v1340 = vadd.f32 %v1256, %v1337
    %s1341 = scalar_lea.vmem %s7, 80
    %v1342 = vld [vmem:[%s1341] sm:$0xff]
    %v1343 = vld [vmem:[%s1341 + $0x8] sm:$0xff]
    %v1344 = vld [vmem:[%s1341 + $0x10] sm:$0xff]
    %v1345 = vld [vmem:[%s1341 + $0x18] sm:$0xff]
    %v1346 = vld [vmem:[%s1341 + $0x20] sm:$0xf]
    %v1347 = vrot.slane %v1174, 4
    %v1348 = vsel %vm67, %v1347, 0
    %v1351 = vsel %vm618, %v1346, 0
    %1353 = vmatprep.subr.mxu0 0.0
    %1354 = vmatpush1.msra.mxu0 %v1342
    %1355 = vmatprep.subr.mxu0 0.0
    %1356 = vmatpush1.msra.mxu0 %v1343
    %1357 = vmatprep.subr.mxu0 0.0
    %1358 = vmatpush1.msra.mxu0 %v1344
    %1359 = vmatprep.subr.mxu0 0.0
    %1360 = vmatpush1.msra.mxu0 %v1345
    %1361 = vmatprep.subr.mxu0 0.0
    %1362 = vmatpush1.msra.mxu0 %v1351
    %1363 = vmatprep.subr.mxu0 0.0
    %1364 = vmatpush1.msra.mxu0 0.0
    %1365 = vmatprep.subr.mxu0 0.0
    %1366 = vmatpush1.msra.mxu0 0.0
    %1367 = vmatprep.subr.mxu0 0.0
    %1368 = vmatpush1.msra.mxu0 0.0
    %1369 = vmatprep.subr.mxu0 0.0
    %1370 = vmatpush1.msra.mxu0 0.0
    %1371 = vmatprep.subr.mxu0 0.0
    %1372 = vmatpush1.msra.mxu0 0.0
    %1373 = vmatprep.subr.mxu0 0.0
    %1374 = vmatpush1.msra.mxu0 0.0
    %1375 = vmatprep.subr.mxu0 0.0
    %1376 = vmatpush1.msra.mxu0 0.0
    %1377 = vmatprep.subr.mxu0 0.0
    %1378 = vmatpush1.msra.mxu0 0.0
    %1379 = vmatprep.subr.mxu0 0.0
    %1380 = vmatpush1.msra.mxu0 0.0
    %1381 = vmatprep.subr.mxu0 0.0
    %1382 = vmatpush1.msra.mxu0 0.0
    %1383 = vmatprep.subr.mxu0 0.0
    %1384 = vmatpush1.msra.mxu0 0.0
    %1385 = vmatprep.subr.mxu0 0.0
    %1386 = vmatpush1.msra.mxu0 0.0
    %1387 = vmatprep.subr.mxu0 0.0
    %1388 = vmatpush1.msra.mxu0 0.0
    %1389 = vmatprep.subr.mxu0 0.0
    %1390 = vmatpush1.msra.mxu0 0.0
    %1391 = vmatprep.subr.mxu0 0.0
    %1392 = vmatpush1.msra.mxu0 0.0
    %1393 = vmatprep.subr.mxu0 0.0
    %1394 = vmatpush1.msra.mxu0 0.0
    %1395 = vmatprep.subr.mxu0 0.0
    %1396 = vmatpush1.msra.mxu0 0.0
    %1397 = vmatprep.subr.mxu0 0.0
    %1398 = vmatpush1.msra.mxu0 0.0
    %1399 = vmatprep.subr.mxu0 0.0
    %1400 = vmatpush1.msra.mxu0 0.0
    %1401 = vmatprep.subr.mxu0 0.0
    %1402 = vmatpush1.msra.mxu0 0.0
    %1403 = vmatprep.subr.mxu0 0.0
    %1404 = vmatpush1.msra.mxu0 0.0
    %1405 = vmatprep.subr.mxu0 0.0
    %1406 = vmatpush1.msra.mxu0 0.0
    %1407 = vmatprep.subr.mxu0 0.0
    %1408 = vmatpush1.msra.mxu0 0.0
    %1409 = vmatprep.subr.mxu0 0.0
    %1410 = vmatpush1.msra.mxu0 0.0
    %1411 = vmatprep.subr.mxu0 0.0
    %1412 = vmatpush1.msra.mxu0 0.0
    %1413 = vmatprep.subr.mxu0 0.0
    %1414 = vmatpush1.msra.mxu0 0.0
    %1415 = vmatprep.subr.mxu0 0.0
    %1416 = vmatpush1.msra.mxu0 0.0
    %1417 = vmatprep.mubr.f32.mxu0 0.0
    %1418 = vmatmul.mubr.f32.gmra.mrb[0].mxu0 %v1348
    %v1419 = vpop.f32.mrb[0].mxu0
    %v1420 = vadd.f32 0.0, %v1419
    %v1421 = vpop.f32.mrb[0].mxu0
    %1422 = vdwg.mxu0
    %v1423 = vadd.f32 %v1340, %v1420
    %s1424 = scalar_lea.vmem %s7, 120
    %v1425 = vld [vmem:[%s1424] sm:$0xff]
    %v1426 = vld [vmem:[%s1424 + $0x8] sm:$0xff]
    %v1427 = vld [vmem:[%s1424 + $0x10] sm:$0xff]
    %v1428 = vld [vmem:[%s1424 + $0x18] sm:$0xff]
    %v1429 = vld [vmem:[%s1424 + $0x20] sm:$0xf]
    %v1430 = vrot.slane %v1174, 6
    %v1431 = vsel %vm67, %v1430, 0
    %v1434 = vsel %vm618, %v1429, 0
    %1436 = vmatprep.subr.mxu0 0.0
    %1437 = vmatpush1.msra.mxu0 %v1425
    %1438 = vmatprep.subr.mxu0 0.0
    %1439 = vmatpush1.msra.mxu0 %v1426
    %1440 = vmatprep.subr.mxu0 0.0
    %1441 = vmatpush1.msra.mxu0 %v1427
    %1442 = vmatprep.subr.mxu0 0.0
    %1443 = vmatpush1.msra.mxu0 %v1428
    %1444 = vmatprep.subr.mxu0 0.0
    %1445 = vmatpush1.msra.mxu0 %v1434
    %1446 = vmatprep.subr.mxu0 0.0
    %1447 = vmatpush1.msra.mxu0 0.0
    %1448 = vmatprep.subr.mxu0 0.0
    %1449 = vmatpush1.msra.mxu0 0.0
    %1450 = vmatprep.subr.mxu0 0.0
    %1451 = vmatpush1.msra.mxu0 0.0
    %1452 = vmatprep.subr.mxu0 0.0
    %1453 = vmatpush1.msra.mxu0 0.0
    %1454 = vmatprep.subr.mxu0 0.0
    %1455 = vmatpush1.msra.mxu0 0.0
    %1456 = vmatprep.subr.mxu0 0.0
    %1457 = vmatpush1.msra.mxu0 0.0
    %1458 = vmatprep.subr.mxu0 0.0
    %1459 = vmatpush1.msra.mxu0 0.0
    %1460 = vmatprep.subr.mxu0 0.0
    %1461 = vmatpush1.msra.mxu0 0.0
    %1462 = vmatprep.subr.mxu0 0.0
    %1463 = vmatpush1.msra.mxu0 0.0
    %1464 = vmatprep.subr.mxu0 0.0
    %1465 = vmatpush1.msra.mxu0 0.0
    %1466 = vmatprep.subr.mxu0 0.0
    %1467 = vmatpush1.msra.mxu0 0.0
    %1468 = vmatprep.subr.mxu0 0.0
    %1469 = vmatpush1.msra.mxu0 0.0
    %1470 = vmatprep.subr.mxu0 0.0
    %1471 = vmatpush1.msra.mxu0 0.0
    %1472 = vmatprep.subr.mxu0 0.0
    %1473 = vmatpush1.msra.mxu0 0.0
    %1474 = vmatprep.subr.mxu0 0.0
    %1475 = vmatpush1.msra.mxu0 0.0
    %1476 = vmatprep.subr.mxu0 0.0
    %1477 = vmatpush1.msra.mxu0 0.0
    %1478 = vmatprep.subr.mxu0 0.0
    %1479 = vmatpush1.msra.mxu0 0.0
    %1480 = vmatprep.subr.mxu0 0.0
    %1481 = vmatpush1.msra.mxu0 0.0
    %1482 = vmatprep.subr.mxu0 0.0
    %1483 = vmatpush1.msra.mxu0 0.0
    %1484 = vmatprep.subr.mxu0 0.0
    %1485 = vmatpush1.msra.mxu0 0.0
    %1486 = vmatprep.subr.mxu0 0.0
    %1487 = vmatpush1.msra.mxu0 0.0
    %1488 = vmatprep.subr.mxu0 0.0
    %1489 = vmatpush1.msra.mxu0 0.0
    %1490 = vmatprep.subr.mxu0 0.0
    %1491 = vmatpush1.msra.mxu0 0.0
    %1492 = vmatprep.subr.mxu0 0.0
    %1493 = vmatpush1.msra.mxu0 0.0
    %1494 = vmatprep.subr.mxu0 0.0
    %1495 = vmatpush1.msra.mxu0 0.0
    %1496 = vmatprep.subr.mxu0 0.0
    %1497 = vmatpush1.msra.mxu0 0.0
    %1498 = vmatprep.subr.mxu0 0.0
    %1499 = vmatpush1.msra.mxu0 0.0
    %1500 = vmatprep.mubr.f32.mxu0 0.0
    %1501 = vmatmul.mubr.f32.gmra.mrb[0].mxu0 %v1431
    %v1502 = vpop.f32.mrb[0].mxu0
    %v1503 = vadd.f32 0.0, %v1502
    %v1504 = vpop.f32.mrb[0].mxu0
    %1505 = vdwg.mxu0
    %v1506 = vadd.f32 %v1423, %v1503
    %vm1507 = vcmask 73728
    %1508 = vst.msk [vmem:[#allocation7] sm:$0x1] %vm1507, %v1506
    %v1509 = vld [vmem:[%s9] sm:$0xff]
    %v1510 = vld [vmem:[%s9 + $0x8] sm:$0x3]
    %v1511 = vld [vmem:[%s10] sm:$0x1]
    %vm1512 = vcmask 80896
    %v1514 = vsel %vm1512, %v1506, 0
    %v1517 = vsel %vm614, %v1510, 0
    %1519 = vmatprep.subr.mxu0 0.0
    %1520 = vmatpush1.msra.mxu0 %v1509
    %1521 = vmatprep.subr.mxu0 0.0
    %1522 = vmatpush1.msra.mxu0 %v1517
    %1523 = vmatprep.subr.mxu0 0.0
    %1524 = vmatpush1.msra.mxu0 0.0
    %1525 = vmatprep.subr.mxu0 0.0
    %1526 = vmatpush1.msra.mxu0 0.0
    %1527 = vmatprep.subr.mxu0 0.0
    %1528 = vmatpush1.msra.mxu0 0.0
    %1529 = vmatprep.subr.mxu0 0.0
    %1530 = vmatpush1.msra.mxu0 0.0
    %1531 = vmatprep.subr.mxu0 0.0
    %1532 = vmatpush1.msra.mxu0 0.0
    %1533 = vmatprep.subr.mxu0 0.0
    %1534 = vmatpush1.msra.mxu0 0.0
    %1535 = vmatprep.subr.mxu0 0.0
    %1536 = vmatpush1.msra.mxu0 0.0
    %1537 = vmatprep.subr.mxu0 0.0
    %1538 = vmatpush1.msra.mxu0 0.0
    %1539 = vmatprep.subr.mxu0 0.0
    %1540 = vmatpush1.msra.mxu0 0.0
    %1541 = vmatprep.subr.mxu0 0.0
    %1542 = vmatpush1.msra.mxu0 0.0
    %1543 = vmatprep.subr.mxu0 0.0
    %1544 = vmatpush1.msra.mxu0 0.0
    %1545 = vmatprep.subr.mxu0 0.0
    %1546 = vmatpush1.msra.mxu0 0.0
    %1547 = vmatprep.subr.mxu0 0.0
    %1548 = vmatpush1.msra.mxu0 0.0
    %1549 = vmatprep.subr.mxu0 0.0
    %1550 = vmatpush1.msra.mxu0 0.0
    %1551 = vmatprep.subr.mxu0 0.0
    %1552 = vmatpush1.msra.mxu0 0.0
    %1553 = vmatprep.subr.mxu0 0.0
    %1554 = vmatpush1.msra.mxu0 0.0
    %1555 = vmatprep.subr.mxu0 0.0
    %1556 = vmatpush1.msra.mxu0 0.0
    %1557 = vmatprep.subr.mxu0 0.0
    %1558 = vmatpush1.msra.mxu0 0.0
    %1559 = vmatprep.subr.mxu0 0.0
    %1560 = vmatpush1.msra.mxu0 0.0
    %1561 = vmatprep.subr.mxu0 0.0
    %1562 = vmatpush1.msra.mxu0 0.0
    %1563 = vmatprep.subr.mxu0 0.0
    %1564 = vmatpush1.msra.mxu0 0.0
    %1565 = vmatprep.subr.mxu0 0.0
    %1566 = vmatpush1.msra.mxu0 0.0
    %1567 = vmatprep.subr.mxu0 0.0
    %1568 = vmatpush1.msra.mxu0 0.0
    %1569 = vmatprep.subr.mxu0 0.0
    %1570 = vmatpush1.msra.mxu0 0.0
    %1571 = vmatprep.subr.mxu0 0.0
    %1572 = vmatpush1.msra.mxu0 0.0
    %1573 = vmatprep.subr.mxu0 0.0
    %1574 = vmatpush1.msra.mxu0 0.0
    %1575 = vmatprep.subr.mxu0 0.0
    %1576 = vmatpush1.msra.mxu0 0.0
    %1577 = vmatprep.subr.mxu0 0.0
    %1578 = vmatpush1.msra.mxu0 0.0
    %1579 = vmatprep.subr.mxu0 0.0
    %1580 = vmatpush1.msra.mxu0 0.0
    %1581 = vmatprep.subr.mxu0 0.0
    %1582 = vmatpush1.msra.mxu0 0.0
    %1583 = vmatprep.mubr.f32.mxu0 0.0
    %1584 = vmatmul.mubr.f32.gmra.mrb[0].mxu0 %v1514
    %v1585 = vpop.f32.mrb[0].mxu0
    %v1586 = vadd.f32 %v1511, %v1585
    %v1587 = vpop.f32.mrb[0].mxu0
    %1588 = vdwg.mxu0
    %vm1589 = vcmask 286720
    %1590 = vst.msk [vmem:[#allocation4 + $0x1] sm:$0x1] %vm1589, %v1586
    %s1591 = scalar_lea.vmem %s9, 16
    %v1592 = vld [vmem:[%s1591] sm:$0xff]
    %v1593 = vld [vmem:[%s1591 + $0x8] sm:$0x3]
    %s1594 = scalar_lea.vmem %s10, 1
    %v1595 = vld [vmem:[%s1594] sm:$0x1]
    %v1597 = vsel %vm614, %v1593, 0
    %1599 = vmatprep.subr.mxu0 0.0
    %1600 = vmatpush1.msra.mxu0 %v1592
    %1601 = vmatprep.subr.mxu0 0.0
    %1602 = vmatpush1.msra.mxu0 %v1597
    %1603 = vmatprep.subr.mxu0 0.0
    %1604 = vmatpush1.msra.mxu0 0.0
    %1605 = vmatprep.subr.mxu0 0.0
    %1606 = vmatpush1.msra.mxu0 0.0
    %1607 = vmatprep.subr.mxu0 0.0
    %1608 = vmatpush1.msra.mxu0 0.0
    %1609 = vmatprep.subr.mxu0 0.0
    %1610 = vmatpush1.msra.mxu0 0.0
    %1611 = vmatprep.subr.mxu0 0.0
    %1612 = vmatpush1.msra.mxu0 0.0
    %1613 = vmatprep.subr.mxu0 0.0
    %1614 = vmatpush1.msra.mxu0 0.0
    %1615 = vmatprep.subr.mxu0 0.0
    %1616 = vmatpush1.msra.mxu0 0.0
    %1617 = vmatprep.subr.mxu0 0.0
    %1618 = vmatpush1.msra.mxu0 0.0
    %1619 = vmatprep.subr.mxu0 0.0
    %1620 = vmatpush1.msra.mxu0 0.0
    %1621 = vmatprep.subr.mxu0 0.0
    %1622 = vmatpush1.msra.mxu0 0.0
    %1623 = vmatprep.subr.mxu0 0.0
    %1624 = vmatpush1.msra.mxu0 0.0
    %1625 = vmatprep.subr.mxu0 0.0
    %1626 = vmatpush1.msra.mxu0 0.0
    %1627 = vmatprep.subr.mxu0 0.0
    %1628 = vmatpush1.msra.mxu0 0.0
    %1629 = vmatprep.subr.mxu0 0.0
    %1630 = vmatpush1.msra.mxu0 0.0
    %1631 = vmatprep.subr.mxu0 0.0
    %1632 = vmatpush1.msra.mxu0 0.0
    %1633 = vmatprep.subr.mxu0 0.0
    %1634 = vmatpush1.msra.mxu0 0.0
    %1635 = vmatprep.subr.mxu0 0.0
    %1636 = vmatpush1.msra.mxu0 0.0
    %1637 = vmatprep.subr.mxu0 0.0
    %1638 = vmatpush1.msra.mxu0 0.0
    %1639 = vmatprep.subr.mxu0 0.0
    %1640 = vmatpush1.msra.mxu0 0.0
    %1641 = vmatprep.subr.mxu0 0.0
    %1642 = vmatpush1.msra.mxu0 0.0
    %1643 = vmatprep.subr.mxu0 0.0
    %1644 = vmatpush1.msra.mxu0 0.0
    %1645 = vmatprep.subr.mxu0 0.0
    %1646 = vmatpush1.msra.mxu0 0.0
    %1647 = vmatprep.subr.mxu0 0.0
    %1648 = vmatpush1.msra.mxu0 0.0
    %1649 = vmatprep.subr.mxu0 0.0
    %1650 = vmatpush1.msra.mxu0 0.0
    %1651 = vmatprep.subr.mxu0 0.0
    %1652 = vmatpush1.msra.mxu0 0.0
    %1653 = vmatprep.subr.mxu0 0.0
    %1654 = vmatpush1.msra.mxu0 0.0
    %1655 = vmatprep.subr.mxu0 0.0
    %1656 = vmatpush1.msra.mxu0 0.0
    %1657 = vmatprep.subr.mxu0 0.0
    %1658 = vmatpush1.msra.mxu0 0.0
    %1659 = vmatprep.subr.mxu0 0.0
    %1660 = vmatpush1.msra.mxu0 0.0
    %1661 = vmatprep.subr.mxu0 0.0
    %1662 = vmatpush1.msra.mxu0 0.0
    %1663 = vmatprep.mubr.f32.mxu0 0.0
    %1664 = vmatmul.mubr.f32.gmra.mrb[0].mxu0 %v1514
    %v1665 = vpop.f32.mrb[0].mxu0
    %v1666 = vadd.f32 %v1595, %v1665
    %v1667 = vpop.f32.mrb[0].mxu0
    %1668 = vdwg.mxu0
    %1669 = vst.msk [vmem:[#allocation4 + $0x3] sm:$0x1] %vm1589, %v1666
    %s1670 = scalar_lea.vmem %s9, 32
    %v1671 = vld [vmem:[%s1670] sm:$0xff]
    %v1672 = vld [vmem:[%s1670 + $0x8] sm:$0x3]
    %s1673 = scalar_lea.vmem %s10, 2
    %v1674 = vld [vmem:[%s1673] sm:$0x1]
    %v1676 = vsel %vm614, %v1672, 0
    %1678 = vmatprep.subr.mxu0 0.0
    %1679 = vmatpush1.msra.mxu0 %v1671
    %1680 = vmatprep.subr.mxu0 0.0
    %1681 = vmatpush1.msra.mxu0 %v1676
    %1682 = vmatprep.subr.mxu0 0.0
    %1683 = vmatpush1.msra.mxu0 0.0
    %1684 = vmatprep.subr.mxu0 0.0
    %1685 = vmatpush1.msra.mxu0 0.0
    %1686 = vmatprep.subr.mxu0 0.0
    %1687 = vmatpush1.msra.mxu0 0.0
    %1688 = vmatprep.subr.mxu0 0.0
    %1689 = vmatpush1.msra.mxu0 0.0
    %1690 = vmatprep.subr.mxu0 0.0
    %1691 = vmatpush1.msra.mxu0 0.0
    %1692 = vmatprep.subr.mxu0 0.0
    %1693 = vmatpush1.msra.mxu0 0.0
    %1694 = vmatprep.subr.mxu0 0.0
    %1695 = vmatpush1.msra.mxu0 0.0
    %1696 = vmatprep.subr.mxu0 0.0
    %1697 = vmatpush1.msra.mxu0 0.0
    %1698 = vmatprep.subr.mxu0 0.0
    %1699 = vmatpush1.msra.mxu0 0.0
    %1700 = vmatprep.subr.mxu0 0.0
    %1701 = vmatpush1.msra.mxu0 0.0
    %1702 = vmatprep.subr.mxu0 0.0
    %1703 = vmatpush1.msra.mxu0 0.0
    %1704 = vmatprep.subr.mxu0 0.0
    %1705 = vmatpush1.msra.mxu0 0.0
    %1706 = vmatprep.subr.mxu0 0.0
    %1707 = vmatpush1.msra.mxu0 0.0
    %1708 = vmatprep.subr.mxu0 0.0
    %1709 = vmatpush1.msra.mxu0 0.0
    %1710 = vmatprep.subr.mxu0 0.0
    %1711 = vmatpush1.msra.mxu0 0.0
    %1712 = vmatprep.subr.mxu0 0.0
    %1713 = vmatpush1.msra.mxu0 0.0
    %1714 = vmatprep.subr.mxu0 0.0
    %1715 = vmatpush1.msra.mxu0 0.0
    %1716 = vmatprep.subr.mxu0 0.0
    %1717 = vmatpush1.msra.mxu0 0.0
    %1718 = vmatprep.subr.mxu0 0.0
    %1719 = vmatpush1.msra.mxu0 0.0
    %1720 = vmatprep.subr.mxu0 0.0
    %1721 = vmatpush1.msra.mxu0 0.0
    %1722 = vmatprep.subr.mxu0 0.0
    %1723 = vmatpush1.msra.mxu0 0.0
    %1724 = vmatprep.subr.mxu0 0.0
    %1725 = vmatpush1.msra.mxu0 0.0
    %1726 = vmatprep.subr.mxu0 0.0
    %1727 = vmatpush1.msra.mxu0 0.0
    %1728 = vmatprep.subr.mxu0 0.0
    %1729 = vmatpush1.msra.mxu0 0.0
    %1730 = vmatprep.subr.mxu0 0.0
    %1731 = vmatpush1.msra.mxu0 0.0
    %1732 = vmatprep.subr.mxu0 0.0
    %1733 = vmatpush1.msra.mxu0 0.0
    %1734 = vmatprep.subr.mxu0 0.0
    %1735 = vmatpush1.msra.mxu0 0.0
    %1736 = vmatprep.subr.mxu0 0.0
    %1737 = vmatpush1.msra.mxu0 0.0
    %1738 = vmatprep.subr.mxu0 0.0
    %1739 = vmatpush1.msra.mxu0 0.0
    %1740 = vmatprep.subr.mxu0 0.0
    %1741 = vmatpush1.msra.mxu0 0.0
    %1742 = vmatprep.mubr.f32.mxu0 0.0
    %1743 = vmatmul.mubr.f32.gmra.mrb[0].mxu0 %v1514
    %v1744 = vpop.f32.mrb[0].mxu0
    %v1745 = vadd.f32 %v1674, %v1744
    %v1746 = vpop.f32.mrb[0].mxu0
    %1747 = vdwg.mxu0
    %1748 = vst.msk [vmem:[#allocation4 + $0x5] sm:$0x1] %vm1589, %v1745
    %s1749 = scalar_lea.vmem %s9, 48
    %v1750 = vld [vmem:[%s1749] sm:$0xff]
    %v1751 = vld [vmem:[%s1749 + $0x8] sm:$0x3]
    %s1752 = scalar_lea.vmem %s10, 3
    %v1753 = vld [vmem:[%s1752] sm:$0x1]
    %v1755 = vsel %vm614, %v1751, 0
    %1757 = vmatprep.subr.mxu0 0.0
    %1758 = vmatpush1.msra.mxu0 %v1750
    %1759 = vmatprep.subr.mxu0 0.0
    %1760 = vmatpush1.msra.mxu0 %v1755
    %1761 = vmatprep.subr.mxu0 0.0
    %1762 = vmatpush1.msra.mxu0 0.0
    %1763 = vmatprep.subr.mxu0 0.0
    %1764 = vmatpush1.msra.mxu0 0.0
    %1765 = vmatprep.subr.mxu0 0.0
    %1766 = vmatpush1.msra.mxu0 0.0
    %1767 = vmatprep.subr.mxu0 0.0
    %1768 = vmatpush1.msra.mxu0 0.0
    %1769 = vmatprep.subr.mxu0 0.0
    %1770 = vmatpush1.msra.mxu0 0.0
    %1771 = vmatprep.subr.mxu0 0.0
    %1772 = vmatpush1.msra.mxu0 0.0
    %1773 = vmatprep.subr.mxu0 0.0
    %1774 = vmatpush1.msra.mxu0 0.0
    %1775 = vmatprep.subr.mxu0 0.0
    %1776 = vmatpush1.msra.mxu0 0.0
    %1777 = vmatprep.subr.mxu0 0.0
    %1778 = vmatpush1.msra.mxu0 0.0
    %1779 = vmatprep.subr.mxu0 0.0
    %1780 = vmatpush1.msra.mxu0 0.0
    %1781 = vmatprep.subr.mxu0 0.0
    %1782 = vmatpush1.msra.mxu0 0.0
    %1783 = vmatprep.subr.mxu0 0.0
    %1784 = vmatpush1.msra.mxu0 0.0
    %1785 = vmatprep.subr.mxu0 0.0
    %1786 = vmatpush1.msra.mxu0 0.0
    %1787 = vmatprep.subr.mxu0 0.0
    %1788 = vmatpush1.msra.mxu0 0.0
    %1789 = vmatprep.subr.mxu0 0.0
    %1790 = vmatpush1.msra.mxu0 0.0
    %1791 = vmatprep.subr.mxu0 0.0
    %1792 = vmatpush1.msra.mxu0 0.0
    %1793 = vmatprep.subr.mxu0 0.0
    %1794 = vmatpush1.msra.mxu0 0.0
    %1795 = vmatprep.subr.mxu0 0.0
    %1796 = vmatpush1.msra.mxu0 0.0
    %1797 = vmatprep.subr.mxu0 0.0
    %1798 = vmatpush1.msra.mxu0 0.0
    %1799 = vmatprep.subr.mxu0 0.0
    %1800 = vmatpush1.msra.mxu0 0.0
    %1801 = vmatprep.subr.mxu0 0.0
    %1802 = vmatpush1.msra.mxu0 0.0
    %1803 = vmatprep.subr.mxu0 0.0
    %1804 = vmatpush1.msra.mxu0 0.0
    %1805 = vmatprep.subr.mxu0 0.0
    %1806 = vmatpush1.msra.mxu0 0.0
    %1807 = vmatprep.subr.mxu0 0.0
    %1808 = vmatpush1.msra.mxu0 0.0
    %1809 = vmatprep.subr.mxu0 0.0
    %1810 = vmatpush1.msra.mxu0 0.0
    %1811 = vmatprep.subr.mxu0 0.0
    %1812 = vmatpush1.msra.mxu0 0.0
    %1813 = vmatprep.subr.mxu0 0.0
    %1814 = vmatpush1.msra.mxu0 0.0
    %1815 = vmatprep.subr.mxu0 0.0
    %1816 = vmatpush1.msra.mxu0 0.0
    %1817 = vmatprep.subr.mxu0 0.0
    %1818 = vmatpush1.msra.mxu0 0.0
    %1819 = vmatprep.subr.mxu0 0.0
    %1820 = vmatpush1.msra.mxu0 0.0
    %1821 = vmatprep.mubr.f32.mxu0 0.0
    %1822 = vmatmul.mubr.f32.gmra.mrb[0].mxu0 %v1514
    %v1823 = vpop.f32.mrb[0].mxu0
    %v1824 = vadd.f32 %v1753, %v1823
    %v1825 = vpop.f32.mrb[0].mxu0
    %1826 = vdwg.mxu0
    %1827 = vst.msk [vmem:[#allocation4 + $0x7] sm:$0x1] %vm1589, %v1824
    %v1828 = vld [vmem:[#allocation4] sm:$0xff]
    %v1829 = vld [vmem:[%s11] sm:$0xff]
    %v1830 = vld [vmem:[%s11 + $0x8] sm:$0xff]
    %v1831 = vld [vmem:[%s11 + $0x10] sm:$0xff]
    %v1832 = vld [vmem:[%s11 + $0x18] sm:$0xff]
    %v1833 = vld [vmem:[%s11 + $0x20] sm:$0xf]
    %v1834 = vld [vmem:[#allocation4 + $0x1] sm:$0xff]
    %s1835 = scalar_lea.vmem %s11, 40
    %v1836 = vld [vmem:[%s1835] sm:$0xff]
    %v1837 = vld [vmem:[%s1835 + $0x8] sm:$0xff]
    %v1838 = vld [vmem:[%s1835 + $0x10] sm:$0xff]
    %v1839 = vld [vmem:[%s1835 + $0x18] sm:$0xff]
    %v1840 = vld [vmem:[%s1835 + $0x20] sm:$0xf]
    %v1842 = vsel %vm67, %v1834, 0
    %v1845 = vsel %vm618, %v1840, 0
    %1847 = vmatprep.subr.mxu0 0.0
    %1848 = vmatpush1.msra.mxu0 %v1836
    %1849 = vmatprep.subr.mxu0 0.0
    %1850 = vmatpush1.msra.mxu0 %v1837
    %1851 = vmatprep.subr.mxu0 0.0
    %1852 = vmatpush1.msra.mxu0 %v1838
    %1853 = vmatprep.subr.mxu0 0.0
    %1854 = vmatpush1.msra.mxu0 %v1839
    %1855 = vmatprep.subr.mxu0 0.0
    %1856 = vmatpush1.msra.mxu0 %v1845
    %1857 = vmatprep.subr.mxu0 0.0
    %1858 = vmatpush1.msra.mxu0 0.0
    %1859 = vmatprep.subr.mxu0 0.0
    %1860 = vmatpush1.msra.mxu0 0.0
    %1861 = vmatprep.subr.mxu0 0.0
    %1862 = vmatpush1.msra.mxu0 0.0
    %1863 = vmatprep.subr.mxu0 0.0
    %1864 = vmatpush1.msra.mxu0 0.0
    %1865 = vmatprep.subr.mxu0 0.0
    %1866 = vmatpush1.msra.mxu0 0.0
    %1867 = vmatprep.subr.mxu0 0.0
    %1868 = vmatpush1.msra.mxu0 0.0
    %1869 = vmatprep.subr.mxu0 0.0
    %1870 = vmatpush1.msra.mxu0 0.0
    %1871 = vmatprep.subr.mxu0 0.0
    %1872 = vmatpush1.msra.mxu0 0.0
    %1873 = vmatprep.subr.mxu0 0.0
    %1874 = vmatpush1.msra.mxu0 0.0
    %1875 = vmatprep.subr.mxu0 0.0
    %1876 = vmatpush1.msra.mxu0 0.0
    %1877 = vmatprep.subr.mxu0 0.0
    %1878 = vmatpush1.msra.mxu0 0.0
    %1879 = vmatprep.subr.mxu0 0.0
    %1880 = vmatpush1.msra.mxu0 0.0
    %1881 = vmatprep.subr.mxu0 0.0
    %1882 = vmatpush1.msra.mxu0 0.0
    %1883 = vmatprep.subr.mxu0 0.0
    %1884 = vmatpush1.msra.mxu0 0.0
    %1885 = vmatprep.subr.mxu0 0.0
    %1886 = vmatpush1.msra.mxu0 0.0
    %1887 = vmatprep.subr.mxu0 0.0
    %1888 = vmatpush1.msra.mxu0 0.0
    %1889 = vmatprep.subr.mxu0 0.0
    %1890 = vmatpush1.msra.mxu0 0.0
    %1891 = vmatprep.subr.mxu0 0.0
    %1892 = vmatpush1.msra.mxu0 0.0
    %1893 = vmatprep.subr.mxu0 0.0
    %1894 = vmatpush1.msra.mxu0 0.0
    %1895 = vmatprep.subr.mxu0 0.0
    %1896 = vmatpush1.msra.mxu0 0.0
    %1897 = vmatprep.subr.mxu0 0.0
    %1898 = vmatpush1.msra.mxu0 0.0
    %1899 = vmatprep.subr.mxu0 0.0
    %1900 = vmatpush1.msra.mxu0 0.0
    %1901 = vmatprep.subr.mxu0 0.0
    %1902 = vmatpush1.msra.mxu0 0.0
    %1903 = vmatprep.subr.mxu0 0.0
    %1904 = vmatpush1.msra.mxu0 0.0
    %1905 = vmatprep.subr.mxu0 0.0
    %1906 = vmatpush1.msra.mxu0 0.0
    %1907 = vmatprep.subr.mxu0 0.0
    %1908 = vmatpush1.msra.mxu0 0.0
    %1909 = vmatprep.subr.mxu0 0.0
    %1910 = vmatpush1.msra.mxu0 0.0
    %1911 = vmatprep.mubr.f32.mxu0 0.0
    %1912 = vmatmul.mubr.f32.gmra.mrb[0].mxu0 %v1842
    %v1913 = vpop.f32.mrb[0].mxu0
    %v1914 = vadd.f32 0.0, %v1913
    %v1915 = vpop.f32.mrb[0].mxu0
    %1916 = vdwg.mxu0
    %v1918 = vsel %vm67, %v1828, 0
    %v1921 = vsel %vm618, %v1833, 0
    %1923 = vmatprep.subr.mxu0 0.0
    %1924 = vmatpush1.msra.mxu0 %v1829
    %1925 = vmatprep.subr.mxu0 0.0
    %1926 = vmatpush1.msra.mxu0 %v1830
    %1927 = vmatprep.subr.mxu0 0.0
    %1928 = vmatpush1.msra.mxu0 %v1831
    %1929 = vmatprep.subr.mxu0 0.0
    %1930 = vmatpush1.msra.mxu0 %v1832
    %1931 = vmatprep.subr.mxu0 0.0
    %1932 = vmatpush1.msra.mxu0 %v1921
    %1933 = vmatprep.subr.mxu0 0.0
    %1934 = vmatpush1.msra.mxu0 0.0
    %1935 = vmatprep.subr.mxu0 0.0
    %1936 = vmatpush1.msra.mxu0 0.0
    %1937 = vmatprep.subr.mxu0 0.0
    %1938 = vmatpush1.msra.mxu0 0.0
    %1939 = vmatprep.subr.mxu0 0.0
    %1940 = vmatpush1.msra.mxu0 0.0
    %1941 = vmatprep.subr.mxu0 0.0
    %1942 = vmatpush1.msra.mxu0 0.0
    %1943 = vmatprep.subr.mxu0 0.0
    %1944 = vmatpush1.msra.mxu0 0.0
    %1945 = vmatprep.subr.mxu0 0.0
    %1946 = vmatpush1.msra.mxu0 0.0
    %1947 = vmatprep.subr.mxu0 0.0
    %1948 = vmatpush1.msra.mxu0 0.0
    %1949 = vmatprep.subr.mxu0 0.0
    %1950 = vmatpush1.msra.mxu0 0.0
    %1951 = vmatprep.subr.mxu0 0.0
    %1952 = vmatpush1.msra.mxu0 0.0
    %1953 = vmatprep.subr.mxu0 0.0
    %1954 = vmatpush1.msra.mxu0 0.0
    %1955 = vmatprep.subr.mxu0 0.0
    %1956 = vmatpush1.msra.mxu0 0.0
    %1957 = vmatprep.subr.mxu0 0.0
    %1958 = vmatpush1.msra.mxu0 0.0
    %1959 = vmatprep.subr.mxu0 0.0
    %1960 = vmatpush1.msra.mxu0 0.0
    %1961 = vmatprep.subr.mxu0 0.0
    %1962 = vmatpush1.msra.mxu0 0.0
    %1963 = vmatprep.subr.mxu0 0.0
    %1964 = vmatpush1.msra.mxu0 0.0
    %1965 = vmatprep.subr.mxu0 0.0
    %1966 = vmatpush1.msra.mxu0 0.0
    %1967 = vmatprep.subr.mxu0 0.0
    %1968 = vmatpush1.msra.mxu0 0.0
    %1969 = vmatprep.subr.mxu0 0.0
    %1970 = vmatpush1.msra.mxu0 0.0
    %1971 = vmatprep.subr.mxu0 0.0
    %1972 = vmatpush1.msra.mxu0 0.0
    %1973 = vmatprep.subr.mxu0 0.0
    %1974 = vmatpush1.msra.mxu0 0.0
    %1975 = vmatprep.subr.mxu0 0.0
    %1976 = vmatpush1.msra.mxu0 0.0
    %1977 = vmatprep.subr.mxu0 0.0
    %1978 = vmatpush1.msra.mxu0 0.0
    %1979 = vmatprep.subr.mxu0 0.0
    %1980 = vmatpush1.msra.mxu0 0.0
    %1981 = vmatprep.subr.mxu0 0.0
    %1982 = vmatpush1.msra.mxu0 0.0
    %1983 = vmatprep.subr.mxu0 0.0
    %1984 = vmatpush1.msra.mxu0 0.0
    %1985 = vmatprep.subr.mxu0 0.0
    %1986 = vmatpush1.msra.mxu0 0.0
    %1987 = vmatprep.mubr.f32.mxu0 0.0
    %1988 = vmatmul.mubr.f32.gmra.mrb[0].mxu0 %v1918
    %v1989 = vpop.f32.mrb[0].mxu0
    %v1990 = vadd.f32 %v1914, %v1989
    %v1991 = vpop.f32.mrb[0].mxu0
    %1992 = vdwg.mxu0
    %v1993 = vld [vmem:[#allocation4 + $0x2] sm:$0xff]
    %s1994 = scalar_lea.vmem %s11, 80
    %v1995 = vld [vmem:[%s1994] sm:$0xff]
    %v1996 = vld [vmem:[%s1994 + $0x8] sm:$0xff]
    %v1997 = vld [vmem:[%s1994 + $0x10] sm:$0xff]
    %v1998 = vld [vmem:[%s1994 + $0x18] sm:$0xff]
    %v1999 = vld [vmem:[%s1994 + $0x20] sm:$0xf]
    %v2001 = vsel %vm67, %v1993, 0
    %v2004 = vsel %vm618, %v1999, 0
    %2006 = vmatprep.subr.mxu0 0.0
    %2007 = vmatpush1.msra.mxu0 %v1995
    %2008 = vmatprep.subr.mxu0 0.0
    %2009 = vmatpush1.msra.mxu0 %v1996
    %2010 = vmatprep.subr.mxu0 0.0
    %2011 = vmatpush1.msra.mxu0 %v1997
    %2012 = vmatprep.subr.mxu0 0.0
    %2013 = vmatpush1.msra.mxu0 %v1998
    %2014 = vmatprep.subr.mxu0 0.0
    %2015 = vmatpush1.msra.mxu0 %v2004
    %2016 = vmatprep.subr.mxu0 0.0
    %2017 = vmatpush1.msra.mxu0 0.0
    %2018 = vmatprep.subr.mxu0 0.0
    %2019 = vmatpush1.msra.mxu0 0.0
    %2020 = vmatprep.subr.mxu0 0.0
    %2021 = vmatpush1.msra.mxu0 0.0
    %2022 = vmatprep.subr.mxu0 0.0
    %2023 = vmatpush1.msra.mxu0 0.0
    %2024 = vmatprep.subr.mxu0 0.0
    %2025 = vmatpush1.msra.mxu0 0.0
    %2026 = vmatprep.subr.mxu0 0.0
    %2027 = vmatpush1.msra.mxu0 0.0
    %2028 = vmatprep.subr.mxu0 0.0
    %2029 = vmatpush1.msra.mxu0 0.0
    %2030 = vmatprep.subr.mxu0 0.0
    %2031 = vmatpush1.msra.mxu0 0.0
    %2032 = vmatprep.subr.mxu0 0.0
    %2033 = vmatpush1.msra.mxu0 0.0
    %2034 = vmatprep.subr.mxu0 0.0
    %2035 = vmatpush1.msra.mxu0 0.0
    %2036 = vmatprep.subr.mxu0 0.0
    %2037 = vmatpush1.msra.mxu0 0.0
    %2038 = vmatprep.subr.mxu0 0.0
    %2039 = vmatpush1.msra.mxu0 0.0
    %2040 = vmatprep.subr.mxu0 0.0
    %2041 = vmatpush1.msra.mxu0 0.0
    %2042 = vmatprep.subr.mxu0 0.0
    %2043 = vmatpush1.msra.mxu0 0.0
    %2044 = vmatprep.subr.mxu0 0.0
    %2045 = vmatpush1.msra.mxu0 0.0
    %2046 = vmatprep.subr.mxu0 0.0
    %2047 = vmatpush1.msra.mxu0 0.0
    %2048 = vmatprep.subr.mxu0 0.0
    %2049 = vmatpush1.msra.mxu0 0.0
    %2050 = vmatprep.subr.mxu0 0.0
    %2051 = vmatpush1.msra.mxu0 0.0
    %2052 = vmatprep.subr.mxu0 0.0
    %2053 = vmatpush1.msra.mxu0 0.0
    %2054 = vmatprep.subr.mxu0 0.0
    %2055 = vmatpush1.msra.mxu0 0.0
    %2056 = vmatprep.subr.mxu0 0.0
    %2057 = vmatpush1.msra.mxu0 0.0
    %2058 = vmatprep.subr.mxu0 0.0
    %2059 = vmatpush1.msra.mxu0 0.0
    %2060 = vmatprep.subr.mxu0 0.0
    %2061 = vmatpush1.msra.mxu0 0.0
    %2062 = vmatprep.subr.mxu0 0.0
    %2063 = vmatpush1.msra.mxu0 0.0
    %2064 = vmatprep.subr.mxu0 0.0
    %2065 = vmatpush1.msra.mxu0 0.0
    %2066 = vmatprep.subr.mxu0 0.0
    %2067 = vmatpush1.msra.mxu0 0.0
    %2068 = vmatprep.subr.mxu0 0.0
    %2069 = vmatpush1.msra.mxu0 0.0
    %2070 = vmatprep.mubr.f32.mxu0 0.0
    %2071 = vmatmul.mubr.f32.gmra.mrb[0].mxu0 %v2001
    %v2072 = vpop.f32.mrb[0].mxu0
    %v2073 = vadd.f32 0.0, %v2072
    %v2074 = vpop.f32.mrb[0].mxu0
    %2075 = vdwg.mxu0
    %v2076 = vadd.f32 %v1990, %v2073
    %v2078 = vlaneseq
    %v2079 = vshrl.u32 %v2078, 7
    %v2080 = vsub.s32 0, %v2079
    %v2081 = vrot.slane %v89, %v2080
    %v2083 = vadd.f32 %v2076, %v2081
    %v2084 = vmax.f32 %v2083, 0.0
    %2085 = vst [vmem:[#allocation5 + $0x3] sm:$0x1] %v2084
    %2086 = vst [vmem:[#allocation5 + $0x4] sm:$0x2] %v2084
    %2087 = vst [vmem:[#allocation5 + $0x5] sm:$0x4] %v2084
    %2088 = vst [vmem:[#allocation5 + $0x6] sm:$0x8] %v2084
    %2089 = vst [vmem:[#allocation5 + $0x7] sm:$0x10] %v2084
    %2090 = vst [vmem:[#allocation5 + $0x8] sm:$0x20] %v2084
    %2091 = vst [vmem:[#allocation5 + $0x9] sm:$0x40] %v2084
    %2092 = vst [vmem:[#allocation5 + $0xa] sm:$0x80] %v2084
    %v2093 = vld [vmem:[#allocation5] sm:$0xff]
    %v2094 = vld [vmem:[#allocation5 + $0x8] sm:$0xff]
    %v2095 = vld [vmem:[#allocation5 + $0x10] sm:$0x1]
    %v2096 = vld [vmem:[%s13] sm:$0xff]
    %v2097 = vld [vmem:[%s13 + $0x8] sm:$0xff]
    %v2098 = vld [vmem:[%s13 + $0x10] sm:$0xff]
    %v2099 = vld [vmem:[%s13 + $0x18] sm:$0xff]
    %v2100 = vld [vmem:[%s13 + $0x20] sm:$0xff]
    %v2101 = vld [vmem:[%s13 + $0x28] sm:$0xff]
    %v2102 = vld [vmem:[%s13 + $0x30] sm:$0xff]
    %v2103 = vld [vmem:[%s13 + $0x38] sm:$0xff]
    %v2104 = vld [vmem:[%s13 + $0x40] sm:$0xff]
    %v2105 = vld [vmem:[%s13 + $0x48] sm:$0xff]
    %v2106 = vld [vmem:[%s13 + $0x50] sm:$0xff]
    %v2107 = vld [vmem:[%s13 + $0x58] sm:$0xff]
    %v2108 = vld [vmem:[%s13 + $0x60] sm:$0xff]
    %v2109 = vld [vmem:[%s13 + $0x68] sm:$0xff]
    %v2110 = vld [vmem:[%s13 + $0x70] sm:$0xff]
    %v2111 = vld [vmem:[%s13 + $0x78] sm:$0xff]
    %v2112 = vld [vmem:[#allocation5 + $0x1] sm:$0xff]
    %v2113 = vld [vmem:[#allocation5 + $0x9] sm:$0xff]
    %v2114 = vld [vmem:[#allocation5 + $0x11] sm:$0x1]
    %s2115 = scalar_lea.vmem %s13, 128
    %v2116 = vld [vmem:[%s2115] sm:$0xff]
    %v2117 = vld [vmem:[%s2115 + $0x8] sm:$0xff]
    %v2118 = vld [vmem:[%s2115 + $0x10] sm:$0xff]
    %v2119 = vld [vmem:[%s2115 + $0x18] sm:$0xff]
    %v2120 = vld [vmem:[%s2115 + $0x20] sm:$0xff]
    %v2121 = vld [vmem:[%s2115 + $0x28] sm:$0xff]
    %v2122 = vld [vmem:[%s2115 + $0x30] sm:$0xff]
    %v2123 = vld [vmem:[%s2115 + $0x38] sm:$0xff]
    %v2124 = vld [vmem:[%s2115 + $0x40] sm:$0xff]
    %v2125 = vld [vmem:[%s2115 + $0x48] sm:$0xff]
    %v2126 = vld [vmem:[%s2115 + $0x50] sm:$0xff]
    %v2127 = vld [vmem:[%s2115 + $0x58] sm:$0xff]
    %v2128 = vld [vmem:[%s2115 + $0x60] sm:$0xff]
    %v2129 = vld [vmem:[%s2115 + $0x68] sm:$0xff]
    %v2130 = vld [vmem:[%s2115 + $0x70] sm:$0xff]
    %v2131 = vld [vmem:[%s2115 + $0x78] sm:$0xff]
    %2132 = vmatprep.subr.mxu0 0.0
    %2133 = vmatpush1.msra.mxu0 %v2116
    %2134 = vmatprep.subr.mxu0 0.0
    %2135 = vmatpush1.msra.mxu0 %v2117
    %2136 = vmatprep.subr.mxu0 0.0
    %2137 = vmatpush1.msra.mxu0 %v2118
    %2138 = vmatprep.subr.mxu0 0.0
    %2139 = vmatpush1.msra.mxu0 %v2119
    %2140 = vmatprep.subr.mxu0 0.0
    %2141 = vmatpush1.msra.mxu0 %v2120
    %2142 = vmatprep.subr.mxu0 0.0
    %2143 = vmatpush1.msra.mxu0 %v2121
    %2144 = vmatprep.subr.mxu0 0.0
    %2145 = vmatpush1.msra.mxu0 %v2122
    %2146 = vmatprep.subr.mxu0 0.0
    %2147 = vmatpush1.msra.mxu0 %v2123
    %2148 = vmatprep.subr.mxu0 0.0
    %2149 = vmatpush1.msra.mxu0 %v2124
    %2150 = vmatprep.subr.mxu0 0.0
    %2151 = vmatpush1.msra.mxu0 %v2125
    %2152 = vmatprep.subr.mxu0 0.0
    %2153 = vmatpush1.msra.mxu0 %v2126
    %2154 = vmatprep.subr.mxu0 0.0
    %2155 = vmatpush1.msra.mxu0 %v2127
    %2156 = vmatprep.subr.mxu0 0.0
    %2157 = vmatpush1.msra.mxu0 %v2128
    %2158 = vmatprep.subr.mxu0 0.0
    %2159 = vmatpush1.msra.mxu0 %v2129
    %2160 = vmatprep.subr.mxu0 0.0
    %2161 = vmatpush1.msra.mxu0 %v2130
    %2162 = vmatprep.subr.mxu0 0.0
    %2163 = vmatpush1.msra.mxu0 %v2131
    %2164 = vmatprep.subr.mxu0 0.0
    %2165 = vmatpush1.msra.mxu0 0.0
    %2166 = vmatprep.subr.mxu0 0.0
    %2167 = vmatpush1.msra.mxu0 0.0
    %2168 = vmatprep.subr.mxu0 0.0
    %2169 = vmatpush1.msra.mxu0 0.0
    %2170 = vmatprep.subr.mxu0 0.0
    %2171 = vmatpush1.msra.mxu0 0.0
    %2172 = vmatprep.subr.mxu0 0.0
    %2173 = vmatpush1.msra.mxu0 0.0
    %2174 = vmatprep.subr.mxu0 0.0
    %2175 = vmatpush1.msra.mxu0 0.0
    %2176 = vmatprep.subr.mxu0 0.0
    %2177 = vmatpush1.msra.mxu0 0.0
    %2178 = vmatprep.subr.mxu0 0.0
    %2179 = vmatpush1.msra.mxu0 0.0
    %2180 = vmatprep.subr.mxu0 0.0
    %2181 = vmatpush1.msra.mxu0 0.0
    %2182 = vmatprep.subr.mxu0 0.0
    %2183 = vmatpush1.msra.mxu0 0.0
    %2184 = vmatprep.subr.mxu0 0.0
    %2185 = vmatpush1.msra.mxu0 0.0
    %2186 = vmatprep.subr.mxu0 0.0
    %2187 = vmatpush1.msra.mxu0 0.0
    %2188 = vmatprep.subr.mxu0 0.0
    %2189 = vmatpush1.msra.mxu0 0.0
    %2190 = vmatprep.subr.mxu0 0.0
    %2191 = vmatpush1.msra.mxu0 0.0
    %2192 = vmatprep.subr.mxu0 0.0
    %2193 = vmatpush1.msra.mxu0 0.0
    %2194 = vmatprep.subr.mxu0 0.0
    %2195 = vmatpush1.msra.mxu0 0.0
    %2196 = vmatprep.mubr.f32.mxu0 0.0
    %2197 = vmatmul.mubr.f32.gmra.mrb[0].mxu0 %v2112
    %v2198 = vpop.f32.mrb[0].mxu0
    %v2199 = vadd.f32 0.0, %v2198
    %v2200 = vpop.f32.mrb[0].mxu0
    %2201 = vmatprep.mubr.f32.mxu0 0.0
    %2202 = vmatmul.mubr.f32.gmra.mrb[0].mxu0 %v2113
    %v2203 = vpop.f32.mrb[0].mxu0
    %v2204 = vadd.f32 0.0, %v2203
    %v2205 = vpop.f32.mrb[0].mxu0
    %2206 = vmatprep.mubr.f32.mxu0 0.0
    %2207 = vmatmul.mubr.f32.gmra.mrb[0].mxu0 %v2114
    %v2208 = vpop.f32.mrb[0].mxu0
    %v2209 = vadd.f32 0.0, %v2208
    %v2210 = vpop.f32.mrb[0].mxu0
    %2211 = vdwg.mxu0
    %2212 = vmatprep.subr.mxu0 0.0
    %2213 = vmatpush1.msra.mxu0 %v2096
    %2214 = vmatprep.subr.mxu0 0.0
    %2215 = vmatpush1.msra.mxu0 %v2097
    %2216 = vmatprep.subr.mxu0 0.0
    %2217 = vmatpush1.msra.mxu0 %v2098
    %2218 = vmatprep.subr.mxu0 0.0
    %2219 = vmatpush1.msra.mxu0 %v2099
    %2220 = vmatprep.subr.mxu0 0.0
    %2221 = vmatpush1.msra.mxu0 %v2100
    %2222 = vmatprep.subr.mxu0 0.0
    %2223 = vmatpush1.msra.mxu0 %v2101
    %2224 = vmatprep.subr.mxu0 0.0
    %2225 = vmatpush1.msra.mxu0 %v2102
    %2226 = vmatprep.subr.mxu0 0.0
    %2227 = vmatpush1.msra.mxu0 %v2103
    %2228 = vmatprep.subr.mxu0 0.0
    %2229 = vmatpush1.msra.mxu0 %v2104
    %2230 = vmatprep.subr.mxu0 0.0
    %2231 = vmatpush1.msra.mxu0 %v2105
    %2232 = vmatprep.subr.mxu0 0.0
    %2233 = vmatpush1.msra.mxu0 %v2106
    %2234 = vmatprep.subr.mxu0 0.0
    %2235 = vmatpush1.msra.mxu0 %v2107
    %2236 = vmatprep.subr.mxu0 0.0
    %2237 = vmatpush1.msra.mxu0 %v2108
    %2238 = vmatprep.subr.mxu0 0.0
    %2239 = vmatpush1.msra.mxu0 %v2109
    %2240 = vmatprep.subr.mxu0 0.0
    %2241 = vmatpush1.msra.mxu0 %v2110
    %2242 = vmatprep.subr.mxu0 0.0
    %2243 = vmatpush1.msra.mxu0 %v2111
    %2244 = vmatprep.subr.mxu0 0.0
    %2245 = vmatpush1.msra.mxu0 0.0
    %2246 = vmatprep.subr.mxu0 0.0
    %2247 = vmatpush1.msra.mxu0 0.0
    %2248 = vmatprep.subr.mxu0 0.0
    %2249 = vmatpush1.msra.mxu0 0.0
    %2250 = vmatprep.subr.mxu0 0.0
    %2251 = vmatpush1.msra.mxu0 0.0
    %2252 = vmatprep.subr.mxu0 0.0
    %2253 = vmatpush1.msra.mxu0 0.0
    %2254 = vmatprep.subr.mxu0 0.0
    %2255 = vmatpush1.msra.mxu0 0.0
    %2256 = vmatprep.subr.mxu0 0.0
    %2257 = vmatpush1.msra.mxu0 0.0
    %2258 = vmatprep.subr.mxu0 0.0
    %2259 = vmatpush1.msra.mxu0 0.0
    %2260 = vmatprep.subr.mxu0 0.0
    %2261 = vmatpush1.msra.mxu0 0.0
    %2262 = vmatprep.subr.mxu0 0.0
    %2263 = vmatpush1.msra.mxu0 0.0
    %2264 = vmatprep.subr.mxu0 0.0
    %2265 = vmatpush1.msra.mxu0 0.0
    %2266 = vmatprep.subr.mxu0 0.0
    %2267 = vmatpush1.msra.mxu0 0.0
    %2268 = vmatprep.subr.mxu0 0.0
    %2269 = vmatpush1.msra.mxu0 0.0
    %2270 = vmatprep.subr.mxu0 0.0
    %2271 = vmatpush1.msra.mxu0 0.0
    %2272 = vmatprep.subr.mxu0 0.0
    %2273 = vmatpush1.msra.mxu0 0.0
    %2274 = vmatprep.subr.mxu0 0.0
    %2275 = vmatpush1.msra.mxu0 0.0
    %2276 = vmatprep.mubr.f32.mxu0 0.0
    %2277 = vmatmul.mubr.f32.gmra.mrb[0].mxu0 %v2093
    %v2278 = vpop.f32.mrb[0].mxu0
    %v2279 = vadd.f32 %v2199, %v2278
    %v2280 = vpop.f32.mrb[0].mxu0
    %2281 = vmatprep.mubr.f32.mxu0 0.0
    %2282 = vmatmul.mubr.f32.gmra.mrb[0].mxu0 %v2094
    %v2283 = vpop.f32.mrb[0].mxu0
    %v2284 = vadd.f32 %v2204, %v2283
    %v2285 = vpop.f32.mrb[0].mxu0
    %2286 = vmatprep.mubr.f32.mxu0 0.0
    %2287 = vmatmul.mubr.f32.gmra.mrb[0].mxu0 %v2095
    %v2288 = vpop.f32.mrb[0].mxu0
    %v2289 = vadd.f32 %v2209, %v2288
    %v2290 = vpop.f32.mrb[0].mxu0
    %2291 = vdwg.mxu0
    %v2292 = vld [vmem:[#allocation5 + $0x2] sm:$0xff]
    %v2293 = vld [vmem:[#allocation5 + $0xa] sm:$0xff]
    %v2294 = vld [vmem:[#allocation5 + $0x12] sm:$0x1]
    %s2295 = scalar_lea.vmem %s13, 256
    %v2296 = vld [vmem:[%s2295] sm:$0xff]
    %v2297 = vld [vmem:[%s2295 + $0x8] sm:$0xff]
    %v2298 = vld [vmem:[%s2295 + $0x10] sm:$0xff]
    %v2299 = vld [vmem:[%s2295 + $0x18] sm:$0xff]
    %v2300 = vld [vmem:[%s2295 + $0x20] sm:$0xff]
    %v2301 = vld [vmem:[%s2295 + $0x28] sm:$0xff]
    %v2302 = vld [vmem:[%s2295 + $0x30] sm:$0xff]
    %v2303 = vld [vmem:[%s2295 + $0x38] sm:$0xff]
    %v2304 = vld [vmem:[%s2295 + $0x40] sm:$0xff]
    %v2305 = vld [vmem:[%s2295 + $0x48] sm:$0xff]
    %v2306 = vld [vmem:[%s2295 + $0x50] sm:$0xff]
    %v2307 = vld [vmem:[%s2295 + $0x58] sm:$0xff]
    %v2308 = vld [vmem:[%s2295 + $0x60] sm:$0xff]
    %v2309 = vld [vmem:[%s2295 + $0x68] sm:$0xff]
    %v2310 = vld [vmem:[%s2295 + $0x70] sm:$0xff]
    %v2311 = vld [vmem:[%s2295 + $0x78] sm:$0xff]
    %2312 = vmatprep.subr.mxu0 0.0
    %2313 = vmatpush1.msra.mxu0 %v2296
    %2314 = vmatprep.subr.mxu0 0.0
    %2315 = vmatpush1.msra.mxu0 %v2297
    %2316 = vmatprep.subr.mxu0 0.0
    %2317 = vmatpush1.msra.mxu0 %v2298
    %2318 = vmatprep.subr.mxu0 0.0
    %2319 = vmatpush1.msra.mxu0 %v2299
    %2320 = vmatprep.subr.mxu0 0.0
    %2321 = vmatpush1.msra.mxu0 %v2300
    %2322 = vmatprep.subr.mxu0 0.0
    %2323 = vmatpush1.msra.mxu0 %v2301
    %2324 = vmatprep.subr.mxu0 0.0
    %2325 = vmatpush1.msra.mxu0 %v2302
    %2326 = vmatprep.subr.mxu0 0.0
    %2327 = vmatpush1.msra.mxu0 %v2303
    %2328 = vmatprep.subr.mxu0 0.0
    %2329 = vmatpush1.msra.mxu0 %v2304
    %2330 = vmatprep.subr.mxu0 0.0
    %2331 = vmatpush1.msra.mxu0 %v2305
    %2332 = vmatprep.subr.mxu0 0.0
    %2333 = vmatpush1.msra.mxu0 %v2306
    %2334 = vmatprep.subr.mxu0 0.0
    %2335 = vmatpush1.msra.mxu0 %v2307
    %2336 = vmatprep.subr.mxu0 0.0
    %2337 = vmatpush1.msra.mxu0 %v2308
    %2338 = vmatprep.subr.mxu0 0.0
    %2339 = vmatpush1.msra.mxu0 %v2309
    %2340 = vmatprep.subr.mxu0 0.0
    %2341 = vmatpush1.msra.mxu0 %v2310
    %2342 = vmatprep.subr.mxu0 0.0
    %2343 = vmatpush1.msra.mxu0 %v2311
    %2344 = vmatprep.subr.mxu0 0.0
    %2345 = vmatpush1.msra.mxu0 0.0
    %2346 = vmatprep.subr.mxu0 0.0
    %2347 = vmatpush1.msra.mxu0 0.0
    %2348 = vmatprep.subr.mxu0 0.0
    %2349 = vmatpush1.msra.mxu0 0.0
    %2350 = vmatprep.subr.mxu0 0.0
    %2351 = vmatpush1.msra.mxu0 0.0
    %2352 = vmatprep.subr.mxu0 0.0
    %2353 = vmatpush1.msra.mxu0 0.0
    %2354 = vmatprep.subr.mxu0 0.0
    %2355 = vmatpush1.msra.mxu0 0.0
    %2356 = vmatprep.subr.mxu0 0.0
    %2357 = vmatpush1.msra.mxu0 0.0
    %2358 = vmatprep.subr.mxu0 0.0
    %2359 = vmatpush1.msra.mxu0 0.0
    %2360 = vmatprep.subr.mxu0 0.0
    %2361 = vmatpush1.msra.mxu0 0.0
    %2362 = vmatprep.subr.mxu0 0.0
    %2363 = vmatpush1.msra.mxu0 0.0
    %2364 = vmatprep.subr.mxu0 0.0
    %2365 = vmatpush1.msra.mxu0 0.0
    %2366 = vmatprep.subr.mxu0 0.0
    %2367 = vmatpush1.msra.mxu0 0.0
    %2368 = vmatprep.subr.mxu0 0.0
    %2369 = vmatpush1.msra.mxu0 0.0
    %2370 = vmatprep.subr.mxu0 0.0
    %2371 = vmatpush1.msra.mxu0 0.0
    %2372 = vmatprep.subr.mxu0 0.0
    %2373 = vmatpush1.msra.mxu0 0.0
    %2374 = vmatprep.subr.mxu0 0.0
    %2375 = vmatpush1.msra.mxu0 0.0
    %2376 = vmatprep.mubr.f32.mxu0 0.0
    %2377 = vmatmul.mubr.f32.gmra.mrb[0].mxu0 %v2292
    %v2378 = vpop.f32.mrb[0].mxu0
    %v2379 = vadd.f32 0.0, %v2378
    %v2380 = vpop.f32.mrb[0].mxu0
    %2381 = vmatprep.mubr.f32.mxu0 0.0
    %2382 = vmatmul.mubr.f32.gmra.mrb[0].mxu0 %v2293
    %v2383 = vpop.f32.mrb[0].mxu0
    %v2384 = vadd.f32 0.0, %v2383
    %v2385 = vpop.f32.mrb[0].mxu0
    %2386 = vmatprep.mubr.f32.mxu0 0.0
    %2387 = vmatmul.mubr.f32.gmra.mrb[0].mxu0 %v2294
    %v2388 = vpop.f32.mrb[0].mxu0
    %v2389 = vadd.f32 0.0, %v2388
    %v2390 = vpop.f32.mrb[0].mxu0
    %2391 = vdwg.mxu0
    %v2392 = vadd.f32 %v2279, %v2379
    %v2393 = vadd.f32 %v2284, %v2384
    %v2394 = vadd.f32 %v2289, %v2389
    %v2395 = vld [vmem:[#allocation5 + $0x3] sm:$0xff]
    %v2396 = vld [vmem:[#allocation5 + $0xb] sm:$0xff]
    %v2397 = vld [vmem:[#allocation5 + $0x13] sm:$0x1]
    %s2398 = scalar_lea.vmem %s13, 384
    %v2399 = vld [vmem:[%s2398] sm:$0xff]
    %v2400 = vld [vmem:[%s2398 + $0x8] sm:$0xff]
    %v2401 = vld [vmem:[%s2398 + $0x10] sm:$0xff]
    %v2402 = vld [vmem:[%s2398 + $0x18] sm:$0xff]
    %v2403 = vld [vmem:[%s2398 + $0x20] sm:$0xff]
    %v2404 = vld [vmem:[%s2398 + $0x28] sm:$0xff]
    %v2405 = vld [vmem:[%s2398 + $0x30] sm:$0xff]
    %v2406 = vld [vmem:[%s2398 + $0x38] sm:$0xff]
    %v2407 = vld [vmem:[%s2398 + $0x40] sm:$0xff]
    %v2408 = vld [vmem:[%s2398 + $0x48] sm:$0xff]
    %v2409 = vld [vmem:[%s2398 + $0x50] sm:$0xff]
    %v2410 = vld [vmem:[%s2398 + $0x58] sm:$0xff]
    %v2411 = vld [vmem:[%s2398 + $0x60] sm:$0xff]
    %v2412 = vld [vmem:[%s2398 + $0x68] sm:$0xff]
    %v2413 = vld [vmem:[%s2398 + $0x70] sm:$0xff]
    %v2414 = vld [vmem:[%s2398 + $0x78] sm:$0xff]
    %2415 = vmatprep.subr.mxu0 0.0
    %2416 = vmatpush1.msra.mxu0 %v2399
    %2417 = vmatprep.subr.mxu0 0.0
    %2418 = vmatpush1.msra.mxu0 %v2400
    %2419 = vmatprep.subr.mxu0 0.0
    %2420 = vmatpush1.msra.mxu0 %v2401
    %2421 = vmatprep.subr.mxu0 0.0
    %2422 = vmatpush1.msra.mxu0 %v2402
    %2423 = vmatprep.subr.mxu0 0.0
    %2424 = vmatpush1.msra.mxu0 %v2403
    %2425 = vmatprep.subr.mxu0 0.0
    %2426 = vmatpush1.msra.mxu0 %v2404
    %2427 = vmatprep.subr.mxu0 0.0
    %2428 = vmatpush1.msra.mxu0 %v2405
    %2429 = vmatprep.subr.mxu0 0.0
    %2430 = vmatpush1.msra.mxu0 %v2406
    %2431 = vmatprep.subr.mxu0 0.0
    %2432 = vmatpush1.msra.mxu0 %v2407
    %2433 = vmatprep.subr.mxu0 0.0
    %2434 = vmatpush1.msra.mxu0 %v2408
    %2435 = vmatprep.subr.mxu0 0.0
    %2436 = vmatpush1.msra.mxu0 %v2409
    %2437 = vmatprep.subr.mxu0 0.0
    %2438 = vmatpush1.msra.mxu0 %v2410
    %2439 = vmatprep.subr.mxu0 0.0
    %2440 = vmatpush1.msra.mxu0 %v2411
    %2441 = vmatprep.subr.mxu0 0.0
    %2442 = vmatpush1.msra.mxu0 %v2412
    %2443 = vmatprep.subr.mxu0 0.0
    %2444 = vmatpush1.msra.mxu0 %v2413
    %2445 = vmatprep.subr.mxu0 0.0
    %2446 = vmatpush1.msra.mxu0 %v2414
    %2447 = vmatprep.subr.mxu0 0.0
    %2448 = vmatpush1.msra.mxu0 0.0
    %2449 = vmatprep.subr.mxu0 0.0
    %2450 = vmatpush1.msra.mxu0 0.0
    %2451 = vmatprep.subr.mxu0 0.0
    %2452 = vmatpush1.msra.mxu0 0.0
    %2453 = vmatprep.subr.mxu0 0.0
    %2454 = vmatpush1.msra.mxu0 0.0
    %2455 = vmatprep.subr.mxu0 0.0
    %2456 = vmatpush1.msra.mxu0 0.0
    %2457 = vmatprep.subr.mxu0 0.0
    %2458 = vmatpush1.msra.mxu0 0.0
    %2459 = vmatprep.subr.mxu0 0.0
    %2460 = vmatpush1.msra.mxu0 0.0
    %2461 = vmatprep.subr.mxu0 0.0
    %2462 = vmatpush1.msra.mxu0 0.0
    %2463 = vmatprep.subr.mxu0 0.0
    %2464 = vmatpush1.msra.mxu0 0.0
    %2465 = vmatprep.subr.mxu0 0.0
    %2466 = vmatpush1.msra.mxu0 0.0
    %2467 = vmatprep.subr.mxu0 0.0
    %2468 = vmatpush1.msra.mxu0 0.0
    %2469 = vmatprep.subr.mxu0 0.0
    %2470 = vmatpush1.msra.mxu0 0.0
    %2471 = vmatprep.subr.mxu0 0.0
    %2472 = vmatpush1.msra.mxu0 0.0
    %2473 = vmatprep.subr.mxu0 0.0
    %2474 = vmatpush1.msra.mxu0 0.0
    %2475 = vmatprep.subr.mxu0 0.0
    %2476 = vmatpush1.msra.mxu0 0.0
    %2477 = vmatprep.subr.mxu0 0.0
    %2478 = vmatpush1.msra.mxu0 0.0
    %2479 = vmatprep.mubr.f32.mxu0 0.0
    %2480 = vmatmul.mubr.f32.gmra.mrb[0].mxu0 %v2395
    %v2481 = vpop.f32.mrb[0].mxu0
    %v2482 = vadd.f32 0.0, %v2481
    %v2483 = vpop.f32.mrb[0].mxu0
    %2484 = vmatprep.mubr.f32.mxu0 0.0
    %2485 = vmatmul.mubr.f32.gmra.mrb[0].mxu0 %v2396
    %v2486 = vpop.f32.mrb[0].mxu0
    %v2487 = vadd.f32 0.0, %v2486
    %v2488 = vpop.f32.mrb[0].mxu0
    %2489 = vmatprep.mubr.f32.mxu0 0.0
    %2490 = vmatmul.mubr.f32.gmra.mrb[0].mxu0 %v2397
    %v2491 = vpop.f32.mrb[0].mxu0
    %v2492 = vadd.f32 0.0, %v2491
    %v2493 = vpop.f32.mrb[0].mxu0
    %2494 = vdwg.mxu0
    %v2495 = vadd.f32 %v2392, %v2482
    %v2496 = vadd.f32 %v2393, %v2487
    %v2497 = vadd.f32 %v2394, %v2492
    %v2498 = vld [vmem:[#allocation5 + $0x4] sm:$0xff]
    %v2499 = vld [vmem:[#allocation5 + $0xc] sm:$0xff]
    %v2500 = vld [vmem:[#allocation5 + $0x14] sm:$0x1]
    %s2501 = scalar_lea.vmem %s13, 512
    %v2502 = vld [vmem:[%s2501] sm:$0xff]
    %v2503 = vld [vmem:[%s2501 + $0x8] sm:$0xff]
    %v2504 = vld [vmem:[%s2501 + $0x10] sm:$0xff]
    %v2505 = vld [vmem:[%s2501 + $0x18] sm:$0xff]
    %v2506 = vld [vmem:[%s2501 + $0x20] sm:$0xff]
    %v2507 = vld [vmem:[%s2501 + $0x28] sm:$0xff]
    %v2508 = vld [vmem:[%s2501 + $0x30] sm:$0xff]
    %v2509 = vld [vmem:[%s2501 + $0x38] sm:$0xff]
    %v2510 = vld [vmem:[%s2501 + $0x40] sm:$0xff]
    %v2511 = vld [vmem:[%s2501 + $0x48] sm:$0xff]
    %v2512 = vld [vmem:[%s2501 + $0x50] sm:$0xff]
    %v2513 = vld [vmem:[%s2501 + $0x58] sm:$0xff]
    %v2514 = vld [vmem:[%s2501 + $0x60] sm:$0xff]
    %v2515 = vld [vmem:[%s2501 + $0x68] sm:$0xff]
    %v2516 = vld [vmem:[%s2501 + $0x70] sm:$0xff]
    %v2517 = vld [vmem:[%s2501 + $0x78] sm:$0xff]
    %2518 = vmatprep.subr.mxu0 0.0
    %2519 = vmatpush1.msra.mxu0 %v2502
    %2520 = vmatprep.subr.mxu0 0.0
    %2521 = vmatpush1.msra.mxu0 %v2503
    %2522 = vmatprep.subr.mxu0 0.0
    %2523 = vmatpush1.msra.mxu0 %v2504
    %2524 = vmatprep.subr.mxu0 0.0
    %2525 = vmatpush1.msra.mxu0 %v2505
    %2526 = vmatprep.subr.mxu0 0.0
    %2527 = vmatpush1.msra.mxu0 %v2506
    %2528 = vmatprep.subr.mxu0 0.0
    %2529 = vmatpush1.msra.mxu0 %v2507
    %2530 = vmatprep.subr.mxu0 0.0
    %2531 = vmatpush1.msra.mxu0 %v2508
    %2532 = vmatprep.subr.mxu0 0.0
    %2533 = vmatpush1.msra.mxu0 %v2509
    %2534 = vmatprep.subr.mxu0 0.0
    %2535 = vmatpush1.msra.mxu0 %v2510
    %2536 = vmatprep.subr.mxu0 0.0
    %2537 = vmatpush1.msra.mxu0 %v2511
    %2538 = vmatprep.subr.mxu0 0.0
    %2539 = vmatpush1.msra.mxu0 %v2512
    %2540 = vmatprep.subr.mxu0 0.0
    %2541 = vmatpush1.msra.mxu0 %v2513
    %2542 = vmatprep.subr.mxu0 0.0
    %2543 = vmatpush1.msra.mxu0 %v2514
    %2544 = vmatprep.subr.mxu0 0.0
    %2545 = vmatpush1.msra.mxu0 %v2515
    %2546 = vmatprep.subr.mxu0 0.0
    %2547 = vmatpush1.msra.mxu0 %v2516
    %2548 = vmatprep.subr.mxu0 0.0
    %2549 = vmatpush1.msra.mxu0 %v2517
    %2550 = vmatprep.subr.mxu0 0.0
    %2551 = vmatpush1.msra.mxu0 0.0
    %2552 = vmatprep.subr.mxu0 0.0
    %2553 = vmatpush1.msra.mxu0 0.0
    %2554 = vmatprep.subr.mxu0 0.0
    %2555 = vmatpush1.msra.mxu0 0.0
    %2556 = vmatprep.subr.mxu0 0.0
    %2557 = vmatpush1.msra.mxu0 0.0
    %2558 = vmatprep.subr.mxu0 0.0
    %2559 = vmatpush1.msra.mxu0 0.0
    %2560 = vmatprep.subr.mxu0 0.0
    %2561 = vmatpush1.msra.mxu0 0.0
    %2562 = vmatprep.subr.mxu0 0.0
    %2563 = vmatpush1.msra.mxu0 0.0
    %2564 = vmatprep.subr.mxu0 0.0
    %2565 = vmatpush1.msra.mxu0 0.0
    %2566 = vmatprep.subr.mxu0 0.0
    %2567 = vmatpush1.msra.mxu0 0.0
    %2568 = vmatprep.subr.mxu0 0.0
    %2569 = vmatpush1.msra.mxu0 0.0
    %2570 = vmatprep.subr.mxu0 0.0
    %2571 = vmatpush1.msra.mxu0 0.0
    %2572 = vmatprep.subr.mxu0 0.0
    %2573 = vmatpush1.msra.mxu0 0.0
    %2574 = vmatprep.subr.mxu0 0.0
    %2575 = vmatpush1.msra.mxu0 0.0
    %2576 = vmatprep.subr.mxu0 0.0
    %2577 = vmatpush1.msra.mxu0 0.0
    %2578 = vmatprep.subr.mxu0 0.0
    %2579 = vmatpush1.msra.mxu0 0.0
    %2580 = vmatprep.subr.mxu0 0.0
    %2581 = vmatpush1.msra.mxu0 0.0
    %2582 = vmatprep.mubr.f32.mxu0 0.0
    %2583 = vmatmul.mubr.f32.gmra.mrb[0].mxu0 %v2498
    %v2584 = vpop.f32.mrb[0].mxu0
    %v2585 = vadd.f32 0.0, %v2584
    %v2586 = vpop.f32.mrb[0].mxu0
    %2587 = vmatprep.mubr.f32.mxu0 0.0
    %2588 = vmatmul.mubr.f32.gmra.mrb[0].mxu0 %v2499
    %v2589 = vpop.f32.mrb[0].mxu0
    %v2590 = vadd.f32 0.0, %v2589
    %v2591 = vpop.f32.mrb[0].mxu0
    %2592 = vmatprep.mubr.f32.mxu0 0.0
    %2593 = vmatmul.mubr.f32.gmra.mrb[0].mxu0 %v2500
    %v2594 = vpop.f32.mrb[0].mxu0
    %v2595 = vadd.f32 0.0, %v2594
    %v2596 = vpop.f32.mrb[0].mxu0
    %2597 = vdwg.mxu0
    %v2598 = vadd.f32 %v2495, %v2585
    %v2599 = vadd.f32 %v2496, %v2590
    %v2600 = vadd.f32 %v2497, %v2595
    %v2602 = vlaneseq
    %v2603 = vshrl.u32 %v2602, 7
    %v2604 = vsub.s32 0, %v2603
    %v2605 = vrot.slane %v90, %v2604
    %2606 = vset.pattern.permute.xlu0 0
    %2607 = vperm.xlu0 %2606, %v2605
    %v2608 = vpop.permute.xlu0 %2607
    %v2610 = vadd.f32 %v2598, %v2608
    %v2611 = vadd.f32 %v2599, %v2608
    %v2612 = vadd.f32 %v2600, %v2608
    %vm2613 = vcmask 138240
    %2614 = vst.msk [vmem:[%s15] sm:$0xff] %vm2613, %v2610
    %2615 = vst.msk [vmem:[%s15 + $0x8] sm:$0xff] %vm2613, %v2611
    %vm2616 = vcmask 131072
    %2617 = vst.msk [vmem:[%s15 + $0x10] sm:$0x1] %vm2616, %v2612
    %s2618 = scalar_lea.vmem [#allocation2], 24
    %v2619 = vld [vmem:[%s2618] sm:$0xff]
    %v2620 = vld [vmem:[%s2618 + $0x8] sm:$0xff]
    %v2621 = vld [vmem:[%s1] sm:$0xff]
    %v2622 = vld [vmem:[%s1 + $0x8] sm:$0xff]
    %v2623 = vld [vmem:[%s2] sm:$0xff]
    %v2624 = vld [vmem:[%s2 + $0x8] sm:$0xff]
    %v2625 = vld [vmem:[%s2618 + $0x1] sm:$0xff]
    %v2626 = vld [vmem:[%s2618 + $0x9] sm:$0xff]
    %v2627 = vld [vmem:[%s100] sm:$0xff]
    %v2628 = vld [vmem:[%s100 + $0x8] sm:$0xff]
    %v2630 = vsel %vm55, %v2625, 0
    %v2633 = vsel %vm55, %v2626, 0
    %2635 = vmatprep.subr.mxu0 0.0
    %2636 = vmatpush1.msra.mxu0 %v2627
    %2637 = vmatprep.subr.mxu0 0.0
    %2638 = vmatpush1.msra.mxu0 %v2628
    %2639 = vmatprep.subr.mxu0 0.0
    %2640 = vmatpush1.msra.mxu0 0.0
    %2641 = vmatprep.subr.mxu0 0.0
    %2642 = vmatpush1.msra.mxu0 0.0
    %2643 = vmatprep.subr.mxu0 0.0
    %2644 = vmatpush1.msra.mxu0 0.0
    %2645 = vmatprep.subr.mxu0 0.0
    %2646 = vmatpush1.msra.mxu0 0.0
    %2647 = vmatprep.subr.mxu0 0.0
    %2648 = vmatpush1.msra.mxu0 0.0
    %2649 = vmatprep.subr.mxu0 0.0
    %2650 = vmatpush1.msra.mxu0 0.0
    %2651 = vmatprep.subr.mxu0 0.0
    %2652 = vmatpush1.msra.mxu0 0.0
    %2653 = vmatprep.subr.mxu0 0.0
    %2654 = vmatpush1.msra.mxu0 0.0
    %2655 = vmatprep.subr.mxu0 0.0
    %2656 = vmatpush1.msra.mxu0 0.0
    %2657 = vmatprep.subr.mxu0 0.0
    %2658 = vmatpush1.msra.mxu0 0.0
    %2659 = vmatprep.subr.mxu0 0.0
    %2660 = vmatpush1.msra.mxu0 0.0
    %2661 = vmatprep.subr.mxu0 0.0
    %2662 = vmatpush1.msra.mxu0 0.0
    %2663 = vmatprep.subr.mxu0 0.0
    %2664 = vmatpush1.msra.mxu0 0.0
    %2665 = vmatprep.subr.mxu0 0.0
    %2666 = vmatpush1.msra.mxu0 0.0
    %2667 = vmatprep.subr.mxu0 0.0
    %2668 = vmatpush1.msra.mxu0 0.0
    %2669 = vmatprep.subr.mxu0 0.0
    %2670 = vmatpush1.msra.mxu0 0.0
    %2671 = vmatprep.subr.mxu0 0.0
    %2672 = vmatpush1.msra.mxu0 0.0
    %2673 = vmatprep.subr.mxu0 0.0
    %2674 = vmatpush1.msra.mxu0 0.0
    %2675 = vmatprep.subr.mxu0 0.0
    %2676 = vmatpush1.msra.mxu0 0.0
    %2677 = vmatprep.subr.mxu0 0.0
    %2678 = vmatpush1.msra.mxu0 0.0
    %2679 = vmatprep.subr.mxu0 0.0
    %2680 = vmatpush1.msra.mxu0 0.0
    %2681 = vmatprep.subr.mxu0 0.0
    %2682 = vmatpush1.msra.mxu0 0.0
    %2683 = vmatprep.subr.mxu0 0.0
    %2684 = vmatpush1.msra.mxu0 0.0
    %2685 = vmatprep.subr.mxu0 0.0
    %2686 = vmatpush1.msra.mxu0 0.0
    %2687 = vmatprep.subr.mxu0 0.0
    %2688 = vmatpush1.msra.mxu0 0.0
    %2689 = vmatprep.subr.mxu0 0.0
    %2690 = vmatpush1.msra.mxu0 0.0
    %2691 = vmatprep.subr.mxu0 0.0
    %2692 = vmatpush1.msra.mxu0 0.0
    %2693 = vmatprep.subr.mxu0 0.0
    %2694 = vmatpush1.msra.mxu0 0.0
    %2695 = vmatprep.subr.mxu0 0.0
    %2696 = vmatpush1.msra.mxu0 0.0
    %2697 = vmatprep.subr.mxu0 0.0
    %2698 = vmatpush1.msra.mxu0 0.0
    %2699 = vmatprep.mubr.f32.mxu0 0.0
    %2700 = vmatmul.mubr.f32.gmra.mrb[0].mxu0 %v2630
    %v2701 = vpop.f32.mrb[0].mxu0
    %v2702 = vadd.f32 0.0, %v2701
    %v2703 = vpop.f32.mrb[0].mxu0
    %2704 = vmatprep.mubr.f32.mxu0 0.0
    %2705 = vmatmul.mubr.f32.gmra.mrb[0].mxu0 %v2633
    %v2706 = vpop.f32.mrb[0].mxu0
    %v2707 = vadd.f32 0.0, %v2706
    %v2708 = vpop.f32.mrb[0].mxu0
    %2709 = vdwg.mxu0
    %v2711 = vsel %vm55, %v2619, 0
    %v2714 = vsel %vm55, %v2620, 0
    %2716 = vmatprep.subr.mxu0 0.0
    %2717 = vmatpush1.msra.mxu0 %v2621
    %2718 = vmatprep.subr.mxu0 0.0
    %2719 = vmatpush1.msra.mxu0 %v2622
    %2720 = vmatprep.subr.mxu0 0.0
    %2721 = vmatpush1.msra.mxu0 0.0
    %2722 = vmatprep.subr.mxu0 0.0
    %2723 = vmatpush1.msra.mxu0 0.0
    %2724 = vmatprep.subr.mxu0 0.0
    %2725 = vmatpush1.msra.mxu0 0.0
    %2726 = vmatprep.subr.mxu0 0.0
    %2727 = vmatpush1.msra.mxu0 0.0
    %2728 = vmatprep.subr.mxu0 0.0
    %2729 = vmatpush1.msra.mxu0 0.0
    %2730 = vmatprep.subr.mxu0 0.0
    %2731 = vmatpush1.msra.mxu0 0.0
    %2732 = vmatprep.subr.mxu0 0.0
    %2733 = vmatpush1.msra.mxu0 0.0
    %2734 = vmatprep.subr.mxu0 0.0
    %2735 = vmatpush1.msra.mxu0 0.0
    %2736 = vmatprep.subr.mxu0 0.0
    %2737 = vmatpush1.msra.mxu0 0.0
    %2738 = vmatprep.subr.mxu0 0.0
    %2739 = vmatpush1.msra.mxu0 0.0
    %2740 = vmatprep.subr.mxu0 0.0
    %2741 = vmatpush1.msra.mxu0 0.0
    %2742 = vmatprep.subr.mxu0 0.0
    %2743 = vmatpush1.msra.mxu0 0.0
    %2744 = vmatprep.subr.mxu0 0.0
    %2745 = vmatpush1.msra.mxu0 0.0
    %2746 = vmatprep.subr.mxu0 0.0
    %2747 = vmatpush1.msra.mxu0 0.0
    %2748 = vmatprep.subr.mxu0 0.0
    %2749 = vmatpush1.msra.mxu0 0.0
    %2750 = vmatprep.subr.mxu0 0.0
    %2751 = vmatpush1.msra.mxu0 0.0
    %2752 = vmatprep.subr.mxu0 0.0
    %2753 = vmatpush1.msra.mxu0 0.0
    %2754 = vmatprep.subr.mxu0 0.0
    %2755 = vmatpush1.msra.mxu0 0.0
    %2756 = vmatprep.subr.mxu0 0.0
    %2757 = vmatpush1.msra.mxu0 0.0
    %2758 = vmatprep.subr.mxu0 0.0
    %2759 = vmatpush1.msra.mxu0 0.0
    %2760 = vmatprep.subr.mxu0 0.0
    %2761 = vmatpush1.msra.mxu0 0.0
    %2762 = vmatprep.subr.mxu0 0.0
    %2763 = vmatpush1.msra.mxu0 0.0
    %2764 = vmatprep.subr.mxu0 0.0
    %2765 = vmatpush1.msra.mxu0 0.0
    %2766 = vmatprep.subr.mxu0 0.0
    %2767 = vmatpush1.msra.mxu0 0.0
    %2768 = vmatprep.subr.mxu0 0.0
    %2769 = vmatpush1.msra.mxu0 0.0
    %2770 = vmatprep.subr.mxu0 0.0
    %2771 = vmatpush1.msra.mxu0 0.0
    %2772 = vmatprep.subr.mxu0 0.0
    %2773 = vmatpush1.msra.mxu0 0.0
    %2774 = vmatprep.subr.mxu0 0.0
    %2775 = vmatpush1.msra.mxu0 0.0
    %2776 = vmatprep.subr.mxu0 0.0
    %2777 = vmatpush1.msra.mxu0 0.0
    %2778 = vmatprep.subr.mxu0 0.0
    %2779 = vmatpush1.msra.mxu0 0.0
    %2780 = vmatprep.mubr.f32.mxu0 0.0
    %2781 = vmatmul.mubr.f32.gmra.mrb[0].mxu0 %v2711
    %v2782 = vpop.f32.mrb[0].mxu0
    %v2783 = vadd.f32 %v2702, %v2782
    %v2784 = vpop.f32.mrb[0].mxu0
    %2785 = vmatprep.mubr.f32.mxu0 0.0
    %2786 = vmatmul.mubr.f32.gmra.mrb[0].mxu0 %v2714
    %v2787 = vpop.f32.mrb[0].mxu0
    %v2788 = vadd.f32 %v2707, %v2787
    %v2789 = vpop.f32.mrb[0].mxu0
    %2790 = vdwg.mxu0
    %v2791 = vld [vmem:[%s265] sm:$0xff]
    %v2792 = vld [vmem:[%s265 + $0x8] sm:$0xff]
    %2793 = vmatprep.subr.mxu0 0.0
    %2794 = vmatpush1.msra.mxu0 %v2791
    %2795 = vmatprep.subr.mxu0 0.0
    %2796 = vmatpush1.msra.mxu0 %v2792
    %2797 = vmatprep.subr.mxu0 0.0
    %2798 = vmatpush1.msra.mxu0 0.0
    %2799 = vmatprep.subr.mxu0 0.0
    %2800 = vmatpush1.msra.mxu0 0.0
    %2801 = vmatprep.subr.mxu0 0.0
    %2802 = vmatpush1.msra.mxu0 0.0
    %2803 = vmatprep.subr.mxu0 0.0
    %2804 = vmatpush1.msra.mxu0 0.0
    %2805 = vmatprep.subr.mxu0 0.0
    %2806 = vmatpush1.msra.mxu0 0.0
    %2807 = vmatprep.subr.mxu0 0.0
    %2808 = vmatpush1.msra.mxu0 0.0
    %2809 = vmatprep.subr.mxu0 0.0
    %2810 = vmatpush1.msra.mxu0 0.0
    %2811 = vmatprep.subr.mxu0 0.0
    %2812 = vmatpush1.msra.mxu0 0.0
    %2813 = vmatprep.subr.mxu0 0.0
    %2814 = vmatpush1.msra.mxu0 0.0
    %2815 = vmatprep.subr.mxu0 0.0
    %2816 = vmatpush1.msra.mxu0 0.0
    %2817 = vmatprep.subr.mxu0 0.0
    %2818 = vmatpush1.msra.mxu0 0.0
    %2819 = vmatprep.subr.mxu0 0.0
    %2820 = vmatpush1.msra.mxu0 0.0
    %2821 = vmatprep.subr.mxu0 0.0
    %2822 = vmatpush1.msra.mxu0 0.0
    %2823 = vmatprep.subr.mxu0 0.0
    %2824 = vmatpush1.msra.mxu0 0.0
    %2825 = vmatprep.subr.mxu0 0.0
    %2826 = vmatpush1.msra.mxu0 0.0
    %2827 = vmatprep.subr.mxu0 0.0
    %2828 = vmatpush1.msra.mxu0 0.0
    %2829 = vmatprep.subr.mxu0 0.0
    %2830 = vmatpush1.msra.mxu0 0.0
    %2831 = vmatprep.subr.mxu0 0.0
    %2832 = vmatpush1.msra.mxu0 0.0
    %2833 = vmatprep.subr.mxu0 0.0
    %2834 = vmatpush1.msra.mxu0 0.0
    %2835 = vmatprep.subr.mxu0 0.0
    %2836 = vmatpush1.msra.mxu0 0.0
    %2837 = vmatprep.subr.mxu0 0.0
    %2838 = vmatpush1.msra.mxu0 0.0
    %2839 = vmatprep.subr.mxu0 0.0
    %2840 = vmatpush1.msra.mxu0 0.0
    %2841 = vmatprep.subr.mxu0 0.0
    %2842 = vmatpush1.msra.mxu0 0.0
    %2843 = vmatprep.subr.mxu0 0.0
    %2844 = vmatpush1.msra.mxu0 0.0
    %2845 = vmatprep.subr.mxu0 0.0
    %2846 = vmatpush1.msra.mxu0 0.0
    %2847 = vmatprep.subr.mxu0 0.0
    %2848 = vmatpush1.msra.mxu0 0.0
    %2849 = vmatprep.subr.mxu0 0.0
    %2850 = vmatpush1.msra.mxu0 0.0
    %2851 = vmatprep.subr.mxu0 0.0
    %2852 = vmatpush1.msra.mxu0 0.0
    %2853 = vmatprep.subr.mxu0 0.0
    %2854 = vmatpush1.msra.mxu0 0.0
    %2855 = vmatprep.subr.mxu0 0.0
    %2856 = vmatpush1.msra.mxu0 0.0
    %2857 = vmatprep.mubr.f32.mxu0 0.0
    %2858 = vmatmul.mubr.f32.gmra.mrb[0].mxu0 %v2630
    %v2859 = vpop.f32.mrb[0].mxu0
    %v2860 = vadd.f32 0.0, %v2859
    %v2861 = vpop.f32.mrb[0].mxu0
    %2862 = vmatprep.mubr.f32.mxu0 0.0
    %2863 = vmatmul.mubr.f32.gmra.mrb[0].mxu0 %v2633
    %v2864 = vpop.f32.mrb[0].mxu0
    %v2865 = vadd.f32 0.0, %v2864
    %v2866 = vpop.f32.mrb[0].mxu0
    %2867 = vdwg.mxu0
    %2868 = vmatprep.subr.mxu0 0.0
    %2869 = vmatpush1.msra.mxu0 %v2623
    %2870 = vmatprep.subr.mxu0 0.0
    %2871 = vmatpush1.msra.mxu0 %v2624
    %2872 = vmatprep.subr.mxu0 0.0
    %2873 = vmatpush1.msra.mxu0 0.0
    %2874 = vmatprep.subr.mxu0 0.0
    %2875 = vmatpush1.msra.mxu0 0.0
    %2876 = vmatprep.subr.mxu0 0.0
    %2877 = vmatpush1.msra.mxu0 0.0
    %2878 = vmatprep.subr.mxu0 0.0
    %2879 = vmatpush1.msra.mxu0 0.0
    %2880 = vmatprep.subr.mxu0 0.0
    %2881 = vmatpush1.msra.mxu0 0.0
    %2882 = vmatprep.subr.mxu0 0.0
    %2883 = vmatpush1.msra.mxu0 0.0
    %2884 = vmatprep.subr.mxu0 0.0
    %2885 = vmatpush1.msra.mxu0 0.0
    %2886 = vmatprep.subr.mxu0 0.0
    %2887 = vmatpush1.msra.mxu0 0.0
    %2888 = vmatprep.subr.mxu0 0.0
    %2889 = vmatpush1.msra.mxu0 0.0
    %2890 = vmatprep.subr.mxu0 0.0
    %2891 = vmatpush1.msra.mxu0 0.0
    %2892 = vmatprep.subr.mxu0 0.0
    %2893 = vmatpush1.msra.mxu0 0.0
    %2894 = vmatprep.subr.mxu0 0.0
    %2895 = vmatpush1.msra.mxu0 0.0
    %2896 = vmatprep.subr.mxu0 0.0
    %2897 = vmatpush1.msra.mxu0 0.0
    %2898 = vmatprep.subr.mxu0 0.0
    %2899 = vmatpush1.msra.mxu0 0.0
    %2900 = vmatprep.subr.mxu0 0.0
    %2901 = vmatpush1.msra.mxu0 0.0
    %2902 = vmatprep.subr.mxu0 0.0
    %2903 = vmatpush1.msra.mxu0 0.0
    %2904 = vmatprep.subr.mxu0 0.0
    %2905 = vmatpush1.msra.mxu0 0.0
    %2906 = vmatprep.subr.mxu0 0.0
    %2907 = vmatpush1.msra.mxu0 0.0
    %2908 = vmatprep.subr.mxu0 0.0
    %2909 = vmatpush1.msra.mxu0 0.0
    %2910 = vmatprep.subr.mxu0 0.0
    %2911 = vmatpush1.msra.mxu0 0.0
    %2912 = vmatprep.subr.mxu0 0.0
    %2913 = vmatpush1.msra.mxu0 0.0
    %2914 = vmatprep.subr.mxu0 0.0
    %2915 = vmatpush1.msra.mxu0 0.0
    %2916 = vmatprep.subr.mxu0 0.0
    %2917 = vmatpush1.msra.mxu0 0.0
    %2918 = vmatprep.subr.mxu0 0.0
    %2919 = vmatpush1.msra.mxu0 0.0
    %2920 = vmatprep.subr.mxu0 0.0
    %2921 = vmatpush1.msra.mxu0 0.0
    %2922 = vmatprep.subr.mxu0 0.0
    %2923 = vmatpush1.msra.mxu0 0.0
    %2924 = vmatprep.subr.mxu0 0.0
    %2925 = vmatpush1.msra.mxu0 0.0
    %2926 = vmatprep.subr.mxu0 0.0
    %2927 = vmatpush1.msra.mxu0 0.0
    %2928 = vmatprep.subr.mxu0 0.0
    %2929 = vmatpush1.msra.mxu0 0.0
    %2930 = vmatprep.subr.mxu0 0.0
    %2931 = vmatpush1.msra.mxu0 0.0
    %2932 = vmatprep.mubr.f32.mxu0 0.0
    %2933 = vmatmul.mubr.f32.gmra.mrb[0].mxu0 %v2711
    %v2934 = vpop.f32.mrb[0].mxu0
    %v2935 = vadd.f32 %v2860, %v2934
    %v2936 = vpop.f32.mrb[0].mxu0
    %2937 = vmatprep.mubr.f32.mxu0 0.0
    %2938 = vmatmul.mubr.f32.gmra.mrb[0].mxu0 %v2714
    %v2939 = vpop.f32.mrb[0].mxu0
    %v2940 = vadd.f32 %v2865, %v2939
    %v2941 = vpop.f32.mrb[0].mxu0
    %2942 = vdwg.mxu0
    %v2943 = vld [vmem:[%s2618 + $0x2] sm:$0xff]
    %v2944 = vld [vmem:[%s2618 + $0xa] sm:$0xff]
    %v2945 = vld [vmem:[%s420] sm:$0xff]
    %v2946 = vld [vmem:[%s420 + $0x8] sm:$0xff]
    %v2948 = vsel %vm55, %v2943, 0
    %v2951 = vsel %vm55, %v2944, 0
    %2953 = vmatprep.subr.mxu0 0.0
    %2954 = vmatpush1.msra.mxu0 %v2945
    %2955 = vmatprep.subr.mxu0 0.0
    %2956 = vmatpush1.msra.mxu0 %v2946
    %2957 = vmatprep.subr.mxu0 0.0
    %2958 = vmatpush1.msra.mxu0 0.0
    %2959 = vmatprep.subr.mxu0 0.0
    %2960 = vmatpush1.msra.mxu0 0.0
    %2961 = vmatprep.subr.mxu0 0.0
    %2962 = vmatpush1.msra.mxu0 0.0
    %2963 = vmatprep.subr.mxu0 0.0
    %2964 = vmatpush1.msra.mxu0 0.0
    %2965 = vmatprep.subr.mxu0 0.0
    %2966 = vmatpush1.msra.mxu0 0.0
    %2967 = vmatprep.subr.mxu0 0.0
    %2968 = vmatpush1.msra.mxu0 0.0
    %2969 = vmatprep.subr.mxu0 0.0
    %2970 = vmatpush1.msra.mxu0 0.0
    %2971 = vmatprep.subr.mxu0 0.0
    %2972 = vmatpush1.msra.mxu0 0.0
    %2973 = vmatprep.subr.mxu0 0.0
    %2974 = vmatpush1.msra.mxu0 0.0
    %2975 = vmatprep.subr.mxu0 0.0
    %2976 = vmatpush1.msra.mxu0 0.0
    %2977 = vmatprep.subr.mxu0 0.0
    %2978 = vmatpush1.msra.mxu0 0.0
    %2979 = vmatprep.subr.mxu0 0.0
    %2980 = vmatpush1.msra.mxu0 0.0
    %2981 = vmatprep.subr.mxu0 0.0
    %2982 = vmatpush1.msra.mxu0 0.0
    %2983 = vmatprep.subr.mxu0 0.0
    %2984 = vmatpush1.msra.mxu0 0.0
    %2985 = vmatprep.subr.mxu0 0.0
    %2986 = vmatpush1.msra.mxu0 0.0
    %2987 = vmatprep.subr.mxu0 0.0
    %2988 = vmatpush1.msra.mxu0 0.0
    %2989 = vmatprep.subr.mxu0 0.0
    %2990 = vmatpush1.msra.mxu0 0.0
    %2991 = vmatprep.subr.mxu0 0.0
    %2992 = vmatpush1.msra.mxu0 0.0
    %2993 = vmatprep.subr.mxu0 0.0
    %2994 = vmatpush1.msra.mxu0 0.0
    %2995 = vmatprep.subr.mxu0 0.0
    %2996 = vmatpush1.msra.mxu0 0.0
    %2997 = vmatprep.subr.mxu0 0.0
    %2998 = vmatpush1.msra.mxu0 0.0
    %2999 = vmatprep.subr.mxu0 0.0
    %3000 = vmatpush1.msra.mxu0 0.0
    %3001 = vmatprep.subr.mxu0 0.0
    %3002 = vmatpush1.msra.mxu0 0.0
    %3003 = vmatprep.subr.mxu0 0.0
    %3004 = vmatpush1.msra.mxu0 0.0
    %3005 = vmatprep.subr.mxu0 0.0
    %3006 = vmatpush1.msra.mxu0 0.0
    %3007 = vmatprep.subr.mxu0 0.0
    %3008 = vmatpush1.msra.mxu0 0.0
    %3009 = vmatprep.subr.mxu0 0.0
    %3010 = vmatpush1.msra.mxu0 0.0
    %3011 = vmatprep.subr.mxu0 0.0
    %3012 = vmatpush1.msra.mxu0 0.0
    %3013 = vmatprep.subr.mxu0 0.0
    %3014 = vmatpush1.msra.mxu0 0.0
    %3015 = vmatprep.subr.mxu0 0.0
    %3016 = vmatpush1.msra.mxu0 0.0
    %3017 = vmatprep.mubr.f32.mxu0 0.0
    %3018 = vmatmul.mubr.f32.gmra.mrb[0].mxu0 %v2948
    %v3019 = vpop.f32.mrb[0].mxu0
    %v3020 = vadd.f32 0.0, %v3019
    %v3021 = vpop.f32.mrb[0].mxu0
    %3022 = vmatprep.mubr.f32.mxu0 0.0
    %3023 = vmatmul.mubr.f32.gmra.mrb[0].mxu0 %v2951
    %v3024 = vpop.f32.mrb[0].mxu0
    %v3025 = vadd.f32 0.0, %v3024
    %v3026 = vpop.f32.mrb[0].mxu0
    %3027 = vdwg.mxu0
    %v3028 = vadd.f32 %v2783, %v3020
    %v3029 = vadd.f32 %v2788, %v3025
    %v3030 = vld [vmem:[%s506] sm:$0xff]
    %v3031 = vld [vmem:[%s506 + $0x8] sm:$0xff]
    %3032 = vmatprep.subr.mxu0 0.0
    %3033 = vmatpush1.msra.mxu0 %v3030
    %3034 = vmatprep.subr.mxu0 0.0
    %3035 = vmatpush1.msra.mxu0 %v3031
    %3036 = vmatprep.subr.mxu0 0.0
    %3037 = vmatpush1.msra.mxu0 0.0
    %3038 = vmatprep.subr.mxu0 0.0
    %3039 = vmatpush1.msra.mxu0 0.0
    %3040 = vmatprep.subr.mxu0 0.0
    %3041 = vmatpush1.msra.mxu0 0.0
    %3042 = vmatprep.subr.mxu0 0.0
    %3043 = vmatpush1.msra.mxu0 0.0
    %3044 = vmatprep.subr.mxu0 0.0
    %3045 = vmatpush1.msra.mxu0 0.0
    %3046 = vmatprep.subr.mxu0 0.0
    %3047 = vmatpush1.msra.mxu0 0.0
    %3048 = vmatprep.subr.mxu0 0.0
    %3049 = vmatpush1.msra.mxu0 0.0
    %3050 = vmatprep.subr.mxu0 0.0
    %3051 = vmatpush1.msra.mxu0 0.0
    %3052 = vmatprep.subr.mxu0 0.0
    %3053 = vmatpush1.msra.mxu0 0.0
    %3054 = vmatprep.subr.mxu0 0.0
    %3055 = vmatpush1.msra.mxu0 0.0
    %3056 = vmatprep.subr.mxu0 0.0
    %3057 = vmatpush1.msra.mxu0 0.0
    %3058 = vmatprep.subr.mxu0 0.0
    %3059 = vmatpush1.msra.mxu0 0.0
    %3060 = vmatprep.subr.mxu0 0.0
    %3061 = vmatpush1.msra.mxu0 0.0
    %3062 = vmatprep.subr.mxu0 0.0
    %3063 = vmatpush1.msra.mxu0 0.0
    %3064 = vmatprep.subr.mxu0 0.0
    %3065 = vmatpush1.msra.mxu0 0.0
    %3066 = vmatprep.subr.mxu0 0.0
    %3067 = vmatpush1.msra.mxu0 0.0
    %3068 = vmatprep.subr.mxu0 0.0
    %3069 = vmatpush1.msra.mxu0 0.0
    %3070 = vmatprep.subr.mxu0 0.0
    %3071 = vmatpush1.msra.mxu0 0.0
    %3072 = vmatprep.subr.mxu0 0.0
    %3073 = vmatpush1.msra.mxu0 0.0
    %3074 = vmatprep.subr.mxu0 0.0
    %3075 = vmatpush1.msra.mxu0 0.0
    %3076 = vmatprep.subr.mxu0 0.0
    %3077 = vmatpush1.msra.mxu0 0.0
    %3078 = vmatprep.subr.mxu0 0.0
    %3079 = vmatpush1.msra.mxu0 0.0
    %3080 = vmatprep.subr.mxu0 0.0
    %3081 = vmatpush1.msra.mxu0 0.0
    %3082 = vmatprep.subr.mxu0 0.0
    %3083 = vmatpush1.msra.mxu0 0.0
    %3084 = vmatprep.subr.mxu0 0.0
    %3085 = vmatpush1.msra.mxu0 0.0
    %3086 = vmatprep.subr.mxu0 0.0
    %3087 = vmatpush1.msra.mxu0 0.0
    %3088 = vmatprep.subr.mxu0 0.0
    %3089 = vmatpush1.msra.mxu0 0.0
    %3090 = vmatprep.subr.mxu0 0.0
    %3091 = vmatpush1.msra.mxu0 0.0
    %3092 = vmatprep.subr.mxu0 0.0
    %3093 = vmatpush1.msra.mxu0 0.0
    %3094 = vmatprep.subr.mxu0 0.0
    %3095 = vmatpush1.msra.mxu0 0.0
    %3096 = vmatprep.mubr.f32.mxu0 0.0
    %3097 = vmatmul.mubr.f32.gmra.mrb[0].mxu0 %v2948
    %v3098 = vpop.f32.mrb[0].mxu0
    %v3099 = vadd.f32 0.0, %v3098
    %v3100 = vpop.f32.mrb[0].mxu0
    %3101 = vmatprep.mubr.f32.mxu0 0.0
    %3102 = vmatmul.mubr.f32.gmra.mrb[0].mxu0 %v2951
    %v3103 = vpop.f32.mrb[0].mxu0
    %v3104 = vadd.f32 0.0, %v3103
    %v3105 = vpop.f32.mrb[0].mxu0
    %3106 = vdwg.mxu0
    %v3107 = vadd.f32 %v2935, %v3099
    %v3108 = vadd.f32 %v2940, %v3104
    %v3109 = vmax.f32 %v3028, %v3107
    %v3110 = vmax.f32 %v3029, %v3108
    %v3112 = vrot.slane %v3109, 1
    %v3114 = vmax.f32 %v3109, %v3112
    %v3116 = vrot.slane %v3110, 1
    %v3118 = vmax.f32 %v3110, %v3116
    %v3120 = vrot.slane %v3114, 1
    %v3122 = vrot.slane %v3114, 2
    %v3124 = vrot.slane %v3114, 3
    %v3127 = vrot.slane %v3118, 4
    %v3129 = vrot.slane %v3118, 5
    %v3131 = vrot.slane %v3118, 6
    %v3133 = vrot.slane %v3118, 7
    %v3135 = vsel %vm612, %v3114, %v3120
    %v3136 = vsel %vm614, %v3135, %v3122
    %v3137 = vsel %vm616, %v3136, %v3124
    %v3138 = vsel %vm618, %v3137, %v3127
    %v3139 = vsel %vm620, %v3138, %v3129
    %v3140 = vsel %vm622, %v3139, %v3131
    %v3141 = vsel %vm624, %v3140, %v3133
    %v3142 = vadd.f32 %v3141, %v630
    %v3143 = vmax.f32 %v3142, 0.0
    %s3144 = scalar_lea.vmem [#allocation3], 16
    %3145 = vst [vmem:[%s3144 + $0x1] sm:$0xff] %v3143
    %v3146 = vld [vmem:[%s3144] sm:$0xff]
    %v3147 = vld [vmem:[%s4] sm:$0xff]
    %v3148 = vld [vmem:[%s4 + $0x8] sm:$0xff]
    %v3149 = vld [vmem:[%s4 + $0x10] sm:$0xff]
    %v3150 = vld [vmem:[%s4 + $0x18] sm:$0xff]
    %v3151 = vld [vmem:[%s4 + $0x20] sm:$0xff]
    %v3152 = vld [vmem:[%s4 + $0x28] sm:$0xff]
    %v3153 = vld [vmem:[%s4 + $0x30] sm:$0xff]
    %v3154 = vld [vmem:[%s4 + $0x38] sm:$0xff]
    %v3155 = vld [vmem:[%s4 + $0x40] sm:$0xff]
    %v3156 = vld [vmem:[%s4 + $0x48] sm:$0xff]
    %v3157 = vld [vmem:[%s4 + $0x50] sm:$0xff]
    %v3158 = vld [vmem:[%s4 + $0x58] sm:$0xff]
    %v3159 = vld [vmem:[%s4 + $0x60] sm:$0xff]
    %v3160 = vld [vmem:[%s4 + $0x68] sm:$0xff]
    %v3161 = vld [vmem:[%s4 + $0x70] sm:$0xff]
    %v3162 = vld [vmem:[%s4 + $0x78] sm:$0xff]
    %v3163 = vld [vmem:[%s5] sm:$0xff]
    %v3164 = vld [vmem:[%s5 + $0x8] sm:$0xff]
    %v3165 = vld [vmem:[%s5 + $0x10] sm:$0xff]
    %v3166 = vld [vmem:[%s5 + $0x18] sm:$0xff]
    %v3167 = vld [vmem:[%s5 + $0x20] sm:$0xff]
    %v3168 = vld [vmem:[%s5 + $0x28] sm:$0xff]
    %v3169 = vld [vmem:[%s5 + $0x30] sm:$0xff]
    %v3170 = vld [vmem:[%s5 + $0x38] sm:$0xff]
    %v3171 = vld [vmem:[%s5 + $0x40] sm:$0xff]
    %v3172 = vld [vmem:[%s5 + $0x48] sm:$0xff]
    %v3173 = vld [vmem:[%s5 + $0x50] sm:$0xff]
    %v3174 = vld [vmem:[%s5 + $0x58] sm:$0xff]
    %v3175 = vld [vmem:[%s5 + $0x60] sm:$0xff]
    %v3176 = vld [vmem:[%s5 + $0x68] sm:$0xff]
    %v3177 = vld [vmem:[%s5 + $0x70] sm:$0xff]
    %v3178 = vld [vmem:[%s5 + $0x78] sm:$0xff]
    %v3179 = vld [vmem:[%s3144 + $0x1] sm:$0xff]
    %v3180 = vld [vmem:[%s669] sm:$0xff]
    %v3181 = vld [vmem:[%s669 + $0x8] sm:$0xff]
    %v3182 = vld [vmem:[%s669 + $0x10] sm:$0xff]
    %v3183 = vld [vmem:[%s669 + $0x18] sm:$0xff]
    %v3184 = vld [vmem:[%s669 + $0x20] sm:$0xff]
    %v3185 = vld [vmem:[%s669 + $0x28] sm:$0xff]
    %v3186 = vld [vmem:[%s669 + $0x30] sm:$0xff]
    %v3187 = vld [vmem:[%s669 + $0x38] sm:$0xff]
    %v3188 = vld [vmem:[%s669 + $0x40] sm:$0xff]
    %v3189 = vld [vmem:[%s669 + $0x48] sm:$0xff]
    %v3190 = vld [vmem:[%s669 + $0x50] sm:$0xff]
    %v3191 = vld [vmem:[%s669 + $0x58] sm:$0xff]
    %v3192 = vld [vmem:[%s669 + $0x60] sm:$0xff]
    %v3193 = vld [vmem:[%s669 + $0x68] sm:$0xff]
    %v3194 = vld [vmem:[%s669 + $0x70] sm:$0xff]
    %v3195 = vld [vmem:[%s669 + $0x78] sm:$0xff]
    %3196 = vmatprep.subr.mxu0 0.0
    %3197 = vmatpush1.msra.mxu0 %v3180
    %3198 = vmatprep.subr.mxu0 0.0
    %3199 = vmatpush1.msra.mxu0 %v3181
    %3200 = vmatprep.subr.mxu0 0.0
    %3201 = vmatpush1.msra.mxu0 %v3182
    %3202 = vmatprep.subr.mxu0 0.0
    %3203 = vmatpush1.msra.mxu0 %v3183
    %3204 = vmatprep.subr.mxu0 0.0
    %3205 = vmatpush1.msra.mxu0 %v3184
    %3206 = vmatprep.subr.mxu0 0.0
    %3207 = vmatpush1.msra.mxu0 %v3185
    %3208 = vmatprep.subr.mxu0 0.0
    %3209 = vmatpush1.msra.mxu0 %v3186
    %3210 = vmatprep.subr.mxu0 0.0
    %3211 = vmatpush1.msra.mxu0 %v3187
    %3212 = vmatprep.subr.mxu0 0.0
    %3213 = vmatpush1.msra.mxu0 %v3188
    %3214 = vmatprep.subr.mxu0 0.0
    %3215 = vmatpush1.msra.mxu0 %v3189
    %3216 = vmatprep.subr.mxu0 0.0
    %3217 = vmatpush1.msra.mxu0 %v3190
    %3218 = vmatprep.subr.mxu0 0.0
    %3219 = vmatpush1.msra.mxu0 %v3191
    %3220 = vmatprep.subr.mxu0 0.0
    %3221 = vmatpush1.msra.mxu0 %v3192
    %3222 = vmatprep.subr.mxu0 0.0
    %3223 = vmatpush1.msra.mxu0 %v3193
    %3224 = vmatprep.subr.mxu0 0.0
    %3225 = vmatpush1.msra.mxu0 %v3194
    %3226 = vmatprep.subr.mxu0 0.0
    %3227 = vmatpush1.msra.mxu0 %v3195
    %3228 = vmatprep.subr.mxu0 0.0
    %3229 = vmatpush1.msra.mxu0 0.0
    %3230 = vmatprep.subr.mxu0 0.0
    %3231 = vmatpush1.msra.mxu0 0.0
    %3232 = vmatprep.subr.mxu0 0.0
    %3233 = vmatpush1.msra.mxu0 0.0
    %3234 = vmatprep.subr.mxu0 0.0
    %3235 = vmatpush1.msra.mxu0 0.0
    %3236 = vmatprep.subr.mxu0 0.0
    %3237 = vmatpush1.msra.mxu0 0.0
    %3238 = vmatprep.subr.mxu0 0.0
    %3239 = vmatpush1.msra.mxu0 0.0
    %3240 = vmatprep.subr.mxu0 0.0
    %3241 = vmatpush1.msra.mxu0 0.0
    %3242 = vmatprep.subr.mxu0 0.0
    %3243 = vmatpush1.msra.mxu0 0.0
    %3244 = vmatprep.subr.mxu0 0.0
    %3245 = vmatpush1.msra.mxu0 0.0
    %3246 = vmatprep.subr.mxu0 0.0
    %3247 = vmatpush1.msra.mxu0 0.0
    %3248 = vmatprep.subr.mxu0 0.0
    %3249 = vmatpush1.msra.mxu0 0.0
    %3250 = vmatprep.subr.mxu0 0.0
    %3251 = vmatpush1.msra.mxu0 0.0
    %3252 = vmatprep.subr.mxu0 0.0
    %3253 = vmatpush1.msra.mxu0 0.0
    %3254 = vmatprep.subr.mxu0 0.0
    %3255 = vmatpush1.msra.mxu0 0.0
    %3256 = vmatprep.subr.mxu0 0.0
    %3257 = vmatpush1.msra.mxu0 0.0
    %3258 = vmatprep.subr.mxu0 0.0
    %3259 = vmatpush1.msra.mxu0 0.0
    %3260 = vmatprep.mubr.f32.mxu0 0.0
    %3261 = vmatmul.mubr.f32.gmra.mrb[0].mxu0 %v3179
    %v3262 = vpop.f32.mrb[0].mxu0
    %v3263 = vadd.f32 0.0, %v3262
    %v3264 = vpop.f32.mrb[0].mxu0
    %3265 = vdwg.mxu0
    %3266 = vmatprep.subr.mxu0 0.0
    %3267 = vmatpush1.msra.mxu0 %v3147
    %3268 = vmatprep.subr.mxu0 0.0
    %3269 = vmatpush1.msra.mxu0 %v3148
    %3270 = vmatprep.subr.mxu0 0.0
    %3271 = vmatpush1.msra.mxu0 %v3149
    %3272 = vmatprep.subr.mxu0 0.0
    %3273 = vmatpush1.msra.mxu0 %v3150
    %3274 = vmatprep.subr.mxu0 0.0
    %3275 = vmatpush1.msra.mxu0 %v3151
    %3276 = vmatprep.subr.mxu0 0.0
    %3277 = vmatpush1.msra.mxu0 %v3152
    %3278 = vmatprep.subr.mxu0 0.0
    %3279 = vmatpush1.msra.mxu0 %v3153
    %3280 = vmatprep.subr.mxu0 0.0
    %3281 = vmatpush1.msra.mxu0 %v3154
    %3282 = vmatprep.subr.mxu0 0.0
    %3283 = vmatpush1.msra.mxu0 %v3155
    %3284 = vmatprep.subr.mxu0 0.0
    %3285 = vmatpush1.msra.mxu0 %v3156
    %3286 = vmatprep.subr.mxu0 0.0
    %3287 = vmatpush1.msra.mxu0 %v3157
    %3288 = vmatprep.subr.mxu0 0.0
    %3289 = vmatpush1.msra.mxu0 %v3158
    %3290 = vmatprep.subr.mxu0 0.0
    %3291 = vmatpush1.msra.mxu0 %v3159
    %3292 = vmatprep.subr.mxu0 0.0
    %3293 = vmatpush1.msra.mxu0 %v3160
    %3294 = vmatprep.subr.mxu0 0.0
    %3295 = vmatpush1.msra.mxu0 %v3161
    %3296 = vmatprep.subr.mxu0 0.0
    %3297 = vmatpush1.msra.mxu0 %v3162
    %3298 = vmatprep.subr.mxu0 0.0
    %3299 = vmatpush1.msra.mxu0 0.0
    %3300 = vmatprep.subr.mxu0 0.0
    %3301 = vmatpush1.msra.mxu0 0.0
    %3302 = vmatprep.subr.mxu0 0.0
    %3303 = vmatpush1.msra.mxu0 0.0
    %3304 = vmatprep.subr.mxu0 0.0
    %3305 = vmatpush1.msra.mxu0 0.0
    %3306 = vmatprep.subr.mxu0 0.0
    %3307 = vmatpush1.msra.mxu0 0.0
    %3308 = vmatprep.subr.mxu0 0.0
    %3309 = vmatpush1.msra.mxu0 0.0
    %3310 = vmatprep.subr.mxu0 0.0
    %3311 = vmatpush1.msra.mxu0 0.0
    %3312 = vmatprep.subr.mxu0 0.0
    %3313 = vmatpush1.msra.mxu0 0.0
    %3314 = vmatprep.subr.mxu0 0.0
    %3315 = vmatpush1.msra.mxu0 0.0
    %3316 = vmatprep.subr.mxu0 0.0
    %3317 = vmatpush1.msra.mxu0 0.0
    %3318 = vmatprep.subr.mxu0 0.0
    %3319 = vmatpush1.msra.mxu0 0.0
    %3320 = vmatprep.subr.mxu0 0.0
    %3321 = vmatpush1.msra.mxu0 0.0
    %3322 = vmatprep.subr.mxu0 0.0
    %3323 = vmatpush1.msra.mxu0 0.0
    %3324 = vmatprep.subr.mxu0 0.0
    %3325 = vmatpush1.msra.mxu0 0.0
    %3326 = vmatprep.subr.mxu0 0.0
    %3327 = vmatpush1.msra.mxu0 0.0
    %3328 = vmatprep.subr.mxu0 0.0
    %3329 = vmatpush1.msra.mxu0 0.0
    %3330 = vmatprep.mubr.f32.mxu0 0.0
    %3331 = vmatmul.mubr.f32.gmra.mrb[0].mxu0 %v3146
    %v3332 = vpop.f32.mrb[0].mxu0
    %v3333 = vadd.f32 %v3263, %v3332
    %v3334 = vpop.f32.mrb[0].mxu0
    %3335 = vdwg.mxu0
    %v3336 = vld [vmem:[%s826] sm:$0xff]
    %v3337 = vld [vmem:[%s826 + $0x8] sm:$0xff]
    %v3338 = vld [vmem:[%s826 + $0x10] sm:$0xff]
    %v3339 = vld [vmem:[%s826 + $0x18] sm:$0xff]
    %v3340 = vld [vmem:[%s826 + $0x20] sm:$0xff]
    %v3341 = vld [vmem:[%s826 + $0x28] sm:$0xff]
    %v3342 = vld [vmem:[%s826 + $0x30] sm:$0xff]
    %v3343 = vld [vmem:[%s826 + $0x38] sm:$0xff]
    %v3344 = vld [vmem:[%s826 + $0x40] sm:$0xff]
    %v3345 = vld [vmem:[%s826 + $0x48] sm:$0xff]
    %v3346 = vld [vmem:[%s826 + $0x50] sm:$0xff]
    %v3347 = vld [vmem:[%s826 + $0x58] sm:$0xff]
    %v3348 = vld [vmem:[%s826 + $0x60] sm:$0xff]
    %v3349 = vld [vmem:[%s826 + $0x68] sm:$0xff]
    %v3350 = vld [vmem:[%s826 + $0x70] sm:$0xff]
    %v3351 = vld [vmem:[%s826 + $0x78] sm:$0xff]
    %3352 = vmatprep.subr.mxu0 0.0
    %3353 = vmatpush1.msra.mxu0 %v3336
    %3354 = vmatprep.subr.mxu0 0.0
    %3355 = vmatpush1.msra.mxu0 %v3337
    %3356 = vmatprep.subr.mxu0 0.0
    %3357 = vmatpush1.msra.mxu0 %v3338
    %3358 = vmatprep.subr.mxu0 0.0
    %3359 = vmatpush1.msra.mxu0 %v3339
    %3360 = vmatprep.subr.mxu0 0.0
    %3361 = vmatpush1.msra.mxu0 %v3340
    %3362 = vmatprep.subr.mxu0 0.0
    %3363 = vmatpush1.msra.mxu0 %v3341
    %3364 = vmatprep.subr.mxu0 0.0
    %3365 = vmatpush1.msra.mxu0 %v3342
    %3366 = vmatprep.subr.mxu0 0.0
    %3367 = vmatpush1.msra.mxu0 %v3343
    %3368 = vmatprep.subr.mxu0 0.0
    %3369 = vmatpush1.msra.mxu0 %v3344
    %3370 = vmatprep.subr.mxu0 0.0
    %3371 = vmatpush1.msra.mxu0 %v3345
    %3372 = vmatprep.subr.mxu0 0.0
    %3373 = vmatpush1.msra.mxu0 %v3346
    %3374 = vmatprep.subr.mxu0 0.0
    %3375 = vmatpush1.msra.mxu0 %v3347
    %3376 = vmatprep.subr.mxu0 0.0
    %3377 = vmatpush1.msra.mxu0 %v3348
    %3378 = vmatprep.subr.mxu0 0.0
    %3379 = vmatpush1.msra.mxu0 %v3349
    %3380 = vmatprep.subr.mxu0 0.0
    %3381 = vmatpush1.msra.mxu0 %v3350
    %3382 = vmatprep.subr.mxu0 0.0
    %3383 = vmatpush1.msra.mxu0 %v3351
    %3384 = vmatprep.subr.mxu0 0.0
    %3385 = vmatpush1.msra.mxu0 0.0
    %3386 = vmatprep.subr.mxu0 0.0
    %3387 = vmatpush1.msra.mxu0 0.0
    %3388 = vmatprep.subr.mxu0 0.0
    %3389 = vmatpush1.msra.mxu0 0.0
    %3390 = vmatprep.subr.mxu0 0.0
    %3391 = vmatpush1.msra.mxu0 0.0
    %3392 = vmatprep.subr.mxu0 0.0
    %3393 = vmatpush1.msra.mxu0 0.0
    %3394 = vmatprep.subr.mxu0 0.0
    %3395 = vmatpush1.msra.mxu0 0.0
    %3396 = vmatprep.subr.mxu0 0.0
    %3397 = vmatpush1.msra.mxu0 0.0
    %3398 = vmatprep.subr.mxu0 0.0
    %3399 = vmatpush1.msra.mxu0 0.0
    %3400 = vmatprep.subr.mxu0 0.0
    %3401 = vmatpush1.msra.mxu0 0.0
    %3402 = vmatprep.subr.mxu0 0.0
    %3403 = vmatpush1.msra.mxu0 0.0
    %3404 = vmatprep.subr.mxu0 0.0
    %3405 = vmatpush1.msra.mxu0 0.0
    %3406 = vmatprep.subr.mxu0 0.0
    %3407 = vmatpush1.msra.mxu0 0.0
    %3408 = vmatprep.subr.mxu0 0.0
    %3409 = vmatpush1.msra.mxu0 0.0
    %3410 = vmatprep.subr.mxu0 0.0
    %3411 = vmatpush1.msra.mxu0 0.0
    %3412 = vmatprep.subr.mxu0 0.0
    %3413 = vmatpush1.msra.mxu0 0.0
    %3414 = vmatprep.subr.mxu0 0.0
    %3415 = vmatpush1.msra.mxu0 0.0
    %3416 = vmatprep.mubr.f32.mxu0 0.0
    %3417 = vmatmul.mubr.f32.gmra.mrb[0].mxu0 %v3179
    %v3418 = vpop.f32.mrb[0].mxu0
    %v3419 = vadd.f32 0.0, %v3418
    %v3420 = vpop.f32.mrb[0].mxu0
    %3421 = vdwg.mxu0
    %3422 = vmatprep.subr.mxu0 0.0
    %3423 = vmatpush1.msra.mxu0 %v3163
    %3424 = vmatprep.subr.mxu0 0.0
    %3425 = vmatpush1.msra.mxu0 %v3164
    %3426 = vmatprep.subr.mxu0 0.0
    %3427 = vmatpush1.msra.mxu0 %v3165
    %3428 = vmatprep.subr.mxu0 0.0
    %3429 = vmatpush1.msra.mxu0 %v3166
    %3430 = vmatprep.subr.mxu0 0.0
    %3431 = vmatpush1.msra.mxu0 %v3167
    %3432 = vmatprep.subr.mxu0 0.0
    %3433 = vmatpush1.msra.mxu0 %v3168
    %3434 = vmatprep.subr.mxu0 0.0
    %3435 = vmatpush1.msra.mxu0 %v3169
    %3436 = vmatprep.subr.mxu0 0.0
    %3437 = vmatpush1.msra.mxu0 %v3170
    %3438 = vmatprep.subr.mxu0 0.0
    %3439 = vmatpush1.msra.mxu0 %v3171
    %3440 = vmatprep.subr.mxu0 0.0
    %3441 = vmatpush1.msra.mxu0 %v3172
    %3442 = vmatprep.subr.mxu0 0.0
    %3443 = vmatpush1.msra.mxu0 %v3173
    %3444 = vmatprep.subr.mxu0 0.0
    %3445 = vmatpush1.msra.mxu0 %v3174
    %3446 = vmatprep.subr.mxu0 0.0
    %3447 = vmatpush1.msra.mxu0 %v3175
    %3448 = vmatprep.subr.mxu0 0.0
    %3449 = vmatpush1.msra.mxu0 %v3176
    %3450 = vmatprep.subr.mxu0 0.0
    %3451 = vmatpush1.msra.mxu0 %v3177
    %3452 = vmatprep.subr.mxu0 0.0
    %3453 = vmatpush1.msra.mxu0 %v3178
    %3454 = vmatprep.subr.mxu0 0.0
    %3455 = vmatpush1.msra.mxu0 0.0
    %3456 = vmatprep.subr.mxu0 0.0
    %3457 = vmatpush1.msra.mxu0 0.0
    %3458 = vmatprep.subr.mxu0 0.0
    %3459 = vmatpush1.msra.mxu0 0.0
    %3460 = vmatprep.subr.mxu0 0.0
    %3461 = vmatpush1.msra.mxu0 0.0
    %3462 = vmatprep.subr.mxu0 0.0
    %3463 = vmatpush1.msra.mxu0 0.0
    %3464 = vmatprep.subr.mxu0 0.0
    %3465 = vmatpush1.msra.mxu0 0.0
    %3466 = vmatprep.subr.mxu0 0.0
    %3467 = vmatpush1.msra.mxu0 0.0
    %3468 = vmatprep.subr.mxu0 0.0
    %3469 = vmatpush1.msra.mxu0 0.0
    %3470 = vmatprep.subr.mxu0 0.0
    %3471 = vmatpush1.msra.mxu0 0.0
    %3472 = vmatprep.subr.mxu0 0.0
    %3473 = vmatpush1.msra.mxu0 0.0
    %3474 = vmatprep.subr.mxu0 0.0
    %3475 = vmatpush1.msra.mxu0 0.0
    %3476 = vmatprep.subr.mxu0 0.0
    %3477 = vmatpush1.msra.mxu0 0.0
    %3478 = vmatprep.subr.mxu0 0.0
    %3479 = vmatpush1.msra.mxu0 0.0
    %3480 = vmatprep.subr.mxu0 0.0
    %3481 = vmatpush1.msra.mxu0 0.0
    %3482 = vmatprep.subr.mxu0 0.0
    %3483 = vmatpush1.msra.mxu0 0.0
    %3484 = vmatprep.subr.mxu0 0.0
    %3485 = vmatpush1.msra.mxu0 0.0
    %3486 = vmatprep.mubr.f32.mxu0 0.0
    %3487 = vmatmul.mubr.f32.gmra.mrb[0].mxu0 %v3146
    %v3488 = vpop.f32.mrb[0].mxu0
    %v3489 = vadd.f32 %v3419, %v3488
    %v3490 = vpop.f32.mrb[0].mxu0
    %3491 = vdwg.mxu0
    %v3492 = vld [vmem:[%s3144 + $0x2] sm:$0xff]
    %v3493 = vld [vmem:[%s984] sm:$0xff]
    %v3494 = vld [vmem:[%s984 + $0x8] sm:$0xff]
    %v3495 = vld [vmem:[%s984 + $0x10] sm:$0xff]
    %v3496 = vld [vmem:[%s984 + $0x18] sm:$0xff]
    %v3497 = vld [vmem:[%s984 + $0x20] sm:$0xff]
    %v3498 = vld [vmem:[%s984 + $0x28] sm:$0xff]
    %v3499 = vld [vmem:[%s984 + $0x30] sm:$0xff]
    %v3500 = vld [vmem:[%s984 + $0x38] sm:$0xff]
    %v3501 = vld [vmem:[%s984 + $0x40] sm:$0xff]
    %v3502 = vld [vmem:[%s984 + $0x48] sm:$0xff]
    %v3503 = vld [vmem:[%s984 + $0x50] sm:$0xff]
    %v3504 = vld [vmem:[%s984 + $0x58] sm:$0xff]
    %v3505 = vld [vmem:[%s984 + $0x60] sm:$0xff]
    %v3506 = vld [vmem:[%s984 + $0x68] sm:$0xff]
    %v3507 = vld [vmem:[%s984 + $0x70] sm:$0xff]
    %v3508 = vld [vmem:[%s984 + $0x78] sm:$0xff]
    %3509 = vmatprep.subr.mxu0 0.0
    %3510 = vmatpush1.msra.mxu0 %v3493
    %3511 = vmatprep.subr.mxu0 0.0
    %3512 = vmatpush1.msra.mxu0 %v3494
    %3513 = vmatprep.subr.mxu0 0.0
    %3514 = vmatpush1.msra.mxu0 %v3495
    %3515 = vmatprep.subr.mxu0 0.0
    %3516 = vmatpush1.msra.mxu0 %v3496
    %3517 = vmatprep.subr.mxu0 0.0
    %3518 = vmatpush1.msra.mxu0 %v3497
    %3519 = vmatprep.subr.mxu0 0.0
    %3520 = vmatpush1.msra.mxu0 %v3498
    %3521 = vmatprep.subr.mxu0 0.0
    %3522 = vmatpush1.msra.mxu0 %v3499
    %3523 = vmatprep.subr.mxu0 0.0
    %3524 = vmatpush1.msra.mxu0 %v3500
    %3525 = vmatprep.subr.mxu0 0.0
    %3526 = vmatpush1.msra.mxu0 %v3501
    %3527 = vmatprep.subr.mxu0 0.0
    %3528 = vmatpush1.msra.mxu0 %v3502
    %3529 = vmatprep.subr.mxu0 0.0
    %3530 = vmatpush1.msra.mxu0 %v3503
    %3531 = vmatprep.subr.mxu0 0.0
    %3532 = vmatpush1.msra.mxu0 %v3504
    %3533 = vmatprep.subr.mxu0 0.0
    %3534 = vmatpush1.msra.mxu0 %v3505
    %3535 = vmatprep.subr.mxu0 0.0
    %3536 = vmatpush1.msra.mxu0 %v3506
    %3537 = vmatprep.subr.mxu0 0.0
    %3538 = vmatpush1.msra.mxu0 %v3507
    %3539 = vmatprep.subr.mxu0 0.0
    %3540 = vmatpush1.msra.mxu0 %v3508
    %3541 = vmatprep.subr.mxu0 0.0
    %3542 = vmatpush1.msra.mxu0 0.0
    %3543 = vmatprep.subr.mxu0 0.0
    %3544 = vmatpush1.msra.mxu0 0.0
    %3545 = vmatprep.subr.mxu0 0.0
    %3546 = vmatpush1.msra.mxu0 0.0
    %3547 = vmatprep.subr.mxu0 0.0
    %3548 = vmatpush1.msra.mxu0 0.0
    %3549 = vmatprep.subr.mxu0 0.0
    %3550 = vmatpush1.msra.mxu0 0.0
    %3551 = vmatprep.subr.mxu0 0.0
    %3552 = vmatpush1.msra.mxu0 0.0
    %3553 = vmatprep.subr.mxu0 0.0
    %3554 = vmatpush1.msra.mxu0 0.0
    %3555 = vmatprep.subr.mxu0 0.0
    %3556 = vmatpush1.msra.mxu0 0.0
    %3557 = vmatprep.subr.mxu0 0.0
    %3558 = vmatpush1.msra.mxu0 0.0
    %3559 = vmatprep.subr.mxu0 0.0
    %3560 = vmatpush1.msra.mxu0 0.0
    %3561 = vmatprep.subr.mxu0 0.0
    %3562 = vmatpush1.msra.mxu0 0.0
    %3563 = vmatprep.subr.mxu0 0.0
    %3564 = vmatpush1.msra.mxu0 0.0
    %3565 = vmatprep.subr.mxu0 0.0
    %3566 = vmatpush1.msra.mxu0 0.0
    %3567 = vmatprep.subr.mxu0 0.0
    %3568 = vmatpush1.msra.mxu0 0.0
    %3569 = vmatprep.subr.mxu0 0.0
    %3570 = vmatpush1.msra.mxu0 0.0
    %3571 = vmatprep.subr.mxu0 0.0
    %3572 = vmatpush1.msra.mxu0 0.0
    %3573 = vmatprep.mubr.f32.mxu0 0.0
    %3574 = vmatmul.mubr.f32.gmra.mrb[0].mxu0 %v3492
    %v3575 = vpop.f32.mrb[0].mxu0
    %v3576 = vadd.f32 0.0, %v3575
    %v3577 = vpop.f32.mrb[0].mxu0
    %3578 = vdwg.mxu0
    %v3579 = vadd.f32 %v3333, %v3576
    %v3580 = vld [vmem:[%s1072] sm:$0xff]
    %v3581 = vld [vmem:[%s1072 + $0x8] sm:$0xff]
    %v3582 = vld [vmem:[%s1072 + $0x10] sm:$0xff]
    %v3583 = vld [vmem:[%s1072 + $0x18] sm:$0xff]
    %v3584 = vld [vmem:[%s1072 + $0x20] sm:$0xff]
    %v3585 = vld [vmem:[%s1072 + $0x28] sm:$0xff]
    %v3586 = vld [vmem:[%s1072 + $0x30] sm:$0xff]
    %v3587 = vld [vmem:[%s1072 + $0x38] sm:$0xff]
    %v3588 = vld [vmem:[%s1072 + $0x40] sm:$0xff]
    %v3589 = vld [vmem:[%s1072 + $0x48] sm:$0xff]
    %v3590 = vld [vmem:[%s1072 + $0x50] sm:$0xff]
    %v3591 = vld [vmem:[%s1072 + $0x58] sm:$0xff]
    %v3592 = vld [vmem:[%s1072 + $0x60] sm:$0xff]
    %v3593 = vld [vmem:[%s1072 + $0x68] sm:$0xff]
    %v3594 = vld [vmem:[%s1072 + $0x70] sm:$0xff]
    %v3595 = vld [vmem:[%s1072 + $0x78] sm:$0xff]
    %3596 = vmatprep.subr.mxu0 0.0
    %3597 = vmatpush1.msra.mxu0 %v3580
    %3598 = vmatprep.subr.mxu0 0.0
    %3599 = vmatpush1.msra.mxu0 %v3581
    %3600 = vmatprep.subr.mxu0 0.0
    %3601 = vmatpush1.msra.mxu0 %v3582
    %3602 = vmatprep.subr.mxu0 0.0
    %3603 = vmatpush1.msra.mxu0 %v3583
    %3604 = vmatprep.subr.mxu0 0.0
    %3605 = vmatpush1.msra.mxu0 %v3584
    %3606 = vmatprep.subr.mxu0 0.0
    %3607 = vmatpush1.msra.mxu0 %v3585
    %3608 = vmatprep.subr.mxu0 0.0
    %3609 = vmatpush1.msra.mxu0 %v3586
    %3610 = vmatprep.subr.mxu0 0.0
    %3611 = vmatpush1.msra.mxu0 %v3587
    %3612 = vmatprep.subr.mxu0 0.0
    %3613 = vmatpush1.msra.mxu0 %v3588
    %3614 = vmatprep.subr.mxu0 0.0
    %3615 = vmatpush1.msra.mxu0 %v3589
    %3616 = vmatprep.subr.mxu0 0.0
    %3617 = vmatpush1.msra.mxu0 %v3590
    %3618 = vmatprep.subr.mxu0 0.0
    %3619 = vmatpush1.msra.mxu0 %v3591
    %3620 = vmatprep.subr.mxu0 0.0
    %3621 = vmatpush1.msra.mxu0 %v3592
    %3622 = vmatprep.subr.mxu0 0.0
    %3623 = vmatpush1.msra.mxu0 %v3593
    %3624 = vmatprep.subr.mxu0 0.0
    %3625 = vmatpush1.msra.mxu0 %v3594
    %3626 = vmatprep.subr.mxu0 0.0
    %3627 = vmatpush1.msra.mxu0 %v3595
    %3628 = vmatprep.subr.mxu0 0.0
    %3629 = vmatpush1.msra.mxu0 0.0
    %3630 = vmatprep.subr.mxu0 0.0
    %3631 = vmatpush1.msra.mxu0 0.0
    %3632 = vmatprep.subr.mxu0 0.0
    %3633 = vmatpush1.msra.mxu0 0.0
    %3634 = vmatprep.subr.mxu0 0.0
    %3635 = vmatpush1.msra.mxu0 0.0
    %3636 = vmatprep.subr.mxu0 0.0
    %3637 = vmatpush1.msra.mxu0 0.0
    %3638 = vmatprep.subr.mxu0 0.0
    %3639 = vmatpush1.msra.mxu0 0.0
    %3640 = vmatprep.subr.mxu0 0.0
    %3641 = vmatpush1.msra.mxu0 0.0
    %3642 = vmatprep.subr.mxu0 0.0
    %3643 = vmatpush1.msra.mxu0 0.0
    %3644 = vmatprep.subr.mxu0 0.0
    %3645 = vmatpush1.msra.mxu0 0.0
    %3646 = vmatprep.subr.mxu0 0.0
    %3647 = vmatpush1.msra.mxu0 0.0
    %3648 = vmatprep.subr.mxu0 0.0
    %3649 = vmatpush1.msra.mxu0 0.0
    %3650 = vmatprep.subr.mxu0 0.0
    %3651 = vmatpush1.msra.mxu0 0.0
    %3652 = vmatprep.subr.mxu0 0.0
    %3653 = vmatpush1.msra.mxu0 0.0
    %3654 = vmatprep.subr.mxu0 0.0
    %3655 = vmatpush1.msra.mxu0 0.0
    %3656 = vmatprep.subr.mxu0 0.0
    %3657 = vmatpush1.msra.mxu0 0.0
    %3658 = vmatprep.subr.mxu0 0.0
    %3659 = vmatpush1.msra.mxu0 0.0
    %3660 = vmatprep.mubr.f32.mxu0 0.0
    %3661 = vmatmul.mubr.f32.gmra.mrb[0].mxu0 %v3492
    %v3662 = vpop.f32.mrb[0].mxu0
    %v3663 = vadd.f32 0.0, %v3662
    %v3664 = vpop.f32.mrb[0].mxu0
    %3665 = vdwg.mxu0
    %v3666 = vadd.f32 %v3489, %v3663
    %v3667 = vmax.f32 %v3579, %v3666
    %v3669 = vrot.slane %v3667, 1
    %v3671 = vmax.f32 %v3667, %v3669
    %v3672 = vadd.f32 %v3671, %v88
    %v3673 = vmax.f32 %v3672, 0.0
    %v3674 = vadd.f32 %v3671, %v1171
    %v3675 = vmax.f32 %v3674, 0.0
    %v3676 = vld [vmem:[%s7] sm:$0xff]
    %v3677 = vld [vmem:[%s7 + $0x8] sm:$0xff]
    %v3678 = vld [vmem:[%s7 + $0x10] sm:$0xff]
    %v3679 = vld [vmem:[%s7 + $0x18] sm:$0xff]
    %v3680 = vld [vmem:[%s7 + $0x20] sm:$0xf]
    %v3682 = vsel %vm67, %v3673, 0
    %v3685 = vsel %vm618, %v3680, 0
    %3687 = vmatprep.subr.mxu0 0.0
    %3688 = vmatpush1.msra.mxu0 %v3676
    %3689 = vmatprep.subr.mxu0 0.0
    %3690 = vmatpush1.msra.mxu0 %v3677
    %3691 = vmatprep.subr.mxu0 0.0
    %3692 = vmatpush1.msra.mxu0 %v3678
    %3693 = vmatprep.subr.mxu0 0.0
    %3694 = vmatpush1.msra.mxu0 %v3679
    %3695 = vmatprep.subr.mxu0 0.0
    %3696 = vmatpush1.msra.mxu0 %v3685
    %3697 = vmatprep.subr.mxu0 0.0
    %3698 = vmatpush1.msra.mxu0 0.0
    %3699 = vmatprep.subr.mxu0 0.0
    %3700 = vmatpush1.msra.mxu0 0.0
    %3701 = vmatprep.subr.mxu0 0.0
    %3702 = vmatpush1.msra.mxu0 0.0
    %3703 = vmatprep.subr.mxu0 0.0
    %3704 = vmatpush1.msra.mxu0 0.0
    %3705 = vmatprep.subr.mxu0 0.0
    %3706 = vmatpush1.msra.mxu0 0.0
    %3707 = vmatprep.subr.mxu0 0.0
    %3708 = vmatpush1.msra.mxu0 0.0
    %3709 = vmatprep.subr.mxu0 0.0
    %3710 = vmatpush1.msra.mxu0 0.0
    %3711 = vmatprep.subr.mxu0 0.0
    %3712 = vmatpush1.msra.mxu0 0.0
    %3713 = vmatprep.subr.mxu0 0.0
    %3714 = vmatpush1.msra.mxu0 0.0
    %3715 = vmatprep.subr.mxu0 0.0
    %3716 = vmatpush1.msra.mxu0 0.0
    %3717 = vmatprep.subr.mxu0 0.0
    %3718 = vmatpush1.msra.mxu0 0.0
    %3719 = vmatprep.subr.mxu0 0.0
    %3720 = vmatpush1.msra.mxu0 0.0
    %3721 = vmatprep.subr.mxu0 0.0
    %3722 = vmatpush1.msra.mxu0 0.0
    %3723 = vmatprep.subr.mxu0 0.0
    %3724 = vmatpush1.msra.mxu0 0.0
    %3725 = vmatprep.subr.mxu0 0.0
    %3726 = vmatpush1.msra.mxu0 0.0
    %3727 = vmatprep.subr.mxu0 0.0
    %3728 = vmatpush1.msra.mxu0 0.0
    %3729 = vmatprep.subr.mxu0 0.0
    %3730 = vmatpush1.msra.mxu0 0.0
    %3731 = vmatprep.subr.mxu0 0.0
    %3732 = vmatpush1.msra.mxu0 0.0
    %3733 = vmatprep.subr.mxu0 0.0
    %3734 = vmatpush1.msra.mxu0 0.0
    %3735 = vmatprep.subr.mxu0 0.0
    %3736 = vmatpush1.msra.mxu0 0.0
    %3737 = vmatprep.subr.mxu0 0.0
    %3738 = vmatpush1.msra.mxu0 0.0
    %3739 = vmatprep.subr.mxu0 0.0
    %3740 = vmatpush1.msra.mxu0 0.0
    %3741 = vmatprep.subr.mxu0 0.0
    %3742 = vmatpush1.msra.mxu0 0.0
    %3743 = vmatprep.subr.mxu0 0.0
    %3744 = vmatpush1.msra.mxu0 0.0
    %3745 = vmatprep.subr.mxu0 0.0
    %3746 = vmatpush1.msra.mxu0 0.0
    %3747 = vmatprep.subr.mxu0 0.0
    %3748 = vmatpush1.msra.mxu0 0.0
    %3749 = vmatprep.subr.mxu0 0.0
    %3750 = vmatpush1.msra.mxu0 0.0
    %3751 = vmatprep.mubr.f32.mxu0 0.0
    %3752 = vmatmul.mubr.f32.gmra.mrb[0].mxu0 %v3682
    %v3753 = vpop.f32.mrb[0].mxu0
    %v3754 = vadd.f32 0.0, %v3753
    %v3755 = vpop.f32.mrb[0].mxu0
    %3756 = vdwg.mxu0
    %v3757 = vadd.f32 %v91, %v3754
    %v3758 = vld [vmem:[%s1257] sm:$0xff]
    %v3759 = vld [vmem:[%s1257 + $0x8] sm:$0xff]
    %v3760 = vld [vmem:[%s1257 + $0x10] sm:$0xff]
    %v3761 = vld [vmem:[%s1257 + $0x18] sm:$0xff]
    %v3762 = vld [vmem:[%s1257 + $0x20] sm:$0xf]
    %v3764 = vrot.slane %v3675, 2
    %v3765 = vsel %vm67, %v3764, 0
    %v3768 = vsel %vm618, %v3762, 0
    %3770 = vmatprep.subr.mxu0 0.0
    %3771 = vmatpush1.msra.mxu0 %v3758
    %3772 = vmatprep.subr.mxu0 0.0
    %3773 = vmatpush1.msra.mxu0 %v3759
    %3774 = vmatprep.subr.mxu0 0.0
    %3775 = vmatpush1.msra.mxu0 %v3760
    %3776 = vmatprep.subr.mxu0 0.0
    %3777 = vmatpush1.msra.mxu0 %v3761
    %3778 = vmatprep.subr.mxu0 0.0
    %3779 = vmatpush1.msra.mxu0 %v3768
    %3780 = vmatprep.subr.mxu0 0.0
    %3781 = vmatpush1.msra.mxu0 0.0
    %3782 = vmatprep.subr.mxu0 0.0
    %3783 = vmatpush1.msra.mxu0 0.0
    %3784 = vmatprep.subr.mxu0 0.0
    %3785 = vmatpush1.msra.mxu0 0.0
    %3786 = vmatprep.subr.mxu0 0.0
    %3787 = vmatpush1.msra.mxu0 0.0
    %3788 = vmatprep.subr.mxu0 0.0
    %3789 = vmatpush1.msra.mxu0 0.0
    %3790 = vmatprep.subr.mxu0 0.0
    %3791 = vmatpush1.msra.mxu0 0.0
    %3792 = vmatprep.subr.mxu0 0.0
    %3793 = vmatpush1.msra.mxu0 0.0
    %3794 = vmatprep.subr.mxu0 0.0
    %3795 = vmatpush1.msra.mxu0 0.0
    %3796 = vmatprep.subr.mxu0 0.0
    %3797 = vmatpush1.msra.mxu0 0.0
    %3798 = vmatprep.subr.mxu0 0.0
    %3799 = vmatpush1.msra.mxu0 0.0
    %3800 = vmatprep.subr.mxu0 0.0
    %3801 = vmatpush1.msra.mxu0 0.0
    %3802 = vmatprep.subr.mxu0 0.0
    %3803 = vmatpush1.msra.mxu0 0.0
    %3804 = vmatprep.subr.mxu0 0.0
    %3805 = vmatpush1.msra.mxu0 0.0
    %3806 = vmatprep.subr.mxu0 0.0
    %3807 = vmatpush1.msra.mxu0 0.0
    %3808 = vmatprep.subr.mxu0 0.0
    %3809 = vmatpush1.msra.mxu0 0.0
    %3810 = vmatprep.subr.mxu0 0.0
    %3811 = vmatpush1.msra.mxu0 0.0
    %3812 = vmatprep.subr.mxu0 0.0
    %3813 = vmatpush1.msra.mxu0 0.0
    %3814 = vmatprep.subr.mxu0 0.0
    %3815 = vmatpush1.msra.mxu0 0.0
    %3816 = vmatprep.subr.mxu0 0.0
    %3817 = vmatpush1.msra.mxu0 0.0
    %3818 = vmatprep.subr.mxu0 0.0
    %3819 = vmatpush1.msra.mxu0 0.0
    %3820 = vmatprep.subr.mxu0 0.0
    %3821 = vmatpush1.msra.mxu0 0.0
    %3822 = vmatprep.subr.mxu0 0.0
    %3823 = vmatpush1.msra.mxu0 0.0
    %3824 = vmatprep.subr.mxu0 0.0
    %3825 = vmatpush1.msra.mxu0 0.0
    %3826 = vmatprep.subr.mxu0 0.0
    %3827 = vmatpush1.msra.mxu0 0.0
    %3828 = vmatprep.subr.mxu0 0.0
    %3829 = vmatpush1.msra.mxu0 0.0
    %3830 = vmatprep.subr.mxu0 0.0
    %3831 = vmatpush1.msra.mxu0 0.0
    %3832 = vmatprep.subr.mxu0 0.0
    %3833 = vmatpush1.msra.mxu0 0.0
    %3834 = vmatprep.mubr.f32.mxu0 0.0
    %3835 = vmatmul.mubr.f32.gmra.mrb[0].mxu0 %v3765
    %v3836 = vpop.f32.mrb[0].mxu0
    %v3837 = vadd.f32 0.0, %v3836
    %v3838 = vpop.f32.mrb[0].mxu0
    %3839 = vdwg.mxu0
    %v3840 = vadd.f32 %v3757, %v3837
    %v3841 = vld [vmem:[%s1341] sm:$0xff]
    %v3842 = vld [vmem:[%s1341 + $0x8] sm:$0xff]
    %v3843 = vld [vmem:[%s1341 + $0x10] sm:$0xff]
    %v3844 = vld [vmem:[%s1341 + $0x18] sm:$0xff]
    %v3845 = vld [vmem:[%s1341 + $0x20] sm:$0xf]
    %v3846 = vrot.slane %v3675, 4
    %v3847 = vsel %vm67, %v3846, 0
    %v3850 = vsel %vm618, %v3845, 0
    %3852 = vmatprep.subr.mxu0 0.0
    %3853 = vmatpush1.msra.mxu0 %v3841
    %3854 = vmatprep.subr.mxu0 0.0
    %3855 = vmatpush1.msra.mxu0 %v3842
    %3856 = vmatprep.subr.mxu0 0.0
    %3857 = vmatpush1.msra.mxu0 %v3843
    %3858 = vmatprep.subr.mxu0 0.0
    %3859 = vmatpush1.msra.mxu0 %v3844
    %3860 = vmatprep.subr.mxu0 0.0
    %3861 = vmatpush1.msra.mxu0 %v3850
    %3862 = vmatprep.subr.mxu0 0.0
    %3863 = vmatpush1.msra.mxu0 0.0
    %3864 = vmatprep.subr.mxu0 0.0
    %3865 = vmatpush1.msra.mxu0 0.0
    %3866 = vmatprep.subr.mxu0 0.0
    %3867 = vmatpush1.msra.mxu0 0.0
    %3868 = vmatprep.subr.mxu0 0.0
    %3869 = vmatpush1.msra.mxu0 0.0
    %3870 = vmatprep.subr.mxu0 0.0
    %3871 = vmatpush1.msra.mxu0 0.0
    %3872 = vmatprep.subr.mxu0 0.0
    %3873 = vmatpush1.msra.mxu0 0.0
    %3874 = vmatprep.subr.mxu0 0.0
    %3875 = vmatpush1.msra.mxu0 0.0
    %3876 = vmatprep.subr.mxu0 0.0
    %3877 = vmatpush1.msra.mxu0 0.0
    %3878 = vmatprep.subr.mxu0 0.0
    %3879 = vmatpush1.msra.mxu0 0.0
    %3880 = vmatprep.subr.mxu0 0.0
    %3881 = vmatpush1.msra.mxu0 0.0
    %3882 = vmatprep.subr.mxu0 0.0
    %3883 = vmatpush1.msra.mxu0 0.0
    %3884 = vmatprep.subr.mxu0 0.0
    %3885 = vmatpush1.msra.mxu0 0.0
    %3886 = vmatprep.subr.mxu0 0.0
    %3887 = vmatpush1.msra.mxu0 0.0
    %3888 = vmatprep.subr.mxu0 0.0
    %3889 = vmatpush1.msra.mxu0 0.0
    %3890 = vmatprep.subr.mxu0 0.0
    %3891 = vmatpush1.msra.mxu0 0.0
    %3892 = vmatprep.subr.mxu0 0.0
    %3893 = vmatpush1.msra.mxu0 0.0
    %3894 = vmatprep.subr.mxu0 0.0
    %3895 = vmatpush1.msra.mxu0 0.0
    %3896 = vmatprep.subr.mxu0 0.0
    %3897 = vmatpush1.msra.mxu0 0.0
    %3898 = vmatprep.subr.mxu0 0.0
    %3899 = vmatpush1.msra.mxu0 0.0
    %3900 = vmatprep.subr.mxu0 0.0
    %3901 = vmatpush1.msra.mxu0 0.0
    %3902 = vmatprep.subr.mxu0 0.0
    %3903 = vmatpush1.msra.mxu0 0.0
    %3904 = vmatprep.subr.mxu0 0.0
    %3905 = vmatpush1.msra.mxu0 0.0
    %3906 = vmatprep.subr.mxu0 0.0
    %3907 = vmatpush1.msra.mxu0 0.0
    %3908 = vmatprep.subr.mxu0 0.0
    %3909 = vmatpush1.msra.mxu0 0.0
    %3910 = vmatprep.subr.mxu0 0.0
    %3911 = vmatpush1.msra.mxu0 0.0
    %3912 = vmatprep.subr.mxu0 0.0
    %3913 = vmatpush1.msra.mxu0 0.0
    %3914 = vmatprep.subr.mxu0 0.0
    %3915 = vmatpush1.msra.mxu0 0.0
    %3916 = vmatprep.mubr.f32.mxu0 0.0
    %3917 = vmatmul.mubr.f32.gmra.mrb[0].mxu0 %v3847
    %v3918 = vpop.f32.mrb[0].mxu0
    %v3919 = vadd.f32 0.0, %v3918
    %v3920 = vpop.f32.mrb[0].mxu0
    %3921 = vdwg.mxu0
    %v3922 = vadd.f32 %v3840, %v3919
    %v3923 = vld [vmem:[%s1424] sm:$0xff]
    %v3924 = vld [vmem:[%s1424 + $0x8] sm:$0xff]
    %v3925 = vld [vmem:[%s1424 + $0x10] sm:$0xff]
    %v3926 = vld [vmem:[%s1424 + $0x18] sm:$0xff]
    %v3927 = vld [vmem:[%s1424 + $0x20] sm:$0xf]
    %v3928 = vrot.slane %v3675, 6
    %v3929 = vsel %vm67, %v3928, 0
    %v3932 = vsel %vm618, %v3927, 0
    %3934 = vmatprep.subr.mxu0 0.0
    %3935 = vmatpush1.msra.mxu0 %v3923
    %3936 = vmatprep.subr.mxu0 0.0
    %3937 = vmatpush1.msra.mxu0 %v3924
    %3938 = vmatprep.subr.mxu0 0.0
    %3939 = vmatpush1.msra.mxu0 %v3925
    %3940 = vmatprep.subr.mxu0 0.0
    %3941 = vmatpush1.msra.mxu0 %v3926
    %3942 = vmatprep.subr.mxu0 0.0
    %3943 = vmatpush1.msra.mxu0 %v3932
    %3944 = vmatprep.subr.mxu0 0.0
    %3945 = vmatpush1.msra.mxu0 0.0
    %3946 = vmatprep.subr.mxu0 0.0
    %3947 = vmatpush1.msra.mxu0 0.0
    %3948 = vmatprep.subr.mxu0 0.0
    %3949 = vmatpush1.msra.mxu0 0.0
    %3950 = vmatprep.subr.mxu0 0.0
    %3951 = vmatpush1.msra.mxu0 0.0
    %3952 = vmatprep.subr.mxu0 0.0
    %3953 = vmatpush1.msra.mxu0 0.0
    %3954 = vmatprep.subr.mxu0 0.0
    %3955 = vmatpush1.msra.mxu0 0.0
    %3956 = vmatprep.subr.mxu0 0.0
    %3957 = vmatpush1.msra.mxu0 0.0
    %3958 = vmatprep.subr.mxu0 0.0
    %3959 = vmatpush1.msra.mxu0 0.0
    %3960 = vmatprep.subr.mxu0 0.0
    %3961 = vmatpush1.msra.mxu0 0.0
    %3962 = vmatprep.subr.mxu0 0.0
    %3963 = vmatpush1.msra.mxu0 0.0
    %3964 = vmatprep.subr.mxu0 0.0
    %3965 = vmatpush1.msra.mxu0 0.0
    %3966 = vmatprep.subr.mxu0 0.0
    %3967 = vmatpush1.msra.mxu0 0.0
    %3968 = vmatprep.subr.mxu0 0.0
    %3969 = vmatpush1.msra.mxu0 0.0
    %3970 = vmatprep.subr.mxu0 0.0
    %3971 = vmatpush1.msra.mxu0 0.0
    %3972 = vmatprep.subr.mxu0 0.0
    %3973 = vmatpush1.msra.mxu0 0.0
    %3974 = vmatprep.subr.mxu0 0.0
    %3975 = vmatpush1.msra.mxu0 0.0
    %3976 = vmatprep.subr.mxu0 0.0
    %3977 = vmatpush1.msra.mxu0 0.0
    %3978 = vmatprep.subr.mxu0 0.0
    %3979 = vmatpush1.msra.mxu0 0.0
    %3980 = vmatprep.subr.mxu0 0.0
    %3981 = vmatpush1.msra.mxu0 0.0
    %3982 = vmatprep.subr.mxu0 0.0
    %3983 = vmatpush1.msra.mxu0 0.0
    %3984 = vmatprep.subr.mxu0 0.0
    %3985 = vmatpush1.msra.mxu0 0.0
    %3986 = vmatprep.subr.mxu0 0.0
    %3987 = vmatpush1.msra.mxu0 0.0
    %3988 = vmatprep.subr.mxu0 0.0
    %3989 = vmatpush1.msra.mxu0 0.0
    %3990 = vmatprep.subr.mxu0 0.0
    %3991 = vmatpush1.msra.mxu0 0.0
    %3992 = vmatprep.subr.mxu0 0.0
    %3993 = vmatpush1.msra.mxu0 0.0
    %3994 = vmatprep.subr.mxu0 0.0
    %3995 = vmatpush1.msra.mxu0 0.0
    %3996 = vmatprep.subr.mxu0 0.0
    %3997 = vmatpush1.msra.mxu0 0.0
    %3998 = vmatprep.mubr.f32.mxu0 0.0
    %3999 = vmatmul.mubr.f32.gmra.mrb[0].mxu0 %v3929
    %v4000 = vpop.f32.mrb[0].mxu0
    %v4001 = vadd.f32 0.0, %v4000
    %v4002 = vpop.f32.mrb[0].mxu0
    %4003 = vdwg.mxu0
    %v4004 = vadd.f32 %v3922, %v4001
    %4005 = vst.msk [vmem:[#allocation7 + $0x1] sm:$0x1] %vm1507, %v4004
    %v4006 = vld [vmem:[%s9] sm:$0xff]
    %v4007 = vld [vmem:[%s9 + $0x8] sm:$0x3]
    %v4008 = vld [vmem:[%s10] sm:$0x1]
    %v4010 = vsel %vm1512, %v4004, 0
    %v4013 = vsel %vm614, %v4007, 0
    %4015 = vmatprep.subr.mxu0 0.0
    %4016 = vmatpush1.msra.mxu0 %v4006
    %4017 = vmatprep.subr.mxu0 0.0
    %4018 = vmatpush1.msra.mxu0 %v4013
    %4019 = vmatprep.subr.mxu0 0.0
    %4020 = vmatpush1.msra.mxu0 0.0
    %4021 = vmatprep.subr.mxu0 0.0
    %4022 = vmatpush1.msra.mxu0 0.0
    %4023 = vmatprep.subr.mxu0 0.0
    %4024 = vmatpush1.msra.mxu0 0.0
    %4025 = vmatprep.subr.mxu0 0.0
    %4026 = vmatpush1.msra.mxu0 0.0
    %4027 = vmatprep.subr.mxu0 0.0
    %4028 = vmatpush1.msra.mxu0 0.0
    %4029 = vmatprep.subr.mxu0 0.0
    %4030 = vmatpush1.msra.mxu0 0.0
    %4031 = vmatprep.subr.mxu0 0.0
    %4032 = vmatpush1.msra.mxu0 0.0
    %4033 = vmatprep.subr.mxu0 0.0
    %4034 = vmatpush1.msra.mxu0 0.0
    %4035 = vmatprep.subr.mxu0 0.0
    %4036 = vmatpush1.msra.mxu0 0.0
    %4037 = vmatprep.subr.mxu0 0.0
    %4038 = vmatpush1.msra.mxu0 0.0
    %4039 = vmatprep.subr.mxu0 0.0
    %4040 = vmatpush1.msra.mxu0 0.0
    %4041 = vmatprep.subr.mxu0 0.0
    %4042 = vmatpush1.msra.mxu0 0.0
    %4043 = vmatprep.subr.mxu0 0.0
    %4044 = vmatpush1.msra.mxu0 0.0
    %4045 = vmatprep.subr.mxu0 0.0
    %4046 = vmatpush1.msra.mxu0 0.0
    %4047 = vmatprep.subr.mxu0 0.0
    %4048 = vmatpush1.msra.mxu0 0.0
    %4049 = vmatprep.subr.mxu0 0.0
    %4050 = vmatpush1.msra.mxu0 0.0
    %4051 = vmatprep.subr.mxu0 0.0
    %4052 = vmatpush1.msra.mxu0 0.0
    %4053 = vmatprep.subr.mxu0 0.0
    %4054 = vmatpush1.msra.mxu0 0.0
    %4055 = vmatprep.subr.mxu0 0.0
    %4056 = vmatpush1.msra.mxu0 0.0
    %4057 = vmatprep.subr.mxu0 0.0
    %4058 = vmatpush1.msra.mxu0 0.0
    %4059 = vmatprep.subr.mxu0 0.0
    %4060 = vmatpush1.msra.mxu0 0.0
    %4061 = vmatprep.subr.mxu0 0.0
    %4062 = vmatpush1.msra.mxu0 0.0
    %4063 = vmatprep.subr.mxu0 0.0
    %4064 = vmatpush1.msra.mxu0 0.0
    %4065 = vmatprep.subr.mxu0 0.0
    %4066 = vmatpush1.msra.mxu0 0.0
    %4067 = vmatprep.subr.mxu0 0.0
    %4068 = vmatpush1.msra.mxu0 0.0
    %4069 = vmatprep.subr.mxu0 0.0
    %4070 = vmatpush1.msra.mxu0 0.0
    %4071 = vmatprep.subr.mxu0 0.0
    %4072 = vmatpush1.msra.mxu0 0.0
    %4073 = vmatprep.subr.mxu0 0.0
    %4074 = vmatpush1.msra.mxu0 0.0
    %4075 = vmatprep.subr.mxu0 0.0
    %4076 = vmatpush1.msra.mxu0 0.0
    %4077 = vmatprep.subr.mxu0 0.0
    %4078 = vmatpush1.msra.mxu0 0.0
    %4079 = vmatprep.mubr.f32.mxu0 0.0
    %4080 = vmatmul.mubr.f32.gmra.mrb[0].mxu0 %v4010
    %v4081 = vpop.f32.mrb[0].mxu0
    %v4082 = vadd.f32 %v4008, %v4081
    %v4083 = vpop.f32.mrb[0].mxu0
    %4084 = vdwg.mxu0
    %s4085 = scalar_lea.vmem [#allocation4], 16
    %4086 = vst.msk [vmem:[%s4085 + $0x1] sm:$0x1] %vm1589, %v4082
    %v4087 = vld [vmem:[%s1591] sm:$0xff]
    %v4088 = vld [vmem:[%s1591 + $0x8] sm:$0x3]
    %v4089 = vld [vmem:[%s1594] sm:$0x1]
    %v4091 = vsel %vm614, %v4088, 0
    %4093 = vmatprep.subr.mxu0 0.0
    %4094 = vmatpush1.msra.mxu0 %v4087
    %4095 = vmatprep.subr.mxu0 0.0
    %4096 = vmatpush1.msra.mxu0 %v4091
    %4097 = vmatprep.subr.mxu0 0.0
    %4098 = vmatpush1.msra.mxu0 0.0
    %4099 = vmatprep.subr.mxu0 0.0
    %4100 = vmatpush1.msra.mxu0 0.0
    %4101 = vmatprep.subr.mxu0 0.0
    %4102 = vmatpush1.msra.mxu0 0.0
    %4103 = vmatprep.subr.mxu0 0.0
    %4104 = vmatpush1.msra.mxu0 0.0
    %4105 = vmatprep.subr.mxu0 0.0
    %4106 = vmatpush1.msra.mxu0 0.0
    %4107 = vmatprep.subr.mxu0 0.0
    %4108 = vmatpush1.msra.mxu0 0.0
    %4109 = vmatprep.subr.mxu0 0.0
    %4110 = vmatpush1.msra.mxu0 0.0
    %4111 = vmatprep.subr.mxu0 0.0
    %4112 = vmatpush1.msra.mxu0 0.0
    %4113 = vmatprep.subr.mxu0 0.0
    %4114 = vmatpush1.msra.mxu0 0.0
    %4115 = vmatprep.subr.mxu0 0.0
    %4116 = vmatpush1.msra.mxu0 0.0
    %4117 = vmatprep.subr.mxu0 0.0
    %4118 = vmatpush1.msra.mxu0 0.0
    %4119 = vmatprep.subr.mxu0 0.0
    %4120 = vmatpush1.msra.mxu0 0.0
    %4121 = vmatprep.subr.mxu0 0.0
    %4122 = vmatpush1.msra.mxu0 0.0
    %4123 = vmatprep.subr.mxu0 0.0
    %4124 = vmatpush1.msra.mxu0 0.0
    %4125 = vmatprep.subr.mxu0 0.0
    %4126 = vmatpush1.msra.mxu0 0.0
    %4127 = vmatprep.subr.mxu0 0.0
    %4128 = vmatpush1.msra.mxu0 0.0
    %4129 = vmatprep.subr.mxu0 0.0
    %4130 = vmatpush1.msra.mxu0 0.0
    %4131 = vmatprep.subr.mxu0 0.0
    %4132 = vmatpush1.msra.mxu0 0.0
    %4133 = vmatprep.subr.mxu0 0.0
    %4134 = vmatpush1.msra.mxu0 0.0
    %4135 = vmatprep.subr.mxu0 0.0
    %4136 = vmatpush1.msra.mxu0 0.0
    %4137 = vmatprep.subr.mxu0 0.0
    %4138 = vmatpush1.msra.mxu0 0.0
    %4139 = vmatprep.subr.mxu0 0.0
    %4140 = vmatpush1.msra.mxu0 0.0
    %4141 = vmatprep.subr.mxu0 0.0
    %4142 = vmatpush1.msra.mxu0 0.0
    %4143 = vmatprep.subr.mxu0 0.0
    %4144 = vmatpush1.msra.mxu0 0.0
    %4145 = vmatprep.subr.mxu0 0.0
    %4146 = vmatpush1.msra.mxu0 0.0
    %4147 = vmatprep.subr.mxu0 0.0
    %4148 = vmatpush1.msra.mxu0 0.0
    %4149 = vmatprep.subr.mxu0 0.0
    %4150 = vmatpush1.msra.mxu0 0.0
    %4151 = vmatprep.subr.mxu0 0.0
    %4152 = vmatpush1.msra.mxu0 0.0
    %4153 = vmatprep.subr.mxu0 0.0
    %4154 = vmatpush1.msra.mxu0 0.0
    %4155 = vmatprep.subr.mxu0 0.0
    %4156 = vmatpush1.msra.mxu0 0.0
    %4157 = vmatprep.mubr.f32.mxu0 0.0
    %4158 = vmatmul.mubr.f32.gmra.mrb[0].mxu0 %v4010
    %v4159 = vpop.f32.mrb[0].mxu0
    %v4160 = vadd.f32 %v4089, %v4159
    %v4161 = vpop.f32.mrb[0].mxu0
    %4162 = vdwg.mxu0
    %4163 = vst.msk [vmem:[%s4085 + $0x3] sm:$0x1] %vm1589, %v4160
    %v4164 = vld [vmem:[%s1670] sm:$0xff]
    %v4165 = vld [vmem:[%s1670 + $0x8] sm:$0x3]
    %v4166 = vld [vmem:[%s1673] sm:$0x1]
    %v4168 = vsel %vm614, %v4165, 0
    %4170 = vmatprep.subr.mxu0 0.0
    %4171 = vmatpush1.msra.mxu0 %v4164
    %4172 = vmatprep.subr.mxu0 0.0
    %4173 = vmatpush1.msra.mxu0 %v4168
    %4174 = vmatprep.subr.mxu0 0.0
    %4175 = vmatpush1.msra.mxu0 0.0
    %4176 = vmatprep.subr.mxu0 0.0
    %4177 = vmatpush1.msra.mxu0 0.0
    %4178 = vmatprep.subr.mxu0 0.0
    %4179 = vmatpush1.msra.mxu0 0.0
    %4180 = vmatprep.subr.mxu0 0.0
    %4181 = vmatpush1.msra.mxu0 0.0
    %4182 = vmatprep.subr.mxu0 0.0
    %4183 = vmatpush1.msra.mxu0 0.0
    %4184 = vmatprep.subr.mxu0 0.0
    %4185 = vmatpush1.msra.mxu0 0.0
    %4186 = vmatprep.subr.mxu0 0.0
    %4187 = vmatpush1.msra.mxu0 0.0
    %4188 = vmatprep.subr.mxu0 0.0
    %4189 = vmatpush1.msra.mxu0 0.0
    %4190 = vmatprep.subr.mxu0 0.0
    %4191 = vmatpush1.msra.mxu0 0.0
    %4192 = vmatprep.subr.mxu0 0.0
    %4193 = vmatpush1.msra.mxu0 0.0
    %4194 = vmatprep.subr.mxu0 0.0
    %4195 = vmatpush1.msra.mxu0 0.0
    %4196 = vmatprep.subr.mxu0 0.0
    %4197 = vmatpush1.msra.mxu0 0.0
    %4198 = vmatprep.subr.mxu0 0.0
    %4199 = vmatpush1.msra.mxu0 0.0
    %4200 = vmatprep.subr.mxu0 0.0
    %4201 = vmatpush1.msra.mxu0 0.0
    %4202 = vmatprep.subr.mxu0 0.0
    %4203 = vmatpush1.msra.mxu0 0.0
    %4204 = vmatprep.subr.mxu0 0.0
    %4205 = vmatpush1.msra.mxu0 0.0
    %4206 = vmatprep.subr.mxu0 0.0
    %4207 = vmatpush1.msra.mxu0 0.0
    %4208 = vmatprep.subr.mxu0 0.0
    %4209 = vmatpush1.msra.mxu0 0.0
    %4210 = vmatprep.subr.mxu0 0.0
    %4211 = vmatpush1.msra.mxu0 0.0
    %4212 = vmatprep.subr.mxu0 0.0
    %4213 = vmatpush1.msra.mxu0 0.0
    %4214 = vmatprep.subr.mxu0 0.0
    %4215 = vmatpush1.msra.mxu0 0.0
    %4216 = vmatprep.subr.mxu0 0.0
    %4217 = vmatpush1.msra.mxu0 0.0
    %4218 = vmatprep.subr.mxu0 0.0
    %4219 = vmatpush1.msra.mxu0 0.0
    %4220 = vmatprep.subr.mxu0 0.0
    %4221 = vmatpush1.msra.mxu0 0.0
    %4222 = vmatprep.subr.mxu0 0.0
    %4223 = vmatpush1.msra.mxu0 0.0
    %4224 = vmatprep.subr.mxu0 0.0
    %4225 = vmatpush1.msra.mxu0 0.0
    %4226 = vmatprep.subr.mxu0 0.0
    %4227 = vmatpush1.msra.mxu0 0.0
    %4228 = vmatprep.subr.mxu0 0.0
    %4229 = vmatpush1.msra.mxu0 0.0
    %4230 = vmatprep.subr.mxu0 0.0
    %4231 = vmatpush1.msra.mxu0 0.0
    %4232 = vmatprep.subr.mxu0 0.0
    %4233 = vmatpush1.msra.mxu0 0.0
    %4234 = vmatprep.mubr.f32.mxu0 0.0
    %4235 = vmatmul.mubr.f32.gmra.mrb[0].mxu0 %v4010
    %v4236 = vpop.f32.mrb[0].mxu0
    %v4237 = vadd.f32 %v4166, %v4236
    %v4238 = vpop.f32.mrb[0].mxu0
    %4239 = vdwg.mxu0
    %4240 = vst.msk [vmem:[%s4085 + $0x5] sm:$0x1] %vm1589, %v4237
    %v4241 = vld [vmem:[%s1749] sm:$0xff]
    %v4242 = vld [vmem:[%s1749 + $0x8] sm:$0x3]
    %v4243 = vld [vmem:[%s1752] sm:$0x1]
    %v4245 = vsel %vm614, %v4242, 0
    %4247 = vmatprep.subr.mxu0 0.0
    %4248 = vmatpush1.msra.mxu0 %v4241
    %4249 = vmatprep.subr.mxu0 0.0
    %4250 = vmatpush1.msra.mxu0 %v4245
    %4251 = vmatprep.subr.mxu0 0.0
    %4252 = vmatpush1.msra.mxu0 0.0
    %4253 = vmatprep.subr.mxu0 0.0
    %4254 = vmatpush1.msra.mxu0 0.0
    %4255 = vmatprep.subr.mxu0 0.0
    %4256 = vmatpush1.msra.mxu0 0.0
    %4257 = vmatprep.subr.mxu0 0.0
    %4258 = vmatpush1.msra.mxu0 0.0
    %4259 = vmatprep.subr.mxu0 0.0
    %4260 = vmatpush1.msra.mxu0 0.0
    %4261 = vmatprep.subr.mxu0 0.0
    %4262 = vmatpush1.msra.mxu0 0.0
    %4263 = vmatprep.subr.mxu0 0.0
    %4264 = vmatpush1.msra.mxu0 0.0
    %4265 = vmatprep.subr.mxu0 0.0
    %4266 = vmatpush1.msra.mxu0 0.0
    %4267 = vmatprep.subr.mxu0 0.0
    %4268 = vmatpush1.msra.mxu0 0.0
    %4269 = vmatprep.subr.mxu0 0.0
    %4270 = vmatpush1.msra.mxu0 0.0
    %4271 = vmatprep.subr.mxu0 0.0
    %4272 = vmatpush1.msra.mxu0 0.0
    %4273 = vmatprep.subr.mxu0 0.0
    %4274 = vmatpush1.msra.mxu0 0.0
    %4275 = vmatprep.subr.mxu0 0.0
    %4276 = vmatpush1.msra.mxu0 0.0
    %4277 = vmatprep.subr.mxu0 0.0
    %4278 = vmatpush1.msra.mxu0 0.0
    %4279 = vmatprep.subr.mxu0 0.0
    %4280 = vmatpush1.msra.mxu0 0.0
    %4281 = vmatprep.subr.mxu0 0.0
    %4282 = vmatpush1.msra.mxu0 0.0
    %4283 = vmatprep.subr.mxu0 0.0
    %4284 = vmatpush1.msra.mxu0 0.0
    %4285 = vmatprep.subr.mxu0 0.0
    %4286 = vmatpush1.msra.mxu0 0.0
    %4287 = vmatprep.subr.mxu0 0.0
    %4288 = vmatpush1.msra.mxu0 0.0
    %4289 = vmatprep.subr.mxu0 0.0
    %4290 = vmatpush1.msra.mxu0 0.0
    %4291 = vmatprep.subr.mxu0 0.0
    %4292 = vmatpush1.msra.mxu0 0.0
    %4293 = vmatprep.subr.mxu0 0.0
    %4294 = vmatpush1.msra.mxu0 0.0
    %4295 = vmatprep.subr.mxu0 0.0
    %4296 = vmatpush1.msra.mxu0 0.0
    %4297 = vmatprep.subr.mxu0 0.0
    %4298 = vmatpush1.msra.mxu0 0.0
    %4299 = vmatprep.subr.mxu0 0.0
    %4300 = vmatpush1.msra.mxu0 0.0
    %4301 = vmatprep.subr.mxu0 0.0
    %4302 = vmatpush1.msra.mxu0 0.0
    %4303 = vmatprep.subr.mxu0 0.0
    %4304 = vmatpush1.msra.mxu0 0.0
    %4305 = vmatprep.subr.mxu0 0.0
    %4306 = vmatpush1.msra.mxu0 0.0
    %4307 = vmatprep.subr.mxu0 0.0
    %4308 = vmatpush1.msra.mxu0 0.0
    %4309 = vmatprep.subr.mxu0 0.0
    %4310 = vmatpush1.msra.mxu0 0.0
    %4311 = vmatprep.mubr.f32.mxu0 0.0
    %4312 = vmatmul.mubr.f32.gmra.mrb[0].mxu0 %v4010
    %v4313 = vpop.f32.mrb[0].mxu0
    %v4314 = vadd.f32 %v4243, %v4313
    %v4315 = vpop.f32.mrb[0].mxu0
    %4316 = vdwg.mxu0
    %4317 = vst.msk [vmem:[%s4085 + $0x7] sm:$0x1] %vm1589, %v4314
    %v4318 = vld [vmem:[%s4085] sm:$0xff]
    %v4319 = vld [vmem:[%s11] sm:$0xff]
    %v4320 = vld [vmem:[%s11 + $0x8] sm:$0xff]
    %v4321 = vld [vmem:[%s11 + $0x10] sm:$0xff]
    %v4322 = vld [vmem:[%s11 + $0x18] sm:$0xff]
    %v4323 = vld [vmem:[%s11 + $0x20] sm:$0xf]
    %v4324 = vld [vmem:[%s4085 + $0x1] sm:$0xff]
    %v4325 = vld [vmem:[%s1835] sm:$0xff]
    %v4326 = vld [vmem:[%s1835 + $0x8] sm:$0xff]
    %v4327 = vld [vmem:[%s1835 + $0x10] sm:$0xff]
    %v4328 = vld [vmem:[%s1835 + $0x18] sm:$0xff]
    %v4329 = vld [vmem:[%s1835 + $0x20] sm:$0xf]
    %v4331 = vsel %vm67, %v4324, 0
    %v4334 = vsel %vm618, %v4329, 0
    %4336 = vmatprep.subr.mxu0 0.0
    %4337 = vmatpush1.msra.mxu0 %v4325
    %4338 = vmatprep.subr.mxu0 0.0
    %4339 = vmatpush1.msra.mxu0 %v4326
    %4340 = vmatprep.subr.mxu0 0.0
    %4341 = vmatpush1.msra.mxu0 %v4327
    %4342 = vmatprep.subr.mxu0 0.0
    %4343 = vmatpush1.msra.mxu0 %v4328
    %4344 = vmatprep.subr.mxu0 0.0
    %4345 = vmatpush1.msra.mxu0 %v4334
    %4346 = vmatprep.subr.mxu0 0.0
    %4347 = vmatpush1.msra.mxu0 0.0
    %4348 = vmatprep.subr.mxu0 0.0
    %4349 = vmatpush1.msra.mxu0 0.0
    %4350 = vmatprep.subr.mxu0 0.0
    %4351 = vmatpush1.msra.mxu0 0.0
    %4352 = vmatprep.subr.mxu0 0.0
    %4353 = vmatpush1.msra.mxu0 0.0
    %4354 = vmatprep.subr.mxu0 0.0
    %4355 = vmatpush1.msra.mxu0 0.0
    %4356 = vmatprep.subr.mxu0 0.0
    %4357 = vmatpush1.msra.mxu0 0.0
    %4358 = vmatprep.subr.mxu0 0.0
    %4359 = vmatpush1.msra.mxu0 0.0
    %4360 = vmatprep.subr.mxu0 0.0
    %4361 = vmatpush1.msra.mxu0 0.0
    %4362 = vmatprep.subr.mxu0 0.0
    %4363 = vmatpush1.msra.mxu0 0.0
    %4364 = vmatprep.subr.mxu0 0.0
    %4365 = vmatpush1.msra.mxu0 0.0
    %4366 = vmatprep.subr.mxu0 0.0
    %4367 = vmatpush1.msra.mxu0 0.0
    %4368 = vmatprep.subr.mxu0 0.0
    %4369 = vmatpush1.msra.mxu0 0.0
    %4370 = vmatprep.subr.mxu0 0.0
    %4371 = vmatpush1.msra.mxu0 0.0
    %4372 = vmatprep.subr.mxu0 0.0
    %4373 = vmatpush1.msra.mxu0 0.0
    %4374 = vmatprep.subr.mxu0 0.0
    %4375 = vmatpush1.msra.mxu0 0.0
    %4376 = vmatprep.subr.mxu0 0.0
    %4377 = vmatpush1.msra.mxu0 0.0
    %4378 = vmatprep.subr.mxu0 0.0
    %4379 = vmatpush1.msra.mxu0 0.0
    %4380 = vmatprep.subr.mxu0 0.0
    %4381 = vmatpush1.msra.mxu0 0.0
    %4382 = vmatprep.subr.mxu0 0.0
    %4383 = vmatpush1.msra.mxu0 0.0
    %4384 = vmatprep.subr.mxu0 0.0
    %4385 = vmatpush1.msra.mxu0 0.0
    %4386 = vmatprep.subr.mxu0 0.0
    %4387 = vmatpush1.msra.mxu0 0.0
    %4388 = vmatprep.subr.mxu0 0.0
    %4389 = vmatpush1.msra.mxu0 0.0
    %4390 = vmatprep.subr.mxu0 0.0
    %4391 = vmatpush1.msra.mxu0 0.0
    %4392 = vmatprep.subr.mxu0 0.0
    %4393 = vmatpush1.msra.mxu0 0.0
    %4394 = vmatprep.subr.mxu0 0.0
    %4395 = vmatpush1.msra.mxu0 0.0
    %4396 = vmatprep.subr.mxu0 0.0
    %4397 = vmatpush1.msra.mxu0 0.0
    %4398 = vmatprep.subr.mxu0 0.0
    %4399 = vmatpush1.msra.mxu0 0.0
    %4400 = vmatprep.mubr.f32.mxu0 0.0
    %4401 = vmatmul.mubr.f32.gmra.mrb[0].mxu0 %v4331
    %v4402 = vpop.f32.mrb[0].mxu0
    %v4403 = vadd.f32 0.0, %v4402
    %v4404 = vpop.f32.mrb[0].mxu0
    %4405 = vdwg.mxu0
    %v4407 = vsel %vm67, %v4318, 0
    %v4410 = vsel %vm618, %v4323, 0
    %4412 = vmatprep.subr.mxu0 0.0
    %4413 = vmatpush1.msra.mxu0 %v4319
    %4414 = vmatprep.subr.mxu0 0.0
    %4415 = vmatpush1.msra.mxu0 %v4320
    %4416 = vmatprep.subr.mxu0 0.0
    %4417 = vmatpush1.msra.mxu0 %v4321
    %4418 = vmatprep.subr.mxu0 0.0
    %4419 = vmatpush1.msra.mxu0 %v4322
    %4420 = vmatprep.subr.mxu0 0.0
    %4421 = vmatpush1.msra.mxu0 %v4410
    %4422 = vmatprep.subr.mxu0 0.0
    %4423 = vmatpush1.msra.mxu0 0.0
    %4424 = vmatprep.subr.mxu0 0.0
    %4425 = vmatpush1.msra.mxu0 0.0
    %4426 = vmatprep.subr.mxu0 0.0
    %4427 = vmatpush1.msra.mxu0 0.0
    %4428 = vmatprep.subr.mxu0 0.0
    %4429 = vmatpush1.msra.mxu0 0.0
    %4430 = vmatprep.subr.mxu0 0.0
    %4431 = vmatpush1.msra.mxu0 0.0
    %4432 = vmatprep.subr.mxu0 0.0
    %4433 = vmatpush1.msra.mxu0 0.0
    %4434 = vmatprep.subr.mxu0 0.0
    %4435 = vmatpush1.msra.mxu0 0.0
    %4436 = vmatprep.subr.mxu0 0.0
    %4437 = vmatpush1.msra.mxu0 0.0
    %4438 = vmatprep.subr.mxu0 0.0
    %4439 = vmatpush1.msra.mxu0 0.0
    %4440 = vmatprep.subr.mxu0 0.0
    %4441 = vmatpush1.msra.mxu0 0.0
    %4442 = vmatprep.subr.mxu0 0.0
    %4443 = vmatpush1.msra.mxu0 0.0
    %4444 = vmatprep.subr.mxu0 0.0
    %4445 = vmatpush1.msra.mxu0 0.0
    %4446 = vmatprep.subr.mxu0 0.0
    %4447 = vmatpush1.msra.mxu0 0.0
    %4448 = vmatprep.subr.mxu0 0.0
    %4449 = vmatpush1.msra.mxu0 0.0
    %4450 = vmatprep.subr.mxu0 0.0
    %4451 = vmatpush1.msra.mxu0 0.0
    %4452 = vmatprep.subr.mxu0 0.0
    %4453 = vmatpush1.msra.mxu0 0.0
    %4454 = vmatprep.subr.mxu0 0.0
    %4455 = vmatpush1.msra.mxu0 0.0
    %4456 = vmatprep.subr.mxu0 0.0
    %4457 = vmatpush1.msra.mxu0 0.0
    %4458 = vmatprep.subr.mxu0 0.0
    %4459 = vmatpush1.msra.mxu0 0.0
    %4460 = vmatprep.subr.mxu0 0.0
    %4461 = vmatpush1.msra.mxu0 0.0
    %4462 = vmatprep.subr.mxu0 0.0
    %4463 = vmatpush1.msra.mxu0 0.0
    %4464 = vmatprep.subr.mxu0 0.0
    %4465 = vmatpush1.msra.mxu0 0.0
    %4466 = vmatprep.subr.mxu0 0.0
    %4467 = vmatpush1.msra.mxu0 0.0
    %4468 = vmatprep.subr.mxu0 0.0
    %4469 = vmatpush1.msra.mxu0 0.0
    %4470 = vmatprep.subr.mxu0 0.0
    %4471 = vmatpush1.msra.mxu0 0.0
    %4472 = vmatprep.subr.mxu0 0.0
    %4473 = vmatpush1.msra.mxu0 0.0
    %4474 = vmatprep.subr.mxu0 0.0
    %4475 = vmatpush1.msra.mxu0 0.0
    %4476 = vmatprep.mubr.f32.mxu0 0.0
    %4477 = vmatmul.mubr.f32.gmra.mrb[0].mxu0 %v4407
    %v4478 = vpop.f32.mrb[0].mxu0
    %v4479 = vadd.f32 %v4403, %v4478
    %v4480 = vpop.f32.mrb[0].mxu0
    %4481 = vdwg.mxu0
    %v4482 = vld [vmem:[%s4085 + $0x2] sm:$0xff]
    %v4483 = vld [vmem:[%s1994] sm:$0xff]
    %v4484 = vld [vmem:[%s1994 + $0x8] sm:$0xff]
    %v4485 = vld [vmem:[%s1994 + $0x10] sm:$0xff]
    %v4486 = vld [vmem:[%s1994 + $0x18] sm:$0xff]
    %v4487 = vld [vmem:[%s1994 + $0x20] sm:$0xf]
    %v4489 = vsel %vm67, %v4482, 0
    %v4492 = vsel %vm618, %v4487, 0
    %4494 = vmatprep.subr.mxu0 0.0
    %4495 = vmatpush1.msra.mxu0 %v4483
    %4496 = vmatprep.subr.mxu0 0.0
    %4497 = vmatpush1.msra.mxu0 %v4484
    %4498 = vmatprep.subr.mxu0 0.0
    %4499 = vmatpush1.msra.mxu0 %v4485
    %4500 = vmatprep.subr.mxu0 0.0
    %4501 = vmatpush1.msra.mxu0 %v4486
    %4502 = vmatprep.subr.mxu0 0.0
    %4503 = vmatpush1.msra.mxu0 %v4492
    %4504 = vmatprep.subr.mxu0 0.0
    %4505 = vmatpush1.msra.mxu0 0.0
    %4506 = vmatprep.subr.mxu0 0.0
    %4507 = vmatpush1.msra.mxu0 0.0
    %4508 = vmatprep.subr.mxu0 0.0
    %4509 = vmatpush1.msra.mxu0 0.0
    %4510 = vmatprep.subr.mxu0 0.0
    %4511 = vmatpush1.msra.mxu0 0.0
    %4512 = vmatprep.subr.mxu0 0.0
    %4513 = vmatpush1.msra.mxu0 0.0
    %4514 = vmatprep.subr.mxu0 0.0
    %4515 = vmatpush1.msra.mxu0 0.0
    %4516 = vmatprep.subr.mxu0 0.0
    %4517 = vmatpush1.msra.mxu0 0.0
    %4518 = vmatprep.subr.mxu0 0.0
    %4519 = vmatpush1.msra.mxu0 0.0
    %4520 = vmatprep.subr.mxu0 0.0
    %4521 = vmatpush1.msra.mxu0 0.0
    %4522 = vmatprep.subr.mxu0 0.0
    %4523 = vmatpush1.msra.mxu0 0.0
    %4524 = vmatprep.subr.mxu0 0.0
    %4525 = vmatpush1.msra.mxu0 0.0
    %4526 = vmatprep.subr.mxu0 0.0
    %4527 = vmatpush1.msra.mxu0 0.0
    %4528 = vmatprep.subr.mxu0 0.0
    %4529 = vmatpush1.msra.mxu0 0.0
    %4530 = vmatprep.subr.mxu0 0.0
    %4531 = vmatpush1.msra.mxu0 0.0
    %4532 = vmatprep.subr.mxu0 0.0
    %4533 = vmatpush1.msra.mxu0 0.0
    %4534 = vmatprep.subr.mxu0 0.0
    %4535 = vmatpush1.msra.mxu0 0.0
    %4536 = vmatprep.subr.mxu0 0.0
    %4537 = vmatpush1.msra.mxu0 0.0
    %4538 = vmatprep.subr.mxu0 0.0
    %4539 = vmatpush1.msra.mxu0 0.0
    %4540 = vmatprep.subr.mxu0 0.0
    %4541 = vmatpush1.msra.mxu0 0.0
    %4542 = vmatprep.subr.mxu0 0.0
    %4543 = vmatpush1.msra.mxu0 0.0
    %4544 = vmatprep.subr.mxu0 0.0
    %4545 = vmatpush1.msra.mxu0 0.0
    %4546 = vmatprep.subr.mxu0 0.0
    %4547 = vmatpush1.msra.mxu0 0.0
    %4548 = vmatprep.subr.mxu0 0.0
    %4549 = vmatpush1.msra.mxu0 0.0
    %4550 = vmatprep.subr.mxu0 0.0
    %4551 = vmatpush1.msra.mxu0 0.0
    %4552 = vmatprep.subr.mxu0 0.0
    %4553 = vmatpush1.msra.mxu0 0.0
    %4554 = vmatprep.subr.mxu0 0.0
    %4555 = vmatpush1.msra.mxu0 0.0
    %4556 = vmatprep.subr.mxu0 0.0
    %4557 = vmatpush1.msra.mxu0 0.0
    %4558 = vmatprep.mubr.f32.mxu0 0.0
    %4559 = vmatmul.mubr.f32.gmra.mrb[0].mxu0 %v4489
    %v4560 = vpop.f32.mrb[0].mxu0
    %v4561 = vadd.f32 0.0, %v4560
    %v4562 = vpop.f32.mrb[0].mxu0
    %4563 = vdwg.mxu0
    %v4564 = vadd.f32 %v4479, %v4561
    %v4565 = vadd.f32 %v4564, %v2081
    %v4566 = vmax.f32 %v4565, 0.0
    %s4567 = scalar_lea.vmem [#allocation5], 24
    %4568 = vst [vmem:[%s4567 + $0x3] sm:$0x1] %v4566
    %4569 = vst [vmem:[%s4567 + $0x4] sm:$0x2] %v4566
    %4570 = vst [vmem:[%s4567 + $0x5] sm:$0x4] %v4566
    %4571 = vst [vmem:[%s4567 + $0x6] sm:$0x8] %v4566
    %4572 = vst [vmem:[%s4567 + $0x7] sm:$0x10] %v4566
    %4573 = vst [vmem:[%s4567 + $0x8] sm:$0x20] %v4566
    %4574 = vst [vmem:[%s4567 + $0x9] sm:$0x40] %v4566
    %4575 = vst [vmem:[%s4567 + $0xa] sm:$0x80] %v4566
    %v4576 = vld [vmem:[%s4567] sm:$0xff]
    %v4577 = vld [vmem:[%s4567 + $0x8] sm:$0xff]
    %v4578 = vld [vmem:[%s4567 + $0x10] sm:$0x1]
    %v4579 = vld [vmem:[%s13] sm:$0xff]
    %v4580 = vld [vmem:[%s13 + $0x8] sm:$0xff]
    %v4581 = vld [vmem:[%s13 + $0x10] sm:$0xff]
    %v4582 = vld [vmem:[%s13 + $0x18] sm:$0xff]
    %v4583 = vld [vmem:[%s13 + $0x20] sm:$0xff]
    %v4584 = vld [vmem:[%s13 + $0x28] sm:$0xff]
    %v4585 = vld [vmem:[%s13 + $0x30] sm:$0xff]
    %v4586 = vld [vmem:[%s13 + $0x38] sm:$0xff]
    %v4587 = vld [vmem:[%s13 + $0x40] sm:$0xff]
    %v4588 = vld [vmem:[%s13 + $0x48] sm:$0xff]
    %v4589 = vld [vmem:[%s13 + $0x50] sm:$0xff]
    %v4590 = vld [vmem:[%s13 + $0x58] sm:$0xff]
    %v4591 = vld [vmem:[%s13 + $0x60] sm:$0xff]
    %v4592 = vld [vmem:[%s13 + $0x68] sm:$0xff]
    %v4593 = vld [vmem:[%s13 + $0x70] sm:$0xff]
    %v4594 = vld [vmem:[%s13 + $0x78] sm:$0xff]
    %v4595 = vld [vmem:[%s4567 + $0x1] sm:$0xff]
    %v4596 = vld [vmem:[%s4567 + $0x9] sm:$0xff]
    %v4597 = vld [vmem:[%s4567 + $0x11] sm:$0x1]
    %v4598 = vld [vmem:[%s2115] sm:$0xff]
    %v4599 = vld [vmem:[%s2115 + $0x8] sm:$0xff]
    %v4600 = vld [vmem:[%s2115 + $0x10] sm:$0xff]
    %v4601 = vld [vmem:[%s2115 + $0x18] sm:$0xff]
    %v4602 = vld [vmem:[%s2115 + $0x20] sm:$0xff]
    %v4603 = vld [vmem:[%s2115 + $0x28] sm:$0xff]
    %v4604 = vld [vmem:[%s2115 + $0x30] sm:$0xff]
    %v4605 = vld [vmem:[%s2115 + $0x38] sm:$0xff]
    %v4606 = vld [vmem:[%s2115 + $0x40] sm:$0xff]
    %v4607 = vld [vmem:[%s2115 + $0x48] sm:$0xff]
    %v4608 = vld [vmem:[%s2115 + $0x50] sm:$0xff]
    %v4609 = vld [vmem:[%s2115 + $0x58] sm:$0xff]
    %v4610 = vld [vmem:[%s2115 + $0x60] sm:$0xff]
    %v4611 = vld [vmem:[%s2115 + $0x68] sm:$0xff]
    %v4612 = vld [vmem:[%s2115 + $0x70] sm:$0xff]
    %v4613 = vld [vmem:[%s2115 + $0x78] sm:$0xff]
    %4614 = vmatprep.subr.mxu0 0.0
    %4615 = vmatpush1.msra.mxu0 %v4598
    %4616 = vmatprep.subr.mxu0 0.0
    %4617 = vmatpush1.msra.mxu0 %v4599
    %4618 = vmatprep.subr.mxu0 0.0
    %4619 = vmatpush1.msra.mxu0 %v4600
    %4620 = vmatprep.subr.mxu0 0.0
    %4621 = vmatpush1.msra.mxu0 %v4601
    %4622 = vmatprep.subr.mxu0 0.0
    %4623 = vmatpush1.msra.mxu0 %v4602
    %4624 = vmatprep.subr.mxu0 0.0
    %4625 = vmatpush1.msra.mxu0 %v4603
    %4626 = vmatprep.subr.mxu0 0.0
    %4627 = vmatpush1.msra.mxu0 %v4604
    %4628 = vmatprep.subr.mxu0 0.0
    %4629 = vmatpush1.msra.mxu0 %v4605
    %4630 = vmatprep.subr.mxu0 0.0
    %4631 = vmatpush1.msra.mxu0 %v4606
    %4632 = vmatprep.subr.mxu0 0.0
    %4633 = vmatpush1.msra.mxu0 %v4607
    %4634 = vmatprep.subr.mxu0 0.0
    %4635 = vmatpush1.msra.mxu0 %v4608
    %4636 = vmatprep.subr.mxu0 0.0
    %4637 = vmatpush1.msra.mxu0 %v4609
    %4638 = vmatprep.subr.mxu0 0.0
    %4639 = vmatpush1.msra.mxu0 %v4610
    %4640 = vmatprep.subr.mxu0 0.0
    %4641 = vmatpush1.msra.mxu0 %v4611
    %4642 = vmatprep.subr.mxu0 0.0
    %4643 = vmatpush1.msra.mxu0 %v4612
    %4644 = vmatprep.subr.mxu0 0.0
    %4645 = vmatpush1.msra.mxu0 %v4613
    %4646 = vmatprep.subr.mxu0 0.0
    %4647 = vmatpush1.msra.mxu0 0.0
    %4648 = vmatprep.subr.mxu0 0.0
    %4649 = vmatpush1.msra.mxu0 0.0
    %4650 = vmatprep.subr.mxu0 0.0
    %4651 = vmatpush1.msra.mxu0 0.0
    %4652 = vmatprep.subr.mxu0 0.0
    %4653 = vmatpush1.msra.mxu0 0.0
    %4654 = vmatprep.subr.mxu0 0.0
    %4655 = vmatpush1.msra.mxu0 0.0
    %4656 = vmatprep.subr.mxu0 0.0
    %4657 = vmatpush1.msra.mxu0 0.0
    %4658 = vmatprep.subr.mxu0 0.0
    %4659 = vmatpush1.msra.mxu0 0.0
    %4660 = vmatprep.subr.mxu0 0.0
    %4661 = vmatpush1.msra.mxu0 0.0
    %4662 = vmatprep.subr.mxu0 0.0
    %4663 = vmatpush1.msra.mxu0 0.0
    %4664 = vmatprep.subr.mxu0 0.0
    %4665 = vmatpush1.msra.mxu0 0.0
    %4666 = vmatprep.subr.mxu0 0.0
    %4667 = vmatpush1.msra.mxu0 0.0
    %4668 = vmatprep.subr.mxu0 0.0
    %4669 = vmatpush1.msra.mxu0 0.0
    %4670 = vmatprep.subr.mxu0 0.0
    %4671 = vmatpush1.msra.mxu0 0.0
    %4672 = vmatprep.subr.mxu0 0.0
    %4673 = vmatpush1.msra.mxu0 0.0
    %4674 = vmatprep.subr.mxu0 0.0
    %4675 = vmatpush1.msra.mxu0 0.0
    %4676 = vmatprep.subr.mxu0 0.0
    %4677 = vmatpush1.msra.mxu0 0.0
    %4678 = vmatprep.mubr.f32.mxu0 0.0
    %4679 = vmatmul.mubr.f32.gmra.mrb[0].mxu0 %v4595
    %v4680 = vpop.f32.mrb[0].mxu0
    %v4681 = vadd.f32 0.0, %v4680
    %v4682 = vpop.f32.mrb[0].mxu0
    %4683 = vmatprep.mubr.f32.mxu0 0.0
    %4684 = vmatmul.mubr.f32.gmra.mrb[0].mxu0 %v4596
    %v4685 = vpop.f32.mrb[0].mxu0
    %v4686 = vadd.f32 0.0, %v4685
    %v4687 = vpop.f32.mrb[0].mxu0
    %4688 = vmatprep.mubr.f32.mxu0 0.0
    %4689 = vmatmul.mubr.f32.gmra.mrb[0].mxu0 %v4597
    %v4690 = vpop.f32.mrb[0].mxu0
    %v4691 = vadd.f32 0.0, %v4690
    %v4692 = vpop.f32.mrb[0].mxu0
    %4693 = vdwg.mxu0
    %4694 = vmatprep.subr.mxu0 0.0
    %4695 = vmatpush1.msra.mxu0 %v4579
    %4696 = vmatprep.subr.mxu0 0.0
    %4697 = vmatpush1.msra.mxu0 %v4580
    %4698 = vmatprep.subr.mxu0 0.0
    %4699 = vmatpush1.msra.mxu0 %v4581
    %4700 = vmatprep.subr.mxu0 0.0
    %4701 = vmatpush1.msra.mxu0 %v4582
    %4702 = vmatprep.subr.mxu0 0.0
    %4703 = vmatpush1.msra.mxu0 %v4583
    %4704 = vmatprep.subr.mxu0 0.0
    %4705 = vmatpush1.msra.mxu0 %v4584
    %4706 = vmatprep.subr.mxu0 0.0
    %4707 = vmatpush1.msra.mxu0 %v4585
    %4708 = vmatprep.subr.mxu0 0.0
    %4709 = vmatpush1.msra.mxu0 %v4586
    %4710 = vmatprep.subr.mxu0 0.0
    %4711 = vmatpush1.msra.mxu0 %v4587
    %4712 = vmatprep.subr.mxu0 0.0
    %4713 = vmatpush1.msra.mxu0 %v4588
    %4714 = vmatprep.subr.mxu0 0.0
    %4715 = vmatpush1.msra.mxu0 %v4589
    %4716 = vmatprep.subr.mxu0 0.0
    %4717 = vmatpush1.msra.mxu0 %v4590
    %4718 = vmatprep.subr.mxu0 0.0
    %4719 = vmatpush1.msra.mxu0 %v4591
    %4720 = vmatprep.subr.mxu0 0.0
    %4721 = vmatpush1.msra.mxu0 %v4592
    %4722 = vmatprep.subr.mxu0 0.0
    %4723 = vmatpush1.msra.mxu0 %v4593
    %4724 = vmatprep.subr.mxu0 0.0
    %4725 = vmatpush1.msra.mxu0 %v4594
    %4726 = vmatprep.subr.mxu0 0.0
    %4727 = vmatpush1.msra.mxu0 0.0
    %4728 = vmatprep.subr.mxu0 0.0
    %4729 = vmatpush1.msra.mxu0 0.0
    %4730 = vmatprep.subr.mxu0 0.0
    %4731 = vmatpush1.msra.mxu0 0.0
    %4732 = vmatprep.subr.mxu0 0.0
    %4733 = vmatpush1.msra.mxu0 0.0
    %4734 = vmatprep.subr.mxu0 0.0
    %4735 = vmatpush1.msra.mxu0 0.0
    %4736 = vmatprep.subr.mxu0 0.0
    %4737 = vmatpush1.msra.mxu0 0.0
    %4738 = vmatprep.subr.mxu0 0.0
    %4739 = vmatpush1.msra.mxu0 0.0
    %4740 = vmatprep.subr.mxu0 0.0
    %4741 = vmatpush1.msra.mxu0 0.0
    %4742 = vmatprep.subr.mxu0 0.0
    %4743 = vmatpush1.msra.mxu0 0.0
    %4744 = vmatprep.subr.mxu0 0.0
    %4745 = vmatpush1.msra.mxu0 0.0
    %4746 = vmatprep.subr.mxu0 0.0
    %4747 = vmatpush1.msra.mxu0 0.0
    %4748 = vmatprep.subr.mxu0 0.0
    %4749 = vmatpush1.msra.mxu0 0.0
    %4750 = vmatprep.subr.mxu0 0.0
    %4751 = vmatpush1.msra.mxu0 0.0
    %4752 = vmatprep.subr.mxu0 0.0
    %4753 = vmatpush1.msra.mxu0 0.0
    %4754 = vmatprep.subr.mxu0 0.0
    %4755 = vmatpush1.msra.mxu0 0.0
    %4756 = vmatprep.subr.mxu0 0.0
    %4757 = vmatpush1.msra.mxu0 0.0
    %4758 = vmatprep.mubr.f32.mxu0 0.0
    %4759 = vmatmul.mubr.f32.gmra.mrb[0].mxu0 %v4576
    %v4760 = vpop.f32.mrb[0].mxu0
    %v4761 = vadd.f32 %v4681, %v4760
    %v4762 = vpop.f32.mrb[0].mxu0
    %4763 = vmatprep.mubr.f32.mxu0 0.0
    %4764 = vmatmul.mubr.f32.gmra.mrb[0].mxu0 %v4577
    %v4765 = vpop.f32.mrb[0].mxu0
    %v4766 = vadd.f32 %v4686, %v4765
    %v4767 = vpop.f32.mrb[0].mxu0
    %4768 = vmatprep.mubr.f32.mxu0 0.0
    %4769 = vmatmul.mubr.f32.gmra.mrb[0].mxu0 %v4578
    %v4770 = vpop.f32.mrb[0].mxu0
    %v4771 = vadd.f32 %v4691, %v4770
    %v4772 = vpop.f32.mrb[0].mxu0
    %4773 = vdwg.mxu0
    %v4774 = vld [vmem:[%s4567 + $0x2] sm:$0xff]
    %v4775 = vld [vmem:[%s4567 + $0xa] sm:$0xff]
    %v4776 = vld [vmem:[%s4567 + $0x12] sm:$0x1]
    %v4777 = vld [vmem:[%s2295] sm:$0xff]
    %v4778 = vld [vmem:[%s2295 + $0x8] sm:$0xff]
    %v4779 = vld [vmem:[%s2295 + $0x10] sm:$0xff]
    %v4780 = vld [vmem:[%s2295 + $0x18] sm:$0xff]
    %v4781 = vld [vmem:[%s2295 + $0x20] sm:$0xff]
    %v4782 = vld [vmem:[%s2295 + $0x28] sm:$0xff]
    %v4783 = vld [vmem:[%s2295 + $0x30] sm:$0xff]
    %v4784 = vld [vmem:[%s2295 + $0x38] sm:$0xff]
    %v4785 = vld [vmem:[%s2295 + $0x40] sm:$0xff]
    %v4786 = vld [vmem:[%s2295 + $0x48] sm:$0xff]
    %v4787 = vld [vmem:[%s2295 + $0x50] sm:$0xff]
    %v4788 = vld [vmem:[%s2295 + $0x58] sm:$0xff]
    %v4789 = vld [vmem:[%s2295 + $0x60] sm:$0xff]
    %v4790 = vld [vmem:[%s2295 + $0x68] sm:$0xff]
    %v4791 = vld [vmem:[%s2295 + $0x70] sm:$0xff]
    %v4792 = vld [vmem:[%s2295 + $0x78] sm:$0xff]
    %4793 = vmatprep.subr.mxu0 0.0
    %4794 = vmatpush1.msra.mxu0 %v4777
    %4795 = vmatprep.subr.mxu0 0.0
    %4796 = vmatpush1.msra.mxu0 %v4778
    %4797 = vmatprep.subr.mxu0 0.0
    %4798 = vmatpush1.msra.mxu0 %v4779
    %4799 = vmatprep.subr.mxu0 0.0
    %4800 = vmatpush1.msra.mxu0 %v4780
    %4801 = vmatprep.subr.mxu0 0.0
    %4802 = vmatpush1.msra.mxu0 %v4781
    %4803 = vmatprep.subr.mxu0 0.0
    %4804 = vmatpush1.msra.mxu0 %v4782
    %4805 = vmatprep.subr.mxu0 0.0
    %4806 = vmatpush1.msra.mxu0 %v4783
    %4807 = vmatprep.subr.mxu0 0.0
    %4808 = vmatpush1.msra.mxu0 %v4784
    %4809 = vmatprep.subr.mxu0 0.0
    %4810 = vmatpush1.msra.mxu0 %v4785
    %4811 = vmatprep.subr.mxu0 0.0
    %4812 = vmatpush1.msra.mxu0 %v4786
    %4813 = vmatprep.subr.mxu0 0.0
    %4814 = vmatpush1.msra.mxu0 %v4787
    %4815 = vmatprep.subr.mxu0 0.0
    %4816 = vmatpush1.msra.mxu0 %v4788
    %4817 = vmatprep.subr.mxu0 0.0
    %4818 = vmatpush1.msra.mxu0 %v4789
    %4819 = vmatprep.subr.mxu0 0.0
    %4820 = vmatpush1.msra.mxu0 %v4790
    %4821 = vmatprep.subr.mxu0 0.0
    %4822 = vmatpush1.msra.mxu0 %v4791
    %4823 = vmatprep.subr.mxu0 0.0
    %4824 = vmatpush1.msra.mxu0 %v4792
    %4825 = vmatprep.subr.mxu0 0.0
    %4826 = vmatpush1.msra.mxu0 0.0
    %4827 = vmatprep.subr.mxu0 0.0
    %4828 = vmatpush1.msra.mxu0 0.0
    %4829 = vmatprep.subr.mxu0 0.0
    %4830 = vmatpush1.msra.mxu0 0.0
    %4831 = vmatprep.subr.mxu0 0.0
    %4832 = vmatpush1.msra.mxu0 0.0
    %4833 = vmatprep.subr.mxu0 0.0
    %4834 = vmatpush1.msra.mxu0 0.0
    %4835 = vmatprep.subr.mxu0 0.0
    %4836 = vmatpush1.msra.mxu0 0.0
    %4837 = vmatprep.subr.mxu0 0.0
    %4838 = vmatpush1.msra.mxu0 0.0
    %4839 = vmatprep.subr.mxu0 0.0
    %4840 = vmatpush1.msra.mxu0 0.0
    %4841 = vmatprep.subr.mxu0 0.0
    %4842 = vmatpush1.msra.mxu0 0.0
    %4843 = vmatprep.subr.mxu0 0.0
    %4844 = vmatpush1.msra.mxu0 0.0
    %4845 = vmatprep.subr.mxu0 0.0
    %4846 = vmatpush1.msra.mxu0 0.0
    %4847 = vmatprep.subr.mxu0 0.0
    %4848 = vmatpush1.msra.mxu0 0.0
    %4849 = vmatprep.subr.mxu0 0.0
    %4850 = vmatpush1.msra.mxu0 0.0
    %4851 = vmatprep.subr.mxu0 0.0
    %4852 = vmatpush1.msra.mxu0 0.0
    %4853 = vmatprep.subr.mxu0 0.0
    %4854 = vmatpush1.msra.mxu0 0.0
    %4855 = vmatprep.subr.mxu0 0.0
    %4856 = vmatpush1.msra.mxu0 0.0
    %4857 = vmatprep.mubr.f32.mxu0 0.0
    %4858 = vmatmul.mubr.f32.gmra.mrb[0].mxu0 %v4774
    %v4859 = vpop.f32.mrb[0].mxu0
    %v4860 = vadd.f32 0.0, %v4859
    %v4861 = vpop.f32.mrb[0].mxu0
    %4862 = vmatprep.mubr.f32.mxu0 0.0
    %4863 = vmatmul.mubr.f32.gmra.mrb[0].mxu0 %v4775
    %v4864 = vpop.f32.mrb[0].mxu0
    %v4865 = vadd.f32 0.0, %v4864
    %v4866 = vpop.f32.mrb[0].mxu0
    %4867 = vmatprep.mubr.f32.mxu0 0.0
    %4868 = vmatmul.mubr.f32.gmra.mrb[0].mxu0 %v4776
    %v4869 = vpop.f32.mrb[0].mxu0
    %v4870 = vadd.f32 0.0, %v4869
    %v4871 = vpop.f32.mrb[0].mxu0
    %4872 = vdwg.mxu0
    %v4873 = vadd.f32 %v4761, %v4860
    %v4874 = vadd.f32 %v4766, %v4865
    %v4875 = vadd.f32 %v4771, %v4870
    %v4876 = vld [vmem:[%s4567 + $0x3] sm:$0xff]
    %v4877 = vld [vmem:[%s4567 + $0xb] sm:$0xff]
    %v4878 = vld [vmem:[%s4567 + $0x13] sm:$0x1]
    %v4879 = vld [vmem:[%s2398] sm:$0xff]
    %v4880 = vld [vmem:[%s2398 + $0x8] sm:$0xff]
    %v4881 = vld [vmem:[%s2398 + $0x10] sm:$0xff]
    %v4882 = vld [vmem:[%s2398 + $0x18] sm:$0xff]
    %v4883 = vld [vmem:[%s2398 + $0x20] sm:$0xff]
    %v4884 = vld [vmem:[%s2398 + $0x28] sm:$0xff]
    %v4885 = vld [vmem:[%s2398 + $0x30] sm:$0xff]
    %v4886 = vld [vmem:[%s2398 + $0x38] sm:$0xff]
    %v4887 = vld [vmem:[%s2398 + $0x40] sm:$0xff]
    %v4888 = vld [vmem:[%s2398 + $0x48] sm:$0xff]
    %v4889 = vld [vmem:[%s2398 + $0x50] sm:$0xff]
    %v4890 = vld [vmem:[%s2398 + $0x58] sm:$0xff]
    %v4891 = vld [vmem:[%s2398 + $0x60] sm:$0xff]
    %v4892 = vld [vmem:[%s2398 + $0x68] sm:$0xff]
    %v4893 = vld [vmem:[%s2398 + $0x70] sm:$0xff]
    %v4894 = vld [vmem:[%s2398 + $0x78] sm:$0xff]
    %4895 = vmatprep.subr.mxu0 0.0
    %4896 = vmatpush1.msra.mxu0 %v4879
    %4897 = vmatprep.subr.mxu0 0.0
    %4898 = vmatpush1.msra.mxu0 %v4880
    %4899 = vmatprep.subr.mxu0 0.0
    %4900 = vmatpush1.msra.mxu0 %v4881
    %4901 = vmatprep.subr.mxu0 0.0
    %4902 = vmatpush1.msra.mxu0 %v4882
    %4903 = vmatprep.subr.mxu0 0.0
    %4904 = vmatpush1.msra.mxu0 %v4883
    %4905 = vmatprep.subr.mxu0 0.0
    %4906 = vmatpush1.msra.mxu0 %v4884
    %4907 = vmatprep.subr.mxu0 0.0
    %4908 = vmatpush1.msra.mxu0 %v4885
    %4909 = vmatprep.subr.mxu0 0.0
    %4910 = vmatpush1.msra.mxu0 %v4886
    %4911 = vmatprep.subr.mxu0 0.0
    %4912 = vmatpush1.msra.mxu0 %v4887
    %4913 = vmatprep.subr.mxu0 0.0
    %4914 = vmatpush1.msra.mxu0 %v4888
    %4915 = vmatprep.subr.mxu0 0.0
    %4916 = vmatpush1.msra.mxu0 %v4889
    %4917 = vmatprep.subr.mxu0 0.0
    %4918 = vmatpush1.msra.mxu0 %v4890
    %4919 = vmatprep.subr.mxu0 0.0
    %4920 = vmatpush1.msra.mxu0 %v4891
    %4921 = vmatprep.subr.mxu0 0.0
    %4922 = vmatpush1.msra.mxu0 %v4892
    %4923 = vmatprep.subr.mxu0 0.0
    %4924 = vmatpush1.msra.mxu0 %v4893
    %4925 = vmatprep.subr.mxu0 0.0
    %4926 = vmatpush1.msra.mxu0 %v4894
    %4927 = vmatprep.subr.mxu0 0.0
    %4928 = vmatpush1.msra.mxu0 0.0
    %4929 = vmatprep.subr.mxu0 0.0
    %4930 = vmatpush1.msra.mxu0 0.0
    %4931 = vmatprep.subr.mxu0 0.0
    %4932 = vmatpush1.msra.mxu0 0.0
    %4933 = vmatprep.subr.mxu0 0.0
    %4934 = vmatpush1.msra.mxu0 0.0
    %4935 = vmatprep.subr.mxu0 0.0
    %4936 = vmatpush1.msra.mxu0 0.0
    %4937 = vmatprep.subr.mxu0 0.0
    %4938 = vmatpush1.msra.mxu0 0.0
    %4939 = vmatprep.subr.mxu0 0.0
    %4940 = vmatpush1.msra.mxu0 0.0
    %4941 = vmatprep.subr.mxu0 0.0
    %4942 = vmatpush1.msra.mxu0 0.0
    %4943 = vmatprep.subr.mxu0 0.0
    %4944 = vmatpush1.msra.mxu0 0.0
    %4945 = vmatprep.subr.mxu0 0.0
    %4946 = vmatpush1.msra.mxu0 0.0
    %4947 = vmatprep.subr.mxu0 0.0
    %4948 = vmatpush1.msra.mxu0 0.0
    %4949 = vmatprep.subr.mxu0 0.0
    %4950 = vmatpush1.msra.mxu0 0.0
    %4951 = vmatprep.subr.mxu0 0.0
    %4952 = vmatpush1.msra.mxu0 0.0
    %4953 = vmatprep.subr.mxu0 0.0
    %4954 = vmatpush1.msra.mxu0 0.0
    %4955 = vmatprep.subr.mxu0 0.0
    %4956 = vmatpush1.msra.mxu0 0.0
    %4957 = vmatprep.subr.mxu0 0.0
    %4958 = vmatpush1.msra.mxu0 0.0
    %4959 = vmatprep.mubr.f32.mxu0 0.0
    %4960 = vmatmul.mubr.f32.gmra.mrb[0].mxu0 %v4876
    %v4961 = vpop.f32.mrb[0].mxu0
    %v4962 = vadd.f32 0.0, %v4961
    %v4963 = vpop.f32.mrb[0].mxu0
    %4964 = vmatprep.mubr.f32.mxu0 0.0
    %4965 = vmatmul.mubr.f32.gmra.mrb[0].mxu0 %v4877
    %v4966 = vpop.f32.mrb[0].mxu0
    %v4967 = vadd.f32 0.0, %v4966
    %v4968 = vpop.f32.mrb[0].mxu0
    %4969 = vmatprep.mubr.f32.mxu0 0.0
    %4970 = vmatmul.mubr.f32.gmra.mrb[0].mxu0 %v4878
    %v4971 = vpop.f32.mrb[0].mxu0
    %v4972 = vadd.f32 0.0, %v4971
    %v4973 = vpop.f32.mrb[0].mxu0
    %4974 = vdwg.mxu0
    %v4975 = vadd.f32 %v4873, %v4962
    %v4976 = vadd.f32 %v4874, %v4967
    %v4977 = vadd.f32 %v4875, %v4972
    %v4978 = vld [vmem:[%s4567 + $0x4] sm:$0xff]
    %v4979 = vld [vmem:[%s4567 + $0xc] sm:$0xff]
    %v4980 = vld [vmem:[%s4567 + $0x14] sm:$0x1]
    %v4981 = vld [vmem:[%s2501] sm:$0xff]
    %v4982 = vld [vmem:[%s2501 + $0x8] sm:$0xff]
    %v4983 = vld [vmem:[%s2501 + $0x10] sm:$0xff]
    %v4984 = vld [vmem:[%s2501 + $0x18] sm:$0xff]
    %v4985 = vld [vmem:[%s2501 + $0x20] sm:$0xff]
    %v4986 = vld [vmem:[%s2501 + $0x28] sm:$0xff]
    %v4987 = vld [vmem:[%s2501 + $0x30] sm:$0xff]
    %v4988 = vld [vmem:[%s2501 + $0x38] sm:$0xff]
    %v4989 = vld [vmem:[%s2501 + $0x40] sm:$0xff]
    %v4990 = vld [vmem:[%s2501 + $0x48] sm:$0xff]
    %v4991 = vld [vmem:[%s2501 + $0x50] sm:$0xff]
    %v4992 = vld [vmem:[%s2501 + $0x58] sm:$0xff]
    %v4993 = vld [vmem:[%s2501 + $0x60] sm:$0xff]
    %v4994 = vld [vmem:[%s2501 + $0x68] sm:$0xff]
    %v4995 = vld [vmem:[%s2501 + $0x70] sm:$0xff]
    %v4996 = vld [vmem:[%s2501 + $0x78] sm:$0xff]
    %4997 = vmatprep.subr.mxu0 0.0
    %4998 = vmatpush1.msra.mxu0 %v4981
    %4999 = vmatprep.subr.mxu0 0.0
    %5000 = vmatpush1.msra.mxu0 %v4982
    %5001 = vmatprep.subr.mxu0 0.0
    %5002 = vmatpush1.msra.mxu0 %v4983
    %5003 = vmatprep.subr.mxu0 0.0
    %5004 = vmatpush1.msra.mxu0 %v4984
    %5005 = vmatprep.subr.mxu0 0.0
    %5006 = vmatpush1.msra.mxu0 %v4985
    %5007 = vmatprep.subr.mxu0 0.0
    %5008 = vmatpush1.msra.mxu0 %v4986
    %5009 = vmatprep.subr.mxu0 0.0
    %5010 = vmatpush1.msra.mxu0 %v4987
    %5011 = vmatprep.subr.mxu0 0.0
    %5012 = vmatpush1.msra.mxu0 %v4988
    %5013 = vmatprep.subr.mxu0 0.0
    %5014 = vmatpush1.msra.mxu0 %v4989
    %5015 = vmatprep.subr.mxu0 0.0
    %5016 = vmatpush1.msra.mxu0 %v4990
    %5017 = vmatprep.subr.mxu0 0.0
    %5018 = vmatpush1.msra.mxu0 %v4991
    %5019 = vmatprep.subr.mxu0 0.0
    %5020 = vmatpush1.msra.mxu0 %v4992
    %5021 = vmatprep.subr.mxu0 0.0
    %5022 = vmatpush1.msra.mxu0 %v4993
    %5023 = vmatprep.subr.mxu0 0.0
    %5024 = vmatpush1.msra.mxu0 %v4994
    %5025 = vmatprep.subr.mxu0 0.0
    %5026 = vmatpush1.msra.mxu0 %v4995
    %5027 = vmatprep.subr.mxu0 0.0
    %5028 = vmatpush1.msra.mxu0 %v4996
    %5029 = vmatprep.subr.mxu0 0.0
    %5030 = vmatpush1.msra.mxu0 0.0
    %5031 = vmatprep.subr.mxu0 0.0
    %5032 = vmatpush1.msra.mxu0 0.0
    %5033 = vmatprep.subr.mxu0 0.0
    %5034 = vmatpush1.msra.mxu0 0.0
    %5035 = vmatprep.subr.mxu0 0.0
    %5036 = vmatpush1.msra.mxu0 0.0
    %5037 = vmatprep.subr.mxu0 0.0
    %5038 = vmatpush1.msra.mxu0 0.0
    %5039 = vmatprep.subr.mxu0 0.0
    %5040 = vmatpush1.msra.mxu0 0.0
    %5041 = vmatprep.subr.mxu0 0.0
    %5042 = vmatpush1.msra.mxu0 0.0
    %5043 = vmatprep.subr.mxu0 0.0
    %5044 = vmatpush1.msra.mxu0 0.0
    %5045 = vmatprep.subr.mxu0 0.0
    %5046 = vmatpush1.msra.mxu0 0.0
    %5047 = vmatprep.subr.mxu0 0.0
    %5048 = vmatpush1.msra.mxu0 0.0
    %5049 = vmatprep.subr.mxu0 0.0
    %5050 = vmatpush1.msra.mxu0 0.0
    %5051 = vmatprep.subr.mxu0 0.0
    %5052 = vmatpush1.msra.mxu0 0.0
    %5053 = vmatprep.subr.mxu0 0.0
    %5054 = vmatpush1.msra.mxu0 0.0
    %5055 = vmatprep.subr.mxu0 0.0
    %5056 = vmatpush1.msra.mxu0 0.0
    %5057 = vmatprep.subr.mxu0 0.0
    %5058 = vmatpush1.msra.mxu0 0.0
    %5059 = vmatprep.subr.mxu0 0.0
    %5060 = vmatpush1.msra.mxu0 0.0
    %5061 = vmatprep.mubr.f32.mxu0 0.0
    %5062 = vmatmul.mubr.f32.gmra.mrb[0].mxu0 %v4978
    %v5063 = vpop.f32.mrb[0].mxu0
    %v5064 = vadd.f32 0.0, %v5063
    %v5065 = vpop.f32.mrb[0].mxu0
    %5066 = vmatprep.mubr.f32.mxu0 0.0
    %5067 = vmatmul.mubr.f32.gmra.mrb[0].mxu0 %v4979
    %v5068 = vpop.f32.mrb[0].mxu0
    %v5069 = vadd.f32 0.0, %v5068
    %v5070 = vpop.f32.mrb[0].mxu0
    %5071 = vmatprep.mubr.f32.mxu0 0.0
    %5072 = vmatmul.mubr.f32.gmra.mrb[0].mxu0 %v4980
    %v5073 = vpop.f32.mrb[0].mxu0
    %v5074 = vadd.f32 0.0, %v5073
    %v5075 = vpop.f32.mrb[0].mxu0
    %5076 = vdwg.mxu0
    %v5077 = vadd.f32 %v4975, %v5064
    %v5078 = vadd.f32 %v4976, %v5069
    %v5079 = vadd.f32 %v4977, %v5074
    %v5080 = vadd.f32 %v5077, %v2608
    %v5081 = vadd.f32 %v5078, %v2608
    %v5082 = vadd.f32 %v5079, %v2608
    %s5083 = scalar_lea.vmem %s15, 24
    %5084 = vst.msk [vmem:[%s5083] sm:$0xff] %vm2613, %v5080
    %5085 = vst.msk [vmem:[%s5083 + $0x8] sm:$0xff] %vm2613, %v5081
    %5086 = vst.msk [vmem:[%s5083 + $0x10] sm:$0x1] %vm2616, %v5082
    // Predicated region
    $region62: #{autoencoder_forward.1} parent=1 // pred_check
      _
    $region63: #{autoencoder_forward.1} parent=1 // pred_check_branch
      %5088 = sbr.rel (0) target = $region65
    $region64: #{autoencoder_forward.1} parent=1 // pred_region
      _
    $region65: #{autoencoder_forward.1} parent=1 // pred_fallthru
      _
    // Predicated region
    $region66: #{autoencoder_forward.1} parent=1 // pred_check
      _
    $region67: #{autoencoder_forward.1} parent=1 // pred_check_branch
      %5090 = sbr.rel (0) target = $region69
    $region68: #{autoencoder_forward.1} parent=1 // pred_region
      %s5092 = ssub.s32 32, 32
      %5093 = vsyncadd [#allocation8], %s5092
      %s5095 = sshll.u32 [#allocation7], 4
      %s5096 = int_to_ptr.vmem [resolvable:$true] %s5095
      %5098 = dma.vmem_to_hbm [thread:$0]  %s5096, 32, %s16, [#allocation8]
    $region69: #{autoencoder_forward.1} parent=1 // pred_fallthru
      _
    // Predicated region
    $region70: #{autoencoder_forward.1} parent=1 // pred_check
      _
    $region71: #{autoencoder_forward.1} parent=1 // pred_check_branch
      %5100 = sbr.rel (0) target = $region73
    $region72: #{autoencoder_forward.1} parent=1 // pred_region
      _
    $region73: #{autoencoder_forward.1} parent=1 // pred_fallthru
      _
    // Predicated region
    $region74: #{autoencoder_forward.1} parent=1 // pred_check
      _
    $region75: #{autoencoder_forward.1} parent=1 // pred_check_branch
      %5102 = sbr.rel (0) target = $region77
    $region76: #{autoencoder_forward.1} parent=1 // pred_region
      %5103 = dma.done [#allocation8], 32
    $region77: #{autoencoder_forward.1} parent=1 // pred_fallthru
      _
    %5104 = vsyncpa [#allocation8], 1

</llo_original>
